<compile_context>
chip_gen: v7x
topology: tpu7x:2x2x1
jax: 0.10.0
libtpu: 0.0.40
codegen_flags: <defaults>
</compile_context>

<pallas_src>
import jax
import jax.numpy as jnp
from jax import lax
from jax.experimental import pallas as pl
from jax.experimental.pallas import tpu as pltpu


# ------------------------------ helpers --------------------------------------

def _round_up(x, m):
    return ((x + m - 1) // m) * m


def _pick_n_block(n):
    """Block size for the LSTM batch axis (W): sublane-aligned, >= 2 grid steps
    when possible so v7x's two TensorCores both get work (no effect on v5e/v6e)."""
    if n % 16 != 0:
        return n                      # single full block (still a legal BlockSpec)
    blk = n // 2
    while blk > 256 and blk % 16 == 0:
        blk //= 2
    return blk


def _pick_m_block(m):
    """Row-block for the fc GEMM grid."""
    for blk in (512, 256, 128):
        if m > blk and m % blk == 0:
            return blk
    return m


# --------------------- fused bidirectional LSTM kernel -----------------------

def _make_bilstm_kernel(num_layers, T, Hp, compute_dtype, unroll):
    """Fused multi-layer bidirectional LSTM kernel (one grid step = one W-block).

    Ref order: x, (wih, whh, b) * num_layers, out, xproj_scr, h_scr, c_scr.
      x     : (T, n_blk, C_in)
      wih_l : (C_l, 8*Hp)          columns = [fwd: i f g o | rev: i f g o], gate-padded
      whh_l : (2*Hp, 8*Hp)         block-diagonal (fwd h rows -> fwd cols, rev -> rev)
      b_l   : (1, 8*Hp)   f32      bih + bhh, gate-padded
      out   : (T, n_blk, 2*Hp) f32 [:, :, :Hp] = forward, [:, :, Hp:] = reverse
    The recurrence runs along axis 0 (T); the reverse direction reads timestep
    T-1-t and writes its output there, so flip + concat never leave VMEM.  The
    previous layer's output (out_ref) is re-read in VMEM as the next layer's input.
    """
    G = 4 * Hp

    def kernel(*refs):
        x_ref = refs[0]
        w_refs = refs[1:1 + 3 * num_layers]
        out_ref = refs[1 + 3 * num_layers]
        xproj_scr, h_scr, c_scr = refs[2 + 3 * num_layers:]
        n_blk = x_ref.shape[1]

        for layer in range(num_layers):
            wih_ref, whh_ref, b_ref = w_refs[3 * layer:3 * layer + 3]
            src_ref = x_ref if layer == 0 else out_ref   # previous layer output

            # ---- hoisted input projection (+ bias): out of the recurrence ----
            bias_full = jnp.broadcast_to(b_ref[...], (n_blk, 2 * G))  # hoisted

            def proj_body(t, _, src_ref=src_ref, wih_ref=wih_ref,
                          bias_full=bias_full):
                xv = src_ref[t].astype(compute_dtype)                 # (n, C_l)
                xproj_scr[t] = (
                    jnp.dot(xv, wih_ref[...],
                            preferred_element_type=jnp.float32) + bias_full)
                return 0

            lax.fori_loop(0, T, proj_body, 0, unroll=unroll)

            # ---- recurrence: only h @ Whh inside (both directions, one dot) ----
            h_scr[...] = jnp.zeros(h_scr.shape, h_scr.dtype)
            c_scr[...] = jnp.zeros(c_scr.shape, c_scr.dtype)

            def step(t, _, whh_ref=whh_ref):
                rt = (T - 1) - t
                h_prev = h_scr[...].astype(compute_dtype)             # (n, 2Hp)
                grec = jnp.dot(h_prev, whh_ref[...],
                               preferred_element_type=jnp.float32)    # (n, 8Hp)
                g_f = xproj_scr[t, :, pl.ds(0, G)] + grec[:, :G]
                g_r = xproj_scr[rt, :, pl.ds(G, G)] + grec[:, G:]

                def lstm_cell(g, c_prev):          # f32, lane-aligned gate slices
                    i = jax.nn.sigmoid(g[:, 0 * Hp:1 * Hp])
                    f = jax.nn.sigmoid(g[:, 1 * Hp:2 * Hp])
                    gg = jnp.tanh(g[:, 2 * Hp:3 * Hp])
                    o = jax.nn.sigmoid(g[:, 3 * Hp:4 * Hp])
                    c = f * c_prev + i * gg
                    h = o * jnp.tanh(c)
                    return h, c

                h_f, c_f = lstm_cell(g_f, c_scr[:, :Hp])
                h_r, c_r = lstm_cell(g_r, c_scr[:, Hp:])
                c_scr[:, :Hp] = c_f
                c_scr[:, Hp:] = c_r
                h_scr[:, :Hp] = h_f
                h_scr[:, Hp:] = h_r
                out_ref[t, :, pl.ds(0, Hp)] = h_f.astype(out_ref.dtype)
                out_ref[rt, :, pl.ds(Hp, Hp)] = h_r.astype(out_ref.dtype)
                return 0

            lax.fori_loop(0, T, step, 0, unroll=unroll)

    return kernel


def _bilstm_forward(seq, packed_layers, Hp, compute_dtype):
    """seq: (T, N, C) f32.  Returns (T, N, 2*Hp) f32 ([fwd | rev], lane-padded)."""
    T, N, C = seq.shape
    n_blk = _pick_n_block(N)
    num_layers = len(packed_layers)

    in_specs = [pl.BlockSpec((T, n_blk, C), lambda n: (0, n, 0))]
    args = [seq]
    for wih, whh, b in packed_layers:
        in_specs += [pl.BlockSpec(wih.shape, lambda n: (0, 0)),
                     pl.BlockSpec(whh.shape, lambda n: (0, 0)),
                     pl.BlockSpec(b.shape, lambda n: (0, 0))]
        args += [wih, whh, b]

    kernel = _make_bilstm_kernel(num_layers, T, Hp, compute_dtype,
                                 unroll=(T <= 8))
    return pl.pallas_call(
        kernel,
        out_shape=jax.ShapeDtypeStruct((T, N, 2 * Hp), jnp.float32),
        grid=(N // n_blk,),
        in_specs=in_specs,
        out_specs=pl.BlockSpec((T, n_blk, 2 * Hp), lambda n: (0, n, 0)),
        scratch_shapes=[
            pltpu.VMEM((T, n_blk, 8 * Hp), jnp.float32),  # hoisted x @ Wih + b
            pltpu.VMEM((n_blk, 2 * Hp), jnp.float32),     # h state  [fwd | rev]
            pltpu.VMEM((n_blk, 2 * Hp), jnp.float32),     # c state  [fwd | rev]
        ],
        compiler_params=pltpu.CompilerParams(
            # independent W-columns per grid step -> both v7x TensorCores
            dimension_semantics=("parallel",),
            # keep x / x_proj / weights resident in VMEM; raise further on
            # v5e/v6e (128 MiB physical) for larger shapes; v7x physical is 64 MiB.
            vmem_limit_bytes=32 * 1024 * 1024,
        ),
    )(*args)


# ------------------------------ fc kernel ------------------------------------

def _fc_forward(x2d, w_packed, b_packed, compute_dtype):
    """(M, C) @ (C, Hp_out) + b, lane-dense (128-padded) output, M-tiled grid."""
    M, C = x2d.shape
    Hp_out = w_packed.shape[1]
    tm = _pick_m_block(M)

    def kernel(x_ref, w_ref, b_ref, o_ref):
        xv = x_ref[...].astype(compute_dtype)
        o_ref[...] = (jnp.dot(xv, w_ref[...],
                              preferred_element_type=jnp.float32) + b_ref[...])

    return pl.pallas_call(
        kernel,
        out_shape=jax.ShapeDtypeStruct((M, Hp_out), jnp.float32),
        grid=(M // tm,),
        in_specs=[pl.BlockSpec((tm, C), lambda i: (i, 0)),
                  pl.BlockSpec(w_packed.shape, lambda i: (0, 0)),
                  pl.BlockSpec(b_packed.shape, lambda i: (0, 0))],
        out_specs=pl.BlockSpec((tm, Hp_out), lambda i: (i, 0)),
        compiler_params=pltpu.CompilerParams(dimension_semantics=("parallel",)),
    )(x2d, w_packed, b_packed)


# --------------------------- parameter init / packing ------------------------

def init_lstm_params(key, input_size, hidden_size, num_layers=2):
    """PyTorch nn.LSTM-style uniform(-1/sqrt(H), 1/sqrt(H)) init, bidirectional.
    Raw (unpacked) parameters in PyTorch layout; gate order i, f, g, o."""
    params = []
    bound = 1.0 / float(hidden_size) ** 0.5
    for layer in range(num_layers):
        din = input_size if layer == 0 else hidden_size * 2
        layer_p = []
        for _direction in range(2):
            key, k1, k2, k3, k4 = jax.random.split(key, 5)
            wih = jax.random.uniform(k1, (4 * hidden_size, din), jnp.float32, -bound, bound)
            whh = jax.random.uniform(k2, (4 * hidden_size, hidden_size), jnp.float32, -bound, bound)
            bih = jax.random.uniform(k3, (4 * hidden_size,), jnp.float32, -bound, bound)
            bhh = jax.random.uniform(k4, (4 * hidden_size,), jnp.float32, -bound, bound)
            layer_p.append(dict(wih=wih, whh=whh, b=bih + bhh))
        params.append(layer_p)
    return params


def _pad_gate_cols(w_t, H, Hp):
    """(rows, 4H) -> (rows, 4*Hp): each gate block (i,f,g,o) padded to Hp columns
    (zeros) so gate slices in the kernel are 128-lane aligned."""
    rows = w_t.shape[0]
    out = jnp.zeros((rows, 4 * Hp), jnp.float32)
    for k in range(4):
        out = out.at[:, k * Hp:k * Hp + H].set(w_t[:, k * H:(k + 1) * H])
    return out


def _pad_gate_vec(b, H, Hp):
    out = jnp.zeros((4 * Hp,), jnp.float32)
    for k in range(4):
        out = out.at[k * Hp:k * Hp + H].set(b[k * H:(k + 1) * H])
    return out


def _pack_bilstm_layer(p_fwd, p_rev, H, Hp, first_layer, compute_dtype):
    """Pack one bidirectional layer into the fused-kernel layout.

    Returns (wih, whh, b):
      wih : (C_in or 2*Hp, 8*Hp)  columns = [fwd: i f g o | rev: i f g o]
      whh : (2*Hp, 8*Hp)          block-diagonal (fwd h rows -> fwd cols, rev -> rev)
      b   : (1, 8*Hp) f32         bih + bhh, gate-padded.
    Padded rows/columns are zero => padded hidden lanes stay exactly 0.
    """
    wih_f = _pad_gate_cols(p_fwd["wih"].T, H, Hp)                # (C_in, 4Hp)
    wih_r = _pad_gate_cols(p_rev["wih"].T, H, Hp)
    wih_both = jnp.concatenate([wih_f, wih_r], axis=1)           # (C_in, 8Hp)
    if first_layer:
        wih = wih_both
    else:
        # previous layer output is [fwd H | pad | rev H | pad] = 2*Hp channels
        wih = jnp.zeros((2 * Hp, 8 * Hp), jnp.float32)
        wih = wih.at[0:H, :].set(wih_both[0:H, :])
        wih = wih.at[Hp:Hp + H, :].set(wih_both[H:2 * H, :])

    whh_f = _pad_gate_cols(p_fwd["whh"].T, H, Hp)                # (H, 4Hp)
    whh_r = _pad_gate_cols(p_rev["whh"].T, H, Hp)
    whh = jnp.zeros((2 * Hp, 8 * Hp), jnp.float32)
    whh = whh.at[0:H, 0:4 * Hp].set(whh_f)
    whh = whh.at[Hp:Hp + H, 4 * Hp:].set(whh_r)

    b = jnp.concatenate([_pad_gate_vec(p_fwd["b"], H, Hp),
                         _pad_gate_vec(p_rev["b"], H, Hp)])[None, :]
    return wih.astype(compute_dtype), whh.astype(compute_dtype), b


# ------------------------------ SequenceEncoder ------------------------------

class SequenceEncoder:
    """encoder_type in {'reshape', 'fc', 'rnn'} (CRNN neck)."""

    def __init__(self, in_channels, encoder_type, hidden_size=48, *,
                 key, compute_dtype=jnp.bfloat16):
        self.encoder_type = encoder_type
        self.in_channels = in_channels
        self.hidden_size = hidden_size
        self.compute_dtype = compute_dtype

        if encoder_type == "reshape":
            self.out_channels = in_channels
        elif encoder_type == "fc":
            bound = 1.0 / float(in_channels) ** 0.5
            k1, k2 = jax.random.split(key)
            self.fc_weight = jax.random.uniform(k1, (hidden_size, in_channels),
                                                jnp.float32, -bound, bound)
            self.fc_bias = jax.random.uniform(k2, (hidden_size,),
                                              jnp.float32, -bound, bound)
            hp = _round_up(hidden_size, 128)          # lane-dense output layout
            w = jnp.zeros((in_channels, hp), jnp.float32)
            w = w.at[:, :hidden_size].set(self.fc_weight.T)
            b = jnp.zeros((1, hp), jnp.float32).at[0, :hidden_size].set(self.fc_bias)
            self.fc_w_packed = w.astype(compute_dtype)
            self.fc_b_packed = b
            self.out_channels = hidden_size
        elif encoder_type == "rnn":
            self.lstm_params = init_lstm_params(key, in_channels, hidden_size,
                                                num_layers=2)
            self.Hp = _round_up(hidden_size, 128)
            self.packed_layers = [
                _pack_bilstm_layer(lp[0], lp[1], hidden_size, self.Hp,
                                   first_layer=(i == 0),
                                   compute_dtype=compute_dtype)
                for i, lp in enumerate(self.lstm_params)]
            self.out_channels = hidden_size * 2
        else:
            # TODO(synk): 'svtr' and 'cascadernn' encoders not implemented.
            raise NotImplementedError(f"encoder_type={encoder_type} not implemented")

    def __call__(self, x):
        # x: NCHW, H must be 1 (Im2Seq)
        B, C, H, W = x.shape
        assert H == 1
        seq = jnp.transpose(jnp.squeeze(x, axis=2), (0, 2, 1))   # (B, W, C)

        if self.encoder_type == "reshape":
            return seq

        if self.encoder_type == "fc":
            out = _fc_forward(seq.reshape(B * W, C), self.fc_w_packed,
                              self.fc_b_packed, self.compute_dtype)
            return out[:, :self.hidden_size].reshape(B, W, self.hidden_size)

        # 'rnn': 2-layer bidirectional LSTM, recurrence along axis 0 (faithful to
        # nn.LSTM(batch_first=False) being fed a batch-first tensor, as in the
        # reference module).
        out_pad = _bilstm_forward(seq, self.packed_layers, self.Hp,
                                  self.compute_dtype)
        Hh, Hp = self.hidden_size, self.Hp
        if Hp == Hh:
            return out_pad
        # strip the internal 128-lane padding only at the very end
        return jnp.concatenate([out_pad[..., :Hh], out_pad[..., Hp:Hp + Hh]],
                               axis=-1)


# ----------------------------- pure-JAX reference ----------------------------

def _ref_lstm_dir(x, wih, whh, b):
    T, N, _ = x.shape
    H = whh.shape[1]
    wih_t, whh_t = wih.T, whh.T

    def step(carry, x_t):
        h, c = carry
        gates = x_t @ wih_t + h @ whh_t + b
        i = jax.nn.sigmoid(gates[:, :H])
        f = jax.nn.sigmoid(gates[:, H:2 * H])
        g = jnp.tanh(gates[:, 2 * H:3 * H])
        o = jax.nn.sigmoid(gates[:, 3 * H:])
        c = f * c + i * g
        h = o * jnp.tanh(c)
        return (h, c), h

    init = (jnp.zeros((N, H), jnp.float32), jnp.zeros((N, H), jnp.float32))
    _, hs = lax.scan(step, init, x)
    return hs


def _ref_rnn_encoder(x, lstm_params):
    seq = jnp.transpose(jnp.squeeze(x, axis=2), (0, 2, 1))
    h = seq
    for layer_p in lstm_params:
        fwd = _ref_lstm_dir(h, layer_p[0]["wih"], layer_p[0]["whh"], layer_p[0]["b"])
        rev = jnp.flip(_ref_lstm_dir(jnp.flip(h, 0), layer_p[1]["wih"],
                                     layer_p[1]["whh"], layer_p[1]["b"]), 0)
        h = jnp.concatenate([fwd, rev], axis=-1)
    return h


# ----------------------------------- main -------------------------------------

if __name__ == "__main__":
    key = jax.random.PRNGKey(0)
    kx, kp = jax.random.split(key)

    B, C, W = 2, 4, 16
    hidden = 32
    x = jax.random.normal(kx, (B, C, 1, W), jnp.float32)

    # exact-semantics check (f32 compute) against the pure-JAX reference
    enc_f32 = SequenceEncoder(C, "rnn", hidden_size=hidden, key=kp,
                              compute_dtype=jnp.float32)
    out_f32 = jax.block_until_ready(enc_f32(x))
    assert out_f32.shape == (B, W, 2 * hidden), out_f32.shape
    ref = _ref_rnn_encoder(x, enc_f32.lstm_params)
    assert jnp.allclose(out_f32, ref, atol=2e-3, rtol=2e-3), \
        float(jnp.max(jnp.abs(out_f32 - ref)))

    # fast path: bf16 MXU inputs (f32 accumulation / state / nonlinearities)
    enc_bf16 = SequenceEncoder(C, "rnn", hidden_size=hidden, key=kp)
    out_bf16 = jax.block_until_ready(enc_bf16(x))
    assert out_bf16.shape == (B, W, 2 * hidden), out_bf16.shape
    assert jnp.allclose(out_bf16, ref, atol=5e-2, rtol=5e-2), \
        float(jnp.max(jnp.abs(out_bf16 - ref)))

    # 'fc' path
    enc_fc = SequenceEncoder(C, "fc", hidden_size=hidden, key=kp,
                             compute_dtype=jnp.float32)
    out_fc = jax.block_until_ready(enc_fc(x))
    assert out_fc.shape == (B, W, hidden), out_fc.shape
    seq = jnp.transpose(x[:, :, 0, :], (0, 2, 1))
    ref_fc = seq @ enc_fc.fc_weight.T + enc_fc.fc_bias
    assert jnp.allclose(out_fc, ref_fc, atol=2e-3, rtol=2e-3), \
        float(jnp.max(jnp.abs(out_fc - ref_fc)))

    # 'reshape' path
    enc_rs = SequenceEncoder(C, "reshape", key=kp)
    out_rs = jax.block_until_ready(enc_rs(x))
    assert out_rs.shape == (B, W, C), out_rs.shape

    print("KERNEL_OK")
</pallas_src>

<mosaic_0001>
module attributes {stable_mosaic.version = 11 : i64} {
  func.func @kernel(%arg0: i32, %arg1: memref<2x8x4xf32, #tpu.memory_space<vmem>>, %arg2: memref<4x1024xf32, #tpu.memory_space<vmem>>, %arg3: memref<256x1024xf32, #tpu.memory_space<vmem>>, %arg4: memref<1x1024xf32, #tpu.memory_space<vmem>>, %arg5: memref<256x1024xf32, #tpu.memory_space<vmem>>, %arg6: memref<256x1024xf32, #tpu.memory_space<vmem>>, %arg7: memref<1x1024xf32, #tpu.memory_space<vmem>>, %arg8: memref<2x8x256xf32, #tpu.memory_space<vmem>>, %arg9: memref<2x8x1024xf32, #tpu.memory_space<vmem>>, %arg10: memref<8x256xf32, #tpu.memory_space<vmem>>, %arg11: memref<8x256xf32, #tpu.memory_space<vmem>>) attributes {dimension_semantics = [#tpu.dimension_semantics<parallel>], iteration_bounds = array<i64: 2>, scalar_prefetch = 0 : i64, scratch_operands = 3 : i64, tpu.core_type = #tpu.core_type<tc>, window_params = [{transform_indices = @transform_0, window_bounds = array<i64: 2, 8, 4>}, {pipeline_mode = #tpu.pipeline_mode<synchronous>, transform_indices = @transform_1, window_bounds = array<i64: 4, 1024>}, {pipeline_mode = #tpu.pipeline_mode<synchronous>, transform_indices = @transform_2, window_bounds = array<i64: 256, 1024>}, {pipeline_mode = #tpu.pipeline_mode<synchronous>, transform_indices = @transform_3, window_bounds = array<i64: 1, 1024>}, {pipeline_mode = #tpu.pipeline_mode<synchronous>, transform_indices = @transform_4, window_bounds = array<i64: 256, 1024>}, {pipeline_mode = #tpu.pipeline_mode<synchronous>, transform_indices = @transform_5, window_bounds = array<i64: 256, 1024>}, {pipeline_mode = #tpu.pipeline_mode<synchronous>, transform_indices = @transform_6, window_bounds = array<i64: 1, 1024>}, {transform_indices = @transform_7, window_bounds = array<i64: 2, 8, 256>}]} {
    %c0 = arith.constant 0 : index
    %c0_0 = arith.constant 0 : index
    %0 = vector.load %arg4[%c0, %c0_0] : memref<1x1024xf32, #tpu.memory_space<vmem>>, vector<1x1024xf32>
    %1 = vector.shape_cast %0 : vector<1x1024xf32> to vector<1x1024xf32>
    %2 = vector.broadcast %1 : vector<1x1024xf32> to vector<8x1024xf32>
    %c0_i32 = arith.constant 0 : i32
    %3 = arith.index_cast %c0_i32 : i32 to index
    %c0_1 = arith.constant 0 : index
    %c0_2 = arith.constant 0 : index
    %4 = vector.load %arg1[%3, %c0_1, %c0_2] : memref<2x8x4xf32, #tpu.memory_space<vmem>>, vector<1x8x4xf32>
    %5 = vector.shape_cast %4 : vector<1x8x4xf32> to vector<8x4xf32>
    %c0_3 = arith.constant 0 : index
    %c0_4 = arith.constant 0 : index
    %6 = vector.load %arg2[%c0_3, %c0_4] : memref<4x1024xf32, #tpu.memory_space<vmem>>, vector<4x1024xf32>
    %cst = arith.constant dense<0.000000e+00> : vector<8x1024xf32>
    %7 = tpu.matmul %5, %6, %cst {dimension_numbers = #tpu.dot_dimension_numbers<[1], [0], [0], [1], [0, 0, 1, 1], [], []>} : vector<8x4xf32>, vector<4x1024xf32>, vector<8x1024xf32> -> vector<8x1024xf32>
    %8 = arith.addf %7, %2 : vector<8x1024xf32>
    %9 = arith.index_cast %c0_i32 : i32 to index
    %c0_5 = arith.constant 0 : index
    %c0_6 = arith.constant 0 : index
    %10 = vector.load %arg9[%9, %c0_5, %c0_6] : memref<2x8x1024xf32, #tpu.memory_space<vmem>>, vector<1x8x1024xf32>
    %11 = vector.shape_cast %10 : vector<1x8x1024xf32> to vector<8x1024xf32>
    %12 = vector.shape_cast %8 : vector<8x1024xf32> to vector<1x8x1024xf32>
    tpu.vector_store %arg9[%9, %c0_5, %c0_6], %12 {strides = array<i32>} : memref<2x8x1024xf32, #tpu.memory_space<vmem>>, vector<1x8x1024xf32>,
    %c1_i32 = arith.constant 1 : i32
    %13 = arith.index_cast %c1_i32 : i32 to index
    %c0_7 = arith.constant 0 : index
    %c0_8 = arith.constant 0 : index
    %14 = vector.load %arg1[%13, %c0_7, %c0_8] : memref<2x8x4xf32, #tpu.memory_space<vmem>>, vector<1x8x4xf32>
    %15 = vector.shape_cast %14 : vector<1x8x4xf32> to vector<8x4xf32>
    %c0_9 = arith.constant 0 : index
    %c0_10 = arith.constant 0 : index
    %16 = vector.load %arg2[%c0_9, %c0_10] : memref<4x1024xf32, #tpu.memory_space<vmem>>, vector<4x1024xf32>
    %cst_11 = arith.constant dense<0.000000e+00> : vector<8x1024xf32>
    %17 = tpu.matmul %15, %16, %cst_11 {dimension_numbers = #tpu.dot_dimension_numbers<[1], [0], [0], [1], [0, 0, 1, 1], [], []>} : vector<8x4xf32>, vector<4x1024xf32>, vector<8x1024xf32> -> vector<8x1024xf32>
    %18 = arith.addf %17, %2 : vector<8x1024xf32>
    %19 = arith.index_cast %c1_i32 : i32 to index
    %c0_12 = arith.constant 0 : index
    %c0_13 = arith.constant 0 : index
    %20 = vector.load %arg9[%19, %c0_12, %c0_13] : memref<2x8x1024xf32, #tpu.memory_space<vmem>>, vector<1x8x1024xf32>
    %21 = vector.shape_cast %20 : vector<1x8x1024xf32> to vector<8x1024xf32>
    %22 = vector.shape_cast %18 : vector<8x1024xf32> to vector<1x8x1024xf32>
    tpu.vector_store %arg9[%19, %c0_12, %c0_13], %22 {strides = array<i32>} : memref<2x8x1024xf32, #tpu.memory_space<vmem>>, vector<1x8x1024xf32>,
    %c2_i32 = arith.constant 2 : i32
    %cst_14 = arith.constant 0.000000e+00 : f32
    %23 = vector.broadcast %cst_14 : f32 to vector<8x256xf32>
    %c0_15 = arith.constant 0 : index
    %c0_16 = arith.constant 0 : index
    %24 = vector.load %arg10[%c0_15, %c0_16] : memref<8x256xf32, #tpu.memory_space<vmem>>, vector<8x256xf32>
    tpu.vector_store %arg10[%c0_15, %c0_16], %23 {strides = array<i32>} : memref<8x256xf32, #tpu.memory_space<vmem>>, vector<8x256xf32>,
    %cst_17 = arith.constant 0.000000e+00 : f32
    %25 = vector.broadcast %cst_17 : f32 to vector<8x256xf32>
    %c0_18 = arith.constant 0 : index
    %c0_19 = arith.constant 0 : index
    %26 = vector.load %arg11[%c0_18, %c0_19] : memref<8x256xf32, #tpu.memory_space<vmem>>, vector<8x256xf32>
    tpu.vector_store %arg11[%c0_18, %c0_19], %25 {strides = array<i32>} : memref<8x256xf32, #tpu.memory_space<vmem>>, vector<8x256xf32>,
    %c0_i32_20 = arith.constant 0 : i32
    %c1_i32_21 = arith.constant 1 : i32
    %27 = arith.subi %c1_i32_21, %c0_i32_20 : i32
    %c0_22 = arith.constant 0 : index
    %c0_23 = arith.constant 0 : index
    %28 = vector.load %arg10[%c0_22, %c0_23] : memref<8x256xf32, #tpu.memory_space<vmem>>, vector<8x256xf32>
    %c0_24 = arith.constant 0 : index
    %c0_25 = arith.constant 0 : index
    %29 = vector.load %arg3[%c0_24, %c0_25] : memref<256x1024xf32, #tpu.memory_space<vmem>>, vector<256x1024xf32>
    %cst_26 = arith.constant dense<0.000000e+00> : vector<8x1024xf32>
    %30 = tpu.matmul %28, %29, %cst_26 {dimension_numbers = #tpu.dot_dimension_numbers<[1], [0], [0], [1], [0, 0, 1, 1], [], []>} : vector<8x256xf32>, vector<256x1024xf32>, vector<8x1024xf32> -> vector<8x1024xf32>
    %31 = arith.index_cast %c0_i32_20 : i32 to index
    %c0_27 = arith.constant 0 : index
    %c0_28 = arith.constant 0 : index
    %32 = vector.load %arg9[%31, %c0_27, %c0_28] : memref<2x8x1024xf32, #tpu.memory_space<vmem>>, vector<1x8x512xf32>
    %33 = vector.shape_cast %32 : vector<1x8x512xf32> to vector<8x512xf32>
    %34 = vector.extract_strided_slice %30 {offsets = [0, 0], sizes = [8, 512], strides = [1, 1]} : vector<8x1024xf32> to vector<8x512xf32>
    %35 = arith.addf %33, %34 : vector<8x512xf32>
    %36 = arith.index_cast %27 : i32 to index
    %c0_29 = arith.constant 0 : index
    %c512 = arith.constant 512 : index
    %37 = vector.load %arg9[%36, %c0_29, %c512] : memref<2x8x1024xf32, #tpu.memory_space<vmem>>, vector<1x8x512xf32>
    %38 = vector.shape_cast %37 : vector<1x8x512xf32> to vector<8x512xf32>
    %39 = vector.extract_strided_slice %30 {offsets = [0, 512], sizes = [8, 512], strides = [1, 1]} : vector<8x1024xf32> to vector<8x512xf32>
    %40 = arith.addf %38, %39 : vector<8x512xf32>
    %c0_30 = arith.constant 0 : index
    %c0_31 = arith.constant 0 : index
    %41 = vector.load %arg11[%c0_30, %c0_31] : memref<8x256xf32, #tpu.memory_space<vmem>>, vector<8x128xf32>
    %42 = vector.extract_strided_slice %35 {offsets = [0, 0], sizes = [8, 128], strides = [1, 1]} : vector<8x512xf32> to vector<8x128xf32>
    %43 = arith.negf %42 : vector<8x128xf32>
    %44 = math.exp %43 : vector<8x128xf32>
    %cst_32 = arith.constant 1.000000e+00 : f32
    %45 = vector.broadcast %cst_32 : f32 to vector<8x128xf32>
    %46 = arith.addf %45, %44 : vector<8x128xf32>
    %47 = arith.divf %45, %46 : vector<8x128xf32>
    %48 = vector.extract_strided_slice %35 {offsets = [0, 128], sizes = [8, 128], strides = [1, 1]} : vector<8x512xf32> to vector<8x128xf32>
    %49 = arith.negf %48 : vector<8x128xf32>
    %50 = math.exp %49 : vector<8x128xf32>
    %cst_33 = arith.constant 1.000000e+00 : f32
    %51 = vector.broadcast %cst_33 : f32 to vector<8x128xf32>
    %52 = arith.addf %51, %50 : vector<8x128xf32>
    %53 = arith.divf %51, %52 : vector<8x128xf32>
    %54 = vector.extract_strided_slice %35 {offsets = [0, 256], sizes = [8, 128], strides = [1, 1]} : vector<8x512xf32> to vector<8x128xf32>
    %55 = math.tanh %54 : vector<8x128xf32>
    %56 = vector.extract_strided_slice %35 {offsets = [0, 384], sizes = [8, 128], strides = [1, 1]} : vector<8x512xf32> to vector<8x128xf32>
    %57 = arith.negf %56 : vector<8x128xf32>
    %58 = math.exp %57 : vector<8x128xf32>
    %cst_34 = arith.constant 1.000000e+00 : f32
    %59 = vector.broadcast %cst_34 : f32 to vector<8x128xf32>
    %60 = arith.addf %59, %58 : vector<8x128xf32>
    %61 = arith.divf %59, %60 : vector<8x128xf32>
    %62 = arith.mulf %53, %41 : vector<8x128xf32>
    %63 = arith.mulf %47, %55 : vector<8x128xf32>
    %64 = arith.addf %62, %63 : vector<8x128xf32>
    %65 = math.tanh %64 : vector<8x128xf32>
    %66 = arith.mulf %61, %65 : vector<8x128xf32>
    %c0_35 = arith.constant 0 : index
    %c128 = arith.constant 128 : index
    %67 = vector.load %arg11[%c0_35, %c128] : memref<8x256xf32, #tpu.memory_space<vmem>>, vector<8x128xf32>
    %68 = vector.extract_strided_slice %40 {offsets = [0, 0], sizes = [8, 128], strides = [1, 1]} : vector<8x512xf32> to vector<8x128xf32>
    %69 = arith.negf %68 : vector<8x128xf32>
    %70 = math.exp %69 : vector<8x128xf32>
    %cst_36 = arith.constant 1.000000e+00 : f32
    %71 = vector.broadcast %cst_36 : f32 to vector<8x128xf32>
    %72 = arith.addf %71, %70 : vector<8x128xf32>
    %73 = arith.divf %71, %72 : vector<8x128xf32>
    %74 = vector.extract_strided_slice %40 {offsets = [0, 128], sizes = [8, 128], strides = [1, 1]} : vector<8x512xf32> to vector<8x128xf32>
    %75 = arith.negf %74 : vector<8x128xf32>
    %76 = math.exp %75 : vector<8x128xf32>
    %cst_37 = arith.constant 1.000000e+00 : f32
    %77 = vector.broadcast %cst_37 : f32 to vector<8x128xf32>
    %78 = arith.addf %77, %76 : vector<8x128xf32>
    %79 = arith.divf %77, %78 : vector<8x128xf32>
    %80 = vector.extract_strided_slice %40 {offsets = [0, 256], sizes = [8, 128], strides = [1, 1]} : vector<8x512xf32> to vector<8x128xf32>
    %81 = math.tanh %80 : vector<8x128xf32>
    %82 = vector.extract_strided_slice %40 {offsets = [0, 384], sizes = [8, 128], strides = [1, 1]} : vector<8x512xf32> to vector<8x128xf32>
    %83 = arith.negf %82 : vector<8x128xf32>
    %84 = math.exp %83 : vector<8x128xf32>
    %cst_38 = arith.constant 1.000000e+00 : f32
    %85 = vector.broadcast %cst_38 : f32 to vector<8x128xf32>
    %86 = arith.addf %85, %84 : vector<8x128xf32>
    %87 = arith.divf %85, %86 : vector<8x128xf32>
    %88 = arith.mulf %79, %67 : vector<8x128xf32>
    %89 = arith.mulf %73, %81 : vector<8x128xf32>
    %90 = arith.addf %88, %89 : vector<8x128xf32>
    %91 = math.tanh %90 : vector<8x128xf32>
    %92 = arith.mulf %87, %91 : vector<8x128xf32>
    %c0_39 = arith.constant 0 : index
    %c0_40 = arith.constant 0 : index
    %93 = vector.load %arg11[%c0_39, %c0_40] : memref<8x256xf32, #tpu.memory_space<vmem>>, vector<8x128xf32>
    tpu.vector_store %arg11[%c0_39, %c0_40], %64 {strides = array<i32>} : memref<8x256xf32, #tpu.memory_space<vmem>>, vector<8x128xf32>,
    %c0_41 = arith.constant 0 : index
    %c128_42 = arith.constant 128 : index
    %94 = vector.load %arg11[%c0_41, %c128_42] : memref<8x256xf32, #tpu.memory_space<vmem>>, vector<8x128xf32>
    tpu.vector_store %arg11[%c0_41, %c128_42], %90 {strides = array<i32>} : memref<8x256xf32, #tpu.memory_space<vmem>>, vector<8x128xf32>,
    %c0_43 = arith.constant 0 : index
    %c0_44 = arith.constant 0 : index
    %95 = vector.load %arg10[%c0_43, %c0_44] : memref<8x256xf32, #tpu.memory_space<vmem>>, vector<8x128xf32>
    tpu.vector_store %arg10[%c0_43, %c0_44], %66 {strides = array<i32>} : memref<8x256xf32, #tpu.memory_space<vmem>>, vector<8x128xf32>,
    %c0_45 = arith.constant 0 : index
    %c128_46 = arith.constant 128 : index
    %96 = vector.load %arg10[%c0_45, %c128_46] : memref<8x256xf32, #tpu.memory_space<vmem>>, vector<8x128xf32>
    tpu.vector_store %arg10[%c0_45, %c128_46], %92 {strides = array<i32>} : memref<8x256xf32, #tpu.memory_space<vmem>>, vector<8x128xf32>,
    %97 = arith.index_cast %c0_i32_20 : i32 to index
    %c0_47 = arith.constant 0 : index
    %c0_48 = arith.constant 0 : index
    %98 = vector.load %arg8[%97, %c0_47, %c0_48] : memref<2x8x256xf32, #tpu.memory_space<vmem>>, vector<1x8x128xf32>
    %99 = vector.shape_cast %98 : vector<1x8x128xf32> to vector<8x128xf32>
    %100 = vector.shape_cast %66 : vector<8x128xf32> to vector<1x8x128xf32>
    tpu.vector_store %arg8[%97, %c0_47, %c0_48], %100 {strides = array<i32>} : memref<2x8x256xf32, #tpu.memory_space<vmem>>, vector<1x8x128xf32>,
    %101 = arith.index_cast %27 : i32 to index
    %c0_49 = arith.constant 0 : index
    %c128_50 = arith.constant 128 : index
    %102 = vector.load %arg8[%101, %c0_49, %c128_50] : memref<2x8x256xf32, #tpu.memory_space<vmem>>, vector<1x8x128xf32>
    %103 = vector.shape_cast %102 : vector<1x8x128xf32> to vector<8x128xf32>
    %104 = vector.shape_cast %92 : vector<8x128xf32> to vector<1x8x128xf32>
    tpu.vector_store %arg8[%101, %c0_49, %c128_50], %104 {strides = array<i32>} : memref<2x8x256xf32, #tpu.memory_space<vmem>>, vector<1x8x128xf32>,
    %c1_i32_51 = arith.constant 1 : i32
    %c1_i32_52 = arith.constant 1 : i32
    %105 = arith.subi %c1_i32_52, %c1_i32_51 : i32
    %c0_53 = arith.constant 0 : index
    %c0_54 = arith.constant 0 : index
    %106 = vector.load %arg10[%c0_53, %c0_54] : memref<8x256xf32, #tpu.memory_space<vmem>>, vector<8x256xf32>
    %c0_55 = arith.constant 0 : index
    %c0_56 = arith.constant 0 : index
    %107 = vector.load %arg3[%c0_55, %c0_56] : memref<256x1024xf32, #tpu.memory_space<vmem>>, vector<256x1024xf32>
    %cst_57 = arith.constant dense<0.000000e+00> : vector<8x1024xf32>
    %108 = tpu.matmul %106, %107, %cst_57 {dimension_numbers = #tpu.dot_dimension_numbers<[1], [0], [0], [1], [0, 0, 1, 1], [], []>} : vector<8x256xf32>, vector<256x1024xf32>, vector<8x1024xf32> -> vector<8x1024xf32>
    %109 = arith.index_cast %c1_i32_51 : i32 to index
    %c0_58 = arith.constant 0 : index
    %c0_59 = arith.constant 0 : index
    %110 = vector.load %arg9[%109, %c0_58, %c0_59] : memref<2x8x1024xf32, #tpu.memory_space<vmem>>, vector<1x8x512xf32>
    %111 = vector.shape_cast %110 : vector<1x8x512xf32> to vector<8x512xf32>
    %112 = vector.extract_strided_slice %108 {offsets = [0, 0], sizes = [8, 512], strides = [1, 1]} : vector<8x1024xf32> to vector<8x512xf32>
    %113 = arith.addf %111, %112 : vector<8x512xf32>
    %114 = arith.index_cast %105 : i32 to index
    %c0_60 = arith.constant 0 : index
    %c512_61 = arith.constant 512 : index
    %115 = vector.load %arg9[%114, %c0_60, %c512_61] : memref<2x8x1024xf32, #tpu.memory_space<vmem>>, vector<1x8x512xf32>
    %116 = vector.shape_cast %115 : vector<1x8x512xf32> to vector<8x512xf32>
    %117 = vector.extract_strided_slice %108 {offsets = [0, 512], sizes = [8, 512], strides = [1, 1]} : vector<8x1024xf32> to vector<8x512xf32>
    %118 = arith.addf %116, %117 : vector<8x512xf32>
    %c0_62 = arith.constant 0 : index
    %c0_63 = arith.constant 0 : index
    %119 = vector.load %arg11[%c0_62, %c0_63] : memref<8x256xf32, #tpu.memory_space<vmem>>, vector<8x128xf32>
    %120 = vector.extract_strided_slice %113 {offsets = [0, 0], sizes = [8, 128], strides = [1, 1]} : vector<8x512xf32> to vector<8x128xf32>
    %121 = arith.negf %120 : vector<8x128xf32>
    %122 = math.exp %121 : vector<8x128xf32>
    %cst_64 = arith.constant 1.000000e+00 : f32
    %123 = vector.broadcast %cst_64 : f32 to vector<8x128xf32>
    %124 = arith.addf %123, %122 : vector<8x128xf32>
    %125 = arith.divf %123, %124 : vector<8x128xf32>
    %126 = vector.extract_strided_slice %113 {offsets = [0, 128], sizes = [8, 128], strides = [1, 1]} : vector<8x512xf32> to vector<8x128xf32>
    %127 = arith.negf %126 : vector<8x128xf32>
    %128 = math.exp %127 : vector<8x128xf32>
    %cst_65 = arith.constant 1.000000e+00 : f32
    %129 = vector.broadcast %cst_65 : f32 to vector<8x128xf32>
    %130 = arith.addf %129, %128 : vector<8x128xf32>
    %131 = arith.divf %129, %130 : vector<8x128xf32>
    %132 = vector.extract_strided_slice %113 {offsets = [0, 256], sizes = [8, 128], strides = [1, 1]} : vector<8x512xf32> to vector<8x128xf32>
    %133 = math.tanh %132 : vector<8x128xf32>
    %134 = vector.extract_strided_slice %113 {offsets = [0, 384], sizes = [8, 128], strides = [1, 1]} : vector<8x512xf32> to vector<8x128xf32>
    %135 = arith.negf %134 : vector<8x128xf32>
    %136 = math.exp %135 : vector<8x128xf32>
    %cst_66 = arith.constant 1.000000e+00 : f32
    %137 = vector.broadcast %cst_66 : f32 to vector<8x128xf32>
    %138 = arith.addf %137, %136 : vector<8x128xf32>
    %139 = arith.divf %137, %138 : vector<8x128xf32>
    %140 = arith.mulf %131, %119 : vector<8x128xf32>
    %141 = arith.mulf %125, %133 : vector<8x128xf32>
    %142 = arith.addf %140, %141 : vector<8x128xf32>
    %143 = math.tanh %142 : vector<8x128xf32>
    %144 = arith.mulf %139, %143 : vector<8x128xf32>
    %c0_67 = arith.constant 0 : index
    %c128_68 = arith.constant 128 : index
    %145 = vector.load %arg11[%c0_67, %c128_68] : memref<8x256xf32, #tpu.memory_space<vmem>>, vector<8x128xf32>
    %146 = vector.extract_strided_slice %118 {offsets = [0, 0], sizes = [8, 128], strides = [1, 1]} : vector<8x512xf32> to vector<8x128xf32>
    %147 = arith.negf %146 : vector<8x128xf32>
    %148 = math.exp %147 : vector<8x128xf32>
    %cst_69 = arith.constant 1.000000e+00 : f32
    %149 = vector.broadcast %cst_69 : f32 to vector<8x128xf32>
    %150 = arith.addf %149, %148 : vector<8x128xf32>
    %151 = arith.divf %149, %150 : vector<8x128xf32>
    %152 = vector.extract_strided_slice %118 {offsets = [0, 128], sizes = [8, 128], strides = [1, 1]} : vector<8x512xf32> to vector<8x128xf32>
    %153 = arith.negf %152 : vector<8x128xf32>
    %154 = math.exp %153 : vector<8x128xf32>
    %cst_70 = arith.constant 1.000000e+00 : f32
    %155 = vector.broadcast %cst_70 : f32 to vector<8x128xf32>
    %156 = arith.addf %155, %154 : vector<8x128xf32>
    %157 = arith.divf %155, %156 : vector<8x128xf32>
    %158 = vector.extract_strided_slice %118 {offsets = [0, 256], sizes = [8, 128], strides = [1, 1]} : vector<8x512xf32> to vector<8x128xf32>
    %159 = math.tanh %158 : vector<8x128xf32>
    %160 = vector.extract_strided_slice %118 {offsets = [0, 384], sizes = [8, 128], strides = [1, 1]} : vector<8x512xf32> to vector<8x128xf32>
    %161 = arith.negf %160 : vector<8x128xf32>
    %162 = math.exp %161 : vector<8x128xf32>
    %cst_71 = arith.constant 1.000000e+00 : f32
    %163 = vector.broadcast %cst_71 : f32 to vector<8x128xf32>
    %164 = arith.addf %163, %162 : vector<8x128xf32>
    %165 = arith.divf %163, %164 : vector<8x128xf32>
    %166 = arith.mulf %157, %145 : vector<8x128xf32>
    %167 = arith.mulf %151, %159 : vector<8x128xf32>
    %168 = arith.addf %166, %167 : vector<8x128xf32>
    %169 = math.tanh %168 : vector<8x128xf32>
    %170 = arith.mulf %165, %169 : vector<8x128xf32>
    %c0_72 = arith.constant 0 : index
    %c0_73 = arith.constant 0 : index
    %171 = vector.load %arg11[%c0_72, %c0_73] : memref<8x256xf32, #tpu.memory_space<vmem>>, vector<8x128xf32>
    tpu.vector_store %arg11[%c0_72, %c0_73], %142 {strides = array<i32>} : memref<8x256xf32, #tpu.memory_space<vmem>>, vector<8x128xf32>,
    %c0_74 = arith.constant 0 : index
    %c128_75 = arith.constant 128 : index
    %172 = vector.load %arg11[%c0_74, %c128_75] : memref<8x256xf32, #tpu.memory_space<vmem>>, vector<8x128xf32>
    tpu.vector_store %arg11[%c0_74, %c128_75], %168 {strides = array<i32>} : memref<8x256xf32, #tpu.memory_space<vmem>>, vector<8x128xf32>,
    %c0_76 = arith.constant 0 : index
    %c0_77 = arith.constant 0 : index
    %173 = vector.load %arg10[%c0_76, %c0_77] : memref<8x256xf32, #tpu.memory_space<vmem>>, vector<8x128xf32>
    tpu.vector_store %arg10[%c0_76, %c0_77], %144 {strides = array<i32>} : memref<8x256xf32, #tpu.memory_space<vmem>>, vector<8x128xf32>,
    %c0_78 = arith.constant 0 : index
    %c128_79 = arith.constant 128 : index
    %174 = vector.load %arg10[%c0_78, %c128_79] : memref<8x256xf32, #tpu.memory_space<vmem>>, vector<8x128xf32>
    tpu.vector_store %arg10[%c0_78, %c128_79], %170 {strides = array<i32>} : memref<8x256xf32, #tpu.memory_space<vmem>>, vector<8x128xf32>,
    %175 = arith.index_cast %c1_i32_51 : i32 to index
    %c0_80 = arith.constant 0 : index
    %c0_81 = arith.constant 0 : index
    %176 = vector.load %arg8[%175, %c0_80, %c0_81] : memref<2x8x256xf32, #tpu.memory_space<vmem>>, vector<1x8x128xf32>
    %177 = vector.shape_cast %176 : vector<1x8x128xf32> to vector<8x128xf32>
    %178 = vector.shape_cast %144 : vector<8x128xf32> to vector<1x8x128xf32>
    tpu.vector_store %arg8[%175, %c0_80, %c0_81], %178 {strides = array<i32>} : memref<2x8x256xf32, #tpu.memory_space<vmem>>, vector<1x8x128xf32>,
    %179 = arith.index_cast %105 : i32 to index
    %c0_82 = arith.constant 0 : index
    %c128_83 = arith.constant 128 : index
    %180 = vector.load %arg8[%179, %c0_82, %c128_83] : memref<2x8x256xf32, #tpu.memory_space<vmem>>, vector<1x8x128xf32>
    %181 = vector.shape_cast %180 : vector<1x8x128xf32> to vector<8x128xf32>
    %182 = vector.shape_cast %170 : vector<8x128xf32> to vector<1x8x128xf32>
    tpu.vector_store %arg8[%179, %c0_82, %c128_83], %182 {strides = array<i32>} : memref<2x8x256xf32, #tpu.memory_space<vmem>>, vector<1x8x128xf32>,
    %c2_i32_84 = arith.constant 2 : i32
    %c0_85 = arith.constant 0 : index
    %c0_86 = arith.constant 0 : index
    %183 = vector.load %arg7[%c0_85, %c0_86] : memref<1x1024xf32, #tpu.memory_space<vmem>>, vector<1x1024xf32>
    %184 = vector.shape_cast %183 : vector<1x1024xf32> to vector<1x1024xf32>
    %185 = vector.broadcast %184 : vector<1x1024xf32> to vector<8x1024xf32>
    %c0_i32_87 = arith.constant 0 : i32
    %186 = arith.index_cast %c0_i32_87 : i32 to index
    %c0_88 = arith.constant 0 : index
    %c0_89 = arith.constant 0 : index
    %187 = vector.load %arg8[%186, %c0_88, %c0_89] : memref<2x8x256xf32, #tpu.memory_space<vmem>>, vector<1x8x256xf32>
    %188 = vector.shape_cast %187 : vector<1x8x256xf32> to vector<8x256xf32>
    %c0_90 = arith.constant 0 : index
    %c0_91 = arith.constant 0 : index
    %189 = vector.load %arg5[%c0_90, %c0_91] : memref<256x1024xf32, #tpu.memory_space<vmem>>, vector<256x1024xf32>
    %cst_92 = arith.constant dense<0.000000e+00> : vector<8x1024xf32>
    %190 = tpu.matmul %188, %189, %cst_92 {dimension_numbers = #tpu.dot_dimension_numbers<[1], [0], [0], [1], [0, 0, 1, 1], [], []>} : vector<8x256xf32>, vector<256x1024xf32>, vector<8x1024xf32> -> vector<8x1024xf32>
    %191 = arith.addf %190, %185 : vector<8x1024xf32>
    %192 = arith.index_cast %c0_i32_87 : i32 to index
    %c0_93 = arith.constant 0 : index
    %c0_94 = arith.constant 0 : index
    %193 = vector.load %arg9[%192, %c0_93, %c0_94] : memref<2x8x1024xf32, #tpu.memory_space<vmem>>, vector<1x8x1024xf32>
    %194 = vector.shape_cast %193 : vector<1x8x1024xf32> to vector<8x1024xf32>
    %195 = vector.shape_cast %191 : vector<8x1024xf32> to vector<1x8x1024xf32>
    tpu.vector_store %arg9[%192, %c0_93, %c0_94], %195 {strides = array<i32>} : memref<2x8x1024xf32, #tpu.memory_space<vmem>>, vector<1x8x1024xf32>,
    %c1_i32_95 = arith.constant 1 : i32
    %196 = arith.index_cast %c1_i32_95 : i32 to index
    %c0_96 = arith.constant 0 : index
    %c0_97 = arith.constant 0 : index
    %197 = vector.load %arg8[%196, %c0_96, %c0_97] : memref<2x8x256xf32, #tpu.memory_space<vmem>>, vector<1x8x256xf32>
    %198 = vector.shape_cast %197 : vector<1x8x256xf32> to vector<8x256xf32>
    %c0_98 = arith.constant 0 : index
    %c0_99 = arith.constant 0 : index
    %199 = vector.load %arg5[%c0_98, %c0_99] : memref<256x1024xf32, #tpu.memory_space<vmem>>, vector<256x1024xf32>
    %cst_100 = arith.constant dense<0.000000e+00> : vector<8x1024xf32>
    %200 = tpu.matmul %198, %199, %cst_100 {dimension_numbers = #tpu.dot_dimension_numbers<[1], [0], [0], [1], [0, 0, 1, 1], [], []>} : vector<8x256xf32>, vector<256x1024xf32>, vector<8x1024xf32> -> vector<8x1024xf32>
    %201 = arith.addf %200, %185 : vector<8x1024xf32>
    %202 = arith.index_cast %c1_i32_95 : i32 to index
    %c0_101 = arith.constant 0 : index
    %c0_102 = arith.constant 0 : index
    %203 = vector.load %arg9[%202, %c0_101, %c0_102] : memref<2x8x1024xf32, #tpu.memory_space<vmem>>, vector<1x8x1024xf32>
    %204 = vector.shape_cast %203 : vector<1x8x1024xf32> to vector<8x1024xf32>
    %205 = vector.shape_cast %201 : vector<8x1024xf32> to vector<1x8x1024xf32>
    tpu.vector_store %arg9[%202, %c0_101, %c0_102], %205 {strides = array<i32>} : memref<2x8x1024xf32, #tpu.memory_space<vmem>>, vector<1x8x1024xf32>,
    %c2_i32_103 = arith.constant 2 : i32
    %cst_104 = arith.constant 0.000000e+00 : f32
    %206 = vector.broadcast %cst_104 : f32 to vector<8x256xf32>
    %c0_105 = arith.constant 0 : index
    %c0_106 = arith.constant 0 : index
    %207 = vector.load %arg10[%c0_105, %c0_106] : memref<8x256xf32, #tpu.memory_space<vmem>>, vector<8x256xf32>
    tpu.vector_store %arg10[%c0_105, %c0_106], %206 {strides = array<i32>} : memref<8x256xf32, #tpu.memory_space<vmem>>, vector<8x256xf32>,
    %cst_107 = arith.constant 0.000000e+00 : f32
    %208 = vector.broadcast %cst_107 : f32 to vector<8x256xf32>
    %c0_108 = arith.constant 0 : index
    %c0_109 = arith.constant 0 : index
    %209 = vector.load %arg11[%c0_108, %c0_109] : memref<8x256xf32, #tpu.memory_space<vmem>>, vector<8x256xf32>
    tpu.vector_store %arg11[%c0_108, %c0_109], %208 {strides = array<i32>} : memref<8x256xf32, #tpu.memory_space<vmem>>, vector<8x256xf32>,
    %c0_i32_110 = arith.constant 0 : i32
    %c1_i32_111 = arith.constant 1 : i32
    %210 = arith.subi %c1_i32_111, %c0_i32_110 : i32
    %c0_112 = arith.constant 0 : index
    %c0_113 = arith.constant 0 : index
    %211 = vector.load %arg10[%c0_112, %c0_113] : memref<8x256xf32, #tpu.memory_space<vmem>>, vector<8x256xf32>
    %c0_114 = arith.constant 0 : index
    %c0_115 = arith.constant 0 : index
    %212 = vector.load %arg6[%c0_114, %c0_115] : memref<256x1024xf32, #tpu.memory_space<vmem>>, vector<256x1024xf32>
    %cst_116 = arith.constant dense<0.000000e+00> : vector<8x1024xf32>
    %213 = tpu.matmul %211, %212, %cst_116 {dimension_numbers = #tpu.dot_dimension_numbers<[1], [0], [0], [1], [0, 0, 1, 1], [], []>} : vector<8x256xf32>, vector<256x1024xf32>, vector<8x1024xf32> -> vector<8x1024xf32>
    %214 = arith.index_cast %c0_i32_110 : i32 to index
    %c0_117 = arith.constant 0 : index
    %c0_118 = arith.constant 0 : index
    %215 = vector.load %arg9[%214, %c0_117, %c0_118] : memref<2x8x1024xf32, #tpu.memory_space<vmem>>, vector<1x8x512xf32>
    %216 = vector.shape_cast %215 : vector<1x8x512xf32> to vector<8x512xf32>
    %217 = vector.extract_strided_slice %213 {offsets = [0, 0], sizes = [8, 512], strides = [1, 1]} : vector<8x1024xf32> to vector<8x512xf32>
    %218 = arith.addf %216, %217 : vector<8x512xf32>
    %219 = arith.index_cast %210 : i32 to index
    %c0_119 = arith.constant 0 : index
    %c512_120 = arith.constant 512 : index
    %220 = vector.load %arg9[%219, %c0_119, %c512_120] : memref<2x8x1024xf32, #tpu.memory_space<vmem>>, vector<1x8x512xf32>
    %221 = vector.shape_cast %220 : vector<1x8x512xf32> to vector<8x512xf32>
    %222 = vector.extract_strided_slice %213 {offsets = [0, 512], sizes = [8, 512], strides = [1, 1]} : vector<8x1024xf32> to vector<8x512xf32>
    %223 = arith.addf %221, %222 : vector<8x512xf32>
    %c0_121 = arith.constant 0 : index
    %c0_122 = arith.constant 0 : index
    %224 = vector.load %arg11[%c0_121, %c0_122] : memref<8x256xf32, #tpu.memory_space<vmem>>, vector<8x128xf32>
    %225 = vector.extract_strided_slice %218 {offsets = [0, 0], sizes = [8, 128], strides = [1, 1]} : vector<8x512xf32> to vector<8x128xf32>
    %226 = arith.negf %225 : vector<8x128xf32>
    %227 = math.exp %226 : vector<8x128xf32>
    %cst_123 = arith.constant 1.000000e+00 : f32
    %228 = vector.broadcast %cst_123 : f32 to vector<8x128xf32>
    %229 = arith.addf %228, %227 : vector<8x128xf32>
    %230 = arith.divf %228, %229 : vector<8x128xf32>
    %231 = vector.extract_strided_slice %218 {offsets = [0, 128], sizes = [8, 128], strides = [1, 1]} : vector<8x512xf32> to vector<8x128xf32>
    %232 = arith.negf %231 : vector<8x128xf32>
    %233 = math.exp %232 : vector<8x128xf32>
    %cst_124 = arith.constant 1.000000e+00 : f32
    %234 = vector.broadcast %cst_124 : f32 to vector<8x128xf32>
    %235 = arith.addf %234, %233 : vector<8x128xf32>
    %236 = arith.divf %234, %235 : vector<8x128xf32>
    %237 = vector.extract_strided_slice %218 {offsets = [0, 256], sizes = [8, 128], strides = [1, 1]} : vector<8x512xf32> to vector<8x128xf32>
    %238 = math.tanh %237 : vector<8x128xf32>
    %239 = vector.extract_strided_slice %218 {offsets = [0, 384], sizes = [8, 128], strides = [1, 1]} : vector<8x512xf32> to vector<8x128xf32>
    %240 = arith.negf %239 : vector<8x128xf32>
    %241 = math.exp %240 : vector<8x128xf32>
    %cst_125 = arith.constant 1.000000e+00 : f32
    %242 = vector.broadcast %cst_125 : f32 to vector<8x128xf32>
    %243 = arith.addf %242, %241 : vector<8x128xf32>
    %244 = arith.divf %242, %243 : vector<8x128xf32>
    %245 = arith.mulf %236, %224 : vector<8x128xf32>
    %246 = arith.mulf %230, %238 : vector<8x128xf32>
    %247 = arith.addf %245, %246 : vector<8x128xf32>
    %248 = math.tanh %247 : vector<8x128xf32>
    %249 = arith.mulf %244, %248 : vector<8x128xf32>
    %c0_126 = arith.constant 0 : index
    %c128_127 = arith.constant 128 : index
    %250 = vector.load %arg11[%c0_126, %c128_127] : memref<8x256xf32, #tpu.memory_space<vmem>>, vector<8x128xf32>
    %251 = vector.extract_strided_slice %223 {offsets = [0, 0], sizes = [8, 128], strides = [1, 1]} : vector<8x512xf32> to vector<8x128xf32>
    %252 = arith.negf %251 : vector<8x128xf32>
    %253 = math.exp %252 : vector<8x128xf32>
    %cst_128 = arith.constant 1.000000e+00 : f32
    %254 = vector.broadcast %cst_128 : f32 to vector<8x128xf32>
    %255 = arith.addf %254, %253 : vector<8x128xf32>
    %256 = arith.divf %254, %255 : vector<8x128xf32>
    %257 = vector.extract_strided_slice %223 {offsets = [0, 128], sizes = [8, 128], strides = [1, 1]} : vector<8x512xf32> to vector<8x128xf32>
    %258 = arith.negf %257 : vector<8x128xf32>
    %259 = math.exp %258 : vector<8x128xf32>
    %cst_129 = arith.constant 1.000000e+00 : f32
    %260 = vector.broadcast %cst_129 : f32 to vector<8x128xf32>
    %261 = arith.addf %260, %259 : vector<8x128xf32>
    %262 = arith.divf %260, %261 : vector<8x128xf32>
    %263 = vector.extract_strided_slice %223 {offsets = [0, 256], sizes = [8, 128], strides = [1, 1]} : vector<8x512xf32> to vector<8x128xf32>
    %264 = math.tanh %263 : vector<8x128xf32>
    %265 = vector.extract_strided_slice %223 {offsets = [0, 384], sizes = [8, 128], strides = [1, 1]} : vector<8x512xf32> to vector<8x128xf32>
    %266 = arith.negf %265 : vector<8x128xf32>
    %267 = math.exp %266 : vector<8x128xf32>
    %cst_130 = arith.constant 1.000000e+00 : f32
    %268 = vector.broadcast %cst_130 : f32 to vector<8x128xf32>
    %269 = arith.addf %268, %267 : vector<8x128xf32>
    %270 = arith.divf %268, %269 : vector<8x128xf32>
    %271 = arith.mulf %262, %250 : vector<8x128xf32>
    %272 = arith.mulf %256, %264 : vector<8x128xf32>
    %273 = arith.addf %271, %272 : vector<8x128xf32>
    %274 = math.tanh %273 : vector<8x128xf32>
    %275 = arith.mulf %270, %274 : vector<8x128xf32>
    %c0_131 = arith.constant 0 : index
    %c0_132 = arith.constant 0 : index
    %276 = vector.load %arg11[%c0_131, %c0_132] : memref<8x256xf32, #tpu.memory_space<vmem>>, vector<8x128xf32>
    tpu.vector_store %arg11[%c0_131, %c0_132], %247 {strides = array<i32>} : memref<8x256xf32, #tpu.memory_space<vmem>>, vector<8x128xf32>,
    %c0_133 = arith.constant 0 : index
    %c128_134 = arith.constant 128 : index
    %277 = vector.load %arg11[%c0_133, %c128_134] : memref<8x256xf32, #tpu.memory_space<vmem>>, vector<8x128xf32>
    tpu.vector_store %arg11[%c0_133, %c128_134], %273 {strides = array<i32>} : memref<8x256xf32, #tpu.memory_space<vmem>>, vector<8x128xf32>,
    %c0_135 = arith.constant 0 : index
    %c0_136 = arith.constant 0 : index
    %278 = vector.load %arg10[%c0_135, %c0_136] : memref<8x256xf32, #tpu.memory_space<vmem>>, vector<8x128xf32>
    tpu.vector_store %arg10[%c0_135, %c0_136], %249 {strides = array<i32>} : memref<8x256xf32, #tpu.memory_space<vmem>>, vector<8x128xf32>,
    %c0_137 = arith.constant 0 : index
    %c128_138 = arith.constant 128 : index
    %279 = vector.load %arg10[%c0_137, %c128_138] : memref<8x256xf32, #tpu.memory_space<vmem>>, vector<8x128xf32>
    tpu.vector_store %arg10[%c0_137, %c128_138], %275 {strides = array<i32>} : memref<8x256xf32, #tpu.memory_space<vmem>>, vector<8x128xf32>,
    %280 = arith.index_cast %c0_i32_110 : i32 to index
    %c0_139 = arith.constant 0 : index
    %c0_140 = arith.constant 0 : index
    %281 = vector.load %arg8[%280, %c0_139, %c0_140] : memref<2x8x256xf32, #tpu.memory_space<vmem>>, vector<1x8x128xf32>
    %282 = vector.shape_cast %281 : vector<1x8x128xf32> to vector<8x128xf32>
    %283 = vector.shape_cast %249 : vector<8x128xf32> to vector<1x8x128xf32>
    tpu.vector_store %arg8[%280, %c0_139, %c0_140], %283 {strides = array<i32>} : memref<2x8x256xf32, #tpu.memory_space<vmem>>, vector<1x8x128xf32>,
    %284 = arith.index_cast %210 : i32 to index
    %c0_141 = arith.constant 0 : index
    %c128_142 = arith.constant 128 : index
    %285 = vector.load %arg8[%284, %c0_141, %c128_142] : memref<2x8x256xf32, #tpu.memory_space<vmem>>, vector<1x8x128xf32>
    %286 = vector.shape_cast %285 : vector<1x8x128xf32> to vector<8x128xf32>
    %287 = vector.shape_cast %275 : vector<8x128xf32> to vector<1x8x128xf32>
    tpu.vector_store %arg8[%284, %c0_141, %c128_142], %287 {strides = array<i32>} : memref<2x8x256xf32, #tpu.memory_space<vmem>>, vector<1x8x128xf32>,
    %c1_i32_143 = arith.constant 1 : i32
    %c1_i32_144 = arith.constant 1 : i32
    %288 = arith.subi %c1_i32_144, %c1_i32_143 : i32
    %c0_145 = arith.constant 0 : index
    %c0_146 = arith.constant 0 : index
    %289 = vector.load %arg10[%c0_145, %c0_146] : memref<8x256xf32, #tpu.memory_space<vmem>>, vector<8x256xf32>
    %c0_147 = arith.constant 0 : index
    %c0_148 = arith.constant 0 : index
    %290 = vector.load %arg6[%c0_147, %c0_148] : memref<256x1024xf32, #tpu.memory_space<vmem>>, vector<256x1024xf32>
    %cst_149 = arith.constant dense<0.000000e+00> : vector<8x1024xf32>
    %291 = tpu.matmul %289, %290, %cst_149 {dimension_numbers = #tpu.dot_dimension_numbers<[1], [0], [0], [1], [0, 0, 1, 1], [], []>} : vector<8x256xf32>, vector<256x1024xf32>, vector<8x1024xf32> -> vector<8x1024xf32>
    %292 = arith.index_cast %c1_i32_143 : i32 to index
    %c0_150 = arith.constant 0 : index
    %c0_151 = arith.constant 0 : index
    %293 = vector.load %arg9[%292, %c0_150, %c0_151] : memref<2x8x1024xf32, #tpu.memory_space<vmem>>, vector<1x8x512xf32>
    %294 = vector.shape_cast %293 : vector<1x8x512xf32> to vector<8x512xf32>
    %295 = vector.extract_strided_slice %291 {offsets = [0, 0], sizes = [8, 512], strides = [1, 1]} : vector<8x1024xf32> to vector<8x512xf32>
    %296 = arith.addf %294, %295 : vector<8x512xf32>
    %297 = arith.index_cast %288 : i32 to index
    %c0_152 = arith.constant 0 : index
    %c512_153 = arith.constant 512 : index
    %298 = vector.load %arg9[%297, %c0_152, %c512_153] : memref<2x8x1024xf32, #tpu.memory_space<vmem>>, vector<1x8x512xf32>
    %299 = vector.shape_cast %298 : vector<1x8x512xf32> to vector<8x512xf32>
    %300 = vector.extract_strided_slice %291 {offsets = [0, 512], sizes = [8, 512], strides = [1, 1]} : vector<8x1024xf32> to vector<8x512xf32>
    %301 = arith.addf %299, %300 : vector<8x512xf32>
    %c0_154 = arith.constant 0 : index
    %c0_155 = arith.constant 0 : index
    %302 = vector.load %arg11[%c0_154, %c0_155] : memref<8x256xf32, #tpu.memory_space<vmem>>, vector<8x128xf32>
    %303 = vector.extract_strided_slice %296 {offsets = [0, 0], sizes = [8, 128], strides = [1, 1]} : vector<8x512xf32> to vector<8x128xf32>
    %304 = arith.negf %303 : vector<8x128xf32>
    %305 = math.exp %304 : vector<8x128xf32>
    %cst_156 = arith.constant 1.000000e+00 : f32
    %306 = vector.broadcast %cst_156 : f32 to vector<8x128xf32>
    %307 = arith.addf %306, %305 : vector<8x128xf32>
    %308 = arith.divf %306, %307 : vector<8x128xf32>
    %309 = vector.extract_strided_slice %296 {offsets = [0, 128], sizes = [8, 128], strides = [1, 1]} : vector<8x512xf32> to vector<8x128xf32>
    %310 = arith.negf %309 : vector<8x128xf32>
    %311 = math.exp %310 : vector<8x128xf32>
    %cst_157 = arith.constant 1.000000e+00 : f32
    %312 = vector.broadcast %cst_157 : f32 to vector<8x128xf32>
    %313 = arith.addf %312, %311 : vector<8x128xf32>
    %314 = arith.divf %312, %313 : vector<8x128xf32>
    %315 = vector.extract_strided_slice %296 {offsets = [0, 256], sizes = [8, 128], strides = [1, 1]} : vector<8x512xf32> to vector<8x128xf32>
    %316 = math.tanh %315 : vector<8x128xf32>
    %317 = vector.extract_strided_slice %296 {offsets = [0, 384], sizes = [8, 128], strides = [1, 1]} : vector<8x512xf32> to vector<8x128xf32>
    %318 = arith.negf %317 : vector<8x128xf32>
    %319 = math.exp %318 : vector<8x128xf32>
    %cst_158 = arith.constant 1.000000e+00 : f32
    %320 = vector.broadcast %cst_158 : f32 to vector<8x128xf32>
    %321 = arith.addf %320, %319 : vector<8x128xf32>
    %322 = arith.divf %320, %321 : vector<8x128xf32>
    %323 = arith.mulf %314, %302 : vector<8x128xf32>
    %324 = arith.mulf %308, %316 : vector<8x128xf32>
    %325 = arith.addf %323, %324 : vector<8x128xf32>
    %326 = math.tanh %325 : vector<8x128xf32>
    %327 = arith.mulf %322, %326 : vector<8x128xf32>
    %c0_159 = arith.constant 0 : index
    %c128_160 = arith.constant 128 : index
    %328 = vector.load %arg11[%c0_159, %c128_160] : memref<8x256xf32, #tpu.memory_space<vmem>>, vector<8x128xf32>
    %329 = vector.extract_strided_slice %301 {offsets = [0, 0], sizes = [8, 128], strides = [1, 1]} : vector<8x512xf32> to vector<8x128xf32>
    %330 = arith.negf %329 : vector<8x128xf32>
    %331 = math.exp %330 : vector<8x128xf32>
    %cst_161 = arith.constant 1.000000e+00 : f32
    %332 = vector.broadcast %cst_161 : f32 to vector<8x128xf32>
    %333 = arith.addf %332, %331 : vector<8x128xf32>
    %334 = arith.divf %332, %333 : vector<8x128xf32>
    %335 = vector.extract_strided_slice %301 {offsets = [0, 128], sizes = [8, 128], strides = [1, 1]} : vector<8x512xf32> to vector<8x128xf32>
    %336 = arith.negf %335 : vector<8x128xf32>
    %337 = math.exp %336 : vector<8x128xf32>
    %cst_162 = arith.constant 1.000000e+00 : f32
    %338 = vector.broadcast %cst_162 : f32 to vector<8x128xf32>
    %339 = arith.addf %338, %337 : vector<8x128xf32>
    %340 = arith.divf %338, %339 : vector<8x128xf32>
    %341 = vector.extract_strided_slice %301 {offsets = [0, 256], sizes = [8, 128], strides = [1, 1]} : vector<8x512xf32> to vector<8x128xf32>
    %342 = math.tanh %341 : vector<8x128xf32>
    %343 = vector.extract_strided_slice %301 {offsets = [0, 384], sizes = [8, 128], strides = [1, 1]} : vector<8x512xf32> to vector<8x128xf32>
    %344 = arith.negf %343 : vector<8x128xf32>
    %345 = math.exp %344 : vector<8x128xf32>
    %cst_163 = arith.constant 1.000000e+00 : f32
    %346 = vector.broadcast %cst_163 : f32 to vector<8x128xf32>
    %347 = arith.addf %346, %345 : vector<8x128xf32>
    %348 = arith.divf %346, %347 : vector<8x128xf32>
    %349 = arith.mulf %340, %328 : vector<8x128xf32>
    %350 = arith.mulf %334, %342 : vector<8x128xf32>
    %351 = arith.addf %349, %350 : vector<8x128xf32>
    %352 = math.tanh %351 : vector<8x128xf32>
    %353 = arith.mulf %348, %352 : vector<8x128xf32>
    %c0_164 = arith.constant 0 : index
    %c0_165 = arith.constant 0 : index
    %354 = vector.load %arg11[%c0_164, %c0_165] : memref<8x256xf32, #tpu.memory_space<vmem>>, vector<8x128xf32>
    tpu.vector_store %arg11[%c0_164, %c0_165], %325 {strides = array<i32>} : memref<8x256xf32, #tpu.memory_space<vmem>>, vector<8x128xf32>,
    %c0_166 = arith.constant 0 : index
    %c128_167 = arith.constant 128 : index
    %355 = vector.load %arg11[%c0_166, %c128_167] : memref<8x256xf32, #tpu.memory_space<vmem>>, vector<8x128xf32>
    tpu.vector_store %arg11[%c0_166, %c128_167], %351 {strides = array<i32>} : memref<8x256xf32, #tpu.memory_space<vmem>>, vector<8x128xf32>,
    %c0_168 = arith.constant 0 : index
    %c0_169 = arith.constant 0 : index
    %356 = vector.load %arg10[%c0_168, %c0_169] : memref<8x256xf32, #tpu.memory_space<vmem>>, vector<8x128xf32>
    tpu.vector_store %arg10[%c0_168, %c0_169], %327 {strides = array<i32>} : memref<8x256xf32, #tpu.memory_space<vmem>>, vector<8x128xf32>,
    %c0_170 = arith.constant 0 : index
    %c128_171 = arith.constant 128 : index
    %357 = vector.load %arg10[%c0_170, %c128_171] : memref<8x256xf32, #tpu.memory_space<vmem>>, vector<8x128xf32>
    tpu.vector_store %arg10[%c0_170, %c128_171], %353 {strides = array<i32>} : memref<8x256xf32, #tpu.memory_space<vmem>>, vector<8x128xf32>,
    %358 = arith.index_cast %c1_i32_143 : i32 to index
    %c0_172 = arith.constant 0 : index
    %c0_173 = arith.constant 0 : index
    %359 = vector.load %arg8[%358, %c0_172, %c0_173] : memref<2x8x256xf32, #tpu.memory_space<vmem>>, vector<1x8x128xf32>
    %360 = vector.shape_cast %359 : vector<1x8x128xf32> to vector<8x128xf32>
    %361 = vector.shape_cast %327 : vector<8x128xf32> to vector<1x8x128xf32>
    tpu.vector_store %arg8[%358, %c0_172, %c0_173], %361 {strides = array<i32>} : memref<2x8x256xf32, #tpu.memory_space<vmem>>, vector<1x8x128xf32>,
    %362 = arith.index_cast %288 : i32 to index
    %c0_174 = arith.constant 0 : index
    %c128_175 = arith.constant 128 : index
    %363 = vector.load %arg8[%362, %c0_174, %c128_175] : memref<2x8x256xf32, #tpu.memory_space<vmem>>, vector<1x8x128xf32>
    %364 = vector.shape_cast %363 : vector<1x8x128xf32> to vector<8x128xf32>
    %365 = vector.shape_cast %353 : vector<8x128xf32> to vector<1x8x128xf32>
    tpu.vector_store %arg8[%362, %c0_174, %c128_175], %365 {strides = array<i32>} : memref<2x8x256xf32, #tpu.memory_space<vmem>>, vector<1x8x128xf32>,
    %c2_i32_176 = arith.constant 2 : i32
    return
  }
  func.func @transform_0(%arg0: i32) -> (i32, i32, i32) {
    %c0_i32 = arith.constant 0 : i32
    %c0_i32_0 = arith.constant 0 : i32
    %c0_i32_1 = arith.constant 0 : i32
    return %c0_i32, %arg0, %c0_i32_0 : i32, i32, i32
  }
  func.func @transform_1(%arg0: i32) -> (i32, i32) {
    %c0_i32 = arith.constant 0 : i32
    %c0_i32_0 = arith.constant 0 : i32
    %c0_i32_1 = arith.constant 0 : i32
    return %c0_i32, %c0_i32_0 : i32, i32
  }
  func.func @transform_2(%arg0: i32) -> (i32, i32) {
    %c0_i32 = arith.constant 0 : i32
    %c0_i32_0 = arith.constant 0 : i32
    %c0_i32_1 = arith.constant 0 : i32
    return %c0_i32, %c0_i32_0 : i32, i32
  }
  func.func @transform_3(%arg0: i32) -> (i32, i32) {
    %c0_i32 = arith.constant 0 : i32
    %c0_i32_0 = arith.constant 0 : i32
    %c0_i32_1 = arith.constant 0 : i32
    return %c0_i32, %c0_i32_0 : i32, i32
  }
  func.func @transform_4(%arg0: i32) -> (i32, i32) {
    %c0_i32 = arith.constant 0 : i32
    %c0_i32_0 = arith.constant 0 : i32
    %c0_i32_1 = arith.constant 0 : i32
    return %c0_i32, %c0_i32_0 : i32, i32
  }
  func.func @transform_5(%arg0: i32) -> (i32, i32) {
    %c0_i32 = arith.constant 0 : i32
    %c0_i32_0 = arith.constant 0 : i32
    %c0_i32_1 = arith.constant 0 : i32
    return %c0_i32, %c0_i32_0 : i32, i32
  }
  func.func @transform_6(%arg0: i32) -> (i32, i32) {
    %c0_i32 = arith.constant 0 : i32
    %c0_i32_0 = arith.constant 0 : i32
    %c0_i32_1 = arith.constant 0 : i32
    return %c0_i32, %c0_i32_0 : i32, i32
  }
  func.func @transform_7(%arg0: i32) -> (i32, i32, i32) {
    %c0_i32 = arith.constant 0 : i32
    %c0_i32_0 = arith.constant 0 : i32
    %c0_i32_1 = arith.constant 0 : i32
    return %c0_i32, %arg0, %c0_i32_0 : i32, i32, i32
  }
}

</mosaic_0001>

<llo_original>
// kernel: tpu_custom_call.1
$region0: #{tpu_custom_call.1}
  #allocation0 [shape = 'u32[]', space=smem, size = 0x4, offset = 0x4, fixed_abs, tag = 'smem constant byte address 0x4 - core index']
  #allocation1 [shape = 'u32[144,128]{1,0:T(1,128)}', space=vmem, size = 0x12000, scoped, tag = 'internal scratch']
  #allocation2 [shape = 'f32[2,8,1024]{2,1,0:T(8,128)}', space=vmem, size = 0x10000, scoped, tag = 'scratch operand']
  #allocation3 [shape = 'f32[8,256]{1,0:T(8,128)}', space=vmem, size = 0x2000, scoped, tag = 'scratch operand']
  #allocation4 [shape = 'f32[8,256]{1,0:T(8,128)}', space=vmem, size = 0x2000, scoped, tag = 'scratch operand']
  %s0 = inlined_call_operand.vmem [shape: f32[2,16,4], index: 0, kind: input, shape index: {}]
  %s1 = inlined_call_operand.vmem [shape: f32[4,1024], index: 1, kind: input, shape index: {}]
  %s2 = inlined_call_operand.hbm [shape: f32[256,1024], index: 2, kind: input, shape index: {}]
  %s3 = inlined_call_operand.vmem [shape: f32[1,1024], index: 3, kind: input, shape index: {}]
  %s4 = inlined_call_operand.hbm [shape: f32[256,1024], index: 4, kind: input, shape index: {}]
  %s5 = inlined_call_operand.hbm [shape: f32[256,1024], index: 5, kind: input, shape index: {}]
  %s6 = inlined_call_operand.vmem [shape: f32[1,1024], index: 6, kind: input, shape index: {}]
  %s7 = inlined_call_operand.hbm [shape: f32[2,16,256], index: 7, kind: output, shape index: {}]
  %s8 = sld [smem:[#allocation0]]
  $region111: #{tpu_custom_call.1} parent=0
    _
  %s10 = ssub.s32 1, %s8
  %s11 = scalar_select 0, %s10, %s8
  $region1: #{tpu_custom_call.1} parent=0
    #allocation5 [shape = 'u8[16384]{0}', space=vmem, size = 0x4000, scoped, tag = 'input window, operand 0']
    #allocation6 [shape = 'u8[1048576]{0}', space=vmem, size = 0x100000, scoped, tag = 'input window, operand 2, single buffered']
    #allocation7 [shape = 's32[2]{0}', space=sflag, size = 0x8, scoped, tag = 'scoped memory for tpu_custom_call.1']
    #allocation8 [shape = 's32[2]{0}', space=sflag, size = 0x8, scoped, tag = 'scoped memory for tpu_custom_call.1']
    #allocation9 [shape = 'u8[1048576]{0}', space=vmem, size = 0x100000, scoped, tag = 'input window, operand 4, single buffered']
    #allocation10 [shape = 's32[1]{0}', space=sflag, size = 0x4, scoped, tag = 'scoped memory for tpu_custom_call.1']
    #allocation11 [shape = 'u8[1048576]{0}', space=vmem, size = 0x100000, scoped, tag = 'input window, operand 5, single buffered']
    #allocation12 [shape = 'u8[32768]{0}', space=vmem, size = 0x8000, scoped, tag = 'output window, operand 0']
    %12 = vsyncpa [#allocation7], 0
    %13 = vsyncpa [#allocation10], 0
    %14 = vsyncpa [#allocation8], 0
    %s15 = scalar_lea.sflag [#allocation8], 1
    %16 = vsyncpa %s15, 0
    loop: start=0, step=1, limit=4
    $region2: #{tpu_custom_call.1} parent=1 // loop_pre_header
      _
    $region3: #{tpu_custom_call.1} parent=1 // loop_header
      %s18 = sphi 0, %s22
      %p19 = scmp.ge.s32.totalorder %s18, 4
      %s28 = sphi 0, %s30
      %s31 = sphi 0, %s28
      %s32 = sphi 0, %s31
      %s48 = sphi 0, %s32
      %s52 = sphi 0, %s52
      %s54 = sphi 0, %s52
      %s55 = sphi 0, %s54
      %s69 = sphi 0, %s55
      %s73 = sphi 0, %s73
      %s75 = sphi 0, %s73
      %s76 = sphi 0, %s75
      %s90 = sphi 0, %s76
      %s94 = sphi 0, %s94
      %s96 = sphi 0, %s94
      %s97 = sphi 0, %s96
      %s111 = sphi 0, %s97
      %s115 = sphi 0, %s115
      %s117 = sphi 0, %s115
      %s118 = sphi 0, %s117
      %s132 = sphi 0, %s118
      %s136 = sphi 0, %s136
      %s138 = sphi 0, %s136
      %s139 = sphi 0, %s138
      %s153 = sphi 0, %s139
      %s157 = sphi 0, %s157
      %s159 = sphi 0, %s157
      %s160 = sphi 0, %s159
      %s174 = sphi 0, %s160
      %s180 = sphi 0, %s182
      %s183 = sphi 0, %s180
      %s184 = sphi 0, %s183
      %s200 = sphi 0, %s184
    $region4: #{tpu_custom_call.1} parent=1 // loop_header_branch
      %21 = sbr.rel (%p19) target = $region8
    $region5: #{tpu_custom_call.1} parent=1 // loop_body
      %s23 = ssub.s32 %s18, 1
      %s24 = ssub.s32 %s18, 2
      %s25 = sadd.s32 %s18, 1
      %s26 = ssub.s32 %s18, %s25
      %p27 = scmp.eq.s32.totalorder %s26, 0
      %s29 = sadd.s32 %s28, 1
      %s30 = scalar_select %p27, %s28, %s29
      %p33 = pneg %p27
      %p34 = scmp.eq.s32.totalorder %s18, 1
      %p35 = por %p33, %p34
      %p36 = scmp.ne.s32.totalorder %s28, %s31
      %p37 = scmp.eq.s32.totalorder %s18, 0
      %p38 = por %p36, %p37
      %p39 = scmp.ne.s32.totalorder %s28, %s31
      %p40 = scmp.eq.s32.totalorder %s23, 1
      %p41 = por %p39, %p40
      %p42 = scmp.ne.s32.totalorder %s31, %s32
      %p43 = scmp.eq.s32.totalorder %s23, 0
      %p44 = por %p42, %p43
      %p45 = scmp.ne.s32.totalorder %s31, %s32
      %p46 = scmp.eq.s32.totalorder %s24, 1
      %p47 = por %p45, %p46
      %p49 = scmp.ne.s32.totalorder %s32, %s48
      %p50 = scmp.eq.s32.totalorder %s24, 0
      %p51 = por %p49, %p50
      %s53 = sadd.s32 %s52, 1
      %p56 = scmp.eq.s32.totalorder %s18, 1
      %p57 = scmp.ne.s32.totalorder %s52, %s54
      %p58 = scmp.eq.s32.totalorder %s18, 0
      %p59 = por %p57, %p58
      %p60 = scmp.ne.s32.totalorder %s52, %s54
      %p61 = scmp.eq.s32.totalorder %s23, 1
      %p62 = por %p60, %p61
      %p63 = scmp.ne.s32.totalorder %s54, %s55
      %p64 = scmp.eq.s32.totalorder %s23, 0
      %p65 = por %p63, %p64
      %p66 = scmp.ne.s32.totalorder %s54, %s55
      %p67 = scmp.eq.s32.totalorder %s24, 1
      %p68 = por %p66, %p67
      %p70 = scmp.ne.s32.totalorder %s55, %s69
      %p71 = scmp.eq.s32.totalorder %s24, 0
      %p72 = por %p70, %p71
      %s74 = sadd.s32 %s73, 1
      %p77 = scmp.eq.s32.totalorder %s18, 1
      %p78 = scmp.ne.s32.totalorder %s73, %s75
      %p79 = scmp.eq.s32.totalorder %s18, 0
      %p80 = por %p78, %p79
      %p81 = scmp.ne.s32.totalorder %s73, %s75
      %p82 = scmp.eq.s32.totalorder %s23, 1
      %p83 = por %p81, %p82
      %p84 = scmp.ne.s32.totalorder %s75, %s76
      %p85 = scmp.eq.s32.totalorder %s23, 0
      %p86 = por %p84, %p85
      %p87 = scmp.ne.s32.totalorder %s75, %s76
      %p88 = scmp.eq.s32.totalorder %s24, 1
      %p89 = por %p87, %p88
      %p91 = scmp.ne.s32.totalorder %s76, %s90
      %p92 = scmp.eq.s32.totalorder %s24, 0
      %p93 = por %p91, %p92
      %s95 = sadd.s32 %s94, 1
      %p98 = scmp.eq.s32.totalorder %s18, 1
      %p99 = scmp.ne.s32.totalorder %s94, %s96
      %p100 = scmp.eq.s32.totalorder %s18, 0
      %p101 = por %p99, %p100
      %p102 = scmp.ne.s32.totalorder %s94, %s96
      %p103 = scmp.eq.s32.totalorder %s23, 1
      %p104 = por %p102, %p103
      %p105 = scmp.ne.s32.totalorder %s96, %s97
      %p106 = scmp.eq.s32.totalorder %s23, 0
      %p107 = por %p105, %p106
      %p108 = scmp.ne.s32.totalorder %s96, %s97
      %p109 = scmp.eq.s32.totalorder %s24, 1
      %p110 = por %p108, %p109
      %p112 = scmp.ne.s32.totalorder %s97, %s111
      %p113 = scmp.eq.s32.totalorder %s24, 0
      %p114 = por %p112, %p113
      %s116 = sadd.s32 %s115, 1
      %p119 = scmp.eq.s32.totalorder %s18, 1
      %p120 = scmp.ne.s32.totalorder %s115, %s117
      %p121 = scmp.eq.s32.totalorder %s18, 0
      %p122 = por %p120, %p121
      %p123 = scmp.ne.s32.totalorder %s115, %s117
      %p124 = scmp.eq.s32.totalorder %s23, 1
      %p125 = por %p123, %p124
      %p126 = scmp.ne.s32.totalorder %s117, %s118
      %p127 = scmp.eq.s32.totalorder %s23, 0
      %p128 = por %p126, %p127
      %p129 = scmp.ne.s32.totalorder %s117, %s118
      %p130 = scmp.eq.s32.totalorder %s24, 1
      %p131 = por %p129, %p130
      %p133 = scmp.ne.s32.totalorder %s118, %s132
      %p134 = scmp.eq.s32.totalorder %s24, 0
      %p135 = por %p133, %p134
      %s137 = sadd.s32 %s136, 1
      %p140 = scmp.eq.s32.totalorder %s18, 1
      %p141 = scmp.ne.s32.totalorder %s136, %s138
      %p142 = scmp.eq.s32.totalorder %s18, 0
      %p143 = por %p141, %p142
      %p144 = scmp.ne.s32.totalorder %s136, %s138
      %p145 = scmp.eq.s32.totalorder %s23, 1
      %p146 = por %p144, %p145
      %p147 = scmp.ne.s32.totalorder %s138, %s139
      %p148 = scmp.eq.s32.totalorder %s23, 0
      %p149 = por %p147, %p148
      %p150 = scmp.ne.s32.totalorder %s138, %s139
      %p151 = scmp.eq.s32.totalorder %s24, 1
      %p152 = por %p150, %p151
      %p154 = scmp.ne.s32.totalorder %s139, %s153
      %p155 = scmp.eq.s32.totalorder %s24, 0
      %p156 = por %p154, %p155
      %s158 = sadd.s32 %s157, 1
      %p161 = scmp.eq.s32.totalorder %s18, 1
      %p162 = scmp.ne.s32.totalorder %s157, %s159
      %p163 = scmp.eq.s32.totalorder %s18, 0
      %p164 = por %p162, %p163
      %p165 = scmp.ne.s32.totalorder %s157, %s159
      %p166 = scmp.eq.s32.totalorder %s23, 1
      %p167 = por %p165, %p166
      %p168 = scmp.ne.s32.totalorder %s159, %s160
      %p169 = scmp.eq.s32.totalorder %s23, 0
      %p170 = por %p168, %p169
      %p171 = scmp.ne.s32.totalorder %s159, %s160
      %p172 = scmp.eq.s32.totalorder %s24, 1
      %p173 = por %p171, %p172
      %p175 = scmp.ne.s32.totalorder %s160, %s174
      %p176 = scmp.eq.s32.totalorder %s24, 0
      %p177 = por %p175, %p176
      %s178 = ssub.s32 %s18, %s25
      %p179 = scmp.eq.s32.totalorder %s178, 0
      %s181 = sadd.s32 %s180, 1
      %s182 = scalar_select %p179, %s180, %s181
      %p185 = pneg %p179
      %p186 = scmp.eq.s32.totalorder %s18, 1
      %p187 = por %p185, %p186
      %p188 = scmp.ne.s32.totalorder %s180, %s183
      %p189 = scmp.eq.s32.totalorder %s18, 0
      %p190 = por %p188, %p189
      %p191 = scmp.ne.s32.totalorder %s180, %s183
      %p192 = scmp.eq.s32.totalorder %s23, 1
      %p193 = por %p191, %p192
      %p194 = scmp.ne.s32.totalorder %s183, %s184
      %p195 = scmp.eq.s32.totalorder %s23, 0
      %p196 = por %p194, %p195
      %p197 = scmp.ne.s32.totalorder %s183, %s184
      %p198 = scmp.eq.s32.totalorder %s24, 1
      %p199 = por %p197, %p198
      %p201 = scmp.ne.s32.totalorder %s184, %s200
      %p202 = scmp.eq.s32.totalorder %s24, 0
      %p203 = por %p201, %p202
      %p204 = scmp.le.s32.totalorder 1, %s18
      %p205 = scmp.lt.s32.totalorder %s18, 3
      %p206 = pnand %p204, %p205
      %p207 = pneg %p206
      // Predicated region
      $region9: #{tpu_custom_call.1} parent=5 // pred_check
        _
      $region10: #{tpu_custom_call.1} parent=5 // pred_check_branch
        %209 = sbr.rel (%p206) target = $region12
      $region11: #{tpu_custom_call.1} parent=5 // pred_region
        %s210 = ssub.s32 %s18, 1
        // Predicated region
        $region13: #{tpu_custom_call.1} parent=11 // pred_check
          %p211 = pneg %p65
        $region14: #{tpu_custom_call.1} parent=11 // pred_check_branch
          %213 = sbr.rel (%p211) target = $region16
        $region15: #{tpu_custom_call.1} parent=11 // pred_region
          _
        $region16: #{tpu_custom_call.1} parent=11 // pred_fallthru
          _
        // Predicated region
        $region17: #{tpu_custom_call.1} parent=11 // pred_check
          %p214 = pneg %p86
        $region18: #{tpu_custom_call.1} parent=11 // pred_check_branch
          %216 = sbr.rel (%p214) target = $region20
        $region19: #{tpu_custom_call.1} parent=11 // pred_region
          %s218 = ssub.s32 32768, 32768
          %219 = vsyncadd [#allocation7], %s218
          %s220 = sshll.u32 [#allocation6], 4
          %s221 = int_to_ptr.vmem [resolvable:$true] %s220
          %226 = dma.hbm_to_vmem [thread:$0]  %s2, 32768, %s221, [#allocation7], 1024, 1024, 64
        $region20: #{tpu_custom_call.1} parent=11 // pred_fallthru
          _
        // Predicated region
        $region21: #{tpu_custom_call.1} parent=11 // pred_check
          %p227 = pneg %p107
        $region22: #{tpu_custom_call.1} parent=11 // pred_check_branch
          %229 = sbr.rel (%p227) target = $region24
        $region23: #{tpu_custom_call.1} parent=11 // pred_region
          _
        $region24: #{tpu_custom_call.1} parent=11 // pred_fallthru
          _
        // Predicated region
        $region25: #{tpu_custom_call.1} parent=11 // pred_check
          %p230 = pneg %p128
        $region26: #{tpu_custom_call.1} parent=11 // pred_check_branch
          %232 = sbr.rel (%p230) target = $region28
        $region27: #{tpu_custom_call.1} parent=11 // pred_region
          %s234 = ssub.s32 32768, 32768
          %235 = vsyncadd [#allocation10], %s234
          %s236 = sshll.u32 [#allocation9], 4
          %s237 = int_to_ptr.vmem [resolvable:$true] %s236
          %242 = dma.hbm_to_vmem [thread:$0]  %s4, 32768, %s237, [#allocation10], 1024, 1024, 64
        $region28: #{tpu_custom_call.1} parent=11 // pred_fallthru
          _
        // Predicated region
        $region29: #{tpu_custom_call.1} parent=11 // pred_check
          %p243 = pneg %p149
        $region30: #{tpu_custom_call.1} parent=11 // pred_check_branch
          %245 = sbr.rel (%p243) target = $region32
        $region31: #{tpu_custom_call.1} parent=11 // pred_region
          %s247 = ssub.s32 32768, 32768
          %248 = vsyncadd [#allocation10], %s247
          %s249 = sshll.u32 [#allocation11], 4
          %s250 = int_to_ptr.vmem [resolvable:$true] %s249
          %255 = dma.hbm_to_vmem [thread:$0]  %s5, 32768, %s250, [#allocation10], 1024, 1024, 64
        $region32: #{tpu_custom_call.1} parent=11 // pred_fallthru
          _
        // Predicated region
        $region33: #{tpu_custom_call.1} parent=11 // pred_check
          %p256 = pneg %p170
        $region34: #{tpu_custom_call.1} parent=11 // pred_check_branch
          %258 = sbr.rel (%p256) target = $region36
        $region35: #{tpu_custom_call.1} parent=11 // pred_region
          _
        $region36: #{tpu_custom_call.1} parent=11 // pred_fallthru
          _
      $region12: #{tpu_custom_call.1} parent=5 // pred_fallthru
        _
      %p259 = scmp.lt.s32.totalorder %s18, 2
      // Predicated region
      $region37: #{tpu_custom_call.1} parent=5 // pred_check
        %p260 = pneg %p259
      $region38: #{tpu_custom_call.1} parent=5 // pred_check_branch
        %262 = sbr.rel (%p260) target = $region40
      $region39: #{tpu_custom_call.1} parent=5 // pred_region
        // Predicated region
        $region41: #{tpu_custom_call.1} parent=39 // pred_check
          %p263 = pneg %p38
        $region42: #{tpu_custom_call.1} parent=39 // pred_check_branch
          %265 = sbr.rel (%p263) target = $region44
        $region43: #{tpu_custom_call.1} parent=39 // pred_region
          %s266 = sand.u32 %s28, 1
          %s267 = sand.u32 %s28, 1
          %s268 = smul.addr %s267, 16
          %s269 = scalar_lea.vmem [#allocation5], %s268
          %s270 = smul.addr %s18, 8
          %s271 = scalar_lea.vmem %s0, %s270
          // Predicated region
          $region45: #{tpu_custom_call.1} parent=43 // pred_check
            _
          $region46: #{tpu_custom_call.1} parent=43 // pred_check_branch
            %273 = sbr.rel (0) target = $region48
          $region47: #{tpu_custom_call.1} parent=43 // pred_region
            // Predicated region
            $region49: #{tpu_custom_call.1} parent=47 // pred_check
              _
            $region50: #{tpu_custom_call.1} parent=47 // pred_check_branch
              %275 = sbr.rel (0) target = $region52
            $region51: #{tpu_custom_call.1} parent=47 // pred_region
              // Predicated region
              $region64: #{tpu_custom_call.1} parent=51 // pred_check
                _
              $region65: #{tpu_custom_call.1} parent=51 // pred_check_branch
                %292 = sbr.rel (0) target = $region67
              $region66: #{tpu_custom_call.1} parent=51 // pred_region
                loop: start=0, step=1, limit=1
                $region68: #{tpu_custom_call.1} parent=66 // loop_pre_header
                  _
                $region69: #{tpu_custom_call.1} parent=66 // loop_header
                  %s294 = sphi 0, %s298
                  %p295 = scmp.ge.s32.totalorder %s294, 1
                  %s299 = sphi %s271, %s271
                  %s300 = sphi %s269, %s269
                $region70: #{tpu_custom_call.1} parent=66 // loop_header_branch
                  %297 = sbr.rel (%p295) target = $region74
                $region71: #{tpu_custom_call.1} parent=66 // loop_body
                  %v301 = vld [vmem:[%s299] sm:$0xff]
                  %302 = vst [vmem:[%s300] sm:$0xff] %v301
                  %v303 = vld [vmem:[%s299 + $0x10] sm:$0xff]
                  %304 = vst [vmem:[%s300 + $0x8] sm:$0xff] %v303
                $region72: #{tpu_custom_call.1} parent=66 // loop_footer
                  %s298 = sadd.s32 1, %s294
                $region73: #{tpu_custom_call.1} parent=66 // loop_footer_branch
                  %293 = sbr.rel target = $region69
                $region74: #{tpu_custom_call.1} parent=66 // loop_exit
                  _
              $region67: #{tpu_custom_call.1} parent=51 // pred_fallthru
                _
              // Predicated region
              $region75: #{tpu_custom_call.1} parent=51 // pred_check
                _
              $region76: #{tpu_custom_call.1} parent=51 // pred_check_branch
                %306 = sbr.rel target = $region78
              $region77: #{tpu_custom_call.1} parent=51 // pred_region
                _
              $region78: #{tpu_custom_call.1} parent=51 // pred_fallthru
                _
            $region52: #{tpu_custom_call.1} parent=47 // pred_fallthru
              _
            // Predicated region
            $region53: #{tpu_custom_call.1} parent=47 // pred_check
              _
            $region54: #{tpu_custom_call.1} parent=47 // pred_check_branch
              %277 = sbr.rel target = $region56
            $region55: #{tpu_custom_call.1} parent=47 // pred_region
              loop: start=0, step=1, limit=1
              $region57: #{tpu_custom_call.1} parent=55 // loop_pre_header
                _
              $region58: #{tpu_custom_call.1} parent=55 // loop_header
                %s280 = sphi 0, %s284
                %p281 = scmp.ge.s32.totalorder %s280, 1
                %s285 = sphi %s271, %s271
                %s286 = sphi %s269, %s269
              $region59: #{tpu_custom_call.1} parent=55 // loop_header_branch
                %283 = sbr.rel (%p281) target = $region63
              $region60: #{tpu_custom_call.1} parent=55 // loop_body
                %v287 = vld [vmem:[%s285] sm:$0xff]
                %288 = vst [vmem:[%s286] sm:$0xff] %v287
                %v289 = vld [vmem:[%s285 + $0x10] sm:$0xff]
                %290 = vst [vmem:[%s286 + $0x8] sm:$0xff] %v289
              $region61: #{tpu_custom_call.1} parent=55 // loop_footer
                %s284 = sadd.s32 1, %s280
              $region62: #{tpu_custom_call.1} parent=55 // loop_footer_branch
                %279 = sbr.rel target = $region58
              $region63: #{tpu_custom_call.1} parent=55 // loop_exit
                _
            $region56: #{tpu_custom_call.1} parent=47 // pred_fallthru
              _
          $region48: #{tpu_custom_call.1} parent=43 // pred_fallthru
            _
          %307 = vnop
        $region44: #{tpu_custom_call.1} parent=39 // pred_fallthru
          _
      $region40: #{tpu_custom_call.1} parent=5 // pred_fallthru
        _
      %p308 = scmp.le.s32.totalorder 1, %s18
      %p309 = scmp.lt.s32.totalorder %s18, 3
      %p310 = pnand %p308, %p309
      %p311 = pneg %p310
      // Predicated region
      $region79: #{tpu_custom_call.1} parent=5 // pred_check
        _
      $region80: #{tpu_custom_call.1} parent=5 // pred_check_branch
        %313 = sbr.rel (%p310) target = $region82
      $region81: #{tpu_custom_call.1} parent=5 // pred_region
        %s314 = ssub.s32 %s18, 1
        %s315 = sand.u32 %s31, 1
        %s316 = sand.u32 %s31, 1
        %s317 = smul.addr %s316, 16
        %s318 = scalar_lea.vmem [#allocation5], %s317
        // Predicated region
        $region83: #{tpu_custom_call.1} parent=81 // pred_check
          %p319 = pneg %p44
        $region84: #{tpu_custom_call.1} parent=81 // pred_check_branch
          %321 = sbr.rel (%p319) target = $region86
        $region85: #{tpu_custom_call.1} parent=81 // pred_region
          _
        $region86: #{tpu_custom_call.1} parent=81 // pred_fallthru
          _
        // Predicated region
        $region87: #{tpu_custom_call.1} parent=81 // pred_check
          %p322 = pneg %p86
        $region88: #{tpu_custom_call.1} parent=81 // pred_check_branch
          %324 = sbr.rel (%p322) target = $region90
        $region89: #{tpu_custom_call.1} parent=81 // pred_region
          %325 = dma.done [#allocation7], 32768
        $region90: #{tpu_custom_call.1} parent=81 // pred_fallthru
          _
        // Predicated region
        $region91: #{tpu_custom_call.1} parent=81 // pred_check
          %p326 = pneg %p128
        $region92: #{tpu_custom_call.1} parent=81 // pred_check_branch
          %328 = sbr.rel (%p326) target = $region94
        $region93: #{tpu_custom_call.1} parent=81 // pred_region
          %329 = dma.done [#allocation10], 32768
        $region94: #{tpu_custom_call.1} parent=81 // pred_fallthru
          _
        // Predicated region
        $region95: #{tpu_custom_call.1} parent=81 // pred_check
          %p330 = pneg %p149
        $region96: #{tpu_custom_call.1} parent=81 // pred_check_branch
          %332 = sbr.rel (%p330) target = $region98
        $region97: #{tpu_custom_call.1} parent=81 // pred_region
          %333 = dma.done [#allocation10], 32768
        $region98: #{tpu_custom_call.1} parent=81 // pred_fallthru
          _
        %s334 = sand.u32 %s31, 1
        %s335 = sand.u32 %s31, 1
        %s336 = smul.addr %s335, 16
        %s337 = scalar_lea.vmem [#allocation5], %s336
        %p338 = pneg %p44
        %p339 = pneg %p41
        %p340 = pneg %p65
        %p341 = pneg %p62
        %p342 = pneg %p86
        %p343 = pneg %p83
        %p344 = pneg %p107
        %p345 = pneg %p104
        %p346 = pneg %p128
        %p347 = pneg %p125
        %p348 = pneg %p149
        %p349 = pneg %p146
        %p350 = pneg %p170
        %p351 = pneg %p167
        %p352 = pneg %p196
        %p353 = pneg %p193
        %s354 = sand.u32 %s183, 1
        %s355 = scalar_lea.sflag [#allocation8], %s354
        %s356 = sand.u32 %s183, 1
        %s357 = smul.addr %s356, 32
        %s358 = scalar_lea.vmem [#allocation12], %s357
        %v359 = vld [vmem:[%s3] sm:$0xff]
        %v361 = vlaneseq
        %v362 = vshrl.u32 %v361, 7
        %v363 = vsub.s32 0, %v362
        %v364 = vrot.slane %v359, %v363
        %v365 = vlaneseq
        %v366 = vshrl.u32 %v365, 7
        %v367 = vsub.s32 1, %v366
        %v368 = vrot.slane %v359, %v367
        %v369 = vlaneseq
        %v370 = vshrl.u32 %v369, 7
        %v371 = vsub.s32 2, %v370
        %v372 = vrot.slane %v359, %v371
        %v373 = vlaneseq
        %v374 = vshrl.u32 %v373, 7
        %v375 = vsub.s32 3, %v374
        %v376 = vrot.slane %v359, %v375
        %v377 = vlaneseq
        %v378 = vshrl.u32 %v377, 7
        %v379 = vsub.s32 4, %v378
        %v380 = vrot.slane %v359, %v379
        %v381 = vlaneseq
        %v382 = vshrl.u32 %v381, 7
        %v383 = vsub.s32 5, %v382
        %v384 = vrot.slane %v359, %v383
        %v385 = vlaneseq
        %v386 = vshrl.u32 %v385, 7
        %v387 = vsub.s32 6, %v386
        %v388 = vrot.slane %v359, %v387
        %v389 = vlaneseq
        %v390 = vshrl.u32 %v389, 7
        %v391 = vsub.s32 7, %v390
        %v392 = vrot.slane %v359, %v391
        %v401 = vld [vmem:[%s318] sm:$0xff]
        %v402 = vld [vmem:[%s1] sm:$0xff]
        %v403 = vld [vmem:[%s1 + $0x8] sm:$0xff]
        %v404 = vld [vmem:[%s1 + $0x10] sm:$0xff]
        %v405 = vld [vmem:[%s1 + $0x18] sm:$0xff]
        %v410 = vcombine.high %v402, %v402
        %v411 = vcombine.high %v403, %v403
        %v412 = vcombine.high %v404, %v404
        %v413 = vcombine.high %v405, %v405
        %vm414 = vcmask 31744
        %v416 = vsel %vm414, %v401, 0
        %vm418 = vcmask 1043456
        %v419 = vsel %vm418, %v402, 0
        %v421 = vsel %vm418, %v410, 0
        %v423 = vsel %vm418, %v403, 0
        %v425 = vsel %vm418, %v411, 0
        %v427 = vsel %vm418, %v404, 0
        %v429 = vsel %vm418, %v412, 0
        %v431 = vsel %vm418, %v405, 0
        %v433 = vsel %vm418, %v413, 0
        %435 = vmatprep.subr.mxu0 %v421
        %436 = vmatpush1.msra.mxu0 %v419
        %437 = vmatprep.subr.mxu0 0.0
        %438 = vmatpush1.msra.mxu0 0.0
        %439 = vmatprep.subr.mxu0 0.0
        %440 = vmatpush1.msra.mxu0 0.0
        %441 = vmatprep.subr.mxu0 0.0
        %442 = vmatpush1.msra.mxu0 0.0
        %443 = vmatprep.subr.mxu0 0.0
        %444 = vmatpush1.msra.mxu0 0.0
        %445 = vmatprep.subr.mxu0 0.0
        %446 = vmatpush1.msra.mxu0 0.0
        %447 = vmatprep.subr.mxu0 0.0
        %448 = vmatpush1.msra.mxu0 0.0
        %449 = vmatprep.subr.mxu0 0.0
        %450 = vmatpush1.msra.mxu0 0.0
        %451 = vmatprep.subr.mxu0 0.0
        %452 = vmatpush1.msra.mxu0 0.0
        %453 = vmatprep.subr.mxu0 0.0
        %454 = vmatpush1.msra.mxu0 0.0
        %455 = vmatprep.subr.mxu0 0.0
        %456 = vmatpush1.msra.mxu0 0.0
        %457 = vmatprep.subr.mxu0 0.0
        %458 = vmatpush1.msra.mxu0 0.0
        %459 = vmatprep.subr.mxu0 0.0
        %460 = vmatpush1.msra.mxu0 0.0
        %461 = vmatprep.subr.mxu0 0.0
        %462 = vmatpush1.msra.mxu0 0.0
        %463 = vmatprep.subr.mxu0 0.0
        %464 = vmatpush1.msra.mxu0 0.0
        %465 = vmatprep.subr.mxu0 0.0
        %466 = vmatpush1.msra.mxu0 0.0
        %467 = vmatprep.subr.mxu0 0.0
        %468 = vmatpush1.msra.mxu0 0.0
        %469 = vmatprep.subr.mxu0 0.0
        %470 = vmatpush1.msra.mxu0 0.0
        %471 = vmatprep.subr.mxu0 0.0
        %472 = vmatpush1.msra.mxu0 0.0
        %473 = vmatprep.subr.mxu0 0.0
        %474 = vmatpush1.msra.mxu0 0.0
        %475 = vmatprep.subr.mxu0 0.0
        %476 = vmatpush1.msra.mxu0 0.0
        %477 = vmatprep.subr.mxu0 0.0
        %478 = vmatpush1.msra.mxu0 0.0
        %479 = vmatprep.subr.mxu0 0.0
        %480 = vmatpush1.msra.mxu0 0.0
        %481 = vmatprep.subr.mxu0 0.0
        %482 = vmatpush1.msra.mxu0 0.0
        %483 = vmatprep.subr.mxu0 0.0
        %484 = vmatpush1.msra.mxu0 0.0
        %485 = vmatprep.subr.mxu0 0.0
        %486 = vmatpush1.msra.mxu0 0.0
        %487 = vmatprep.subr.mxu0 0.0
        %488 = vmatpush1.msra.mxu0 0.0
        %489 = vmatprep.subr.mxu0 0.0
        %490 = vmatpush1.msra.mxu0 0.0
        %491 = vmatprep.subr.mxu0 0.0
        %492 = vmatpush1.msra.mxu0 0.0
        %493 = vmatprep.subr.mxu0 0.0
        %494 = vmatpush1.msra.mxu0 0.0
        %495 = vmatprep.subr.mxu0 0.0
        %496 = vmatpush1.msra.mxu0 0.0
        %497 = vmatprep.subr.mxu0 0.0
        %498 = vmatpush1.msra.mxu0 0.0
        %499 = vmatprep.mubr.f32.mxu0 0.0
        %500 = vmatmul.mubr.f32.gmra.mrb[0].mxu0 %v416
        %v501 = vpop.f32.mrb[0].mxu0
        %v502 = vadd.f32 %v364, %v501
        %v503 = vpop.f32.mrb[0].mxu0
        %v504 = vadd.f32 %v368, %v503
        %505 = vdwg.mxu0
        %506 = vmatprep.subr.mxu0 %v425
        %507 = vmatpush1.msra.mxu0 %v423
        %508 = vmatprep.subr.mxu0 0.0
        %509 = vmatpush1.msra.mxu0 0.0
        %510 = vmatprep.subr.mxu0 0.0
        %511 = vmatpush1.msra.mxu0 0.0
        %512 = vmatprep.subr.mxu0 0.0
        %513 = vmatpush1.msra.mxu0 0.0
        %514 = vmatprep.subr.mxu0 0.0
        %515 = vmatpush1.msra.mxu0 0.0
        %516 = vmatprep.subr.mxu0 0.0
        %517 = vmatpush1.msra.mxu0 0.0
        %518 = vmatprep.subr.mxu0 0.0
        %519 = vmatpush1.msra.mxu0 0.0
        %520 = vmatprep.subr.mxu0 0.0
        %521 = vmatpush1.msra.mxu0 0.0
        %522 = vmatprep.subr.mxu0 0.0
        %523 = vmatpush1.msra.mxu0 0.0
        %524 = vmatprep.subr.mxu0 0.0
        %525 = vmatpush1.msra.mxu0 0.0
        %526 = vmatprep.subr.mxu0 0.0
        %527 = vmatpush1.msra.mxu0 0.0
        %528 = vmatprep.subr.mxu0 0.0
        %529 = vmatpush1.msra.mxu0 0.0
        %530 = vmatprep.subr.mxu0 0.0
        %531 = vmatpush1.msra.mxu0 0.0
        %532 = vmatprep.subr.mxu0 0.0
        %533 = vmatpush1.msra.mxu0 0.0
        %534 = vmatprep.subr.mxu0 0.0
        %535 = vmatpush1.msra.mxu0 0.0
        %536 = vmatprep.subr.mxu0 0.0
        %537 = vmatpush1.msra.mxu0 0.0
        %538 = vmatprep.subr.mxu0 0.0
        %539 = vmatpush1.msra.mxu0 0.0
        %540 = vmatprep.subr.mxu0 0.0
        %541 = vmatpush1.msra.mxu0 0.0
        %542 = vmatprep.subr.mxu0 0.0
        %543 = vmatpush1.msra.mxu0 0.0
        %544 = vmatprep.subr.mxu0 0.0
        %545 = vmatpush1.msra.mxu0 0.0
        %546 = vmatprep.subr.mxu0 0.0
        %547 = vmatpush1.msra.mxu0 0.0
        %548 = vmatprep.subr.mxu0 0.0
        %549 = vmatpush1.msra.mxu0 0.0
        %550 = vmatprep.subr.mxu0 0.0
        %551 = vmatpush1.msra.mxu0 0.0
        %552 = vmatprep.subr.mxu0 0.0
        %553 = vmatpush1.msra.mxu0 0.0
        %554 = vmatprep.subr.mxu0 0.0
        %555 = vmatpush1.msra.mxu0 0.0
        %556 = vmatprep.subr.mxu0 0.0
        %557 = vmatpush1.msra.mxu0 0.0
        %558 = vmatprep.subr.mxu0 0.0
        %559 = vmatpush1.msra.mxu0 0.0
        %560 = vmatprep.subr.mxu0 0.0
        %561 = vmatpush1.msra.mxu0 0.0
        %562 = vmatprep.subr.mxu0 0.0
        %563 = vmatpush1.msra.mxu0 0.0
        %564 = vmatprep.subr.mxu0 0.0
        %565 = vmatpush1.msra.mxu0 0.0
        %566 = vmatprep.subr.mxu0 0.0
        %567 = vmatpush1.msra.mxu0 0.0
        %568 = vmatprep.subr.mxu0 0.0
        %569 = vmatpush1.msra.mxu0 0.0
        %570 = vmatprep.mubr.f32.mxu0 0.0
        %571 = vmatmul.mubr.f32.gmra.mrb[0].mxu0 %v416
        %v572 = vpop.f32.mrb[0].mxu0
        %v573 = vadd.f32 %v372, %v572
        %v574 = vpop.f32.mrb[0].mxu0
        %v575 = vadd.f32 %v376, %v574
        %576 = vdwg.mxu0
        %577 = vmatprep.subr.mxu0 %v429
        %578 = vmatpush1.msra.mxu0 %v427
        %579 = vmatprep.subr.mxu0 0.0
        %580 = vmatpush1.msra.mxu0 0.0
        %581 = vmatprep.subr.mxu0 0.0
        %582 = vmatpush1.msra.mxu0 0.0
        %583 = vmatprep.subr.mxu0 0.0
        %584 = vmatpush1.msra.mxu0 0.0
        %585 = vmatprep.subr.mxu0 0.0
        %586 = vmatpush1.msra.mxu0 0.0
        %587 = vmatprep.subr.mxu0 0.0
        %588 = vmatpush1.msra.mxu0 0.0
        %589 = vmatprep.subr.mxu0 0.0
        %590 = vmatpush1.msra.mxu0 0.0
        %591 = vmatprep.subr.mxu0 0.0
        %592 = vmatpush1.msra.mxu0 0.0
        %593 = vmatprep.subr.mxu0 0.0
        %594 = vmatpush1.msra.mxu0 0.0
        %595 = vmatprep.subr.mxu0 0.0
        %596 = vmatpush1.msra.mxu0 0.0
        %597 = vmatprep.subr.mxu0 0.0
        %598 = vmatpush1.msra.mxu0 0.0
        %599 = vmatprep.subr.mxu0 0.0
        %600 = vmatpush1.msra.mxu0 0.0
        %601 = vmatprep.subr.mxu0 0.0
        %602 = vmatpush1.msra.mxu0 0.0
        %603 = vmatprep.subr.mxu0 0.0
        %604 = vmatpush1.msra.mxu0 0.0
        %605 = vmatprep.subr.mxu0 0.0
        %606 = vmatpush1.msra.mxu0 0.0
        %607 = vmatprep.subr.mxu0 0.0
        %608 = vmatpush1.msra.mxu0 0.0
        %609 = vmatprep.subr.mxu0 0.0
        %610 = vmatpush1.msra.mxu0 0.0
        %611 = vmatprep.subr.mxu0 0.0
        %612 = vmatpush1.msra.mxu0 0.0
        %613 = vmatprep.subr.mxu0 0.0
        %614 = vmatpush1.msra.mxu0 0.0
        %615 = vmatprep.subr.mxu0 0.0
        %616 = vmatpush1.msra.mxu0 0.0
        %617 = vmatprep.subr.mxu0 0.0
        %618 = vmatpush1.msra.mxu0 0.0
        %619 = vmatprep.subr.mxu0 0.0
        %620 = vmatpush1.msra.mxu0 0.0
        %621 = vmatprep.subr.mxu0 0.0
        %622 = vmatpush1.msra.mxu0 0.0
        %623 = vmatprep.subr.mxu0 0.0
        %624 = vmatpush1.msra.mxu0 0.0
        %625 = vmatprep.subr.mxu0 0.0
        %626 = vmatpush1.msra.mxu0 0.0
        %627 = vmatprep.subr.mxu0 0.0
        %628 = vmatpush1.msra.mxu0 0.0
        %629 = vmatprep.subr.mxu0 0.0
        %630 = vmatpush1.msra.mxu0 0.0
        %631 = vmatprep.subr.mxu0 0.0
        %632 = vmatpush1.msra.mxu0 0.0
        %633 = vmatprep.subr.mxu0 0.0
        %634 = vmatpush1.msra.mxu0 0.0
        %635 = vmatprep.subr.mxu0 0.0
        %636 = vmatpush1.msra.mxu0 0.0
        %637 = vmatprep.subr.mxu0 0.0
        %638 = vmatpush1.msra.mxu0 0.0
        %639 = vmatprep.subr.mxu0 0.0
        %640 = vmatpush1.msra.mxu0 0.0
        %641 = vmatprep.mubr.f32.mxu0 0.0
        %642 = vmatmul.mubr.f32.gmra.mrb[0].mxu0 %v416
        %v643 = vpop.f32.mrb[0].mxu0
        %v644 = vadd.f32 %v380, %v643
        %v645 = vpop.f32.mrb[0].mxu0
        %v646 = vadd.f32 %v384, %v645
        %647 = vdwg.mxu0
        %648 = vmatprep.subr.mxu0 %v433
        %649 = vmatpush1.msra.mxu0 %v431
        %650 = vmatprep.subr.mxu0 0.0
        %651 = vmatpush1.msra.mxu0 0.0
        %652 = vmatprep.subr.mxu0 0.0
        %653 = vmatpush1.msra.mxu0 0.0
        %654 = vmatprep.subr.mxu0 0.0
        %655 = vmatpush1.msra.mxu0 0.0
        %656 = vmatprep.subr.mxu0 0.0
        %657 = vmatpush1.msra.mxu0 0.0
        %658 = vmatprep.subr.mxu0 0.0
        %659 = vmatpush1.msra.mxu0 0.0
        %660 = vmatprep.subr.mxu0 0.0
        %661 = vmatpush1.msra.mxu0 0.0
        %662 = vmatprep.subr.mxu0 0.0
        %663 = vmatpush1.msra.mxu0 0.0
        %664 = vmatprep.subr.mxu0 0.0
        %665 = vmatpush1.msra.mxu0 0.0
        %666 = vmatprep.subr.mxu0 0.0
        %667 = vmatpush1.msra.mxu0 0.0
        %668 = vmatprep.subr.mxu0 0.0
        %669 = vmatpush1.msra.mxu0 0.0
        %670 = vmatprep.subr.mxu0 0.0
        %671 = vmatpush1.msra.mxu0 0.0
        %672 = vmatprep.subr.mxu0 0.0
        %673 = vmatpush1.msra.mxu0 0.0
        %674 = vmatprep.subr.mxu0 0.0
        %675 = vmatpush1.msra.mxu0 0.0
        %676 = vmatprep.subr.mxu0 0.0
        %677 = vmatpush1.msra.mxu0 0.0
        %678 = vmatprep.subr.mxu0 0.0
        %679 = vmatpush1.msra.mxu0 0.0
        %680 = vmatprep.subr.mxu0 0.0
        %681 = vmatpush1.msra.mxu0 0.0
        %682 = vmatprep.subr.mxu0 0.0
        %683 = vmatpush1.msra.mxu0 0.0
        %684 = vmatprep.subr.mxu0 0.0
        %685 = vmatpush1.msra.mxu0 0.0
        %686 = vmatprep.subr.mxu0 0.0
        %687 = vmatpush1.msra.mxu0 0.0
        %688 = vmatprep.subr.mxu0 0.0
        %689 = vmatpush1.msra.mxu0 0.0
        %690 = vmatprep.subr.mxu0 0.0
        %691 = vmatpush1.msra.mxu0 0.0
        %692 = vmatprep.subr.mxu0 0.0
        %693 = vmatpush1.msra.mxu0 0.0
        %694 = vmatprep.subr.mxu0 0.0
        %695 = vmatpush1.msra.mxu0 0.0
        %696 = vmatprep.subr.mxu0 0.0
        %697 = vmatpush1.msra.mxu0 0.0
        %698 = vmatprep.subr.mxu0 0.0
        %699 = vmatpush1.msra.mxu0 0.0
        %700 = vmatprep.subr.mxu0 0.0
        %701 = vmatpush1.msra.mxu0 0.0
        %702 = vmatprep.subr.mxu0 0.0
        %703 = vmatpush1.msra.mxu0 0.0
        %704 = vmatprep.subr.mxu0 0.0
        %705 = vmatpush1.msra.mxu0 0.0
        %706 = vmatprep.subr.mxu0 0.0
        %707 = vmatpush1.msra.mxu0 0.0
        %708 = vmatprep.subr.mxu0 0.0
        %709 = vmatpush1.msra.mxu0 0.0
        %710 = vmatprep.subr.mxu0 0.0
        %711 = vmatpush1.msra.mxu0 0.0
        %712 = vmatprep.mubr.f32.mxu0 0.0
        %713 = vmatmul.mubr.f32.gmra.mrb[0].mxu0 %v416
        %v714 = vpop.f32.mrb[0].mxu0
        %v715 = vadd.f32 %v388, %v714
        %v716 = vpop.f32.mrb[0].mxu0
        %v717 = vadd.f32 %v392, %v716
        %718 = vdwg.mxu0
        %719 = vst [vmem:[#allocation2] sm:$0xff] %v502
        %720 = vst [vmem:[#allocation2 + $0x8] sm:$0xff] %v504
        %721 = vst [vmem:[#allocation2 + $0x10] sm:$0xff] %v573
        %722 = vst [vmem:[#allocation2 + $0x18] sm:$0xff] %v575
        %723 = vst [vmem:[#allocation2 + $0x20] sm:$0xff] %v644
        %724 = vst [vmem:[#allocation2 + $0x28] sm:$0xff] %v646
        %725 = vst [vmem:[#allocation2 + $0x30] sm:$0xff] %v715
        %726 = vst [vmem:[#allocation2 + $0x38] sm:$0xff] %v717
        %s727 = scalar_lea.vmem %s318, 8 [#allocation5]
        %v728 = vld [vmem:[%s727] sm:$0xff]
        %v729 = vld [vmem:[%s1] sm:$0xff]
        %v730 = vld [vmem:[%s1 + $0x8] sm:$0xff]
        %v731 = vld [vmem:[%s1 + $0x10] sm:$0xff]
        %v732 = vld [vmem:[%s1 + $0x18] sm:$0xff]
        %v737 = vcombine.high %v729, %v729
        %v738 = vcombine.high %v730, %v730
        %v739 = vcombine.high %v731, %v731
        %v740 = vcombine.high %v732, %v732
        %v742 = vsel %vm414, %v728, 0
        %v744 = vsel %vm418, %v729, 0
        %v746 = vsel %vm418, %v737, 0
        %v748 = vsel %vm418, %v730, 0
        %v750 = vsel %vm418, %v738, 0
        %v752 = vsel %vm418, %v731, 0
        %v754 = vsel %vm418, %v739, 0
        %v756 = vsel %vm418, %v732, 0
        %v758 = vsel %vm418, %v740, 0
        %760 = vmatprep.subr.mxu0 %v746
        %761 = vmatpush1.msra.mxu0 %v744
        %762 = vmatprep.subr.mxu0 0.0
        %763 = vmatpush1.msra.mxu0 0.0
        %764 = vmatprep.subr.mxu0 0.0
        %765 = vmatpush1.msra.mxu0 0.0
        %766 = vmatprep.subr.mxu0 0.0
        %767 = vmatpush1.msra.mxu0 0.0
        %768 = vmatprep.subr.mxu0 0.0
        %769 = vmatpush1.msra.mxu0 0.0
        %770 = vmatprep.subr.mxu0 0.0
        %771 = vmatpush1.msra.mxu0 0.0
        %772 = vmatprep.subr.mxu0 0.0
        %773 = vmatpush1.msra.mxu0 0.0
        %774 = vmatprep.subr.mxu0 0.0
        %775 = vmatpush1.msra.mxu0 0.0
        %776 = vmatprep.subr.mxu0 0.0
        %777 = vmatpush1.msra.mxu0 0.0
        %778 = vmatprep.subr.mxu0 0.0
        %779 = vmatpush1.msra.mxu0 0.0
        %780 = vmatprep.subr.mxu0 0.0
        %781 = vmatpush1.msra.mxu0 0.0
        %782 = vmatprep.subr.mxu0 0.0
        %783 = vmatpush1.msra.mxu0 0.0
        %784 = vmatprep.subr.mxu0 0.0
        %785 = vmatpush1.msra.mxu0 0.0
        %786 = vmatprep.subr.mxu0 0.0
        %787 = vmatpush1.msra.mxu0 0.0
        %788 = vmatprep.subr.mxu0 0.0
        %789 = vmatpush1.msra.mxu0 0.0
        %790 = vmatprep.subr.mxu0 0.0
        %791 = vmatpush1.msra.mxu0 0.0
        %792 = vmatprep.subr.mxu0 0.0
        %793 = vmatpush1.msra.mxu0 0.0
        %794 = vmatprep.subr.mxu0 0.0
        %795 = vmatpush1.msra.mxu0 0.0
        %796 = vmatprep.subr.mxu0 0.0
        %797 = vmatpush1.msra.mxu0 0.0
        %798 = vmatprep.subr.mxu0 0.0
        %799 = vmatpush1.msra.mxu0 0.0
        %800 = vmatprep.subr.mxu0 0.0
        %801 = vmatpush1.msra.mxu0 0.0
        %802 = vmatprep.subr.mxu0 0.0
        %803 = vmatpush1.msra.mxu0 0.0
        %804 = vmatprep.subr.mxu0 0.0
        %805 = vmatpush1.msra.mxu0 0.0
        %806 = vmatprep.subr.mxu0 0.0
        %807 = vmatpush1.msra.mxu0 0.0
        %808 = vmatprep.subr.mxu0 0.0
        %809 = vmatpush1.msra.mxu0 0.0
        %810 = vmatprep.subr.mxu0 0.0
        %811 = vmatpush1.msra.mxu0 0.0
        %812 = vmatprep.subr.mxu0 0.0
        %813 = vmatpush1.msra.mxu0 0.0
        %814 = vmatprep.subr.mxu0 0.0
        %815 = vmatpush1.msra.mxu0 0.0
        %816 = vmatprep.subr.mxu0 0.0
        %817 = vmatpush1.msra.mxu0 0.0
        %818 = vmatprep.subr.mxu0 0.0
        %819 = vmatpush1.msra.mxu0 0.0
        %820 = vmatprep.subr.mxu0 0.0
        %821 = vmatpush1.msra.mxu0 0.0
        %822 = vmatprep.subr.mxu0 0.0
        %823 = vmatpush1.msra.mxu0 0.0
        %824 = vmatprep.mubr.f32.mxu0 0.0
        %825 = vmatmul.mubr.f32.gmra.mrb[0].mxu0 %v742
        %v826 = vpop.f32.mrb[0].mxu0
        %v827 = vadd.f32 %v364, %v826
        %v828 = vpop.f32.mrb[0].mxu0
        %v829 = vadd.f32 %v368, %v828
        %830 = vdwg.mxu0
        %831 = vmatprep.subr.mxu0 %v750
        %832 = vmatpush1.msra.mxu0 %v748
        %833 = vmatprep.subr.mxu0 0.0
        %834 = vmatpush1.msra.mxu0 0.0
        %835 = vmatprep.subr.mxu0 0.0
        %836 = vmatpush1.msra.mxu0 0.0
        %837 = vmatprep.subr.mxu0 0.0
        %838 = vmatpush1.msra.mxu0 0.0
        %839 = vmatprep.subr.mxu0 0.0
        %840 = vmatpush1.msra.mxu0 0.0
        %841 = vmatprep.subr.mxu0 0.0
        %842 = vmatpush1.msra.mxu0 0.0
        %843 = vmatprep.subr.mxu0 0.0
        %844 = vmatpush1.msra.mxu0 0.0
        %845 = vmatprep.subr.mxu0 0.0
        %846 = vmatpush1.msra.mxu0 0.0
        %847 = vmatprep.subr.mxu0 0.0
        %848 = vmatpush1.msra.mxu0 0.0
        %849 = vmatprep.subr.mxu0 0.0
        %850 = vmatpush1.msra.mxu0 0.0
        %851 = vmatprep.subr.mxu0 0.0
        %852 = vmatpush1.msra.mxu0 0.0
        %853 = vmatprep.subr.mxu0 0.0
        %854 = vmatpush1.msra.mxu0 0.0
        %855 = vmatprep.subr.mxu0 0.0
        %856 = vmatpush1.msra.mxu0 0.0
        %857 = vmatprep.subr.mxu0 0.0
        %858 = vmatpush1.msra.mxu0 0.0
        %859 = vmatprep.subr.mxu0 0.0
        %860 = vmatpush1.msra.mxu0 0.0
        %861 = vmatprep.subr.mxu0 0.0
        %862 = vmatpush1.msra.mxu0 0.0
        %863 = vmatprep.subr.mxu0 0.0
        %864 = vmatpush1.msra.mxu0 0.0
        %865 = vmatprep.subr.mxu0 0.0
        %866 = vmatpush1.msra.mxu0 0.0
        %867 = vmatprep.subr.mxu0 0.0
        %868 = vmatpush1.msra.mxu0 0.0
        %869 = vmatprep.subr.mxu0 0.0
        %870 = vmatpush1.msra.mxu0 0.0
        %871 = vmatprep.subr.mxu0 0.0
        %872 = vmatpush1.msra.mxu0 0.0
        %873 = vmatprep.subr.mxu0 0.0
        %874 = vmatpush1.msra.mxu0 0.0
        %875 = vmatprep.subr.mxu0 0.0
        %876 = vmatpush1.msra.mxu0 0.0
        %877 = vmatprep.subr.mxu0 0.0
        %878 = vmatpush1.msra.mxu0 0.0
        %879 = vmatprep.subr.mxu0 0.0
        %880 = vmatpush1.msra.mxu0 0.0
        %881 = vmatprep.subr.mxu0 0.0
        %882 = vmatpush1.msra.mxu0 0.0
        %883 = vmatprep.subr.mxu0 0.0
        %884 = vmatpush1.msra.mxu0 0.0
        %885 = vmatprep.subr.mxu0 0.0
        %886 = vmatpush1.msra.mxu0 0.0
        %887 = vmatprep.subr.mxu0 0.0
        %888 = vmatpush1.msra.mxu0 0.0
        %889 = vmatprep.subr.mxu0 0.0
        %890 = vmatpush1.msra.mxu0 0.0
        %891 = vmatprep.subr.mxu0 0.0
        %892 = vmatpush1.msra.mxu0 0.0
        %893 = vmatprep.subr.mxu0 0.0
        %894 = vmatpush1.msra.mxu0 0.0
        %895 = vmatprep.mubr.f32.mxu0 0.0
        %896 = vmatmul.mubr.f32.gmra.mrb[0].mxu0 %v742
        %v897 = vpop.f32.mrb[0].mxu0
        %v898 = vadd.f32 %v372, %v897
        %v899 = vpop.f32.mrb[0].mxu0
        %v900 = vadd.f32 %v376, %v899
        %901 = vdwg.mxu0
        %902 = vmatprep.subr.mxu0 %v754
        %903 = vmatpush1.msra.mxu0 %v752
        %904 = vmatprep.subr.mxu0 0.0
        %905 = vmatpush1.msra.mxu0 0.0
        %906 = vmatprep.subr.mxu0 0.0
        %907 = vmatpush1.msra.mxu0 0.0
        %908 = vmatprep.subr.mxu0 0.0
        %909 = vmatpush1.msra.mxu0 0.0
        %910 = vmatprep.subr.mxu0 0.0
        %911 = vmatpush1.msra.mxu0 0.0
        %912 = vmatprep.subr.mxu0 0.0
        %913 = vmatpush1.msra.mxu0 0.0
        %914 = vmatprep.subr.mxu0 0.0
        %915 = vmatpush1.msra.mxu0 0.0
        %916 = vmatprep.subr.mxu0 0.0
        %917 = vmatpush1.msra.mxu0 0.0
        %918 = vmatprep.subr.mxu0 0.0
        %919 = vmatpush1.msra.mxu0 0.0
        %920 = vmatprep.subr.mxu0 0.0
        %921 = vmatpush1.msra.mxu0 0.0
        %922 = vmatprep.subr.mxu0 0.0
        %923 = vmatpush1.msra.mxu0 0.0
        %924 = vmatprep.subr.mxu0 0.0
        %925 = vmatpush1.msra.mxu0 0.0
        %926 = vmatprep.subr.mxu0 0.0
        %927 = vmatpush1.msra.mxu0 0.0
        %928 = vmatprep.subr.mxu0 0.0
        %929 = vmatpush1.msra.mxu0 0.0
        %930 = vmatprep.subr.mxu0 0.0
        %931 = vmatpush1.msra.mxu0 0.0
        %932 = vmatprep.subr.mxu0 0.0
        %933 = vmatpush1.msra.mxu0 0.0
        %934 = vmatprep.subr.mxu0 0.0
        %935 = vmatpush1.msra.mxu0 0.0
        %936 = vmatprep.subr.mxu0 0.0
        %937 = vmatpush1.msra.mxu0 0.0
        %938 = vmatprep.subr.mxu0 0.0
        %939 = vmatpush1.msra.mxu0 0.0
        %940 = vmatprep.subr.mxu0 0.0
        %941 = vmatpush1.msra.mxu0 0.0
        %942 = vmatprep.subr.mxu0 0.0
        %943 = vmatpush1.msra.mxu0 0.0
        %944 = vmatprep.subr.mxu0 0.0
        %945 = vmatpush1.msra.mxu0 0.0
        %946 = vmatprep.subr.mxu0 0.0
        %947 = vmatpush1.msra.mxu0 0.0
        %948 = vmatprep.subr.mxu0 0.0
        %949 = vmatpush1.msra.mxu0 0.0
        %950 = vmatprep.subr.mxu0 0.0
        %951 = vmatpush1.msra.mxu0 0.0
        %952 = vmatprep.subr.mxu0 0.0
        %953 = vmatpush1.msra.mxu0 0.0
        %954 = vmatprep.subr.mxu0 0.0
        %955 = vmatpush1.msra.mxu0 0.0
        %956 = vmatprep.subr.mxu0 0.0
        %957 = vmatpush1.msra.mxu0 0.0
        %958 = vmatprep.subr.mxu0 0.0
        %959 = vmatpush1.msra.mxu0 0.0
        %960 = vmatprep.subr.mxu0 0.0
        %961 = vmatpush1.msra.mxu0 0.0
        %962 = vmatprep.subr.mxu0 0.0
        %963 = vmatpush1.msra.mxu0 0.0
        %964 = vmatprep.subr.mxu0 0.0
        %965 = vmatpush1.msra.mxu0 0.0
        %966 = vmatprep.mubr.f32.mxu0 0.0
        %967 = vmatmul.mubr.f32.gmra.mrb[0].mxu0 %v742
        %v968 = vpop.f32.mrb[0].mxu0
        %v969 = vadd.f32 %v380, %v968
        %v970 = vpop.f32.mrb[0].mxu0
        %v971 = vadd.f32 %v384, %v970
        %972 = vdwg.mxu0
        %973 = vmatprep.subr.mxu0 %v758
        %974 = vmatpush1.msra.mxu0 %v756
        %975 = vmatprep.subr.mxu0 0.0
        %976 = vmatpush1.msra.mxu0 0.0
        %977 = vmatprep.subr.mxu0 0.0
        %978 = vmatpush1.msra.mxu0 0.0
        %979 = vmatprep.subr.mxu0 0.0
        %980 = vmatpush1.msra.mxu0 0.0
        %981 = vmatprep.subr.mxu0 0.0
        %982 = vmatpush1.msra.mxu0 0.0
        %983 = vmatprep.subr.mxu0 0.0
        %984 = vmatpush1.msra.mxu0 0.0
        %985 = vmatprep.subr.mxu0 0.0
        %986 = vmatpush1.msra.mxu0 0.0
        %987 = vmatprep.subr.mxu0 0.0
        %988 = vmatpush1.msra.mxu0 0.0
        %989 = vmatprep.subr.mxu0 0.0
        %990 = vmatpush1.msra.mxu0 0.0
        %991 = vmatprep.subr.mxu0 0.0
        %992 = vmatpush1.msra.mxu0 0.0
        %993 = vmatprep.subr.mxu0 0.0
        %994 = vmatpush1.msra.mxu0 0.0
        %995 = vmatprep.subr.mxu0 0.0
        %996 = vmatpush1.msra.mxu0 0.0
        %997 = vmatprep.subr.mxu0 0.0
        %998 = vmatpush1.msra.mxu0 0.0
        %999 = vmatprep.subr.mxu0 0.0
        %1000 = vmatpush1.msra.mxu0 0.0
        %1001 = vmatprep.subr.mxu0 0.0
        %1002 = vmatpush1.msra.mxu0 0.0
        %1003 = vmatprep.subr.mxu0 0.0
        %1004 = vmatpush1.msra.mxu0 0.0
        %1005 = vmatprep.subr.mxu0 0.0
        %1006 = vmatpush1.msra.mxu0 0.0
        %1007 = vmatprep.subr.mxu0 0.0
        %1008 = vmatpush1.msra.mxu0 0.0
        %1009 = vmatprep.subr.mxu0 0.0
        %1010 = vmatpush1.msra.mxu0 0.0
        %1011 = vmatprep.subr.mxu0 0.0
        %1012 = vmatpush1.msra.mxu0 0.0
        %1013 = vmatprep.subr.mxu0 0.0
        %1014 = vmatpush1.msra.mxu0 0.0
        %1015 = vmatprep.subr.mxu0 0.0
        %1016 = vmatpush1.msra.mxu0 0.0
        %1017 = vmatprep.subr.mxu0 0.0
        %1018 = vmatpush1.msra.mxu0 0.0
        %1019 = vmatprep.subr.mxu0 0.0
        %1020 = vmatpush1.msra.mxu0 0.0
        %1021 = vmatprep.subr.mxu0 0.0
        %1022 = vmatpush1.msra.mxu0 0.0
        %1023 = vmatprep.subr.mxu0 0.0
        %1024 = vmatpush1.msra.mxu0 0.0
        %1025 = vmatprep.subr.mxu0 0.0
        %1026 = vmatpush1.msra.mxu0 0.0
        %1027 = vmatprep.subr.mxu0 0.0
        %1028 = vmatpush1.msra.mxu0 0.0
        %1029 = vmatprep.subr.mxu0 0.0
        %1030 = vmatpush1.msra.mxu0 0.0
        %1031 = vmatprep.subr.mxu0 0.0
        %1032 = vmatpush1.msra.mxu0 0.0
        %1033 = vmatprep.subr.mxu0 0.0
        %1034 = vmatpush1.msra.mxu0 0.0
        %1035 = vmatprep.subr.mxu0 0.0
        %1036 = vmatpush1.msra.mxu0 0.0
        %1037 = vmatprep.mubr.f32.mxu0 0.0
        %1038 = vmatmul.mubr.f32.gmra.mrb[0].mxu0 %v742
        %v1039 = vpop.f32.mrb[0].mxu0
        %v1040 = vadd.f32 %v388, %v1039
        %v1041 = vpop.f32.mrb[0].mxu0
        %v1042 = vadd.f32 %v392, %v1041
        %1043 = vdwg.mxu0
        %s1044 = scalar_lea.vmem [#allocation2], 64
        %1045 = vst [vmem:[%s1044] sm:$0xff] %v827
        %1046 = vst [vmem:[%s1044 + $0x8] sm:$0xff] %v829
        %1047 = vst [vmem:[%s1044 + $0x10] sm:$0xff] %v898
        %1048 = vst [vmem:[%s1044 + $0x18] sm:$0xff] %v900
        %1049 = vst [vmem:[%s1044 + $0x20] sm:$0xff] %v969
        %1050 = vst [vmem:[%s1044 + $0x28] sm:$0xff] %v971
        %1051 = vst [vmem:[%s1044 + $0x30] sm:$0xff] %v1040
        %1052 = vst [vmem:[%s1044 + $0x38] sm:$0xff] %v1042
        %1053 = vst [vmem:[#allocation3] sm:$0xff] 0.0
        %1054 = vst [vmem:[#allocation3 + $0x8] sm:$0xff] 0.0
        %1055 = vst [vmem:[#allocation4] sm:$0xff] 0.0
        %1056 = vst [vmem:[#allocation4 + $0x8] sm:$0xff] 0.0
        %v1057 = vld [vmem:[#allocation3] sm:$0xff]
        %v1058 = vld [vmem:[#allocation3 + $0x8] sm:$0xff]
        %v1059 = vld [vmem:[#allocation6] sm:$0xff]
        %v1060 = vld [vmem:[#allocation6 + $0x8] sm:$0xff]
        %v1061 = vld [vmem:[#allocation6 + $0x10] sm:$0xff]
        %v1062 = vld [vmem:[#allocation6 + $0x18] sm:$0xff]
        %v1063 = vld [vmem:[#allocation6 + $0x20] sm:$0xff]
        %v1064 = vld [vmem:[#allocation6 + $0x28] sm:$0xff]
        %v1065 = vld [vmem:[#allocation6 + $0x30] sm:$0xff]
        %v1066 = vld [vmem:[#allocation6 + $0x38] sm:$0xff]
        %v1067 = vld [vmem:[#allocation6 + $0x40] sm:$0xff]
        %v1068 = vld [vmem:[#allocation6 + $0x48] sm:$0xff]
        %v1069 = vld [vmem:[#allocation6 + $0x50] sm:$0xff]
        %v1070 = vld [vmem:[#allocation6 + $0x58] sm:$0xff]
        %v1071 = vld [vmem:[#allocation6 + $0x60] sm:$0xff]
        %v1072 = vld [vmem:[#allocation6 + $0x68] sm:$0xff]
        %v1073 = vld [vmem:[#allocation6 + $0x70] sm:$0xff]
        %v1074 = vld [vmem:[#allocation6 + $0x78] sm:$0xff]
        %v1075 = vld [vmem:[#allocation6 + $0x80] sm:$0xff]
        %v1076 = vld [vmem:[#allocation6 + $0x88] sm:$0xff]
        %v1077 = vld [vmem:[#allocation6 + $0x90] sm:$0xff]
        %v1078 = vld [vmem:[#allocation6 + $0x98] sm:$0xff]
        %v1079 = vld [vmem:[#allocation6 + $0xa0] sm:$0xff]
        %v1080 = vld [vmem:[#allocation6 + $0xa8] sm:$0xff]
        %v1081 = vld [vmem:[#allocation6 + $0xb0] sm:$0xff]
        %v1082 = vld [vmem:[#allocation6 + $0xb8] sm:$0xff]
        %v1083 = vld [vmem:[#allocation6 + $0xc0] sm:$0xff]
        %v1084 = vld [vmem:[#allocation6 + $0xc8] sm:$0xff]
        %v1085 = vld [vmem:[#allocation6 + $0xd0] sm:$0xff]
        %v1086 = vld [vmem:[#allocation6 + $0xd8] sm:$0xff]
        %v1087 = vld [vmem:[#allocation6 + $0xe0] sm:$0xff]
        %v1088 = vld [vmem:[#allocation6 + $0xe8] sm:$0xff]
        %v1089 = vld [vmem:[#allocation6 + $0xf0] sm:$0xff]
        %v1090 = vld [vmem:[#allocation6 + $0xf8] sm:$0xff]
        %v1091 = vld [vmem:[#allocation6 + $0x100] sm:$0xff]
        %v1092 = vld [vmem:[#allocation6 + $0x108] sm:$0xff]
        %v1093 = vld [vmem:[#allocation6 + $0x110] sm:$0xff]
        %v1094 = vld [vmem:[#allocation6 + $0x118] sm:$0xff]
        %v1095 = vld [vmem:[#allocation6 + $0x120] sm:$0xff]
        %v1096 = vld [vmem:[#allocation6 + $0x128] sm:$0xff]
        %v1097 = vld [vmem:[#allocation6 + $0x130] sm:$0xff]
        %v1098 = vld [vmem:[#allocation6 + $0x138] sm:$0xff]
        %v1099 = vld [vmem:[#allocation6 + $0x140] sm:$0xff]
        %v1100 = vld [vmem:[#allocation6 + $0x148] sm:$0xff]
        %v1101 = vld [vmem:[#allocation6 + $0x150] sm:$0xff]
        %v1102 = vld [vmem:[#allocation6 + $0x158] sm:$0xff]
        %v1103 = vld [vmem:[#allocation6 + $0x160] sm:$0xff]
        %v1104 = vld [vmem:[#allocation6 + $0x168] sm:$0xff]
        %v1105 = vld [vmem:[#allocation6 + $0x170] sm:$0xff]
        %v1106 = vld [vmem:[#allocation6 + $0x178] sm:$0xff]
        %v1107 = vld [vmem:[#allocation6 + $0x180] sm:$0xff]
        %v1108 = vld [vmem:[#allocation6 + $0x188] sm:$0xff]
        %v1109 = vld [vmem:[#allocation6 + $0x190] sm:$0xff]
        %v1110 = vld [vmem:[#allocation6 + $0x198] sm:$0xff]
        %v1111 = vld [vmem:[#allocation6 + $0x1a0] sm:$0xff]
        %v1112 = vld [vmem:[#allocation6 + $0x1a8] sm:$0xff]
        %v1113 = vld [vmem:[#allocation6 + $0x1b0] sm:$0xff]
        %v1114 = vld [vmem:[#allocation6 + $0x1b8] sm:$0xff]
        %v1115 = vld [vmem:[#allocation6 + $0x1c0] sm:$0xff]
        %v1116 = vld [vmem:[#allocation6 + $0x1c8] sm:$0xff]
        %v1117 = vld [vmem:[#allocation6 + $0x1d0] sm:$0xff]
        %v1118 = vld [vmem:[#allocation6 + $0x1d8] sm:$0xff]
        %v1119 = vld [vmem:[#allocation6 + $0x1e0] sm:$0xff]
        %v1120 = vld [vmem:[#allocation6 + $0x1e8] sm:$0xff]
        %v1121 = vld [vmem:[#allocation6 + $0x1f0] sm:$0xff]
        %v1122 = vld [vmem:[#allocation6 + $0x1f8] sm:$0xff]
        %v1123 = vld [vmem:[#allocation6 + $0x200] sm:$0xff]
        %v1124 = vld [vmem:[#allocation6 + $0x208] sm:$0xff]
        %v1125 = vld [vmem:[#allocation6 + $0x210] sm:$0xff]
        %v1126 = vld [vmem:[#allocation6 + $0x218] sm:$0xff]
        %v1127 = vld [vmem:[#allocation6 + $0x220] sm:$0xff]
        %v1128 = vld [vmem:[#allocation6 + $0x228] sm:$0xff]
        %v1129 = vld [vmem:[#allocation6 + $0x230] sm:$0xff]
        %v1130 = vld [vmem:[#allocation6 + $0x238] sm:$0xff]
        %v1131 = vld [vmem:[#allocation6 + $0x240] sm:$0xff]
        %v1132 = vld [vmem:[#allocation6 + $0x248] sm:$0xff]
        %v1133 = vld [vmem:[#allocation6 + $0x250] sm:$0xff]
        %v1134 = vld [vmem:[#allocation6 + $0x258] sm:$0xff]
        %v1135 = vld [vmem:[#allocation6 + $0x260] sm:$0xff]
        %v1136 = vld [vmem:[#allocation6 + $0x268] sm:$0xff]
        %v1137 = vld [vmem:[#allocation6 + $0x270] sm:$0xff]
        %v1138 = vld [vmem:[#allocation6 + $0x278] sm:$0xff]
        %v1139 = vld [vmem:[#allocation6 + $0x280] sm:$0xff]
        %v1140 = vld [vmem:[#allocation6 + $0x288] sm:$0xff]
        %v1141 = vld [vmem:[#allocation6 + $0x290] sm:$0xff]
        %v1142 = vld [vmem:[#allocation6 + $0x298] sm:$0xff]
        %v1143 = vld [vmem:[#allocation6 + $0x2a0] sm:$0xff]
        %v1144 = vld [vmem:[#allocation6 + $0x2a8] sm:$0xff]
        %v1145 = vld [vmem:[#allocation6 + $0x2b0] sm:$0xff]
        %v1146 = vld [vmem:[#allocation6 + $0x2b8] sm:$0xff]
        %v1147 = vld [vmem:[#allocation6 + $0x2c0] sm:$0xff]
        %v1148 = vld [vmem:[#allocation6 + $0x2c8] sm:$0xff]
        %v1149 = vld [vmem:[#allocation6 + $0x2d0] sm:$0xff]
        %v1150 = vld [vmem:[#allocation6 + $0x2d8] sm:$0xff]
        %v1151 = vld [vmem:[#allocation6 + $0x2e0] sm:$0xff]
        %v1152 = vld [vmem:[#allocation6 + $0x2e8] sm:$0xff]
        %v1153 = vld [vmem:[#allocation6 + $0x2f0] sm:$0xff]
        %v1154 = vld [vmem:[#allocation6 + $0x2f8] sm:$0xff]
        %v1155 = vld [vmem:[#allocation6 + $0x300] sm:$0xff]
        %v1156 = vld [vmem:[#allocation6 + $0x308] sm:$0xff]
        %v1157 = vld [vmem:[#allocation6 + $0x310] sm:$0xff]
        %v1158 = vld [vmem:[#allocation6 + $0x318] sm:$0xff]
        %v1159 = vld [vmem:[#allocation6 + $0x320] sm:$0xff]
        %v1160 = vld [vmem:[#allocation6 + $0x328] sm:$0xff]
        %v1161 = vld [vmem:[#allocation6 + $0x330] sm:$0xff]
        %v1162 = vld [vmem:[#allocation6 + $0x338] sm:$0xff]
        %v1163 = vld [vmem:[#allocation6 + $0x340] sm:$0xff]
        %v1164 = vld [vmem:[#allocation6 + $0x348] sm:$0xff]
        %v1165 = vld [vmem:[#allocation6 + $0x350] sm:$0xff]
        %v1166 = vld [vmem:[#allocation6 + $0x358] sm:$0xff]
        %v1167 = vld [vmem:[#allocation6 + $0x360] sm:$0xff]
        %v1168 = vld [vmem:[#allocation6 + $0x368] sm:$0xff]
        %v1169 = vld [vmem:[#allocation6 + $0x370] sm:$0xff]
        %v1170 = vld [vmem:[#allocation6 + $0x378] sm:$0xff]
        %v1171 = vld [vmem:[#allocation6 + $0x380] sm:$0xff]
        %v1172 = vld [vmem:[#allocation6 + $0x388] sm:$0xff]
        %v1173 = vld [vmem:[#allocation6 + $0x390] sm:$0xff]
        %v1174 = vld [vmem:[#allocation6 + $0x398] sm:$0xff]
        %v1175 = vld [vmem:[#allocation6 + $0x3a0] sm:$0xff]
        %v1176 = vld [vmem:[#allocation6 + $0x3a8] sm:$0xff]
        %v1177 = vld [vmem:[#allocation6 + $0x3b0] sm:$0xff]
        %v1178 = vld [vmem:[#allocation6 + $0x3b8] sm:$0xff]
        %v1179 = vld [vmem:[#allocation6 + $0x3c0] sm:$0xff]
        %v1180 = vld [vmem:[#allocation6 + $0x3c8] sm:$0xff]
        %v1181 = vld [vmem:[#allocation6 + $0x3d0] sm:$0xff]
        %v1182 = vld [vmem:[#allocation6 + $0x3d8] sm:$0xff]
        %v1183 = vld [vmem:[#allocation6 + $0x3e0] sm:$0xff]
        %v1184 = vld [vmem:[#allocation6 + $0x3e8] sm:$0xff]
        %v1185 = vld [vmem:[#allocation6 + $0x3f0] sm:$0xff]
        %v1186 = vld [vmem:[#allocation6 + $0x3f8] sm:$0xff]
        %v1187 = vld [vmem:[#allocation6 + $0x400] sm:$0xff]
        %v1188 = vld [vmem:[#allocation6 + $0x408] sm:$0xff]
        %v1189 = vld [vmem:[#allocation6 + $0x410] sm:$0xff]
        %v1190 = vld [vmem:[#allocation6 + $0x418] sm:$0xff]
        %v1191 = vld [vmem:[#allocation6 + $0x420] sm:$0xff]
        %v1192 = vld [vmem:[#allocation6 + $0x428] sm:$0xff]
        %v1193 = vld [vmem:[#allocation6 + $0x430] sm:$0xff]
        %v1194 = vld [vmem:[#allocation6 + $0x438] sm:$0xff]
        %v1195 = vld [vmem:[#allocation6 + $0x440] sm:$0xff]
        %v1196 = vld [vmem:[#allocation6 + $0x448] sm:$0xff]
        %v1197 = vld [vmem:[#allocation6 + $0x450] sm:$0xff]
        %v1198 = vld [vmem:[#allocation6 + $0x458] sm:$0xff]
        %v1199 = vld [vmem:[#allocation6 + $0x460] sm:$0xff]
        %v1200 = vld [vmem:[#allocation6 + $0x468] sm:$0xff]
        %v1201 = vld [vmem:[#allocation6 + $0x470] sm:$0xff]
        %v1202 = vld [vmem:[#allocation6 + $0x478] sm:$0xff]
        %v1203 = vld [vmem:[#allocation6 + $0x480] sm:$0xff]
        %v1204 = vld [vmem:[#allocation6 + $0x488] sm:$0xff]
        %v1205 = vld [vmem:[#allocation6 + $0x490] sm:$0xff]
        %v1206 = vld [vmem:[#allocation6 + $0x498] sm:$0xff]
        %v1207 = vld [vmem:[#allocation6 + $0x4a0] sm:$0xff]
        %v1208 = vld [vmem:[#allocation6 + $0x4a8] sm:$0xff]
        %v1209 = vld [vmem:[#allocation6 + $0x4b0] sm:$0xff]
        %v1210 = vld [vmem:[#allocation6 + $0x4b8] sm:$0xff]
        %v1211 = vld [vmem:[#allocation6 + $0x4c0] sm:$0xff]
        %v1212 = vld [vmem:[#allocation6 + $0x4c8] sm:$0xff]
        %v1213 = vld [vmem:[#allocation6 + $0x4d0] sm:$0xff]
        %v1214 = vld [vmem:[#allocation6 + $0x4d8] sm:$0xff]
        %v1215 = vld [vmem:[#allocation6 + $0x4e0] sm:$0xff]
        %v1216 = vld [vmem:[#allocation6 + $0x4e8] sm:$0xff]
        %v1217 = vld [vmem:[#allocation6 + $0x4f0] sm:$0xff]
        %v1218 = vld [vmem:[#allocation6 + $0x4f8] sm:$0xff]
        %v1219 = vld [vmem:[#allocation6 + $0x500] sm:$0xff]
        %v1220 = vld [vmem:[#allocation6 + $0x508] sm:$0xff]
        %v1221 = vld [vmem:[#allocation6 + $0x510] sm:$0xff]
        %v1222 = vld [vmem:[#allocation6 + $0x518] sm:$0xff]
        %v1223 = vld [vmem:[#allocation6 + $0x520] sm:$0xff]
        %v1224 = vld [vmem:[#allocation6 + $0x528] sm:$0xff]
        %v1225 = vld [vmem:[#allocation6 + $0x530] sm:$0xff]
        %v1226 = vld [vmem:[#allocation6 + $0x538] sm:$0xff]
        %v1227 = vld [vmem:[#allocation6 + $0x540] sm:$0xff]
        %v1228 = vld [vmem:[#allocation6 + $0x548] sm:$0xff]
        %v1229 = vld [vmem:[#allocation6 + $0x550] sm:$0xff]
        %v1230 = vld [vmem:[#allocation6 + $0x558] sm:$0xff]
        %v1231 = vld [vmem:[#allocation6 + $0x560] sm:$0xff]
        %v1232 = vld [vmem:[#allocation6 + $0x568] sm:$0xff]
        %v1233 = vld [vmem:[#allocation6 + $0x570] sm:$0xff]
        %v1234 = vld [vmem:[#allocation6 + $0x578] sm:$0xff]
        %v1235 = vld [vmem:[#allocation6 + $0x580] sm:$0xff]
        %v1236 = vld [vmem:[#allocation6 + $0x588] sm:$0xff]
        %v1237 = vld [vmem:[#allocation6 + $0x590] sm:$0xff]
        %v1238 = vld [vmem:[#allocation6 + $0x598] sm:$0xff]
        %v1239 = vld [vmem:[#allocation6 + $0x5a0] sm:$0xff]
        %v1240 = vld [vmem:[#allocation6 + $0x5a8] sm:$0xff]
        %v1241 = vld [vmem:[#allocation6 + $0x5b0] sm:$0xff]
        %v1242 = vld [vmem:[#allocation6 + $0x5b8] sm:$0xff]
        %v1243 = vld [vmem:[#allocation6 + $0x5c0] sm:$0xff]
        %v1244 = vld [vmem:[#allocation6 + $0x5c8] sm:$0xff]
        %v1245 = vld [vmem:[#allocation6 + $0x5d0] sm:$0xff]
        %v1246 = vld [vmem:[#allocation6 + $0x5d8] sm:$0xff]
        %v1247 = vld [vmem:[#allocation6 + $0x5e0] sm:$0xff]
        %v1248 = vld [vmem:[#allocation6 + $0x5e8] sm:$0xff]
        %v1249 = vld [vmem:[#allocation6 + $0x5f0] sm:$0xff]
        %v1250 = vld [vmem:[#allocation6 + $0x5f8] sm:$0xff]
        %v1251 = vld [vmem:[#allocation6 + $0x600] sm:$0xff]
        %v1252 = vld [vmem:[#allocation6 + $0x608] sm:$0xff]
        %v1253 = vld [vmem:[#allocation6 + $0x610] sm:$0xff]
        %v1254 = vld [vmem:[#allocation6 + $0x618] sm:$0xff]
        %v1255 = vld [vmem:[#allocation6 + $0x620] sm:$0xff]
        %v1256 = vld [vmem:[#allocation6 + $0x628] sm:$0xff]
        %v1257 = vld [vmem:[#allocation6 + $0x630] sm:$0xff]
        %v1258 = vld [vmem:[#allocation6 + $0x638] sm:$0xff]
        %v1259 = vld [vmem:[#allocation6 + $0x640] sm:$0xff]
        %v1260 = vld [vmem:[#allocation6 + $0x648] sm:$0xff]
        %v1261 = vld [vmem:[#allocation6 + $0x650] sm:$0xff]
        %v1262 = vld [vmem:[#allocation6 + $0x658] sm:$0xff]
        %v1263 = vld [vmem:[#allocation6 + $0x660] sm:$0xff]
        %v1264 = vld [vmem:[#allocation6 + $0x668] sm:$0xff]
        %v1265 = vld [vmem:[#allocation6 + $0x670] sm:$0xff]
        %v1266 = vld [vmem:[#allocation6 + $0x678] sm:$0xff]
        %v1267 = vld [vmem:[#allocation6 + $0x680] sm:$0xff]
        %v1268 = vld [vmem:[#allocation6 + $0x688] sm:$0xff]
        %v1269 = vld [vmem:[#allocation6 + $0x690] sm:$0xff]
        %v1270 = vld [vmem:[#allocation6 + $0x698] sm:$0xff]
        %v1271 = vld [vmem:[#allocation6 + $0x6a0] sm:$0xff]
        %v1272 = vld [vmem:[#allocation6 + $0x6a8] sm:$0xff]
        %v1273 = vld [vmem:[#allocation6 + $0x6b0] sm:$0xff]
        %v1274 = vld [vmem:[#allocation6 + $0x6b8] sm:$0xff]
        %v1275 = vld [vmem:[#allocation6 + $0x6c0] sm:$0xff]
        %v1276 = vld [vmem:[#allocation6 + $0x6c8] sm:$0xff]
        %v1277 = vld [vmem:[#allocation6 + $0x6d0] sm:$0xff]
        %v1278 = vld [vmem:[#allocation6 + $0x6d8] sm:$0xff]
        %v1279 = vld [vmem:[#allocation6 + $0x6e0] sm:$0xff]
        %v1280 = vld [vmem:[#allocation6 + $0x6e8] sm:$0xff]
        %v1281 = vld [vmem:[#allocation6 + $0x6f0] sm:$0xff]
        %v1282 = vld [vmem:[#allocation6 + $0x6f8] sm:$0xff]
        %v1283 = vld [vmem:[#allocation6 + $0x700] sm:$0xff]
        %v1284 = vld [vmem:[#allocation6 + $0x708] sm:$0xff]
        %v1285 = vld [vmem:[#allocation6 + $0x710] sm:$0xff]
        %v1286 = vld [vmem:[#allocation6 + $0x718] sm:$0xff]
        %v1287 = vld [vmem:[#allocation6 + $0x720] sm:$0xff]
        %v1288 = vld [vmem:[#allocation6 + $0x728] sm:$0xff]
        %v1289 = vld [vmem:[#allocation6 + $0x730] sm:$0xff]
        %v1290 = vld [vmem:[#allocation6 + $0x738] sm:$0xff]
        %v1291 = vld [vmem:[#allocation6 + $0x740] sm:$0xff]
        %v1292 = vld [vmem:[#allocation6 + $0x748] sm:$0xff]
        %v1293 = vld [vmem:[#allocation6 + $0x750] sm:$0xff]
        %v1294 = vld [vmem:[#allocation6 + $0x758] sm:$0xff]
        %v1295 = vld [vmem:[#allocation6 + $0x760] sm:$0xff]
        %v1296 = vld [vmem:[#allocation6 + $0x768] sm:$0xff]
        %v1297 = vld [vmem:[#allocation6 + $0x770] sm:$0xff]
        %v1298 = vld [vmem:[#allocation6 + $0x778] sm:$0xff]
        %v1299 = vld [vmem:[#allocation6 + $0x780] sm:$0xff]
        %v1300 = vld [vmem:[#allocation6 + $0x788] sm:$0xff]
        %v1301 = vld [vmem:[#allocation6 + $0x790] sm:$0xff]
        %v1302 = vld [vmem:[#allocation6 + $0x798] sm:$0xff]
        %v1303 = vld [vmem:[#allocation6 + $0x7a0] sm:$0xff]
        %v1304 = vld [vmem:[#allocation6 + $0x7a8] sm:$0xff]
        %v1305 = vld [vmem:[#allocation6 + $0x7b0] sm:$0xff]
        %v1306 = vld [vmem:[#allocation6 + $0x7b8] sm:$0xff]
        %v1307 = vld [vmem:[#allocation6 + $0x7c0] sm:$0xff]
        %v1308 = vld [vmem:[#allocation6 + $0x7c8] sm:$0xff]
        %v1309 = vld [vmem:[#allocation6 + $0x7d0] sm:$0xff]
        %v1310 = vld [vmem:[#allocation6 + $0x7d8] sm:$0xff]
        %v1311 = vld [vmem:[#allocation6 + $0x7e0] sm:$0xff]
        %v1312 = vld [vmem:[#allocation6 + $0x7e8] sm:$0xff]
        %v1313 = vld [vmem:[#allocation6 + $0x7f0] sm:$0xff]
        %v1314 = vld [vmem:[#allocation6 + $0x7f8] sm:$0xff]
        %1315 = vmatprep.subr.mxu0 %v1060
        %1316 = vmatpush1.msra.mxu0 %v1059
        %1317 = vmatprep.subr.mxu0 %v1068
        %1318 = vmatpush1.msra.mxu0 %v1067
        %1319 = vmatprep.subr.mxu0 %v1076
        %1320 = vmatpush1.msra.mxu0 %v1075
        %1321 = vmatprep.subr.mxu0 %v1084
        %1322 = vmatpush1.msra.mxu0 %v1083
        %1323 = vmatprep.subr.mxu0 %v1092
        %1324 = vmatpush1.msra.mxu0 %v1091
        %1325 = vmatprep.subr.mxu0 %v1100
        %1326 = vmatpush1.msra.mxu0 %v1099
        %1327 = vmatprep.subr.mxu0 %v1108
        %1328 = vmatpush1.msra.mxu0 %v1107
        %1329 = vmatprep.subr.mxu0 %v1116
        %1330 = vmatpush1.msra.mxu0 %v1115
        %1331 = vmatprep.subr.mxu0 %v1124
        %1332 = vmatpush1.msra.mxu0 %v1123
        %1333 = vmatprep.subr.mxu0 %v1132
        %1334 = vmatpush1.msra.mxu0 %v1131
        %1335 = vmatprep.subr.mxu0 %v1140
        %1336 = vmatpush1.msra.mxu0 %v1139
        %1337 = vmatprep.subr.mxu0 %v1148
        %1338 = vmatpush1.msra.mxu0 %v1147
        %1339 = vmatprep.subr.mxu0 %v1156
        %1340 = vmatpush1.msra.mxu0 %v1155
        %1341 = vmatprep.subr.mxu0 %v1164
        %1342 = vmatpush1.msra.mxu0 %v1163
        %1343 = vmatprep.subr.mxu0 %v1172
        %1344 = vmatpush1.msra.mxu0 %v1171
        %1345 = vmatprep.subr.mxu0 %v1180
        %1346 = vmatpush1.msra.mxu0 %v1179
        %1347 = vmatprep.subr.mxu0 %v1188
        %1348 = vmatpush1.msra.mxu0 %v1187
        %1349 = vmatprep.subr.mxu0 %v1196
        %1350 = vmatpush1.msra.mxu0 %v1195
        %1351 = vmatprep.subr.mxu0 %v1204
        %1352 = vmatpush1.msra.mxu0 %v1203
        %1353 = vmatprep.subr.mxu0 %v1212
        %1354 = vmatpush1.msra.mxu0 %v1211
        %1355 = vmatprep.subr.mxu0 %v1220
        %1356 = vmatpush1.msra.mxu0 %v1219
        %1357 = vmatprep.subr.mxu0 %v1228
        %1358 = vmatpush1.msra.mxu0 %v1227
        %1359 = vmatprep.subr.mxu0 %v1236
        %1360 = vmatpush1.msra.mxu0 %v1235
        %1361 = vmatprep.subr.mxu0 %v1244
        %1362 = vmatpush1.msra.mxu0 %v1243
        %1363 = vmatprep.subr.mxu0 %v1252
        %1364 = vmatpush1.msra.mxu0 %v1251
        %1365 = vmatprep.subr.mxu0 %v1260
        %1366 = vmatpush1.msra.mxu0 %v1259
        %1367 = vmatprep.subr.mxu0 %v1268
        %1368 = vmatpush1.msra.mxu0 %v1267
        %1369 = vmatprep.subr.mxu0 %v1276
        %1370 = vmatpush1.msra.mxu0 %v1275
        %1371 = vmatprep.subr.mxu0 %v1284
        %1372 = vmatpush1.msra.mxu0 %v1283
        %1373 = vmatprep.subr.mxu0 %v1292
        %1374 = vmatpush1.msra.mxu0 %v1291
        %1375 = vmatprep.subr.mxu0 %v1300
        %1376 = vmatpush1.msra.mxu0 %v1299
        %1377 = vmatprep.subr.mxu0 %v1308
        %1378 = vmatpush1.msra.mxu0 %v1307
        %1379 = vmatprep.mubr.f32.mxu0 %v1058
        %1380 = vmatmul.mubr.f32.gmra.mrb[0].mxu0 %v1057
        %v1381 = vpop.f32.mrb[0].mxu0
        %v1382 = vadd.f32 0.0, %v1381
        %v1383 = vpop.f32.mrb[0].mxu0
        %v1384 = vadd.f32 0.0, %v1383
        %1385 = vdwg.mxu0
        %1386 = vmatprep.subr.mxu0 %v1062
        %1387 = vmatpush1.msra.mxu0 %v1061
        %1388 = vmatprep.subr.mxu0 %v1070
        %1389 = vmatpush1.msra.mxu0 %v1069
        %1390 = vmatprep.subr.mxu0 %v1078
        %1391 = vmatpush1.msra.mxu0 %v1077
        %1392 = vmatprep.subr.mxu0 %v1086
        %1393 = vmatpush1.msra.mxu0 %v1085
        %1394 = vmatprep.subr.mxu0 %v1094
        %1395 = vmatpush1.msra.mxu0 %v1093
        %1396 = vmatprep.subr.mxu0 %v1102
        %1397 = vmatpush1.msra.mxu0 %v1101
        %1398 = vmatprep.subr.mxu0 %v1110
        %1399 = vmatpush1.msra.mxu0 %v1109
        %1400 = vmatprep.subr.mxu0 %v1118
        %1401 = vmatpush1.msra.mxu0 %v1117
        %1402 = vmatprep.subr.mxu0 %v1126
        %1403 = vmatpush1.msra.mxu0 %v1125
        %1404 = vmatprep.subr.mxu0 %v1134
        %1405 = vmatpush1.msra.mxu0 %v1133
        %1406 = vmatprep.subr.mxu0 %v1142
        %1407 = vmatpush1.msra.mxu0 %v1141
        %1408 = vmatprep.subr.mxu0 %v1150
        %1409 = vmatpush1.msra.mxu0 %v1149
        %1410 = vmatprep.subr.mxu0 %v1158
        %1411 = vmatpush1.msra.mxu0 %v1157
        %1412 = vmatprep.subr.mxu0 %v1166
        %1413 = vmatpush1.msra.mxu0 %v1165
        %1414 = vmatprep.subr.mxu0 %v1174
        %1415 = vmatpush1.msra.mxu0 %v1173
        %1416 = vmatprep.subr.mxu0 %v1182
        %1417 = vmatpush1.msra.mxu0 %v1181
        %1418 = vmatprep.subr.mxu0 %v1190
        %1419 = vmatpush1.msra.mxu0 %v1189
        %1420 = vmatprep.subr.mxu0 %v1198
        %1421 = vmatpush1.msra.mxu0 %v1197
        %1422 = vmatprep.subr.mxu0 %v1206
        %1423 = vmatpush1.msra.mxu0 %v1205
        %1424 = vmatprep.subr.mxu0 %v1214
        %1425 = vmatpush1.msra.mxu0 %v1213
        %1426 = vmatprep.subr.mxu0 %v1222
        %1427 = vmatpush1.msra.mxu0 %v1221
        %1428 = vmatprep.subr.mxu0 %v1230
        %1429 = vmatpush1.msra.mxu0 %v1229
        %1430 = vmatprep.subr.mxu0 %v1238
        %1431 = vmatpush1.msra.mxu0 %v1237
        %1432 = vmatprep.subr.mxu0 %v1246
        %1433 = vmatpush1.msra.mxu0 %v1245
        %1434 = vmatprep.subr.mxu0 %v1254
        %1435 = vmatpush1.msra.mxu0 %v1253
        %1436 = vmatprep.subr.mxu0 %v1262
        %1437 = vmatpush1.msra.mxu0 %v1261
        %1438 = vmatprep.subr.mxu0 %v1270
        %1439 = vmatpush1.msra.mxu0 %v1269
        %1440 = vmatprep.subr.mxu0 %v1278
        %1441 = vmatpush1.msra.mxu0 %v1277
        %1442 = vmatprep.subr.mxu0 %v1286
        %1443 = vmatpush1.msra.mxu0 %v1285
        %1444 = vmatprep.subr.mxu0 %v1294
        %1445 = vmatpush1.msra.mxu0 %v1293
        %1446 = vmatprep.subr.mxu0 %v1302
        %1447 = vmatpush1.msra.mxu0 %v1301
        %1448 = vmatprep.subr.mxu0 %v1310
        %1449 = vmatpush1.msra.mxu0 %v1309
        %1450 = vmatprep.mubr.f32.mxu0 %v1058
        %1451 = vmatmul.mubr.f32.gmra.mrb[0].mxu0 %v1057
        %v1452 = vpop.f32.mrb[0].mxu0
        %v1453 = vadd.f32 0.0, %v1452
        %v1454 = vpop.f32.mrb[0].mxu0
        %v1455 = vadd.f32 0.0, %v1454
        %1456 = vdwg.mxu0
        %1457 = vmatprep.subr.mxu0 %v1064
        %1458 = vmatpush1.msra.mxu0 %v1063
        %1459 = vmatprep.subr.mxu0 %v1072
        %1460 = vmatpush1.msra.mxu0 %v1071
        %1461 = vmatprep.subr.mxu0 %v1080
        %1462 = vmatpush1.msra.mxu0 %v1079
        %1463 = vmatprep.subr.mxu0 %v1088
        %1464 = vmatpush1.msra.mxu0 %v1087
        %1465 = vmatprep.subr.mxu0 %v1096
        %1466 = vmatpush1.msra.mxu0 %v1095
        %1467 = vmatprep.subr.mxu0 %v1104
        %1468 = vmatpush1.msra.mxu0 %v1103
        %1469 = vmatprep.subr.mxu0 %v1112
        %1470 = vmatpush1.msra.mxu0 %v1111
        %1471 = vmatprep.subr.mxu0 %v1120
        %1472 = vmatpush1.msra.mxu0 %v1119
        %1473 = vmatprep.subr.mxu0 %v1128
        %1474 = vmatpush1.msra.mxu0 %v1127
        %1475 = vmatprep.subr.mxu0 %v1136
        %1476 = vmatpush1.msra.mxu0 %v1135
        %1477 = vmatprep.subr.mxu0 %v1144
        %1478 = vmatpush1.msra.mxu0 %v1143
        %1479 = vmatprep.subr.mxu0 %v1152
        %1480 = vmatpush1.msra.mxu0 %v1151
        %1481 = vmatprep.subr.mxu0 %v1160
        %1482 = vmatpush1.msra.mxu0 %v1159
        %1483 = vmatprep.subr.mxu0 %v1168
        %1484 = vmatpush1.msra.mxu0 %v1167
        %1485 = vmatprep.subr.mxu0 %v1176
        %1486 = vmatpush1.msra.mxu0 %v1175
        %1487 = vmatprep.subr.mxu0 %v1184
        %1488 = vmatpush1.msra.mxu0 %v1183
        %1489 = vmatprep.subr.mxu0 %v1192
        %1490 = vmatpush1.msra.mxu0 %v1191
        %1491 = vmatprep.subr.mxu0 %v1200
        %1492 = vmatpush1.msra.mxu0 %v1199
        %1493 = vmatprep.subr.mxu0 %v1208
        %1494 = vmatpush1.msra.mxu0 %v1207
        %1495 = vmatprep.subr.mxu0 %v1216
        %1496 = vmatpush1.msra.mxu0 %v1215
        %1497 = vmatprep.subr.mxu0 %v1224
        %1498 = vmatpush1.msra.mxu0 %v1223
        %1499 = vmatprep.subr.mxu0 %v1232
        %1500 = vmatpush1.msra.mxu0 %v1231
        %1501 = vmatprep.subr.mxu0 %v1240
        %1502 = vmatpush1.msra.mxu0 %v1239
        %1503 = vmatprep.subr.mxu0 %v1248
        %1504 = vmatpush1.msra.mxu0 %v1247
        %1505 = vmatprep.subr.mxu0 %v1256
        %1506 = vmatpush1.msra.mxu0 %v1255
        %1507 = vmatprep.subr.mxu0 %v1264
        %1508 = vmatpush1.msra.mxu0 %v1263
        %1509 = vmatprep.subr.mxu0 %v1272
        %1510 = vmatpush1.msra.mxu0 %v1271
        %1511 = vmatprep.subr.mxu0 %v1280
        %1512 = vmatpush1.msra.mxu0 %v1279
        %1513 = vmatprep.subr.mxu0 %v1288
        %1514 = vmatpush1.msra.mxu0 %v1287
        %1515 = vmatprep.subr.mxu0 %v1296
        %1516 = vmatpush1.msra.mxu0 %v1295
        %1517 = vmatprep.subr.mxu0 %v1304
        %1518 = vmatpush1.msra.mxu0 %v1303
        %1519 = vmatprep.subr.mxu0 %v1312
        %1520 = vmatpush1.msra.mxu0 %v1311
        %1521 = vmatprep.mubr.f32.mxu0 %v1058
        %1522 = vmatmul.mubr.f32.gmra.mrb[0].mxu0 %v1057
        %v1523 = vpop.f32.mrb[0].mxu0
        %v1524 = vadd.f32 0.0, %v1523
        %v1525 = vpop.f32.mrb[0].mxu0
        %v1526 = vadd.f32 0.0, %v1525
        %1527 = vdwg.mxu0
        %1528 = vmatprep.subr.mxu0 %v1066
        %1529 = vmatpush1.msra.mxu0 %v1065
        %1530 = vmatprep.subr.mxu0 %v1074
        %1531 = vmatpush1.msra.mxu0 %v1073
        %1532 = vmatprep.subr.mxu0 %v1082
        %1533 = vmatpush1.msra.mxu0 %v1081
        %1534 = vmatprep.subr.mxu0 %v1090
        %1535 = vmatpush1.msra.mxu0 %v1089
        %1536 = vmatprep.subr.mxu0 %v1098
        %1537 = vmatpush1.msra.mxu0 %v1097
        %1538 = vmatprep.subr.mxu0 %v1106
        %1539 = vmatpush1.msra.mxu0 %v1105
        %1540 = vmatprep.subr.mxu0 %v1114
        %1541 = vmatpush1.msra.mxu0 %v1113
        %1542 = vmatprep.subr.mxu0 %v1122
        %1543 = vmatpush1.msra.mxu0 %v1121
        %1544 = vmatprep.subr.mxu0 %v1130
        %1545 = vmatpush1.msra.mxu0 %v1129
        %1546 = vmatprep.subr.mxu0 %v1138
        %1547 = vmatpush1.msra.mxu0 %v1137
        %1548 = vmatprep.subr.mxu0 %v1146
        %1549 = vmatpush1.msra.mxu0 %v1145
        %1550 = vmatprep.subr.mxu0 %v1154
        %1551 = vmatpush1.msra.mxu0 %v1153
        %1552 = vmatprep.subr.mxu0 %v1162
        %1553 = vmatpush1.msra.mxu0 %v1161
        %1554 = vmatprep.subr.mxu0 %v1170
        %1555 = vmatpush1.msra.mxu0 %v1169
        %1556 = vmatprep.subr.mxu0 %v1178
        %1557 = vmatpush1.msra.mxu0 %v1177
        %1558 = vmatprep.subr.mxu0 %v1186
        %1559 = vmatpush1.msra.mxu0 %v1185
        %1560 = vmatprep.subr.mxu0 %v1194
        %1561 = vmatpush1.msra.mxu0 %v1193
        %1562 = vmatprep.subr.mxu0 %v1202
        %1563 = vmatpush1.msra.mxu0 %v1201
        %1564 = vmatprep.subr.mxu0 %v1210
        %1565 = vmatpush1.msra.mxu0 %v1209
        %1566 = vmatprep.subr.mxu0 %v1218
        %1567 = vmatpush1.msra.mxu0 %v1217
        %1568 = vmatprep.subr.mxu0 %v1226
        %1569 = vmatpush1.msra.mxu0 %v1225
        %1570 = vmatprep.subr.mxu0 %v1234
        %1571 = vmatpush1.msra.mxu0 %v1233
        %1572 = vmatprep.subr.mxu0 %v1242
        %1573 = vmatpush1.msra.mxu0 %v1241
        %1574 = vmatprep.subr.mxu0 %v1250
        %1575 = vmatpush1.msra.mxu0 %v1249
        %1576 = vmatprep.subr.mxu0 %v1258
        %1577 = vmatpush1.msra.mxu0 %v1257
        %1578 = vmatprep.subr.mxu0 %v1266
        %1579 = vmatpush1.msra.mxu0 %v1265
        %1580 = vmatprep.subr.mxu0 %v1274
        %1581 = vmatpush1.msra.mxu0 %v1273
        %1582 = vmatprep.subr.mxu0 %v1282
        %1583 = vmatpush1.msra.mxu0 %v1281
        %1584 = vmatprep.subr.mxu0 %v1290
        %1585 = vmatpush1.msra.mxu0 %v1289
        %1586 = vmatprep.subr.mxu0 %v1298
        %1587 = vmatpush1.msra.mxu0 %v1297
        %1588 = vmatprep.subr.mxu0 %v1306
        %1589 = vmatpush1.msra.mxu0 %v1305
        %1590 = vmatprep.subr.mxu0 %v1314
        %1591 = vmatpush1.msra.mxu0 %v1313
        %1592 = vmatprep.mubr.f32.mxu0 %v1058
        %1593 = vmatmul.mubr.f32.gmra.mrb[0].mxu0 %v1057
        %v1594 = vpop.f32.mrb[0].mxu0
        %v1595 = vadd.f32 0.0, %v1594
        %v1596 = vpop.f32.mrb[0].mxu0
        %v1597 = vadd.f32 0.0, %v1596
        %1598 = vdwg.mxu0
        %v1599 = vld [vmem:[#allocation2] sm:$0xff]
        %v1600 = vld [vmem:[#allocation2 + $0x8] sm:$0xff]
        %v1601 = vld [vmem:[#allocation2 + $0x10] sm:$0xff]
        %v1602 = vld [vmem:[#allocation2 + $0x18] sm:$0xff]
        %v1603 = vadd.f32 %v1599, %v1382
        %v1604 = vadd.f32 %v1600, %v1384
        %v1605 = vadd.f32 %v1601, %v1453
        %v1606 = vadd.f32 %v1602, %v1455
        %v1607 = vld [vmem:[%s1044 + $0x20] sm:$0xff]
        %v1608 = vld [vmem:[%s1044 + $0x28] sm:$0xff]
        %v1609 = vld [vmem:[%s1044 + $0x30] sm:$0xff]
        %v1610 = vld [vmem:[%s1044 + $0x38] sm:$0xff]
        %v1611 = vadd.f32 %v1607, %v1524
        %v1612 = vadd.f32 %v1608, %v1526
        %v1613 = vadd.f32 %v1609, %v1595
        %v1614 = vadd.f32 %v1610, %v1597
        %v1615 = vld [vmem:[#allocation4] sm:$0xff]
        %v1616 = vxor.u32 %v1603, 2147483648
        %v1617 = vmul.f32 %v1616, 1.442695
        %v1618 = vpow.pop %v1617
        %v1619 = vadd.f32 %v1618, 1.0
        %v1620 = vrcp.pop %v1619
        %v1621 = vmul.f32 1.0, %v1620
        %v1622 = vxor.u32 %v1604, 2147483648
        %v1623 = vmul.f32 %v1622, 1.442695
        %v1624 = vpow.pop %v1623
        %v1625 = vadd.f32 %v1624, 1.0
        %v1626 = vrcp.pop %v1625
        %v1627 = vmul.f32 1.0, %v1626
        %v1628 = vtanh.pop %v1605
        %v1629 = vxor.u32 %v1606, 2147483648
        %v1630 = vmul.f32 %v1629, 1.442695
        %v1631 = vpow.pop %v1630
        %v1632 = vadd.f32 %v1631, 1.0
        %v1633 = vrcp.pop %v1632
        %v1634 = vmul.f32 1.0, %v1633
        %v1635 = vmul.f32 %v1627, %v1615
        %v1636 = vmul.f32 %v1621, %v1628
        %v1637 = vadd.f32 %v1635, %v1636
        %v1638 = vtanh.pop %v1637
        %v1639 = vmul.f32 %v1634, %v1638
        %v1640 = vld [vmem:[#allocation4 + $0x8] sm:$0xff]
        %v1641 = vxor.u32 %v1611, 2147483648
        %v1642 = vmul.f32 %v1641, 1.442695
        %v1643 = vpow.pop %v1642
        %v1644 = vadd.f32 %v1643, 1.0
        %v1645 = vrcp.pop %v1644
        %v1646 = vmul.f32 1.0, %v1645
        %v1647 = vxor.u32 %v1612, 2147483648
        %v1648 = vmul.f32 %v1647, 1.442695
        %v1649 = vpow.pop %v1648
        %v1650 = vadd.f32 %v1649, 1.0
        %v1651 = vrcp.pop %v1650
        %v1652 = vmul.f32 1.0, %v1651
        %v1653 = vtanh.pop %v1613
        %v1654 = vxor.u32 %v1614, 2147483648
        %v1655 = vmul.f32 %v1654, 1.442695
        %v1656 = vpow.pop %v1655
        %v1657 = vadd.f32 %v1656, 1.0
        %v1658 = vrcp.pop %v1657
        %v1659 = vmul.f32 1.0, %v1658
        %v1660 = vmul.f32 %v1652, %v1640
        %v1661 = vmul.f32 %v1646, %v1653
        %v1662 = vadd.f32 %v1660, %v1661
        %v1663 = vtanh.pop %v1662
        %v1664 = vmul.f32 %v1659, %v1663
        %1665 = vst [vmem:[#allocation4] sm:$0xff] %v1637
        %1666 = vst [vmem:[#allocation4 + $0x8] sm:$0xff] %v1662
        %1667 = vst [vmem:[#allocation3] sm:$0xff] %v1639
        %1668 = vst [vmem:[#allocation3 + $0x8] sm:$0xff] %v1664
        %1669 = vst [vmem:[%s358] sm:$0xff] %v1639
        %s1670 = scalar_lea.vmem %s358, 16 [#allocation12]
        %1671 = vst [vmem:[%s1670 + $0x8] sm:$0xff] %v1664
        %v1672 = vld [vmem:[#allocation3] sm:$0xff]
        %v1673 = vld [vmem:[#allocation3 + $0x8] sm:$0xff]
        %v1674 = vld [vmem:[#allocation6] sm:$0xff]
        %v1675 = vld [vmem:[#allocation6 + $0x8] sm:$0xff]
        %v1676 = vld [vmem:[#allocation6 + $0x10] sm:$0xff]
        %v1677 = vld [vmem:[#allocation6 + $0x18] sm:$0xff]
        %v1678 = vld [vmem:[#allocation6 + $0x20] sm:$0xff]
        %v1679 = vld [vmem:[#allocation6 + $0x28] sm:$0xff]
        %v1680 = vld [vmem:[#allocation6 + $0x30] sm:$0xff]
        %v1681 = vld [vmem:[#allocation6 + $0x38] sm:$0xff]
        %v1682 = vld [vmem:[#allocation6 + $0x40] sm:$0xff]
        %v1683 = vld [vmem:[#allocation6 + $0x48] sm:$0xff]
        %v1684 = vld [vmem:[#allocation6 + $0x50] sm:$0xff]
        %v1685 = vld [vmem:[#allocation6 + $0x58] sm:$0xff]
        %v1686 = vld [vmem:[#allocation6 + $0x60] sm:$0xff]
        %v1687 = vld [vmem:[#allocation6 + $0x68] sm:$0xff]
        %v1688 = vld [vmem:[#allocation6 + $0x70] sm:$0xff]
        %v1689 = vld [vmem:[#allocation6 + $0x78] sm:$0xff]
        %v1690 = vld [vmem:[#allocation6 + $0x80] sm:$0xff]
        %v1691 = vld [vmem:[#allocation6 + $0x88] sm:$0xff]
        %v1692 = vld [vmem:[#allocation6 + $0x90] sm:$0xff]
        %v1693 = vld [vmem:[#allocation6 + $0x98] sm:$0xff]
        %v1694 = vld [vmem:[#allocation6 + $0xa0] sm:$0xff]
        %v1695 = vld [vmem:[#allocation6 + $0xa8] sm:$0xff]
        %v1696 = vld [vmem:[#allocation6 + $0xb0] sm:$0xff]
        %v1697 = vld [vmem:[#allocation6 + $0xb8] sm:$0xff]
        %v1698 = vld [vmem:[#allocation6 + $0xc0] sm:$0xff]
        %v1699 = vld [vmem:[#allocation6 + $0xc8] sm:$0xff]
        %v1700 = vld [vmem:[#allocation6 + $0xd0] sm:$0xff]
        %v1701 = vld [vmem:[#allocation6 + $0xd8] sm:$0xff]
        %v1702 = vld [vmem:[#allocation6 + $0xe0] sm:$0xff]
        %v1703 = vld [vmem:[#allocation6 + $0xe8] sm:$0xff]
        %v1704 = vld [vmem:[#allocation6 + $0xf0] sm:$0xff]
        %v1705 = vld [vmem:[#allocation6 + $0xf8] sm:$0xff]
        %v1706 = vld [vmem:[#allocation6 + $0x100] sm:$0xff]
        %v1707 = vld [vmem:[#allocation6 + $0x108] sm:$0xff]
        %v1708 = vld [vmem:[#allocation6 + $0x110] sm:$0xff]
        %v1709 = vld [vmem:[#allocation6 + $0x118] sm:$0xff]
        %v1710 = vld [vmem:[#allocation6 + $0x120] sm:$0xff]
        %v1711 = vld [vmem:[#allocation6 + $0x128] sm:$0xff]
        %v1712 = vld [vmem:[#allocation6 + $0x130] sm:$0xff]
        %v1713 = vld [vmem:[#allocation6 + $0x138] sm:$0xff]
        %v1714 = vld [vmem:[#allocation6 + $0x140] sm:$0xff]
        %v1715 = vld [vmem:[#allocation6 + $0x148] sm:$0xff]
        %v1716 = vld [vmem:[#allocation6 + $0x150] sm:$0xff]
        %v1717 = vld [vmem:[#allocation6 + $0x158] sm:$0xff]
        %v1718 = vld [vmem:[#allocation6 + $0x160] sm:$0xff]
        %v1719 = vld [vmem:[#allocation6 + $0x168] sm:$0xff]
        %v1720 = vld [vmem:[#allocation6 + $0x170] sm:$0xff]
        %v1721 = vld [vmem:[#allocation6 + $0x178] sm:$0xff]
        %v1722 = vld [vmem:[#allocation6 + $0x180] sm:$0xff]
        %v1723 = vld [vmem:[#allocation6 + $0x188] sm:$0xff]
        %v1724 = vld [vmem:[#allocation6 + $0x190] sm:$0xff]
        %v1725 = vld [vmem:[#allocation6 + $0x198] sm:$0xff]
        %v1726 = vld [vmem:[#allocation6 + $0x1a0] sm:$0xff]
        %v1727 = vld [vmem:[#allocation6 + $0x1a8] sm:$0xff]
        %v1728 = vld [vmem:[#allocation6 + $0x1b0] sm:$0xff]
        %v1729 = vld [vmem:[#allocation6 + $0x1b8] sm:$0xff]
        %v1730 = vld [vmem:[#allocation6 + $0x1c0] sm:$0xff]
        %v1731 = vld [vmem:[#allocation6 + $0x1c8] sm:$0xff]
        %v1732 = vld [vmem:[#allocation6 + $0x1d0] sm:$0xff]
        %v1733 = vld [vmem:[#allocation6 + $0x1d8] sm:$0xff]
        %v1734 = vld [vmem:[#allocation6 + $0x1e0] sm:$0xff]
        %v1735 = vld [vmem:[#allocation6 + $0x1e8] sm:$0xff]
        %v1736 = vld [vmem:[#allocation6 + $0x1f0] sm:$0xff]
        %v1737 = vld [vmem:[#allocation6 + $0x1f8] sm:$0xff]
        %v1738 = vld [vmem:[#allocation6 + $0x200] sm:$0xff]
        %v1739 = vld [vmem:[#allocation6 + $0x208] sm:$0xff]
        %v1740 = vld [vmem:[#allocation6 + $0x210] sm:$0xff]
        %v1741 = vld [vmem:[#allocation6 + $0x218] sm:$0xff]
        %v1742 = vld [vmem:[#allocation6 + $0x220] sm:$0xff]
        %v1743 = vld [vmem:[#allocation6 + $0x228] sm:$0xff]
        %v1744 = vld [vmem:[#allocation6 + $0x230] sm:$0xff]
        %v1745 = vld [vmem:[#allocation6 + $0x238] sm:$0xff]
        %v1746 = vld [vmem:[#allocation6 + $0x240] sm:$0xff]
        %v1747 = vld [vmem:[#allocation6 + $0x248] sm:$0xff]
        %v1748 = vld [vmem:[#allocation6 + $0x250] sm:$0xff]
        %v1749 = vld [vmem:[#allocation6 + $0x258] sm:$0xff]
        %v1750 = vld [vmem:[#allocation6 + $0x260] sm:$0xff]
        %v1751 = vld [vmem:[#allocation6 + $0x268] sm:$0xff]
        %v1752 = vld [vmem:[#allocation6 + $0x270] sm:$0xff]
        %v1753 = vld [vmem:[#allocation6 + $0x278] sm:$0xff]
        %v1754 = vld [vmem:[#allocation6 + $0x280] sm:$0xff]
        %v1755 = vld [vmem:[#allocation6 + $0x288] sm:$0xff]
        %v1756 = vld [vmem:[#allocation6 + $0x290] sm:$0xff]
        %v1757 = vld [vmem:[#allocation6 + $0x298] sm:$0xff]
        %v1758 = vld [vmem:[#allocation6 + $0x2a0] sm:$0xff]
        %v1759 = vld [vmem:[#allocation6 + $0x2a8] sm:$0xff]
        %v1760 = vld [vmem:[#allocation6 + $0x2b0] sm:$0xff]
        %v1761 = vld [vmem:[#allocation6 + $0x2b8] sm:$0xff]
        %v1762 = vld [vmem:[#allocation6 + $0x2c0] sm:$0xff]
        %v1763 = vld [vmem:[#allocation6 + $0x2c8] sm:$0xff]
        %v1764 = vld [vmem:[#allocation6 + $0x2d0] sm:$0xff]
        %v1765 = vld [vmem:[#allocation6 + $0x2d8] sm:$0xff]
        %v1766 = vld [vmem:[#allocation6 + $0x2e0] sm:$0xff]
        %v1767 = vld [vmem:[#allocation6 + $0x2e8] sm:$0xff]
        %v1768 = vld [vmem:[#allocation6 + $0x2f0] sm:$0xff]
        %v1769 = vld [vmem:[#allocation6 + $0x2f8] sm:$0xff]
        %v1770 = vld [vmem:[#allocation6 + $0x300] sm:$0xff]
        %v1771 = vld [vmem:[#allocation6 + $0x308] sm:$0xff]
        %v1772 = vld [vmem:[#allocation6 + $0x310] sm:$0xff]
        %v1773 = vld [vmem:[#allocation6 + $0x318] sm:$0xff]
        %v1774 = vld [vmem:[#allocation6 + $0x320] sm:$0xff]
        %v1775 = vld [vmem:[#allocation6 + $0x328] sm:$0xff]
        %v1776 = vld [vmem:[#allocation6 + $0x330] sm:$0xff]
        %v1777 = vld [vmem:[#allocation6 + $0x338] sm:$0xff]
        %v1778 = vld [vmem:[#allocation6 + $0x340] sm:$0xff]
        %v1779 = vld [vmem:[#allocation6 + $0x348] sm:$0xff]
        %v1780 = vld [vmem:[#allocation6 + $0x350] sm:$0xff]
        %v1781 = vld [vmem:[#allocation6 + $0x358] sm:$0xff]
        %v1782 = vld [vmem:[#allocation6 + $0x360] sm:$0xff]
        %v1783 = vld [vmem:[#allocation6 + $0x368] sm:$0xff]
        %v1784 = vld [vmem:[#allocation6 + $0x370] sm:$0xff]
        %v1785 = vld [vmem:[#allocation6 + $0x378] sm:$0xff]
        %v1786 = vld [vmem:[#allocation6 + $0x380] sm:$0xff]
        %v1787 = vld [vmem:[#allocation6 + $0x388] sm:$0xff]
        %v1788 = vld [vmem:[#allocation6 + $0x390] sm:$0xff]
        %v1789 = vld [vmem:[#allocation6 + $0x398] sm:$0xff]
        %v1790 = vld [vmem:[#allocation6 + $0x3a0] sm:$0xff]
        %v1791 = vld [vmem:[#allocation6 + $0x3a8] sm:$0xff]
        %v1792 = vld [vmem:[#allocation6 + $0x3b0] sm:$0xff]
        %v1793 = vld [vmem:[#allocation6 + $0x3b8] sm:$0xff]
        %v1794 = vld [vmem:[#allocation6 + $0x3c0] sm:$0xff]
        %v1795 = vld [vmem:[#allocation6 + $0x3c8] sm:$0xff]
        %v1796 = vld [vmem:[#allocation6 + $0x3d0] sm:$0xff]
        %v1797 = vld [vmem:[#allocation6 + $0x3d8] sm:$0xff]
        %v1798 = vld [vmem:[#allocation6 + $0x3e0] sm:$0xff]
        %v1799 = vld [vmem:[#allocation6 + $0x3e8] sm:$0xff]
        %v1800 = vld [vmem:[#allocation6 + $0x3f0] sm:$0xff]
        %v1801 = vld [vmem:[#allocation6 + $0x3f8] sm:$0xff]
        %v1802 = vld [vmem:[#allocation6 + $0x400] sm:$0xff]
        %v1803 = vld [vmem:[#allocation6 + $0x408] sm:$0xff]
        %v1804 = vld [vmem:[#allocation6 + $0x410] sm:$0xff]
        %v1805 = vld [vmem:[#allocation6 + $0x418] sm:$0xff]
        %v1806 = vld [vmem:[#allocation6 + $0x420] sm:$0xff]
        %v1807 = vld [vmem:[#allocation6 + $0x428] sm:$0xff]
        %v1808 = vld [vmem:[#allocation6 + $0x430] sm:$0xff]
        %v1809 = vld [vmem:[#allocation6 + $0x438] sm:$0xff]
        %v1810 = vld [vmem:[#allocation6 + $0x440] sm:$0xff]
        %v1811 = vld [vmem:[#allocation6 + $0x448] sm:$0xff]
        %v1812 = vld [vmem:[#allocation6 + $0x450] sm:$0xff]
        %v1813 = vld [vmem:[#allocation6 + $0x458] sm:$0xff]
        %v1814 = vld [vmem:[#allocation6 + $0x460] sm:$0xff]
        %v1815 = vld [vmem:[#allocation6 + $0x468] sm:$0xff]
        %v1816 = vld [vmem:[#allocation6 + $0x470] sm:$0xff]
        %v1817 = vld [vmem:[#allocation6 + $0x478] sm:$0xff]
        %v1818 = vld [vmem:[#allocation6 + $0x480] sm:$0xff]
        %v1819 = vld [vmem:[#allocation6 + $0x488] sm:$0xff]
        %v1820 = vld [vmem:[#allocation6 + $0x490] sm:$0xff]
        %v1821 = vld [vmem:[#allocation6 + $0x498] sm:$0xff]
        %v1822 = vld [vmem:[#allocation6 + $0x4a0] sm:$0xff]
        %v1823 = vld [vmem:[#allocation6 + $0x4a8] sm:$0xff]
        %v1824 = vld [vmem:[#allocation6 + $0x4b0] sm:$0xff]
        %v1825 = vld [vmem:[#allocation6 + $0x4b8] sm:$0xff]
        %v1826 = vld [vmem:[#allocation6 + $0x4c0] sm:$0xff]
        %v1827 = vld [vmem:[#allocation6 + $0x4c8] sm:$0xff]
        %v1828 = vld [vmem:[#allocation6 + $0x4d0] sm:$0xff]
        %v1829 = vld [vmem:[#allocation6 + $0x4d8] sm:$0xff]
        %v1830 = vld [vmem:[#allocation6 + $0x4e0] sm:$0xff]
        %v1831 = vld [vmem:[#allocation6 + $0x4e8] sm:$0xff]
        %v1832 = vld [vmem:[#allocation6 + $0x4f0] sm:$0xff]
        %v1833 = vld [vmem:[#allocation6 + $0x4f8] sm:$0xff]
        %v1834 = vld [vmem:[#allocation6 + $0x500] sm:$0xff]
        %v1835 = vld [vmem:[#allocation6 + $0x508] sm:$0xff]
        %v1836 = vld [vmem:[#allocation6 + $0x510] sm:$0xff]
        %v1837 = vld [vmem:[#allocation6 + $0x518] sm:$0xff]
        %v1838 = vld [vmem:[#allocation6 + $0x520] sm:$0xff]
        %v1839 = vld [vmem:[#allocation6 + $0x528] sm:$0xff]
        %v1840 = vld [vmem:[#allocation6 + $0x530] sm:$0xff]
        %v1841 = vld [vmem:[#allocation6 + $0x538] sm:$0xff]
        %v1842 = vld [vmem:[#allocation6 + $0x540] sm:$0xff]
        %v1843 = vld [vmem:[#allocation6 + $0x548] sm:$0xff]
        %v1844 = vld [vmem:[#allocation6 + $0x550] sm:$0xff]
        %v1845 = vld [vmem:[#allocation6 + $0x558] sm:$0xff]
        %v1846 = vld [vmem:[#allocation6 + $0x560] sm:$0xff]
        %v1847 = vld [vmem:[#allocation6 + $0x568] sm:$0xff]
        %v1848 = vld [vmem:[#allocation6 + $0x570] sm:$0xff]
        %v1849 = vld [vmem:[#allocation6 + $0x578] sm:$0xff]
        %v1850 = vld [vmem:[#allocation6 + $0x580] sm:$0xff]
        %v1851 = vld [vmem:[#allocation6 + $0x588] sm:$0xff]
        %v1852 = vld [vmem:[#allocation6 + $0x590] sm:$0xff]
        %v1853 = vld [vmem:[#allocation6 + $0x598] sm:$0xff]
        %v1854 = vld [vmem:[#allocation6 + $0x5a0] sm:$0xff]
        %v1855 = vld [vmem:[#allocation6 + $0x5a8] sm:$0xff]
        %v1856 = vld [vmem:[#allocation6 + $0x5b0] sm:$0xff]
        %v1857 = vld [vmem:[#allocation6 + $0x5b8] sm:$0xff]
        %v1858 = vld [vmem:[#allocation6 + $0x5c0] sm:$0xff]
        %v1859 = vld [vmem:[#allocation6 + $0x5c8] sm:$0xff]
        %v1860 = vld [vmem:[#allocation6 + $0x5d0] sm:$0xff]
        %v1861 = vld [vmem:[#allocation6 + $0x5d8] sm:$0xff]
        %v1862 = vld [vmem:[#allocation6 + $0x5e0] sm:$0xff]
        %v1863 = vld [vmem:[#allocation6 + $0x5e8] sm:$0xff]
        %v1864 = vld [vmem:[#allocation6 + $0x5f0] sm:$0xff]
        %v1865 = vld [vmem:[#allocation6 + $0x5f8] sm:$0xff]
        %v1866 = vld [vmem:[#allocation6 + $0x600] sm:$0xff]
        %v1867 = vld [vmem:[#allocation6 + $0x608] sm:$0xff]
        %v1868 = vld [vmem:[#allocation6 + $0x610] sm:$0xff]
        %v1869 = vld [vmem:[#allocation6 + $0x618] sm:$0xff]
        %v1870 = vld [vmem:[#allocation6 + $0x620] sm:$0xff]
        %v1871 = vld [vmem:[#allocation6 + $0x628] sm:$0xff]
        %v1872 = vld [vmem:[#allocation6 + $0x630] sm:$0xff]
        %v1873 = vld [vmem:[#allocation6 + $0x638] sm:$0xff]
        %v1874 = vld [vmem:[#allocation6 + $0x640] sm:$0xff]
        %v1875 = vld [vmem:[#allocation6 + $0x648] sm:$0xff]
        %v1876 = vld [vmem:[#allocation6 + $0x650] sm:$0xff]
        %v1877 = vld [vmem:[#allocation6 + $0x658] sm:$0xff]
        %v1878 = vld [vmem:[#allocation6 + $0x660] sm:$0xff]
        %v1879 = vld [vmem:[#allocation6 + $0x668] sm:$0xff]
        %v1880 = vld [vmem:[#allocation6 + $0x670] sm:$0xff]
        %v1881 = vld [vmem:[#allocation6 + $0x678] sm:$0xff]
        %v1882 = vld [vmem:[#allocation6 + $0x680] sm:$0xff]
        %v1883 = vld [vmem:[#allocation6 + $0x688] sm:$0xff]
        %v1884 = vld [vmem:[#allocation6 + $0x690] sm:$0xff]
        %v1885 = vld [vmem:[#allocation6 + $0x698] sm:$0xff]
        %v1886 = vld [vmem:[#allocation6 + $0x6a0] sm:$0xff]
        %v1887 = vld [vmem:[#allocation6 + $0x6a8] sm:$0xff]
        %v1888 = vld [vmem:[#allocation6 + $0x6b0] sm:$0xff]
        %v1889 = vld [vmem:[#allocation6 + $0x6b8] sm:$0xff]
        %v1890 = vld [vmem:[#allocation6 + $0x6c0] sm:$0xff]
        %v1891 = vld [vmem:[#allocation6 + $0x6c8] sm:$0xff]
        %v1892 = vld [vmem:[#allocation6 + $0x6d0] sm:$0xff]
        %v1893 = vld [vmem:[#allocation6 + $0x6d8] sm:$0xff]
        %v1894 = vld [vmem:[#allocation6 + $0x6e0] sm:$0xff]
        %v1895 = vld [vmem:[#allocation6 + $0x6e8] sm:$0xff]
        %v1896 = vld [vmem:[#allocation6 + $0x6f0] sm:$0xff]
        %v1897 = vld [vmem:[#allocation6 + $0x6f8] sm:$0xff]
        %v1898 = vld [vmem:[#allocation6 + $0x700] sm:$0xff]
        %v1899 = vld [vmem:[#allocation6 + $0x708] sm:$0xff]
        %v1900 = vld [vmem:[#allocation6 + $0x710] sm:$0xff]
        %v1901 = vld [vmem:[#allocation6 + $0x718] sm:$0xff]
        %v1902 = vld [vmem:[#allocation6 + $0x720] sm:$0xff]
        %v1903 = vld [vmem:[#allocation6 + $0x728] sm:$0xff]
        %v1904 = vld [vmem:[#allocation6 + $0x730] sm:$0xff]
        %v1905 = vld [vmem:[#allocation6 + $0x738] sm:$0xff]
        %v1906 = vld [vmem:[#allocation6 + $0x740] sm:$0xff]
        %v1907 = vld [vmem:[#allocation6 + $0x748] sm:$0xff]
        %v1908 = vld [vmem:[#allocation6 + $0x750] sm:$0xff]
        %v1909 = vld [vmem:[#allocation6 + $0x758] sm:$0xff]
        %v1910 = vld [vmem:[#allocation6 + $0x760] sm:$0xff]
        %v1911 = vld [vmem:[#allocation6 + $0x768] sm:$0xff]
        %v1912 = vld [vmem:[#allocation6 + $0x770] sm:$0xff]
        %v1913 = vld [vmem:[#allocation6 + $0x778] sm:$0xff]
        %v1914 = vld [vmem:[#allocation6 + $0x780] sm:$0xff]
        %v1915 = vld [vmem:[#allocation6 + $0x788] sm:$0xff]
        %v1916 = vld [vmem:[#allocation6 + $0x790] sm:$0xff]
        %v1917 = vld [vmem:[#allocation6 + $0x798] sm:$0xff]
        %v1918 = vld [vmem:[#allocation6 + $0x7a0] sm:$0xff]
        %v1919 = vld [vmem:[#allocation6 + $0x7a8] sm:$0xff]
        %v1920 = vld [vmem:[#allocation6 + $0x7b0] sm:$0xff]
        %v1921 = vld [vmem:[#allocation6 + $0x7b8] sm:$0xff]
        %v1922 = vld [vmem:[#allocation6 + $0x7c0] sm:$0xff]
        %v1923 = vld [vmem:[#allocation6 + $0x7c8] sm:$0xff]
        %v1924 = vld [vmem:[#allocation6 + $0x7d0] sm:$0xff]
        %v1925 = vld [vmem:[#allocation6 + $0x7d8] sm:$0xff]
        %v1926 = vld [vmem:[#allocation6 + $0x7e0] sm:$0xff]
        %v1927 = vld [vmem:[#allocation6 + $0x7e8] sm:$0xff]
        %v1928 = vld [vmem:[#allocation6 + $0x7f0] sm:$0xff]
        %v1929 = vld [vmem:[#allocation6 + $0x7f8] sm:$0xff]
        %1930 = vmatprep.subr.mxu0 %v1675
        %1931 = vmatpush1.msra.mxu0 %v1674
        %1932 = vmatprep.subr.mxu0 %v1683
        %1933 = vmatpush1.msra.mxu0 %v1682
        %1934 = vmatprep.subr.mxu0 %v1691
        %1935 = vmatpush1.msra.mxu0 %v1690
        %1936 = vmatprep.subr.mxu0 %v1699
        %1937 = vmatpush1.msra.mxu0 %v1698
        %1938 = vmatprep.subr.mxu0 %v1707
        %1939 = vmatpush1.msra.mxu0 %v1706
        %1940 = vmatprep.subr.mxu0 %v1715
        %1941 = vmatpush1.msra.mxu0 %v1714
        %1942 = vmatprep.subr.mxu0 %v1723
        %1943 = vmatpush1.msra.mxu0 %v1722
        %1944 = vmatprep.subr.mxu0 %v1731
        %1945 = vmatpush1.msra.mxu0 %v1730
        %1946 = vmatprep.subr.mxu0 %v1739
        %1947 = vmatpush1.msra.mxu0 %v1738
        %1948 = vmatprep.subr.mxu0 %v1747
        %1949 = vmatpush1.msra.mxu0 %v1746
        %1950 = vmatprep.subr.mxu0 %v1755
        %1951 = vmatpush1.msra.mxu0 %v1754
        %1952 = vmatprep.subr.mxu0 %v1763
        %1953 = vmatpush1.msra.mxu0 %v1762
        %1954 = vmatprep.subr.mxu0 %v1771
        %1955 = vmatpush1.msra.mxu0 %v1770
        %1956 = vmatprep.subr.mxu0 %v1779
        %1957 = vmatpush1.msra.mxu0 %v1778
        %1958 = vmatprep.subr.mxu0 %v1787
        %1959 = vmatpush1.msra.mxu0 %v1786
        %1960 = vmatprep.subr.mxu0 %v1795
        %1961 = vmatpush1.msra.mxu0 %v1794
        %1962 = vmatprep.subr.mxu0 %v1803
        %1963 = vmatpush1.msra.mxu0 %v1802
        %1964 = vmatprep.subr.mxu0 %v1811
        %1965 = vmatpush1.msra.mxu0 %v1810
        %1966 = vmatprep.subr.mxu0 %v1819
        %1967 = vmatpush1.msra.mxu0 %v1818
        %1968 = vmatprep.subr.mxu0 %v1827
        %1969 = vmatpush1.msra.mxu0 %v1826
        %1970 = vmatprep.subr.mxu0 %v1835
        %1971 = vmatpush1.msra.mxu0 %v1834
        %1972 = vmatprep.subr.mxu0 %v1843
        %1973 = vmatpush1.msra.mxu0 %v1842
        %1974 = vmatprep.subr.mxu0 %v1851
        %1975 = vmatpush1.msra.mxu0 %v1850
        %1976 = vmatprep.subr.mxu0 %v1859
        %1977 = vmatpush1.msra.mxu0 %v1858
        %1978 = vmatprep.subr.mxu0 %v1867
        %1979 = vmatpush1.msra.mxu0 %v1866
        %1980 = vmatprep.subr.mxu0 %v1875
        %1981 = vmatpush1.msra.mxu0 %v1874
        %1982 = vmatprep.subr.mxu0 %v1883
        %1983 = vmatpush1.msra.mxu0 %v1882
        %1984 = vmatprep.subr.mxu0 %v1891
        %1985 = vmatpush1.msra.mxu0 %v1890
        %1986 = vmatprep.subr.mxu0 %v1899
        %1987 = vmatpush1.msra.mxu0 %v1898
        %1988 = vmatprep.subr.mxu0 %v1907
        %1989 = vmatpush1.msra.mxu0 %v1906
        %1990 = vmatprep.subr.mxu0 %v1915
        %1991 = vmatpush1.msra.mxu0 %v1914
        %1992 = vmatprep.subr.mxu0 %v1923
        %1993 = vmatpush1.msra.mxu0 %v1922
        %1994 = vmatprep.mubr.f32.mxu0 %v1673
        %1995 = vmatmul.mubr.f32.gmra.mrb[0].mxu0 %v1672
        %v1996 = vpop.f32.mrb[0].mxu0
        %v1997 = vadd.f32 0.0, %v1996
        %v1998 = vpop.f32.mrb[0].mxu0
        %v1999 = vadd.f32 0.0, %v1998
        %2000 = vdwg.mxu0
        %2001 = vmatprep.subr.mxu0 %v1677
        %2002 = vmatpush1.msra.mxu0 %v1676
        %2003 = vmatprep.subr.mxu0 %v1685
        %2004 = vmatpush1.msra.mxu0 %v1684
        %2005 = vmatprep.subr.mxu0 %v1693
        %2006 = vmatpush1.msra.mxu0 %v1692
        %2007 = vmatprep.subr.mxu0 %v1701
        %2008 = vmatpush1.msra.mxu0 %v1700
        %2009 = vmatprep.subr.mxu0 %v1709
        %2010 = vmatpush1.msra.mxu0 %v1708
        %2011 = vmatprep.subr.mxu0 %v1717
        %2012 = vmatpush1.msra.mxu0 %v1716
        %2013 = vmatprep.subr.mxu0 %v1725
        %2014 = vmatpush1.msra.mxu0 %v1724
        %2015 = vmatprep.subr.mxu0 %v1733
        %2016 = vmatpush1.msra.mxu0 %v1732
        %2017 = vmatprep.subr.mxu0 %v1741
        %2018 = vmatpush1.msra.mxu0 %v1740
        %2019 = vmatprep.subr.mxu0 %v1749
        %2020 = vmatpush1.msra.mxu0 %v1748
        %2021 = vmatprep.subr.mxu0 %v1757
        %2022 = vmatpush1.msra.mxu0 %v1756
        %2023 = vmatprep.subr.mxu0 %v1765
        %2024 = vmatpush1.msra.mxu0 %v1764
        %2025 = vmatprep.subr.mxu0 %v1773
        %2026 = vmatpush1.msra.mxu0 %v1772
        %2027 = vmatprep.subr.mxu0 %v1781
        %2028 = vmatpush1.msra.mxu0 %v1780
        %2029 = vmatprep.subr.mxu0 %v1789
        %2030 = vmatpush1.msra.mxu0 %v1788
        %2031 = vmatprep.subr.mxu0 %v1797
        %2032 = vmatpush1.msra.mxu0 %v1796
        %2033 = vmatprep.subr.mxu0 %v1805
        %2034 = vmatpush1.msra.mxu0 %v1804
        %2035 = vmatprep.subr.mxu0 %v1813
        %2036 = vmatpush1.msra.mxu0 %v1812
        %2037 = vmatprep.subr.mxu0 %v1821
        %2038 = vmatpush1.msra.mxu0 %v1820
        %2039 = vmatprep.subr.mxu0 %v1829
        %2040 = vmatpush1.msra.mxu0 %v1828
        %2041 = vmatprep.subr.mxu0 %v1837
        %2042 = vmatpush1.msra.mxu0 %v1836
        %2043 = vmatprep.subr.mxu0 %v1845
        %2044 = vmatpush1.msra.mxu0 %v1844
        %2045 = vmatprep.subr.mxu0 %v1853
        %2046 = vmatpush1.msra.mxu0 %v1852
        %2047 = vmatprep.subr.mxu0 %v1861
        %2048 = vmatpush1.msra.mxu0 %v1860
        %2049 = vmatprep.subr.mxu0 %v1869
        %2050 = vmatpush1.msra.mxu0 %v1868
        %2051 = vmatprep.subr.mxu0 %v1877
        %2052 = vmatpush1.msra.mxu0 %v1876
        %2053 = vmatprep.subr.mxu0 %v1885
        %2054 = vmatpush1.msra.mxu0 %v1884
        %2055 = vmatprep.subr.mxu0 %v1893
        %2056 = vmatpush1.msra.mxu0 %v1892
        %2057 = vmatprep.subr.mxu0 %v1901
        %2058 = vmatpush1.msra.mxu0 %v1900
        %2059 = vmatprep.subr.mxu0 %v1909
        %2060 = vmatpush1.msra.mxu0 %v1908
        %2061 = vmatprep.subr.mxu0 %v1917
        %2062 = vmatpush1.msra.mxu0 %v1916
        %2063 = vmatprep.subr.mxu0 %v1925
        %2064 = vmatpush1.msra.mxu0 %v1924
        %2065 = vmatprep.mubr.f32.mxu0 %v1673
        %2066 = vmatmul.mubr.f32.gmra.mrb[0].mxu0 %v1672
        %v2067 = vpop.f32.mrb[0].mxu0
        %v2068 = vadd.f32 0.0, %v2067
        %v2069 = vpop.f32.mrb[0].mxu0
        %v2070 = vadd.f32 0.0, %v2069
        %2071 = vdwg.mxu0
        %2072 = vmatprep.subr.mxu0 %v1679
        %2073 = vmatpush1.msra.mxu0 %v1678
        %2074 = vmatprep.subr.mxu0 %v1687
        %2075 = vmatpush1.msra.mxu0 %v1686
        %2076 = vmatprep.subr.mxu0 %v1695
        %2077 = vmatpush1.msra.mxu0 %v1694
        %2078 = vmatprep.subr.mxu0 %v1703
        %2079 = vmatpush1.msra.mxu0 %v1702
        %2080 = vmatprep.subr.mxu0 %v1711
        %2081 = vmatpush1.msra.mxu0 %v1710
        %2082 = vmatprep.subr.mxu0 %v1719
        %2083 = vmatpush1.msra.mxu0 %v1718
        %2084 = vmatprep.subr.mxu0 %v1727
        %2085 = vmatpush1.msra.mxu0 %v1726
        %2086 = vmatprep.subr.mxu0 %v1735
        %2087 = vmatpush1.msra.mxu0 %v1734
        %2088 = vmatprep.subr.mxu0 %v1743
        %2089 = vmatpush1.msra.mxu0 %v1742
        %2090 = vmatprep.subr.mxu0 %v1751
        %2091 = vmatpush1.msra.mxu0 %v1750
        %2092 = vmatprep.subr.mxu0 %v1759
        %2093 = vmatpush1.msra.mxu0 %v1758
        %2094 = vmatprep.subr.mxu0 %v1767
        %2095 = vmatpush1.msra.mxu0 %v1766
        %2096 = vmatprep.subr.mxu0 %v1775
        %2097 = vmatpush1.msra.mxu0 %v1774
        %2098 = vmatprep.subr.mxu0 %v1783
        %2099 = vmatpush1.msra.mxu0 %v1782
        %2100 = vmatprep.subr.mxu0 %v1791
        %2101 = vmatpush1.msra.mxu0 %v1790
        %2102 = vmatprep.subr.mxu0 %v1799
        %2103 = vmatpush1.msra.mxu0 %v1798
        %2104 = vmatprep.subr.mxu0 %v1807
        %2105 = vmatpush1.msra.mxu0 %v1806
        %2106 = vmatprep.subr.mxu0 %v1815
        %2107 = vmatpush1.msra.mxu0 %v1814
        %2108 = vmatprep.subr.mxu0 %v1823
        %2109 = vmatpush1.msra.mxu0 %v1822
        %2110 = vmatprep.subr.mxu0 %v1831
        %2111 = vmatpush1.msra.mxu0 %v1830
        %2112 = vmatprep.subr.mxu0 %v1839
        %2113 = vmatpush1.msra.mxu0 %v1838
        %2114 = vmatprep.subr.mxu0 %v1847
        %2115 = vmatpush1.msra.mxu0 %v1846
        %2116 = vmatprep.subr.mxu0 %v1855
        %2117 = vmatpush1.msra.mxu0 %v1854
        %2118 = vmatprep.subr.mxu0 %v1863
        %2119 = vmatpush1.msra.mxu0 %v1862
        %2120 = vmatprep.subr.mxu0 %v1871
        %2121 = vmatpush1.msra.mxu0 %v1870
        %2122 = vmatprep.subr.mxu0 %v1879
        %2123 = vmatpush1.msra.mxu0 %v1878
        %2124 = vmatprep.subr.mxu0 %v1887
        %2125 = vmatpush1.msra.mxu0 %v1886
        %2126 = vmatprep.subr.mxu0 %v1895
        %2127 = vmatpush1.msra.mxu0 %v1894
        %2128 = vmatprep.subr.mxu0 %v1903
        %2129 = vmatpush1.msra.mxu0 %v1902
        %2130 = vmatprep.subr.mxu0 %v1911
        %2131 = vmatpush1.msra.mxu0 %v1910
        %2132 = vmatprep.subr.mxu0 %v1919
        %2133 = vmatpush1.msra.mxu0 %v1918
        %2134 = vmatprep.subr.mxu0 %v1927
        %2135 = vmatpush1.msra.mxu0 %v1926
        %2136 = vmatprep.mubr.f32.mxu0 %v1673
        %2137 = vmatmul.mubr.f32.gmra.mrb[0].mxu0 %v1672
        %v2138 = vpop.f32.mrb[0].mxu0
        %v2139 = vadd.f32 0.0, %v2138
        %v2140 = vpop.f32.mrb[0].mxu0
        %v2141 = vadd.f32 0.0, %v2140
        %2142 = vdwg.mxu0
        %2143 = vmatprep.subr.mxu0 %v1681
        %2144 = vmatpush1.msra.mxu0 %v1680
        %2145 = vmatprep.subr.mxu0 %v1689
        %2146 = vmatpush1.msra.mxu0 %v1688
        %2147 = vmatprep.subr.mxu0 %v1697
        %2148 = vmatpush1.msra.mxu0 %v1696
        %2149 = vmatprep.subr.mxu0 %v1705
        %2150 = vmatpush1.msra.mxu0 %v1704
        %2151 = vmatprep.subr.mxu0 %v1713
        %2152 = vmatpush1.msra.mxu0 %v1712
        %2153 = vmatprep.subr.mxu0 %v1721
        %2154 = vmatpush1.msra.mxu0 %v1720
        %2155 = vmatprep.subr.mxu0 %v1729
        %2156 = vmatpush1.msra.mxu0 %v1728
        %2157 = vmatprep.subr.mxu0 %v1737
        %2158 = vmatpush1.msra.mxu0 %v1736
        %2159 = vmatprep.subr.mxu0 %v1745
        %2160 = vmatpush1.msra.mxu0 %v1744
        %2161 = vmatprep.subr.mxu0 %v1753
        %2162 = vmatpush1.msra.mxu0 %v1752
        %2163 = vmatprep.subr.mxu0 %v1761
        %2164 = vmatpush1.msra.mxu0 %v1760
        %2165 = vmatprep.subr.mxu0 %v1769
        %2166 = vmatpush1.msra.mxu0 %v1768
        %2167 = vmatprep.subr.mxu0 %v1777
        %2168 = vmatpush1.msra.mxu0 %v1776
        %2169 = vmatprep.subr.mxu0 %v1785
        %2170 = vmatpush1.msra.mxu0 %v1784
        %2171 = vmatprep.subr.mxu0 %v1793
        %2172 = vmatpush1.msra.mxu0 %v1792
        %2173 = vmatprep.subr.mxu0 %v1801
        %2174 = vmatpush1.msra.mxu0 %v1800
        %2175 = vmatprep.subr.mxu0 %v1809
        %2176 = vmatpush1.msra.mxu0 %v1808
        %2177 = vmatprep.subr.mxu0 %v1817
        %2178 = vmatpush1.msra.mxu0 %v1816
        %2179 = vmatprep.subr.mxu0 %v1825
        %2180 = vmatpush1.msra.mxu0 %v1824
        %2181 = vmatprep.subr.mxu0 %v1833
        %2182 = vmatpush1.msra.mxu0 %v1832
        %2183 = vmatprep.subr.mxu0 %v1841
        %2184 = vmatpush1.msra.mxu0 %v1840
        %2185 = vmatprep.subr.mxu0 %v1849
        %2186 = vmatpush1.msra.mxu0 %v1848
        %2187 = vmatprep.subr.mxu0 %v1857
        %2188 = vmatpush1.msra.mxu0 %v1856
        %2189 = vmatprep.subr.mxu0 %v1865
        %2190 = vmatpush1.msra.mxu0 %v1864
        %2191 = vmatprep.subr.mxu0 %v1873
        %2192 = vmatpush1.msra.mxu0 %v1872
        %2193 = vmatprep.subr.mxu0 %v1881
        %2194 = vmatpush1.msra.mxu0 %v1880
        %2195 = vmatprep.subr.mxu0 %v1889
        %2196 = vmatpush1.msra.mxu0 %v1888
        %2197 = vmatprep.subr.mxu0 %v1897
        %2198 = vmatpush1.msra.mxu0 %v1896
        %2199 = vmatprep.subr.mxu0 %v1905
        %2200 = vmatpush1.msra.mxu0 %v1904
        %2201 = vmatprep.subr.mxu0 %v1913
        %2202 = vmatpush1.msra.mxu0 %v1912
        %2203 = vmatprep.subr.mxu0 %v1921
        %2204 = vmatpush1.msra.mxu0 %v1920
        %2205 = vmatprep.subr.mxu0 %v1929
        %2206 = vmatpush1.msra.mxu0 %v1928
        %2207 = vmatprep.mubr.f32.mxu0 %v1673
        %2208 = vmatmul.mubr.f32.gmra.mrb[0].mxu0 %v1672
        %v2209 = vpop.f32.mrb[0].mxu0
        %v2210 = vadd.f32 0.0, %v2209
        %v2211 = vpop.f32.mrb[0].mxu0
        %v2212 = vadd.f32 0.0, %v2211
        %2213 = vdwg.mxu0
        %v2214 = vld [vmem:[%s1044] sm:$0xff]
        %v2215 = vld [vmem:[%s1044 + $0x8] sm:$0xff]
        %v2216 = vld [vmem:[%s1044 + $0x10] sm:$0xff]
        %v2217 = vld [vmem:[%s1044 + $0x18] sm:$0xff]
        %v2218 = vadd.f32 %v2214, %v1997
        %v2219 = vadd.f32 %v2215, %v1999
        %v2220 = vadd.f32 %v2216, %v2068
        %v2221 = vadd.f32 %v2217, %v2070
        %v2222 = vld [vmem:[#allocation2 + $0x20] sm:$0xff]
        %v2223 = vld [vmem:[#allocation2 + $0x28] sm:$0xff]
        %v2224 = vld [vmem:[#allocation2 + $0x30] sm:$0xff]
        %v2225 = vld [vmem:[#allocation2 + $0x38] sm:$0xff]
        %v2226 = vadd.f32 %v2222, %v2139
        %v2227 = vadd.f32 %v2223, %v2141
        %v2228 = vadd.f32 %v2224, %v2210
        %v2229 = vadd.f32 %v2225, %v2212
        %v2230 = vld [vmem:[#allocation4] sm:$0xff]
        %v2231 = vxor.u32 %v2218, 2147483648
        %v2232 = vmul.f32 %v2231, 1.442695
        %v2233 = vpow.pop %v2232
        %v2234 = vadd.f32 %v2233, 1.0
        %v2235 = vrcp.pop %v2234
        %v2236 = vmul.f32 1.0, %v2235
        %v2237 = vxor.u32 %v2219, 2147483648
        %v2238 = vmul.f32 %v2237, 1.442695
        %v2239 = vpow.pop %v2238
        %v2240 = vadd.f32 %v2239, 1.0
        %v2241 = vrcp.pop %v2240
        %v2242 = vmul.f32 1.0, %v2241
        %v2243 = vtanh.pop %v2220
        %v2244 = vxor.u32 %v2221, 2147483648
        %v2245 = vmul.f32 %v2244, 1.442695
        %v2246 = vpow.pop %v2245
        %v2247 = vadd.f32 %v2246, 1.0
        %v2248 = vrcp.pop %v2247
        %v2249 = vmul.f32 1.0, %v2248
        %v2250 = vmul.f32 %v2242, %v2230
        %v2251 = vmul.f32 %v2236, %v2243
        %v2252 = vadd.f32 %v2250, %v2251
        %v2253 = vtanh.pop %v2252
        %v2254 = vmul.f32 %v2249, %v2253
        %v2255 = vld [vmem:[#allocation4 + $0x8] sm:$0xff]
        %v2256 = vxor.u32 %v2226, 2147483648
        %v2257 = vmul.f32 %v2256, 1.442695
        %v2258 = vpow.pop %v2257
        %v2259 = vadd.f32 %v2258, 1.0
        %v2260 = vrcp.pop %v2259
        %v2261 = vmul.f32 1.0, %v2260
        %v2262 = vxor.u32 %v2227, 2147483648
        %v2263 = vmul.f32 %v2262, 1.442695
        %v2264 = vpow.pop %v2263
        %v2265 = vadd.f32 %v2264, 1.0
        %v2266 = vrcp.pop %v2265
        %v2267 = vmul.f32 1.0, %v2266
        %v2268 = vtanh.pop %v2228
        %v2269 = vxor.u32 %v2229, 2147483648
        %v2270 = vmul.f32 %v2269, 1.442695
        %v2271 = vpow.pop %v2270
        %v2272 = vadd.f32 %v2271, 1.0
        %v2273 = vrcp.pop %v2272
        %v2274 = vmul.f32 1.0, %v2273
        %v2275 = vmul.f32 %v2267, %v2255
        %v2276 = vmul.f32 %v2261, %v2268
        %v2277 = vadd.f32 %v2275, %v2276
        %v2278 = vtanh.pop %v2277
        %v2279 = vmul.f32 %v2274, %v2278
        %2280 = vst [vmem:[#allocation4] sm:$0xff] %v2252
        %2281 = vst [vmem:[#allocation4 + $0x8] sm:$0xff] %v2277
        %2282 = vst [vmem:[#allocation3] sm:$0xff] %v2254
        %2283 = vst [vmem:[#allocation3 + $0x8] sm:$0xff] %v2279
        %2284 = vst [vmem:[%s1670] sm:$0xff] %v2254
        %2285 = vst [vmem:[%s358 + $0x8] sm:$0xff] %v2279
        %v2286 = vld [vmem:[%s6] sm:$0xff]
        %v2288 = vlaneseq
        %v2289 = vshrl.u32 %v2288, 7
        %v2290 = vsub.s32 0, %v2289
        %v2291 = vrot.slane %v2286, %v2290
        %v2292 = vlaneseq
        %v2293 = vshrl.u32 %v2292, 7
        %v2294 = vsub.s32 1, %v2293
        %v2295 = vrot.slane %v2286, %v2294
        %v2296 = vlaneseq
        %v2297 = vshrl.u32 %v2296, 7
        %v2298 = vsub.s32 2, %v2297
        %v2299 = vrot.slane %v2286, %v2298
        %v2300 = vlaneseq
        %v2301 = vshrl.u32 %v2300, 7
        %v2302 = vsub.s32 3, %v2301
        %v2303 = vrot.slane %v2286, %v2302
        %v2304 = vlaneseq
        %v2305 = vshrl.u32 %v2304, 7
        %v2306 = vsub.s32 4, %v2305
        %v2307 = vrot.slane %v2286, %v2306
        %v2308 = vlaneseq
        %v2309 = vshrl.u32 %v2308, 7
        %v2310 = vsub.s32 5, %v2309
        %v2311 = vrot.slane %v2286, %v2310
        %v2312 = vlaneseq
        %v2313 = vshrl.u32 %v2312, 7
        %v2314 = vsub.s32 6, %v2313
        %v2315 = vrot.slane %v2286, %v2314
        %v2316 = vlaneseq
        %v2317 = vshrl.u32 %v2316, 7
        %v2318 = vsub.s32 7, %v2317
        %v2319 = vrot.slane %v2286, %v2318
        %v2328 = vld [vmem:[%s358] sm:$0xff]
        %v2329 = vld [vmem:[%s358 + $0x8] sm:$0xff]
        %v2330 = vld [vmem:[#allocation9] sm:$0xff]
        %v2331 = vld [vmem:[#allocation9 + $0x8] sm:$0xff]
        %v2332 = vld [vmem:[#allocation9 + $0x10] sm:$0xff]
        %v2333 = vld [vmem:[#allocation9 + $0x18] sm:$0xff]
        %v2334 = vld [vmem:[#allocation9 + $0x20] sm:$0xff]
        %v2335 = vld [vmem:[#allocation9 + $0x28] sm:$0xff]
        %v2336 = vld [vmem:[#allocation9 + $0x30] sm:$0xff]
        %v2337 = vld [vmem:[#allocation9 + $0x38] sm:$0xff]
        %v2338 = vld [vmem:[#allocation9 + $0x40] sm:$0xff]
        %v2339 = vld [vmem:[#allocation9 + $0x48] sm:$0xff]
        %v2340 = vld [vmem:[#allocation9 + $0x50] sm:$0xff]
        %v2341 = vld [vmem:[#allocation9 + $0x58] sm:$0xff]
        %v2342 = vld [vmem:[#allocation9 + $0x60] sm:$0xff]
        %v2343 = vld [vmem:[#allocation9 + $0x68] sm:$0xff]
        %v2344 = vld [vmem:[#allocation9 + $0x70] sm:$0xff]
        %v2345 = vld [vmem:[#allocation9 + $0x78] sm:$0xff]
        %v2346 = vld [vmem:[#allocation9 + $0x80] sm:$0xff]
        %v2347 = vld [vmem:[#allocation9 + $0x88] sm:$0xff]
        %v2348 = vld [vmem:[#allocation9 + $0x90] sm:$0xff]
        %v2349 = vld [vmem:[#allocation9 + $0x98] sm:$0xff]
        %v2350 = vld [vmem:[#allocation9 + $0xa0] sm:$0xff]
        %v2351 = vld [vmem:[#allocation9 + $0xa8] sm:$0xff]
        %v2352 = vld [vmem:[#allocation9 + $0xb0] sm:$0xff]
        %v2353 = vld [vmem:[#allocation9 + $0xb8] sm:$0xff]
        %v2354 = vld [vmem:[#allocation9 + $0xc0] sm:$0xff]
        %v2355 = vld [vmem:[#allocation9 + $0xc8] sm:$0xff]
        %v2356 = vld [vmem:[#allocation9 + $0xd0] sm:$0xff]
        %v2357 = vld [vmem:[#allocation9 + $0xd8] sm:$0xff]
        %v2358 = vld [vmem:[#allocation9 + $0xe0] sm:$0xff]
        %v2359 = vld [vmem:[#allocation9 + $0xe8] sm:$0xff]
        %v2360 = vld [vmem:[#allocation9 + $0xf0] sm:$0xff]
        %v2361 = vld [vmem:[#allocation9 + $0xf8] sm:$0xff]
        %v2362 = vld [vmem:[#allocation9 + $0x100] sm:$0xff]
        %v2363 = vld [vmem:[#allocation9 + $0x108] sm:$0xff]
        %v2364 = vld [vmem:[#allocation9 + $0x110] sm:$0xff]
        %v2365 = vld [vmem:[#allocation9 + $0x118] sm:$0xff]
        %v2366 = vld [vmem:[#allocation9 + $0x120] sm:$0xff]
        %v2367 = vld [vmem:[#allocation9 + $0x128] sm:$0xff]
        %v2368 = vld [vmem:[#allocation9 + $0x130] sm:$0xff]
        %v2369 = vld [vmem:[#allocation9 + $0x138] sm:$0xff]
        %v2370 = vld [vmem:[#allocation9 + $0x140] sm:$0xff]
        %v2371 = vld [vmem:[#allocation9 + $0x148] sm:$0xff]
        %v2372 = vld [vmem:[#allocation9 + $0x150] sm:$0xff]
        %v2373 = vld [vmem:[#allocation9 + $0x158] sm:$0xff]
        %v2374 = vld [vmem:[#allocation9 + $0x160] sm:$0xff]
        %v2375 = vld [vmem:[#allocation9 + $0x168] sm:$0xff]
        %v2376 = vld [vmem:[#allocation9 + $0x170] sm:$0xff]
        %v2377 = vld [vmem:[#allocation9 + $0x178] sm:$0xff]
        %v2378 = vld [vmem:[#allocation9 + $0x180] sm:$0xff]
        %v2379 = vld [vmem:[#allocation9 + $0x188] sm:$0xff]
        %v2380 = vld [vmem:[#allocation9 + $0x190] sm:$0xff]
        %v2381 = vld [vmem:[#allocation9 + $0x198] sm:$0xff]
        %v2382 = vld [vmem:[#allocation9 + $0x1a0] sm:$0xff]
        %v2383 = vld [vmem:[#allocation9 + $0x1a8] sm:$0xff]
        %v2384 = vld [vmem:[#allocation9 + $0x1b0] sm:$0xff]
        %v2385 = vld [vmem:[#allocation9 + $0x1b8] sm:$0xff]
        %v2386 = vld [vmem:[#allocation9 + $0x1c0] sm:$0xff]
        %v2387 = vld [vmem:[#allocation9 + $0x1c8] sm:$0xff]
        %v2388 = vld [vmem:[#allocation9 + $0x1d0] sm:$0xff]
        %v2389 = vld [vmem:[#allocation9 + $0x1d8] sm:$0xff]
        %v2390 = vld [vmem:[#allocation9 + $0x1e0] sm:$0xff]
        %v2391 = vld [vmem:[#allocation9 + $0x1e8] sm:$0xff]
        %v2392 = vld [vmem:[#allocation9 + $0x1f0] sm:$0xff]
        %v2393 = vld [vmem:[#allocation9 + $0x1f8] sm:$0xff]
        %v2394 = vld [vmem:[#allocation9 + $0x200] sm:$0xff]
        %v2395 = vld [vmem:[#allocation9 + $0x208] sm:$0xff]
        %v2396 = vld [vmem:[#allocation9 + $0x210] sm:$0xff]
        %v2397 = vld [vmem:[#allocation9 + $0x218] sm:$0xff]
        %v2398 = vld [vmem:[#allocation9 + $0x220] sm:$0xff]
        %v2399 = vld [vmem:[#allocation9 + $0x228] sm:$0xff]
        %v2400 = vld [vmem:[#allocation9 + $0x230] sm:$0xff]
        %v2401 = vld [vmem:[#allocation9 + $0x238] sm:$0xff]
        %v2402 = vld [vmem:[#allocation9 + $0x240] sm:$0xff]
        %v2403 = vld [vmem:[#allocation9 + $0x248] sm:$0xff]
        %v2404 = vld [vmem:[#allocation9 + $0x250] sm:$0xff]
        %v2405 = vld [vmem:[#allocation9 + $0x258] sm:$0xff]
        %v2406 = vld [vmem:[#allocation9 + $0x260] sm:$0xff]
        %v2407 = vld [vmem:[#allocation9 + $0x268] sm:$0xff]
        %v2408 = vld [vmem:[#allocation9 + $0x270] sm:$0xff]
        %v2409 = vld [vmem:[#allocation9 + $0x278] sm:$0xff]
        %v2410 = vld [vmem:[#allocation9 + $0x280] sm:$0xff]
        %v2411 = vld [vmem:[#allocation9 + $0x288] sm:$0xff]
        %v2412 = vld [vmem:[#allocation9 + $0x290] sm:$0xff]
        %v2413 = vld [vmem:[#allocation9 + $0x298] sm:$0xff]
        %v2414 = vld [vmem:[#allocation9 + $0x2a0] sm:$0xff]
        %v2415 = vld [vmem:[#allocation9 + $0x2a8] sm:$0xff]
        %v2416 = vld [vmem:[#allocation9 + $0x2b0] sm:$0xff]
        %v2417 = vld [vmem:[#allocation9 + $0x2b8] sm:$0xff]
        %v2418 = vld [vmem:[#allocation9 + $0x2c0] sm:$0xff]
        %v2419 = vld [vmem:[#allocation9 + $0x2c8] sm:$0xff]
        %v2420 = vld [vmem:[#allocation9 + $0x2d0] sm:$0xff]
        %v2421 = vld [vmem:[#allocation9 + $0x2d8] sm:$0xff]
        %v2422 = vld [vmem:[#allocation9 + $0x2e0] sm:$0xff]
        %v2423 = vld [vmem:[#allocation9 + $0x2e8] sm:$0xff]
        %v2424 = vld [vmem:[#allocation9 + $0x2f0] sm:$0xff]
        %v2425 = vld [vmem:[#allocation9 + $0x2f8] sm:$0xff]
        %v2426 = vld [vmem:[#allocation9 + $0x300] sm:$0xff]
        %v2427 = vld [vmem:[#allocation9 + $0x308] sm:$0xff]
        %v2428 = vld [vmem:[#allocation9 + $0x310] sm:$0xff]
        %v2429 = vld [vmem:[#allocation9 + $0x318] sm:$0xff]
        %v2430 = vld [vmem:[#allocation9 + $0x320] sm:$0xff]
        %v2431 = vld [vmem:[#allocation9 + $0x328] sm:$0xff]
        %v2432 = vld [vmem:[#allocation9 + $0x330] sm:$0xff]
        %v2433 = vld [vmem:[#allocation9 + $0x338] sm:$0xff]
        %v2434 = vld [vmem:[#allocation9 + $0x340] sm:$0xff]
        %v2435 = vld [vmem:[#allocation9 + $0x348] sm:$0xff]
        %v2436 = vld [vmem:[#allocation9 + $0x350] sm:$0xff]
        %v2437 = vld [vmem:[#allocation9 + $0x358] sm:$0xff]
        %v2438 = vld [vmem:[#allocation9 + $0x360] sm:$0xff]
        %v2439 = vld [vmem:[#allocation9 + $0x368] sm:$0xff]
        %v2440 = vld [vmem:[#allocation9 + $0x370] sm:$0xff]
        %v2441 = vld [vmem:[#allocation9 + $0x378] sm:$0xff]
        %v2442 = vld [vmem:[#allocation9 + $0x380] sm:$0xff]
        %v2443 = vld [vmem:[#allocation9 + $0x388] sm:$0xff]
        %v2444 = vld [vmem:[#allocation9 + $0x390] sm:$0xff]
        %v2445 = vld [vmem:[#allocation9 + $0x398] sm:$0xff]
        %v2446 = vld [vmem:[#allocation9 + $0x3a0] sm:$0xff]
        %v2447 = vld [vmem:[#allocation9 + $0x3a8] sm:$0xff]
        %v2448 = vld [vmem:[#allocation9 + $0x3b0] sm:$0xff]
        %v2449 = vld [vmem:[#allocation9 + $0x3b8] sm:$0xff]
        %v2450 = vld [vmem:[#allocation9 + $0x3c0] sm:$0xff]
        %v2451 = vld [vmem:[#allocation9 + $0x3c8] sm:$0xff]
        %v2452 = vld [vmem:[#allocation9 + $0x3d0] sm:$0xff]
        %v2453 = vld [vmem:[#allocation9 + $0x3d8] sm:$0xff]
        %v2454 = vld [vmem:[#allocation9 + $0x3e0] sm:$0xff]
        %v2455 = vld [vmem:[#allocation9 + $0x3e8] sm:$0xff]
        %v2456 = vld [vmem:[#allocation9 + $0x3f0] sm:$0xff]
        %v2457 = vld [vmem:[#allocation9 + $0x3f8] sm:$0xff]
        %v2458 = vld [vmem:[#allocation9 + $0x400] sm:$0xff]
        %v2459 = vld [vmem:[#allocation9 + $0x408] sm:$0xff]
        %v2460 = vld [vmem:[#allocation9 + $0x410] sm:$0xff]
        %v2461 = vld [vmem:[#allocation9 + $0x418] sm:$0xff]
        %v2462 = vld [vmem:[#allocation9 + $0x420] sm:$0xff]
        %v2463 = vld [vmem:[#allocation9 + $0x428] sm:$0xff]
        %v2464 = vld [vmem:[#allocation9 + $0x430] sm:$0xff]
        %v2465 = vld [vmem:[#allocation9 + $0x438] sm:$0xff]
        %v2466 = vld [vmem:[#allocation9 + $0x440] sm:$0xff]
        %v2467 = vld [vmem:[#allocation9 + $0x448] sm:$0xff]
        %v2468 = vld [vmem:[#allocation9 + $0x450] sm:$0xff]
        %v2469 = vld [vmem:[#allocation9 + $0x458] sm:$0xff]
        %v2470 = vld [vmem:[#allocation9 + $0x460] sm:$0xff]
        %v2471 = vld [vmem:[#allocation9 + $0x468] sm:$0xff]
        %v2472 = vld [vmem:[#allocation9 + $0x470] sm:$0xff]
        %v2473 = vld [vmem:[#allocation9 + $0x478] sm:$0xff]
        %v2474 = vld [vmem:[#allocation9 + $0x480] sm:$0xff]
        %v2475 = vld [vmem:[#allocation9 + $0x488] sm:$0xff]
        %v2476 = vld [vmem:[#allocation9 + $0x490] sm:$0xff]
        %v2477 = vld [vmem:[#allocation9 + $0x498] sm:$0xff]
        %v2478 = vld [vmem:[#allocation9 + $0x4a0] sm:$0xff]
        %v2479 = vld [vmem:[#allocation9 + $0x4a8] sm:$0xff]
        %v2480 = vld [vmem:[#allocation9 + $0x4b0] sm:$0xff]
        %v2481 = vld [vmem:[#allocation9 + $0x4b8] sm:$0xff]
        %v2482 = vld [vmem:[#allocation9 + $0x4c0] sm:$0xff]
        %v2483 = vld [vmem:[#allocation9 + $0x4c8] sm:$0xff]
        %v2484 = vld [vmem:[#allocation9 + $0x4d0] sm:$0xff]
        %v2485 = vld [vmem:[#allocation9 + $0x4d8] sm:$0xff]
        %v2486 = vld [vmem:[#allocation9 + $0x4e0] sm:$0xff]
        %v2487 = vld [vmem:[#allocation9 + $0x4e8] sm:$0xff]
        %v2488 = vld [vmem:[#allocation9 + $0x4f0] sm:$0xff]
        %v2489 = vld [vmem:[#allocation9 + $0x4f8] sm:$0xff]
        %v2490 = vld [vmem:[#allocation9 + $0x500] sm:$0xff]
        %v2491 = vld [vmem:[#allocation9 + $0x508] sm:$0xff]
        %v2492 = vld [vmem:[#allocation9 + $0x510] sm:$0xff]
        %v2493 = vld [vmem:[#allocation9 + $0x518] sm:$0xff]
        %v2494 = vld [vmem:[#allocation9 + $0x520] sm:$0xff]
        %v2495 = vld [vmem:[#allocation9 + $0x528] sm:$0xff]
        %v2496 = vld [vmem:[#allocation9 + $0x530] sm:$0xff]
        %v2497 = vld [vmem:[#allocation9 + $0x538] sm:$0xff]
        %v2498 = vld [vmem:[#allocation9 + $0x540] sm:$0xff]
        %v2499 = vld [vmem:[#allocation9 + $0x548] sm:$0xff]
        %v2500 = vld [vmem:[#allocation9 + $0x550] sm:$0xff]
        %v2501 = vld [vmem:[#allocation9 + $0x558] sm:$0xff]
        %v2502 = vld [vmem:[#allocation9 + $0x560] sm:$0xff]
        %v2503 = vld [vmem:[#allocation9 + $0x568] sm:$0xff]
        %v2504 = vld [vmem:[#allocation9 + $0x570] sm:$0xff]
        %v2505 = vld [vmem:[#allocation9 + $0x578] sm:$0xff]
        %v2506 = vld [vmem:[#allocation9 + $0x580] sm:$0xff]
        %v2507 = vld [vmem:[#allocation9 + $0x588] sm:$0xff]
        %v2508 = vld [vmem:[#allocation9 + $0x590] sm:$0xff]
        %v2509 = vld [vmem:[#allocation9 + $0x598] sm:$0xff]
        %v2510 = vld [vmem:[#allocation9 + $0x5a0] sm:$0xff]
        %v2511 = vld [vmem:[#allocation9 + $0x5a8] sm:$0xff]
        %v2512 = vld [vmem:[#allocation9 + $0x5b0] sm:$0xff]
        %v2513 = vld [vmem:[#allocation9 + $0x5b8] sm:$0xff]
        %v2514 = vld [vmem:[#allocation9 + $0x5c0] sm:$0xff]
        %v2515 = vld [vmem:[#allocation9 + $0x5c8] sm:$0xff]
        %v2516 = vld [vmem:[#allocation9 + $0x5d0] sm:$0xff]
        %v2517 = vld [vmem:[#allocation9 + $0x5d8] sm:$0xff]
        %v2518 = vld [vmem:[#allocation9 + $0x5e0] sm:$0xff]
        %v2519 = vld [vmem:[#allocation9 + $0x5e8] sm:$0xff]
        %v2520 = vld [vmem:[#allocation9 + $0x5f0] sm:$0xff]
        %v2521 = vld [vmem:[#allocation9 + $0x5f8] sm:$0xff]
        %v2522 = vld [vmem:[#allocation9 + $0x600] sm:$0xff]
        %v2523 = vld [vmem:[#allocation9 + $0x608] sm:$0xff]
        %v2524 = vld [vmem:[#allocation9 + $0x610] sm:$0xff]
        %v2525 = vld [vmem:[#allocation9 + $0x618] sm:$0xff]
        %v2526 = vld [vmem:[#allocation9 + $0x620] sm:$0xff]
        %v2527 = vld [vmem:[#allocation9 + $0x628] sm:$0xff]
        %v2528 = vld [vmem:[#allocation9 + $0x630] sm:$0xff]
        %v2529 = vld [vmem:[#allocation9 + $0x638] sm:$0xff]
        %v2530 = vld [vmem:[#allocation9 + $0x640] sm:$0xff]
        %v2531 = vld [vmem:[#allocation9 + $0x648] sm:$0xff]
        %v2532 = vld [vmem:[#allocation9 + $0x650] sm:$0xff]
        %v2533 = vld [vmem:[#allocation9 + $0x658] sm:$0xff]
        %v2534 = vld [vmem:[#allocation9 + $0x660] sm:$0xff]
        %v2535 = vld [vmem:[#allocation9 + $0x668] sm:$0xff]
        %v2536 = vld [vmem:[#allocation9 + $0x670] sm:$0xff]
        %v2537 = vld [vmem:[#allocation9 + $0x678] sm:$0xff]
        %v2538 = vld [vmem:[#allocation9 + $0x680] sm:$0xff]
        %v2539 = vld [vmem:[#allocation9 + $0x688] sm:$0xff]
        %v2540 = vld [vmem:[#allocation9 + $0x690] sm:$0xff]
        %v2541 = vld [vmem:[#allocation9 + $0x698] sm:$0xff]
        %v2542 = vld [vmem:[#allocation9 + $0x6a0] sm:$0xff]
        %v2543 = vld [vmem:[#allocation9 + $0x6a8] sm:$0xff]
        %v2544 = vld [vmem:[#allocation9 + $0x6b0] sm:$0xff]
        %v2545 = vld [vmem:[#allocation9 + $0x6b8] sm:$0xff]
        %v2546 = vld [vmem:[#allocation9 + $0x6c0] sm:$0xff]
        %v2547 = vld [vmem:[#allocation9 + $0x6c8] sm:$0xff]
        %v2548 = vld [vmem:[#allocation9 + $0x6d0] sm:$0xff]
        %v2549 = vld [vmem:[#allocation9 + $0x6d8] sm:$0xff]
        %v2550 = vld [vmem:[#allocation9 + $0x6e0] sm:$0xff]
        %v2551 = vld [vmem:[#allocation9 + $0x6e8] sm:$0xff]
        %v2552 = vld [vmem:[#allocation9 + $0x6f0] sm:$0xff]
        %v2553 = vld [vmem:[#allocation9 + $0x6f8] sm:$0xff]
        %v2554 = vld [vmem:[#allocation9 + $0x700] sm:$0xff]
        %v2555 = vld [vmem:[#allocation9 + $0x708] sm:$0xff]
        %v2556 = vld [vmem:[#allocation9 + $0x710] sm:$0xff]
        %v2557 = vld [vmem:[#allocation9 + $0x718] sm:$0xff]
        %v2558 = vld [vmem:[#allocation9 + $0x720] sm:$0xff]
        %v2559 = vld [vmem:[#allocation9 + $0x728] sm:$0xff]
        %v2560 = vld [vmem:[#allocation9 + $0x730] sm:$0xff]
        %v2561 = vld [vmem:[#allocation9 + $0x738] sm:$0xff]
        %v2562 = vld [vmem:[#allocation9 + $0x740] sm:$0xff]
        %v2563 = vld [vmem:[#allocation9 + $0x748] sm:$0xff]
        %v2564 = vld [vmem:[#allocation9 + $0x750] sm:$0xff]
        %v2565 = vld [vmem:[#allocation9 + $0x758] sm:$0xff]
        %v2566 = vld [vmem:[#allocation9 + $0x760] sm:$0xff]
        %v2567 = vld [vmem:[#allocation9 + $0x768] sm:$0xff]
        %v2568 = vld [vmem:[#allocation9 + $0x770] sm:$0xff]
        %v2569 = vld [vmem:[#allocation9 + $0x778] sm:$0xff]
        %v2570 = vld [vmem:[#allocation9 + $0x780] sm:$0xff]
        %v2571 = vld [vmem:[#allocation9 + $0x788] sm:$0xff]
        %v2572 = vld [vmem:[#allocation9 + $0x790] sm:$0xff]
        %v2573 = vld [vmem:[#allocation9 + $0x798] sm:$0xff]
        %v2574 = vld [vmem:[#allocation9 + $0x7a0] sm:$0xff]
        %v2575 = vld [vmem:[#allocation9 + $0x7a8] sm:$0xff]
        %v2576 = vld [vmem:[#allocation9 + $0x7b0] sm:$0xff]
        %v2577 = vld [vmem:[#allocation9 + $0x7b8] sm:$0xff]
        %v2578 = vld [vmem:[#allocation9 + $0x7c0] sm:$0xff]
        %v2579 = vld [vmem:[#allocation9 + $0x7c8] sm:$0xff]
        %v2580 = vld [vmem:[#allocation9 + $0x7d0] sm:$0xff]
        %v2581 = vld [vmem:[#allocation9 + $0x7d8] sm:$0xff]
        %v2582 = vld [vmem:[#allocation9 + $0x7e0] sm:$0xff]
        %v2583 = vld [vmem:[#allocation9 + $0x7e8] sm:$0xff]
        %v2584 = vld [vmem:[#allocation9 + $0x7f0] sm:$0xff]
        %v2585 = vld [vmem:[#allocation9 + $0x7f8] sm:$0xff]
        %2586 = vmatprep.subr.mxu0 %v2331
        %2587 = vmatpush1.msra.mxu0 %v2330
        %2588 = vmatprep.subr.mxu0 %v2339
        %2589 = vmatpush1.msra.mxu0 %v2338
        %2590 = vmatprep.subr.mxu0 %v2347
        %2591 = vmatpush1.msra.mxu0 %v2346
        %2592 = vmatprep.subr.mxu0 %v2355
        %2593 = vmatpush1.msra.mxu0 %v2354
        %2594 = vmatprep.subr.mxu0 %v2363
        %2595 = vmatpush1.msra.mxu0 %v2362
        %2596 = vmatprep.subr.mxu0 %v2371
        %2597 = vmatpush1.msra.mxu0 %v2370
        %2598 = vmatprep.subr.mxu0 %v2379
        %2599 = vmatpush1.msra.mxu0 %v2378
        %2600 = vmatprep.subr.mxu0 %v2387
        %2601 = vmatpush1.msra.mxu0 %v2386
        %2602 = vmatprep.subr.mxu0 %v2395
        %2603 = vmatpush1.msra.mxu0 %v2394
        %2604 = vmatprep.subr.mxu0 %v2403
        %2605 = vmatpush1.msra.mxu0 %v2402
        %2606 = vmatprep.subr.mxu0 %v2411
        %2607 = vmatpush1.msra.mxu0 %v2410
        %2608 = vmatprep.subr.mxu0 %v2419
        %2609 = vmatpush1.msra.mxu0 %v2418
        %2610 = vmatprep.subr.mxu0 %v2427
        %2611 = vmatpush1.msra.mxu0 %v2426
        %2612 = vmatprep.subr.mxu0 %v2435
        %2613 = vmatpush1.msra.mxu0 %v2434
        %2614 = vmatprep.subr.mxu0 %v2443
        %2615 = vmatpush1.msra.mxu0 %v2442
        %2616 = vmatprep.subr.mxu0 %v2451
        %2617 = vmatpush1.msra.mxu0 %v2450
        %2618 = vmatprep.subr.mxu0 %v2459
        %2619 = vmatpush1.msra.mxu0 %v2458
        %2620 = vmatprep.subr.mxu0 %v2467
        %2621 = vmatpush1.msra.mxu0 %v2466
        %2622 = vmatprep.subr.mxu0 %v2475
        %2623 = vmatpush1.msra.mxu0 %v2474
        %2624 = vmatprep.subr.mxu0 %v2483
        %2625 = vmatpush1.msra.mxu0 %v2482
        %2626 = vmatprep.subr.mxu0 %v2491
        %2627 = vmatpush1.msra.mxu0 %v2490
        %2628 = vmatprep.subr.mxu0 %v2499
        %2629 = vmatpush1.msra.mxu0 %v2498
        %2630 = vmatprep.subr.mxu0 %v2507
        %2631 = vmatpush1.msra.mxu0 %v2506
        %2632 = vmatprep.subr.mxu0 %v2515
        %2633 = vmatpush1.msra.mxu0 %v2514
        %2634 = vmatprep.subr.mxu0 %v2523
        %2635 = vmatpush1.msra.mxu0 %v2522
        %2636 = vmatprep.subr.mxu0 %v2531
        %2637 = vmatpush1.msra.mxu0 %v2530
        %2638 = vmatprep.subr.mxu0 %v2539
        %2639 = vmatpush1.msra.mxu0 %v2538
        %2640 = vmatprep.subr.mxu0 %v2547
        %2641 = vmatpush1.msra.mxu0 %v2546
        %2642 = vmatprep.subr.mxu0 %v2555
        %2643 = vmatpush1.msra.mxu0 %v2554
        %2644 = vmatprep.subr.mxu0 %v2563
        %2645 = vmatpush1.msra.mxu0 %v2562
        %2646 = vmatprep.subr.mxu0 %v2571
        %2647 = vmatpush1.msra.mxu0 %v2570
        %2648 = vmatprep.subr.mxu0 %v2579
        %2649 = vmatpush1.msra.mxu0 %v2578
        %2650 = vmatprep.mubr.f32.mxu0 %v2329
        %2651 = vmatmul.mubr.f32.gmra.mrb[0].mxu0 %v2328
        %v2652 = vpop.f32.mrb[0].mxu0
        %v2653 = vadd.f32 %v2291, %v2652
        %v2654 = vpop.f32.mrb[0].mxu0
        %v2655 = vadd.f32 %v2295, %v2654
        %2656 = vdwg.mxu0
        %2657 = vmatprep.subr.mxu0 %v2333
        %2658 = vmatpush1.msra.mxu0 %v2332
        %2659 = vmatprep.subr.mxu0 %v2341
        %2660 = vmatpush1.msra.mxu0 %v2340
        %2661 = vmatprep.subr.mxu0 %v2349
        %2662 = vmatpush1.msra.mxu0 %v2348
        %2663 = vmatprep.subr.mxu0 %v2357
        %2664 = vmatpush1.msra.mxu0 %v2356
        %2665 = vmatprep.subr.mxu0 %v2365
        %2666 = vmatpush1.msra.mxu0 %v2364
        %2667 = vmatprep.subr.mxu0 %v2373
        %2668 = vmatpush1.msra.mxu0 %v2372
        %2669 = vmatprep.subr.mxu0 %v2381
        %2670 = vmatpush1.msra.mxu0 %v2380
        %2671 = vmatprep.subr.mxu0 %v2389
        %2672 = vmatpush1.msra.mxu0 %v2388
        %2673 = vmatprep.subr.mxu0 %v2397
        %2674 = vmatpush1.msra.mxu0 %v2396
        %2675 = vmatprep.subr.mxu0 %v2405
        %2676 = vmatpush1.msra.mxu0 %v2404
        %2677 = vmatprep.subr.mxu0 %v2413
        %2678 = vmatpush1.msra.mxu0 %v2412
        %2679 = vmatprep.subr.mxu0 %v2421
        %2680 = vmatpush1.msra.mxu0 %v2420
        %2681 = vmatprep.subr.mxu0 %v2429
        %2682 = vmatpush1.msra.mxu0 %v2428
        %2683 = vmatprep.subr.mxu0 %v2437
        %2684 = vmatpush1.msra.mxu0 %v2436
        %2685 = vmatprep.subr.mxu0 %v2445
        %2686 = vmatpush1.msra.mxu0 %v2444
        %2687 = vmatprep.subr.mxu0 %v2453
        %2688 = vmatpush1.msra.mxu0 %v2452
        %2689 = vmatprep.subr.mxu0 %v2461
        %2690 = vmatpush1.msra.mxu0 %v2460
        %2691 = vmatprep.subr.mxu0 %v2469
        %2692 = vmatpush1.msra.mxu0 %v2468
        %2693 = vmatprep.subr.mxu0 %v2477
        %2694 = vmatpush1.msra.mxu0 %v2476
        %2695 = vmatprep.subr.mxu0 %v2485
        %2696 = vmatpush1.msra.mxu0 %v2484
        %2697 = vmatprep.subr.mxu0 %v2493
        %2698 = vmatpush1.msra.mxu0 %v2492
        %2699 = vmatprep.subr.mxu0 %v2501
        %2700 = vmatpush1.msra.mxu0 %v2500
        %2701 = vmatprep.subr.mxu0 %v2509
        %2702 = vmatpush1.msra.mxu0 %v2508
        %2703 = vmatprep.subr.mxu0 %v2517
        %2704 = vmatpush1.msra.mxu0 %v2516
        %2705 = vmatprep.subr.mxu0 %v2525
        %2706 = vmatpush1.msra.mxu0 %v2524
        %2707 = vmatprep.subr.mxu0 %v2533
        %2708 = vmatpush1.msra.mxu0 %v2532
        %2709 = vmatprep.subr.mxu0 %v2541
        %2710 = vmatpush1.msra.mxu0 %v2540
        %2711 = vmatprep.subr.mxu0 %v2549
        %2712 = vmatpush1.msra.mxu0 %v2548
        %2713 = vmatprep.subr.mxu0 %v2557
        %2714 = vmatpush1.msra.mxu0 %v2556
        %2715 = vmatprep.subr.mxu0 %v2565
        %2716 = vmatpush1.msra.mxu0 %v2564
        %2717 = vmatprep.subr.mxu0 %v2573
        %2718 = vmatpush1.msra.mxu0 %v2572
        %2719 = vmatprep.subr.mxu0 %v2581
        %2720 = vmatpush1.msra.mxu0 %v2580
        %2721 = vmatprep.mubr.f32.mxu0 %v2329
        %2722 = vmatmul.mubr.f32.gmra.mrb[0].mxu0 %v2328
        %v2723 = vpop.f32.mrb[0].mxu0
        %v2724 = vadd.f32 %v2299, %v2723
        %v2725 = vpop.f32.mrb[0].mxu0
        %v2726 = vadd.f32 %v2303, %v2725
        %2727 = vdwg.mxu0
        %2728 = vmatprep.subr.mxu0 %v2335
        %2729 = vmatpush1.msra.mxu0 %v2334
        %2730 = vmatprep.subr.mxu0 %v2343
        %2731 = vmatpush1.msra.mxu0 %v2342
        %2732 = vmatprep.subr.mxu0 %v2351
        %2733 = vmatpush1.msra.mxu0 %v2350
        %2734 = vmatprep.subr.mxu0 %v2359
        %2735 = vmatpush1.msra.mxu0 %v2358
        %2736 = vmatprep.subr.mxu0 %v2367
        %2737 = vmatpush1.msra.mxu0 %v2366
        %2738 = vmatprep.subr.mxu0 %v2375
        %2739 = vmatpush1.msra.mxu0 %v2374
        %2740 = vmatprep.subr.mxu0 %v2383
        %2741 = vmatpush1.msra.mxu0 %v2382
        %2742 = vmatprep.subr.mxu0 %v2391
        %2743 = vmatpush1.msra.mxu0 %v2390
        %2744 = vmatprep.subr.mxu0 %v2399
        %2745 = vmatpush1.msra.mxu0 %v2398
        %2746 = vmatprep.subr.mxu0 %v2407
        %2747 = vmatpush1.msra.mxu0 %v2406
        %2748 = vmatprep.subr.mxu0 %v2415
        %2749 = vmatpush1.msra.mxu0 %v2414
        %2750 = vmatprep.subr.mxu0 %v2423
        %2751 = vmatpush1.msra.mxu0 %v2422
        %2752 = vmatprep.subr.mxu0 %v2431
        %2753 = vmatpush1.msra.mxu0 %v2430
        %2754 = vmatprep.subr.mxu0 %v2439
        %2755 = vmatpush1.msra.mxu0 %v2438
        %2756 = vmatprep.subr.mxu0 %v2447
        %2757 = vmatpush1.msra.mxu0 %v2446
        %2758 = vmatprep.subr.mxu0 %v2455
        %2759 = vmatpush1.msra.mxu0 %v2454
        %2760 = vmatprep.subr.mxu0 %v2463
        %2761 = vmatpush1.msra.mxu0 %v2462
        %2762 = vmatprep.subr.mxu0 %v2471
        %2763 = vmatpush1.msra.mxu0 %v2470
        %2764 = vmatprep.subr.mxu0 %v2479
        %2765 = vmatpush1.msra.mxu0 %v2478
        %2766 = vmatprep.subr.mxu0 %v2487
        %2767 = vmatpush1.msra.mxu0 %v2486
        %2768 = vmatprep.subr.mxu0 %v2495
        %2769 = vmatpush1.msra.mxu0 %v2494
        %2770 = vmatprep.subr.mxu0 %v2503
        %2771 = vmatpush1.msra.mxu0 %v2502
        %2772 = vmatprep.subr.mxu0 %v2511
        %2773 = vmatpush1.msra.mxu0 %v2510
        %2774 = vmatprep.subr.mxu0 %v2519
        %2775 = vmatpush1.msra.mxu0 %v2518
        %2776 = vmatprep.subr.mxu0 %v2527
        %2777 = vmatpush1.msra.mxu0 %v2526
        %2778 = vmatprep.subr.mxu0 %v2535
        %2779 = vmatpush1.msra.mxu0 %v2534
        %2780 = vmatprep.subr.mxu0 %v2543
        %2781 = vmatpush1.msra.mxu0 %v2542
        %2782 = vmatprep.subr.mxu0 %v2551
        %2783 = vmatpush1.msra.mxu0 %v2550
        %2784 = vmatprep.subr.mxu0 %v2559
        %2785 = vmatpush1.msra.mxu0 %v2558
        %2786 = vmatprep.subr.mxu0 %v2567
        %2787 = vmatpush1.msra.mxu0 %v2566
        %2788 = vmatprep.subr.mxu0 %v2575
        %2789 = vmatpush1.msra.mxu0 %v2574
        %2790 = vmatprep.subr.mxu0 %v2583
        %2791 = vmatpush1.msra.mxu0 %v2582
        %2792 = vmatprep.mubr.f32.mxu0 %v2329
        %2793 = vmatmul.mubr.f32.gmra.mrb[0].mxu0 %v2328
        %v2794 = vpop.f32.mrb[0].mxu0
        %v2795 = vadd.f32 %v2307, %v2794
        %v2796 = vpop.f32.mrb[0].mxu0
        %v2797 = vadd.f32 %v2311, %v2796
        %2798 = vdwg.mxu0
        %2799 = vmatprep.subr.mxu0 %v2337
        %2800 = vmatpush1.msra.mxu0 %v2336
        %2801 = vmatprep.subr.mxu0 %v2345
        %2802 = vmatpush1.msra.mxu0 %v2344
        %2803 = vmatprep.subr.mxu0 %v2353
        %2804 = vmatpush1.msra.mxu0 %v2352
        %2805 = vmatprep.subr.mxu0 %v2361
        %2806 = vmatpush1.msra.mxu0 %v2360
        %2807 = vmatprep.subr.mxu0 %v2369
        %2808 = vmatpush1.msra.mxu0 %v2368
        %2809 = vmatprep.subr.mxu0 %v2377
        %2810 = vmatpush1.msra.mxu0 %v2376
        %2811 = vmatprep.subr.mxu0 %v2385
        %2812 = vmatpush1.msra.mxu0 %v2384
        %2813 = vmatprep.subr.mxu0 %v2393
        %2814 = vmatpush1.msra.mxu0 %v2392
        %2815 = vmatprep.subr.mxu0 %v2401
        %2816 = vmatpush1.msra.mxu0 %v2400
        %2817 = vmatprep.subr.mxu0 %v2409
        %2818 = vmatpush1.msra.mxu0 %v2408
        %2819 = vmatprep.subr.mxu0 %v2417
        %2820 = vmatpush1.msra.mxu0 %v2416
        %2821 = vmatprep.subr.mxu0 %v2425
        %2822 = vmatpush1.msra.mxu0 %v2424
        %2823 = vmatprep.subr.mxu0 %v2433
        %2824 = vmatpush1.msra.mxu0 %v2432
        %2825 = vmatprep.subr.mxu0 %v2441
        %2826 = vmatpush1.msra.mxu0 %v2440
        %2827 = vmatprep.subr.mxu0 %v2449
        %2828 = vmatpush1.msra.mxu0 %v2448
        %2829 = vmatprep.subr.mxu0 %v2457
        %2830 = vmatpush1.msra.mxu0 %v2456
        %2831 = vmatprep.subr.mxu0 %v2465
        %2832 = vmatpush1.msra.mxu0 %v2464
        %2833 = vmatprep.subr.mxu0 %v2473
        %2834 = vmatpush1.msra.mxu0 %v2472
        %2835 = vmatprep.subr.mxu0 %v2481
        %2836 = vmatpush1.msra.mxu0 %v2480
        %2837 = vmatprep.subr.mxu0 %v2489
        %2838 = vmatpush1.msra.mxu0 %v2488
        %2839 = vmatprep.subr.mxu0 %v2497
        %2840 = vmatpush1.msra.mxu0 %v2496
        %2841 = vmatprep.subr.mxu0 %v2505
        %2842 = vmatpush1.msra.mxu0 %v2504
        %2843 = vmatprep.subr.mxu0 %v2513
        %2844 = vmatpush1.msra.mxu0 %v2512
        %2845 = vmatprep.subr.mxu0 %v2521
        %2846 = vmatpush1.msra.mxu0 %v2520
        %2847 = vmatprep.subr.mxu0 %v2529
        %2848 = vmatpush1.msra.mxu0 %v2528
        %2849 = vmatprep.subr.mxu0 %v2537
        %2850 = vmatpush1.msra.mxu0 %v2536
        %2851 = vmatprep.subr.mxu0 %v2545
        %2852 = vmatpush1.msra.mxu0 %v2544
        %2853 = vmatprep.subr.mxu0 %v2553
        %2854 = vmatpush1.msra.mxu0 %v2552
        %2855 = vmatprep.subr.mxu0 %v2561
        %2856 = vmatpush1.msra.mxu0 %v2560
        %2857 = vmatprep.subr.mxu0 %v2569
        %2858 = vmatpush1.msra.mxu0 %v2568
        %2859 = vmatprep.subr.mxu0 %v2577
        %2860 = vmatpush1.msra.mxu0 %v2576
        %2861 = vmatprep.subr.mxu0 %v2585
        %2862 = vmatpush1.msra.mxu0 %v2584
        %2863 = vmatprep.mubr.f32.mxu0 %v2329
        %2864 = vmatmul.mubr.f32.gmra.mrb[0].mxu0 %v2328
        %v2865 = vpop.f32.mrb[0].mxu0
        %v2866 = vadd.f32 %v2315, %v2865
        %v2867 = vpop.f32.mrb[0].mxu0
        %v2868 = vadd.f32 %v2319, %v2867
        %2869 = vdwg.mxu0
        %2870 = vst [vmem:[#allocation2] sm:$0xff] %v2653
        %2871 = vst [vmem:[#allocation2 + $0x8] sm:$0xff] %v2655
        %2872 = vst [vmem:[#allocation2 + $0x10] sm:$0xff] %v2724
        %2873 = vst [vmem:[#allocation2 + $0x18] sm:$0xff] %v2726
        %2874 = vst [vmem:[#allocation2 + $0x20] sm:$0xff] %v2795
        %2875 = vst [vmem:[#allocation2 + $0x28] sm:$0xff] %v2797
        %2876 = vst [vmem:[#allocation2 + $0x30] sm:$0xff] %v2866
        %2877 = vst [vmem:[#allocation2 + $0x38] sm:$0xff] %v2868
        %v2878 = vld [vmem:[%s1670] sm:$0xff]
        %v2879 = vld [vmem:[%s1670 + $0x8] sm:$0xff]
        %v2880 = vld [vmem:[#allocation9] sm:$0xff]
        %v2881 = vld [vmem:[#allocation9 + $0x8] sm:$0xff]
        %v2882 = vld [vmem:[#allocation9 + $0x10] sm:$0xff]
        %v2883 = vld [vmem:[#allocation9 + $0x18] sm:$0xff]
        %v2884 = vld [vmem:[#allocation9 + $0x20] sm:$0xff]
        %v2885 = vld [vmem:[#allocation9 + $0x28] sm:$0xff]
        %v2886 = vld [vmem:[#allocation9 + $0x30] sm:$0xff]
        %v2887 = vld [vmem:[#allocation9 + $0x38] sm:$0xff]
        %v2888 = vld [vmem:[#allocation9 + $0x40] sm:$0xff]
        %v2889 = vld [vmem:[#allocation9 + $0x48] sm:$0xff]
        %v2890 = vld [vmem:[#allocation9 + $0x50] sm:$0xff]
        %v2891 = vld [vmem:[#allocation9 + $0x58] sm:$0xff]
        %v2892 = vld [vmem:[#allocation9 + $0x60] sm:$0xff]
        %v2893 = vld [vmem:[#allocation9 + $0x68] sm:$0xff]
        %v2894 = vld [vmem:[#allocation9 + $0x70] sm:$0xff]
        %v2895 = vld [vmem:[#allocation9 + $0x78] sm:$0xff]
        %v2896 = vld [vmem:[#allocation9 + $0x80] sm:$0xff]
        %v2897 = vld [vmem:[#allocation9 + $0x88] sm:$0xff]
        %v2898 = vld [vmem:[#allocation9 + $0x90] sm:$0xff]
        %v2899 = vld [vmem:[#allocation9 + $0x98] sm:$0xff]
        %v2900 = vld [vmem:[#allocation9 + $0xa0] sm:$0xff]
        %v2901 = vld [vmem:[#allocation9 + $0xa8] sm:$0xff]
        %v2902 = vld [vmem:[#allocation9 + $0xb0] sm:$0xff]
        %v2903 = vld [vmem:[#allocation9 + $0xb8] sm:$0xff]
        %v2904 = vld [vmem:[#allocation9 + $0xc0] sm:$0xff]
        %v2905 = vld [vmem:[#allocation9 + $0xc8] sm:$0xff]
        %v2906 = vld [vmem:[#allocation9 + $0xd0] sm:$0xff]
        %v2907 = vld [vmem:[#allocation9 + $0xd8] sm:$0xff]
        %v2908 = vld [vmem:[#allocation9 + $0xe0] sm:$0xff]
        %v2909 = vld [vmem:[#allocation9 + $0xe8] sm:$0xff]
        %v2910 = vld [vmem:[#allocation9 + $0xf0] sm:$0xff]
        %v2911 = vld [vmem:[#allocation9 + $0xf8] sm:$0xff]
        %v2912 = vld [vmem:[#allocation9 + $0x100] sm:$0xff]
        %v2913 = vld [vmem:[#allocation9 + $0x108] sm:$0xff]
        %v2914 = vld [vmem:[#allocation9 + $0x110] sm:$0xff]
        %v2915 = vld [vmem:[#allocation9 + $0x118] sm:$0xff]
        %v2916 = vld [vmem:[#allocation9 + $0x120] sm:$0xff]
        %v2917 = vld [vmem:[#allocation9 + $0x128] sm:$0xff]
        %v2918 = vld [vmem:[#allocation9 + $0x130] sm:$0xff]
        %v2919 = vld [vmem:[#allocation9 + $0x138] sm:$0xff]
        %v2920 = vld [vmem:[#allocation9 + $0x140] sm:$0xff]
        %v2921 = vld [vmem:[#allocation9 + $0x148] sm:$0xff]
        %v2922 = vld [vmem:[#allocation9 + $0x150] sm:$0xff]
        %v2923 = vld [vmem:[#allocation9 + $0x158] sm:$0xff]
        %v2924 = vld [vmem:[#allocation9 + $0x160] sm:$0xff]
        %v2925 = vld [vmem:[#allocation9 + $0x168] sm:$0xff]
        %v2926 = vld [vmem:[#allocation9 + $0x170] sm:$0xff]
        %v2927 = vld [vmem:[#allocation9 + $0x178] sm:$0xff]
        %v2928 = vld [vmem:[#allocation9 + $0x180] sm:$0xff]
        %v2929 = vld [vmem:[#allocation9 + $0x188] sm:$0xff]
        %v2930 = vld [vmem:[#allocation9 + $0x190] sm:$0xff]
        %v2931 = vld [vmem:[#allocation9 + $0x198] sm:$0xff]
        %v2932 = vld [vmem:[#allocation9 + $0x1a0] sm:$0xff]
        %v2933 = vld [vmem:[#allocation9 + $0x1a8] sm:$0xff]
        %v2934 = vld [vmem:[#allocation9 + $0x1b0] sm:$0xff]
        %v2935 = vld [vmem:[#allocation9 + $0x1b8] sm:$0xff]
        %v2936 = vld [vmem:[#allocation9 + $0x1c0] sm:$0xff]
        %v2937 = vld [vmem:[#allocation9 + $0x1c8] sm:$0xff]
        %v2938 = vld [vmem:[#allocation9 + $0x1d0] sm:$0xff]
        %v2939 = vld [vmem:[#allocation9 + $0x1d8] sm:$0xff]
        %v2940 = vld [vmem:[#allocation9 + $0x1e0] sm:$0xff]
        %v2941 = vld [vmem:[#allocation9 + $0x1e8] sm:$0xff]
        %v2942 = vld [vmem:[#allocation9 + $0x1f0] sm:$0xff]
        %v2943 = vld [vmem:[#allocation9 + $0x1f8] sm:$0xff]
        %v2944 = vld [vmem:[#allocation9 + $0x200] sm:$0xff]
        %v2945 = vld [vmem:[#allocation9 + $0x208] sm:$0xff]
        %v2946 = vld [vmem:[#allocation9 + $0x210] sm:$0xff]
        %v2947 = vld [vmem:[#allocation9 + $0x218] sm:$0xff]
        %v2948 = vld [vmem:[#allocation9 + $0x220] sm:$0xff]
        %v2949 = vld [vmem:[#allocation9 + $0x228] sm:$0xff]
        %v2950 = vld [vmem:[#allocation9 + $0x230] sm:$0xff]
        %v2951 = vld [vmem:[#allocation9 + $0x238] sm:$0xff]
        %v2952 = vld [vmem:[#allocation9 + $0x240] sm:$0xff]
        %v2953 = vld [vmem:[#allocation9 + $0x248] sm:$0xff]
        %v2954 = vld [vmem:[#allocation9 + $0x250] sm:$0xff]
        %v2955 = vld [vmem:[#allocation9 + $0x258] sm:$0xff]
        %v2956 = vld [vmem:[#allocation9 + $0x260] sm:$0xff]
        %v2957 = vld [vmem:[#allocation9 + $0x268] sm:$0xff]
        %v2958 = vld [vmem:[#allocation9 + $0x270] sm:$0xff]
        %v2959 = vld [vmem:[#allocation9 + $0x278] sm:$0xff]
        %v2960 = vld [vmem:[#allocation9 + $0x280] sm:$0xff]
        %v2961 = vld [vmem:[#allocation9 + $0x288] sm:$0xff]
        %v2962 = vld [vmem:[#allocation9 + $0x290] sm:$0xff]
        %v2963 = vld [vmem:[#allocation9 + $0x298] sm:$0xff]
        %v2964 = vld [vmem:[#allocation9 + $0x2a0] sm:$0xff]
        %v2965 = vld [vmem:[#allocation9 + $0x2a8] sm:$0xff]
        %v2966 = vld [vmem:[#allocation9 + $0x2b0] sm:$0xff]
        %v2967 = vld [vmem:[#allocation9 + $0x2b8] sm:$0xff]
        %v2968 = vld [vmem:[#allocation9 + $0x2c0] sm:$0xff]
        %v2969 = vld [vmem:[#allocation9 + $0x2c8] sm:$0xff]
        %v2970 = vld [vmem:[#allocation9 + $0x2d0] sm:$0xff]
        %v2971 = vld [vmem:[#allocation9 + $0x2d8] sm:$0xff]
        %v2972 = vld [vmem:[#allocation9 + $0x2e0] sm:$0xff]
        %v2973 = vld [vmem:[#allocation9 + $0x2e8] sm:$0xff]
        %v2974 = vld [vmem:[#allocation9 + $0x2f0] sm:$0xff]
        %v2975 = vld [vmem:[#allocation9 + $0x2f8] sm:$0xff]
        %v2976 = vld [vmem:[#allocation9 + $0x300] sm:$0xff]
        %v2977 = vld [vmem:[#allocation9 + $0x308] sm:$0xff]
        %v2978 = vld [vmem:[#allocation9 + $0x310] sm:$0xff]
        %v2979 = vld [vmem:[#allocation9 + $0x318] sm:$0xff]
        %v2980 = vld [vmem:[#allocation9 + $0x320] sm:$0xff]
        %v2981 = vld [vmem:[#allocation9 + $0x328] sm:$0xff]
        %v2982 = vld [vmem:[#allocation9 + $0x330] sm:$0xff]
        %v2983 = vld [vmem:[#allocation9 + $0x338] sm:$0xff]
        %v2984 = vld [vmem:[#allocation9 + $0x340] sm:$0xff]
        %v2985 = vld [vmem:[#allocation9 + $0x348] sm:$0xff]
        %v2986 = vld [vmem:[#allocation9 + $0x350] sm:$0xff]
        %v2987 = vld [vmem:[#allocation9 + $0x358] sm:$0xff]
        %v2988 = vld [vmem:[#allocation9 + $0x360] sm:$0xff]
        %v2989 = vld [vmem:[#allocation9 + $0x368] sm:$0xff]
        %v2990 = vld [vmem:[#allocation9 + $0x370] sm:$0xff]
        %v2991 = vld [vmem:[#allocation9 + $0x378] sm:$0xff]
        %v2992 = vld [vmem:[#allocation9 + $0x380] sm:$0xff]
        %v2993 = vld [vmem:[#allocation9 + $0x388] sm:$0xff]
        %v2994 = vld [vmem:[#allocation9 + $0x390] sm:$0xff]
        %v2995 = vld [vmem:[#allocation9 + $0x398] sm:$0xff]
        %v2996 = vld [vmem:[#allocation9 + $0x3a0] sm:$0xff]
        %v2997 = vld [vmem:[#allocation9 + $0x3a8] sm:$0xff]
        %v2998 = vld [vmem:[#allocation9 + $0x3b0] sm:$0xff]
        %v2999 = vld [vmem:[#allocation9 + $0x3b8] sm:$0xff]
        %v3000 = vld [vmem:[#allocation9 + $0x3c0] sm:$0xff]
        %v3001 = vld [vmem:[#allocation9 + $0x3c8] sm:$0xff]
        %v3002 = vld [vmem:[#allocation9 + $0x3d0] sm:$0xff]
        %v3003 = vld [vmem:[#allocation9 + $0x3d8] sm:$0xff]
        %v3004 = vld [vmem:[#allocation9 + $0x3e0] sm:$0xff]
        %v3005 = vld [vmem:[#allocation9 + $0x3e8] sm:$0xff]
        %v3006 = vld [vmem:[#allocation9 + $0x3f0] sm:$0xff]
        %v3007 = vld [vmem:[#allocation9 + $0x3f8] sm:$0xff]
        %v3008 = vld [vmem:[#allocation9 + $0x400] sm:$0xff]
        %v3009 = vld [vmem:[#allocation9 + $0x408] sm:$0xff]
        %v3010 = vld [vmem:[#allocation9 + $0x410] sm:$0xff]
        %v3011 = vld [vmem:[#allocation9 + $0x418] sm:$0xff]
        %v3012 = vld [vmem:[#allocation9 + $0x420] sm:$0xff]
        %v3013 = vld [vmem:[#allocation9 + $0x428] sm:$0xff]
        %v3014 = vld [vmem:[#allocation9 + $0x430] sm:$0xff]
        %v3015 = vld [vmem:[#allocation9 + $0x438] sm:$0xff]
        %v3016 = vld [vmem:[#allocation9 + $0x440] sm:$0xff]
        %v3017 = vld [vmem:[#allocation9 + $0x448] sm:$0xff]
        %v3018 = vld [vmem:[#allocation9 + $0x450] sm:$0xff]
        %v3019 = vld [vmem:[#allocation9 + $0x458] sm:$0xff]
        %v3020 = vld [vmem:[#allocation9 + $0x460] sm:$0xff]
        %v3021 = vld [vmem:[#allocation9 + $0x468] sm:$0xff]
        %v3022 = vld [vmem:[#allocation9 + $0x470] sm:$0xff]
        %v3023 = vld [vmem:[#allocation9 + $0x478] sm:$0xff]
        %v3024 = vld [vmem:[#allocation9 + $0x480] sm:$0xff]
        %v3025 = vld [vmem:[#allocation9 + $0x488] sm:$0xff]
        %v3026 = vld [vmem:[#allocation9 + $0x490] sm:$0xff]
        %v3027 = vld [vmem:[#allocation9 + $0x498] sm:$0xff]
        %v3028 = vld [vmem:[#allocation9 + $0x4a0] sm:$0xff]
        %v3029 = vld [vmem:[#allocation9 + $0x4a8] sm:$0xff]
        %v3030 = vld [vmem:[#allocation9 + $0x4b0] sm:$0xff]
        %v3031 = vld [vmem:[#allocation9 + $0x4b8] sm:$0xff]
        %v3032 = vld [vmem:[#allocation9 + $0x4c0] sm:$0xff]
        %v3033 = vld [vmem:[#allocation9 + $0x4c8] sm:$0xff]
        %v3034 = vld [vmem:[#allocation9 + $0x4d0] sm:$0xff]
        %v3035 = vld [vmem:[#allocation9 + $0x4d8] sm:$0xff]
        %v3036 = vld [vmem:[#allocation9 + $0x4e0] sm:$0xff]
        %v3037 = vld [vmem:[#allocation9 + $0x4e8] sm:$0xff]
        %v3038 = vld [vmem:[#allocation9 + $0x4f0] sm:$0xff]
        %v3039 = vld [vmem:[#allocation9 + $0x4f8] sm:$0xff]
        %v3040 = vld [vmem:[#allocation9 + $0x500] sm:$0xff]
        %v3041 = vld [vmem:[#allocation9 + $0x508] sm:$0xff]
        %v3042 = vld [vmem:[#allocation9 + $0x510] sm:$0xff]
        %v3043 = vld [vmem:[#allocation9 + $0x518] sm:$0xff]
        %v3044 = vld [vmem:[#allocation9 + $0x520] sm:$0xff]
        %v3045 = vld [vmem:[#allocation9 + $0x528] sm:$0xff]
        %v3046 = vld [vmem:[#allocation9 + $0x530] sm:$0xff]
        %v3047 = vld [vmem:[#allocation9 + $0x538] sm:$0xff]
        %v3048 = vld [vmem:[#allocation9 + $0x540] sm:$0xff]
        %v3049 = vld [vmem:[#allocation9 + $0x548] sm:$0xff]
        %v3050 = vld [vmem:[#allocation9 + $0x550] sm:$0xff]
        %v3051 = vld [vmem:[#allocation9 + $0x558] sm:$0xff]
        %v3052 = vld [vmem:[#allocation9 + $0x560] sm:$0xff]
        %v3053 = vld [vmem:[#allocation9 + $0x568] sm:$0xff]
        %v3054 = vld [vmem:[#allocation9 + $0x570] sm:$0xff]
        %v3055 = vld [vmem:[#allocation9 + $0x578] sm:$0xff]
        %v3056 = vld [vmem:[#allocation9 + $0x580] sm:$0xff]
        %v3057 = vld [vmem:[#allocation9 + $0x588] sm:$0xff]
        %v3058 = vld [vmem:[#allocation9 + $0x590] sm:$0xff]
        %v3059 = vld [vmem:[#allocation9 + $0x598] sm:$0xff]
        %v3060 = vld [vmem:[#allocation9 + $0x5a0] sm:$0xff]
        %v3061 = vld [vmem:[#allocation9 + $0x5a8] sm:$0xff]
        %v3062 = vld [vmem:[#allocation9 + $0x5b0] sm:$0xff]
        %v3063 = vld [vmem:[#allocation9 + $0x5b8] sm:$0xff]
        %v3064 = vld [vmem:[#allocation9 + $0x5c0] sm:$0xff]
        %v3065 = vld [vmem:[#allocation9 + $0x5c8] sm:$0xff]
        %v3066 = vld [vmem:[#allocation9 + $0x5d0] sm:$0xff]
        %v3067 = vld [vmem:[#allocation9 + $0x5d8] sm:$0xff]
        %v3068 = vld [vmem:[#allocation9 + $0x5e0] sm:$0xff]
        %v3069 = vld [vmem:[#allocation9 + $0x5e8] sm:$0xff]
        %v3070 = vld [vmem:[#allocation9 + $0x5f0] sm:$0xff]
        %v3071 = vld [vmem:[#allocation9 + $0x5f8] sm:$0xff]
        %v3072 = vld [vmem:[#allocation9 + $0x600] sm:$0xff]
        %v3073 = vld [vmem:[#allocation9 + $0x608] sm:$0xff]
        %v3074 = vld [vmem:[#allocation9 + $0x610] sm:$0xff]
        %v3075 = vld [vmem:[#allocation9 + $0x618] sm:$0xff]
        %v3076 = vld [vmem:[#allocation9 + $0x620] sm:$0xff]
        %v3077 = vld [vmem:[#allocation9 + $0x628] sm:$0xff]
        %v3078 = vld [vmem:[#allocation9 + $0x630] sm:$0xff]
        %v3079 = vld [vmem:[#allocation9 + $0x638] sm:$0xff]
        %v3080 = vld [vmem:[#allocation9 + $0x640] sm:$0xff]
        %v3081 = vld [vmem:[#allocation9 + $0x648] sm:$0xff]
        %v3082 = vld [vmem:[#allocation9 + $0x650] sm:$0xff]
        %v3083 = vld [vmem:[#allocation9 + $0x658] sm:$0xff]
        %v3084 = vld [vmem:[#allocation9 + $0x660] sm:$0xff]
        %v3085 = vld [vmem:[#allocation9 + $0x668] sm:$0xff]
        %v3086 = vld [vmem:[#allocation9 + $0x670] sm:$0xff]
        %v3087 = vld [vmem:[#allocation9 + $0x678] sm:$0xff]
        %v3088 = vld [vmem:[#allocation9 + $0x680] sm:$0xff]
        %v3089 = vld [vmem:[#allocation9 + $0x688] sm:$0xff]
        %v3090 = vld [vmem:[#allocation9 + $0x690] sm:$0xff]
        %v3091 = vld [vmem:[#allocation9 + $0x698] sm:$0xff]
        %v3092 = vld [vmem:[#allocation9 + $0x6a0] sm:$0xff]
        %v3093 = vld [vmem:[#allocation9 + $0x6a8] sm:$0xff]
        %v3094 = vld [vmem:[#allocation9 + $0x6b0] sm:$0xff]
        %v3095 = vld [vmem:[#allocation9 + $0x6b8] sm:$0xff]
        %v3096 = vld [vmem:[#allocation9 + $0x6c0] sm:$0xff]
        %v3097 = vld [vmem:[#allocation9 + $0x6c8] sm:$0xff]
        %v3098 = vld [vmem:[#allocation9 + $0x6d0] sm:$0xff]
        %v3099 = vld [vmem:[#allocation9 + $0x6d8] sm:$0xff]
        %v3100 = vld [vmem:[#allocation9 + $0x6e0] sm:$0xff]
        %v3101 = vld [vmem:[#allocation9 + $0x6e8] sm:$0xff]
        %v3102 = vld [vmem:[#allocation9 + $0x6f0] sm:$0xff]
        %v3103 = vld [vmem:[#allocation9 + $0x6f8] sm:$0xff]
        %v3104 = vld [vmem:[#allocation9 + $0x700] sm:$0xff]
        %v3105 = vld [vmem:[#allocation9 + $0x708] sm:$0xff]
        %v3106 = vld [vmem:[#allocation9 + $0x710] sm:$0xff]
        %v3107 = vld [vmem:[#allocation9 + $0x718] sm:$0xff]
        %v3108 = vld [vmem:[#allocation9 + $0x720] sm:$0xff]
        %v3109 = vld [vmem:[#allocation9 + $0x728] sm:$0xff]
        %v3110 = vld [vmem:[#allocation9 + $0x730] sm:$0xff]
        %v3111 = vld [vmem:[#allocation9 + $0x738] sm:$0xff]
        %v3112 = vld [vmem:[#allocation9 + $0x740] sm:$0xff]
        %v3113 = vld [vmem:[#allocation9 + $0x748] sm:$0xff]
        %v3114 = vld [vmem:[#allocation9 + $0x750] sm:$0xff]
        %v3115 = vld [vmem:[#allocation9 + $0x758] sm:$0xff]
        %v3116 = vld [vmem:[#allocation9 + $0x760] sm:$0xff]
        %v3117 = vld [vmem:[#allocation9 + $0x768] sm:$0xff]
        %v3118 = vld [vmem:[#allocation9 + $0x770] sm:$0xff]
        %v3119 = vld [vmem:[#allocation9 + $0x778] sm:$0xff]
        %v3120 = vld [vmem:[#allocation9 + $0x780] sm:$0xff]
        %v3121 = vld [vmem:[#allocation9 + $0x788] sm:$0xff]
        %v3122 = vld [vmem:[#allocation9 + $0x790] sm:$0xff]
        %v3123 = vld [vmem:[#allocation9 + $0x798] sm:$0xff]
        %v3124 = vld [vmem:[#allocation9 + $0x7a0] sm:$0xff]
        %v3125 = vld [vmem:[#allocation9 + $0x7a8] sm:$0xff]
        %v3126 = vld [vmem:[#allocation9 + $0x7b0] sm:$0xff]
        %v3127 = vld [vmem:[#allocation9 + $0x7b8] sm:$0xff]
        %v3128 = vld [vmem:[#allocation9 + $0x7c0] sm:$0xff]
        %v3129 = vld [vmem:[#allocation9 + $0x7c8] sm:$0xff]
        %v3130 = vld [vmem:[#allocation9 + $0x7d0] sm:$0xff]
        %v3131 = vld [vmem:[#allocation9 + $0x7d8] sm:$0xff]
        %v3132 = vld [vmem:[#allocation9 + $0x7e0] sm:$0xff]
        %v3133 = vld [vmem:[#allocation9 + $0x7e8] sm:$0xff]
        %v3134 = vld [vmem:[#allocation9 + $0x7f0] sm:$0xff]
        %v3135 = vld [vmem:[#allocation9 + $0x7f8] sm:$0xff]
        %3136 = vmatprep.subr.mxu0 %v2881
        %3137 = vmatpush1.msra.mxu0 %v2880
        %3138 = vmatprep.subr.mxu0 %v2889
        %3139 = vmatpush1.msra.mxu0 %v2888
        %3140 = vmatprep.subr.mxu0 %v2897
        %3141 = vmatpush1.msra.mxu0 %v2896
        %3142 = vmatprep.subr.mxu0 %v2905
        %3143 = vmatpush1.msra.mxu0 %v2904
        %3144 = vmatprep.subr.mxu0 %v2913
        %3145 = vmatpush1.msra.mxu0 %v2912
        %3146 = vmatprep.subr.mxu0 %v2921
        %3147 = vmatpush1.msra.mxu0 %v2920
        %3148 = vmatprep.subr.mxu0 %v2929
        %3149 = vmatpush1.msra.mxu0 %v2928
        %3150 = vmatprep.subr.mxu0 %v2937
        %3151 = vmatpush1.msra.mxu0 %v2936
        %3152 = vmatprep.subr.mxu0 %v2945
        %3153 = vmatpush1.msra.mxu0 %v2944
        %3154 = vmatprep.subr.mxu0 %v2953
        %3155 = vmatpush1.msra.mxu0 %v2952
        %3156 = vmatprep.subr.mxu0 %v2961
        %3157 = vmatpush1.msra.mxu0 %v2960
        %3158 = vmatprep.subr.mxu0 %v2969
        %3159 = vmatpush1.msra.mxu0 %v2968
        %3160 = vmatprep.subr.mxu0 %v2977
        %3161 = vmatpush1.msra.mxu0 %v2976
        %3162 = vmatprep.subr.mxu0 %v2985
        %3163 = vmatpush1.msra.mxu0 %v2984
        %3164 = vmatprep.subr.mxu0 %v2993
        %3165 = vmatpush1.msra.mxu0 %v2992
        %3166 = vmatprep.subr.mxu0 %v3001
        %3167 = vmatpush1.msra.mxu0 %v3000
        %3168 = vmatprep.subr.mxu0 %v3009
        %3169 = vmatpush1.msra.mxu0 %v3008
        %3170 = vmatprep.subr.mxu0 %v3017
        %3171 = vmatpush1.msra.mxu0 %v3016
        %3172 = vmatprep.subr.mxu0 %v3025
        %3173 = vmatpush1.msra.mxu0 %v3024
        %3174 = vmatprep.subr.mxu0 %v3033
        %3175 = vmatpush1.msra.mxu0 %v3032
        %3176 = vmatprep.subr.mxu0 %v3041
        %3177 = vmatpush1.msra.mxu0 %v3040
        %3178 = vmatprep.subr.mxu0 %v3049
        %3179 = vmatpush1.msra.mxu0 %v3048
        %3180 = vmatprep.subr.mxu0 %v3057
        %3181 = vmatpush1.msra.mxu0 %v3056
        %3182 = vmatprep.subr.mxu0 %v3065
        %3183 = vmatpush1.msra.mxu0 %v3064
        %3184 = vmatprep.subr.mxu0 %v3073
        %3185 = vmatpush1.msra.mxu0 %v3072
        %3186 = vmatprep.subr.mxu0 %v3081
        %3187 = vmatpush1.msra.mxu0 %v3080
        %3188 = vmatprep.subr.mxu0 %v3089
        %3189 = vmatpush1.msra.mxu0 %v3088
        %3190 = vmatprep.subr.mxu0 %v3097
        %3191 = vmatpush1.msra.mxu0 %v3096
        %3192 = vmatprep.subr.mxu0 %v3105
        %3193 = vmatpush1.msra.mxu0 %v3104
        %3194 = vmatprep.subr.mxu0 %v3113
        %3195 = vmatpush1.msra.mxu0 %v3112
        %3196 = vmatprep.subr.mxu0 %v3121
        %3197 = vmatpush1.msra.mxu0 %v3120
        %3198 = vmatprep.subr.mxu0 %v3129
        %3199 = vmatpush1.msra.mxu0 %v3128
        %3200 = vmatprep.mubr.f32.mxu0 %v2879
        %3201 = vmatmul.mubr.f32.gmra.mrb[0].mxu0 %v2878
        %v3202 = vpop.f32.mrb[0].mxu0
        %v3203 = vadd.f32 %v2291, %v3202
        %v3204 = vpop.f32.mrb[0].mxu0
        %v3205 = vadd.f32 %v2295, %v3204
        %3206 = vdwg.mxu0
        %3207 = vmatprep.subr.mxu0 %v2883
        %3208 = vmatpush1.msra.mxu0 %v2882
        %3209 = vmatprep.subr.mxu0 %v2891
        %3210 = vmatpush1.msra.mxu0 %v2890
        %3211 = vmatprep.subr.mxu0 %v2899
        %3212 = vmatpush1.msra.mxu0 %v2898
        %3213 = vmatprep.subr.mxu0 %v2907
        %3214 = vmatpush1.msra.mxu0 %v2906
        %3215 = vmatprep.subr.mxu0 %v2915
        %3216 = vmatpush1.msra.mxu0 %v2914
        %3217 = vmatprep.subr.mxu0 %v2923
        %3218 = vmatpush1.msra.mxu0 %v2922
        %3219 = vmatprep.subr.mxu0 %v2931
        %3220 = vmatpush1.msra.mxu0 %v2930
        %3221 = vmatprep.subr.mxu0 %v2939
        %3222 = vmatpush1.msra.mxu0 %v2938
        %3223 = vmatprep.subr.mxu0 %v2947
        %3224 = vmatpush1.msra.mxu0 %v2946
        %3225 = vmatprep.subr.mxu0 %v2955
        %3226 = vmatpush1.msra.mxu0 %v2954
        %3227 = vmatprep.subr.mxu0 %v2963
        %3228 = vmatpush1.msra.mxu0 %v2962
        %3229 = vmatprep.subr.mxu0 %v2971
        %3230 = vmatpush1.msra.mxu0 %v2970
        %3231 = vmatprep.subr.mxu0 %v2979
        %3232 = vmatpush1.msra.mxu0 %v2978
        %3233 = vmatprep.subr.mxu0 %v2987
        %3234 = vmatpush1.msra.mxu0 %v2986
        %3235 = vmatprep.subr.mxu0 %v2995
        %3236 = vmatpush1.msra.mxu0 %v2994
        %3237 = vmatprep.subr.mxu0 %v3003
        %3238 = vmatpush1.msra.mxu0 %v3002
        %3239 = vmatprep.subr.mxu0 %v3011
        %3240 = vmatpush1.msra.mxu0 %v3010
        %3241 = vmatprep.subr.mxu0 %v3019
        %3242 = vmatpush1.msra.mxu0 %v3018
        %3243 = vmatprep.subr.mxu0 %v3027
        %3244 = vmatpush1.msra.mxu0 %v3026
        %3245 = vmatprep.subr.mxu0 %v3035
        %3246 = vmatpush1.msra.mxu0 %v3034
        %3247 = vmatprep.subr.mxu0 %v3043
        %3248 = vmatpush1.msra.mxu0 %v3042
        %3249 = vmatprep.subr.mxu0 %v3051
        %3250 = vmatpush1.msra.mxu0 %v3050
        %3251 = vmatprep.subr.mxu0 %v3059
        %3252 = vmatpush1.msra.mxu0 %v3058
        %3253 = vmatprep.subr.mxu0 %v3067
        %3254 = vmatpush1.msra.mxu0 %v3066
        %3255 = vmatprep.subr.mxu0 %v3075
        %3256 = vmatpush1.msra.mxu0 %v3074
        %3257 = vmatprep.subr.mxu0 %v3083
        %3258 = vmatpush1.msra.mxu0 %v3082
        %3259 = vmatprep.subr.mxu0 %v3091
        %3260 = vmatpush1.msra.mxu0 %v3090
        %3261 = vmatprep.subr.mxu0 %v3099
        %3262 = vmatpush1.msra.mxu0 %v3098
        %3263 = vmatprep.subr.mxu0 %v3107
        %3264 = vmatpush1.msra.mxu0 %v3106
        %3265 = vmatprep.subr.mxu0 %v3115
        %3266 = vmatpush1.msra.mxu0 %v3114
        %3267 = vmatprep.subr.mxu0 %v3123
        %3268 = vmatpush1.msra.mxu0 %v3122
        %3269 = vmatprep.subr.mxu0 %v3131
        %3270 = vmatpush1.msra.mxu0 %v3130
        %3271 = vmatprep.mubr.f32.mxu0 %v2879
        %3272 = vmatmul.mubr.f32.gmra.mrb[0].mxu0 %v2878
        %v3273 = vpop.f32.mrb[0].mxu0
        %v3274 = vadd.f32 %v2299, %v3273
        %v3275 = vpop.f32.mrb[0].mxu0
        %v3276 = vadd.f32 %v2303, %v3275
        %3277 = vdwg.mxu0
        %3278 = vmatprep.subr.mxu0 %v2885
        %3279 = vmatpush1.msra.mxu0 %v2884
        %3280 = vmatprep.subr.mxu0 %v2893
        %3281 = vmatpush1.msra.mxu0 %v2892
        %3282 = vmatprep.subr.mxu0 %v2901
        %3283 = vmatpush1.msra.mxu0 %v2900
        %3284 = vmatprep.subr.mxu0 %v2909
        %3285 = vmatpush1.msra.mxu0 %v2908
        %3286 = vmatprep.subr.mxu0 %v2917
        %3287 = vmatpush1.msra.mxu0 %v2916
        %3288 = vmatprep.subr.mxu0 %v2925
        %3289 = vmatpush1.msra.mxu0 %v2924
        %3290 = vmatprep.subr.mxu0 %v2933
        %3291 = vmatpush1.msra.mxu0 %v2932
        %3292 = vmatprep.subr.mxu0 %v2941
        %3293 = vmatpush1.msra.mxu0 %v2940
        %3294 = vmatprep.subr.mxu0 %v2949
        %3295 = vmatpush1.msra.mxu0 %v2948
        %3296 = vmatprep.subr.mxu0 %v2957
        %3297 = vmatpush1.msra.mxu0 %v2956
        %3298 = vmatprep.subr.mxu0 %v2965
        %3299 = vmatpush1.msra.mxu0 %v2964
        %3300 = vmatprep.subr.mxu0 %v2973
        %3301 = vmatpush1.msra.mxu0 %v2972
        %3302 = vmatprep.subr.mxu0 %v2981
        %3303 = vmatpush1.msra.mxu0 %v2980
        %3304 = vmatprep.subr.mxu0 %v2989
        %3305 = vmatpush1.msra.mxu0 %v2988
        %3306 = vmatprep.subr.mxu0 %v2997
        %3307 = vmatpush1.msra.mxu0 %v2996
        %3308 = vmatprep.subr.mxu0 %v3005
        %3309 = vmatpush1.msra.mxu0 %v3004
        %3310 = vmatprep.subr.mxu0 %v3013
        %3311 = vmatpush1.msra.mxu0 %v3012
        %3312 = vmatprep.subr.mxu0 %v3021
        %3313 = vmatpush1.msra.mxu0 %v3020
        %3314 = vmatprep.subr.mxu0 %v3029
        %3315 = vmatpush1.msra.mxu0 %v3028
        %3316 = vmatprep.subr.mxu0 %v3037
        %3317 = vmatpush1.msra.mxu0 %v3036
        %3318 = vmatprep.subr.mxu0 %v3045
        %3319 = vmatpush1.msra.mxu0 %v3044
        %3320 = vmatprep.subr.mxu0 %v3053
        %3321 = vmatpush1.msra.mxu0 %v3052
        %3322 = vmatprep.subr.mxu0 %v3061
        %3323 = vmatpush1.msra.mxu0 %v3060
        %3324 = vmatprep.subr.mxu0 %v3069
        %3325 = vmatpush1.msra.mxu0 %v3068
        %3326 = vmatprep.subr.mxu0 %v3077
        %3327 = vmatpush1.msra.mxu0 %v3076
        %3328 = vmatprep.subr.mxu0 %v3085
        %3329 = vmatpush1.msra.mxu0 %v3084
        %3330 = vmatprep.subr.mxu0 %v3093
        %3331 = vmatpush1.msra.mxu0 %v3092
        %3332 = vmatprep.subr.mxu0 %v3101
        %3333 = vmatpush1.msra.mxu0 %v3100
        %3334 = vmatprep.subr.mxu0 %v3109
        %3335 = vmatpush1.msra.mxu0 %v3108
        %3336 = vmatprep.subr.mxu0 %v3117
        %3337 = vmatpush1.msra.mxu0 %v3116
        %3338 = vmatprep.subr.mxu0 %v3125
        %3339 = vmatpush1.msra.mxu0 %v3124
        %3340 = vmatprep.subr.mxu0 %v3133
        %3341 = vmatpush1.msra.mxu0 %v3132
        %3342 = vmatprep.mubr.f32.mxu0 %v2879
        %3343 = vmatmul.mubr.f32.gmra.mrb[0].mxu0 %v2878
        %v3344 = vpop.f32.mrb[0].mxu0
        %v3345 = vadd.f32 %v2307, %v3344
        %v3346 = vpop.f32.mrb[0].mxu0
        %v3347 = vadd.f32 %v2311, %v3346
        %3348 = vdwg.mxu0
        %3349 = vmatprep.subr.mxu0 %v2887
        %3350 = vmatpush1.msra.mxu0 %v2886
        %3351 = vmatprep.subr.mxu0 %v2895
        %3352 = vmatpush1.msra.mxu0 %v2894
        %3353 = vmatprep.subr.mxu0 %v2903
        %3354 = vmatpush1.msra.mxu0 %v2902
        %3355 = vmatprep.subr.mxu0 %v2911
        %3356 = vmatpush1.msra.mxu0 %v2910
        %3357 = vmatprep.subr.mxu0 %v2919
        %3358 = vmatpush1.msra.mxu0 %v2918
        %3359 = vmatprep.subr.mxu0 %v2927
        %3360 = vmatpush1.msra.mxu0 %v2926
        %3361 = vmatprep.subr.mxu0 %v2935
        %3362 = vmatpush1.msra.mxu0 %v2934
        %3363 = vmatprep.subr.mxu0 %v2943
        %3364 = vmatpush1.msra.mxu0 %v2942
        %3365 = vmatprep.subr.mxu0 %v2951
        %3366 = vmatpush1.msra.mxu0 %v2950
        %3367 = vmatprep.subr.mxu0 %v2959
        %3368 = vmatpush1.msra.mxu0 %v2958
        %3369 = vmatprep.subr.mxu0 %v2967
        %3370 = vmatpush1.msra.mxu0 %v2966
        %3371 = vmatprep.subr.mxu0 %v2975
        %3372 = vmatpush1.msra.mxu0 %v2974
        %3373 = vmatprep.subr.mxu0 %v2983
        %3374 = vmatpush1.msra.mxu0 %v2982
        %3375 = vmatprep.subr.mxu0 %v2991
        %3376 = vmatpush1.msra.mxu0 %v2990
        %3377 = vmatprep.subr.mxu0 %v2999
        %3378 = vmatpush1.msra.mxu0 %v2998
        %3379 = vmatprep.subr.mxu0 %v3007
        %3380 = vmatpush1.msra.mxu0 %v3006
        %3381 = vmatprep.subr.mxu0 %v3015
        %3382 = vmatpush1.msra.mxu0 %v3014
        %3383 = vmatprep.subr.mxu0 %v3023
        %3384 = vmatpush1.msra.mxu0 %v3022
        %3385 = vmatprep.subr.mxu0 %v3031
        %3386 = vmatpush1.msra.mxu0 %v3030
        %3387 = vmatprep.subr.mxu0 %v3039
        %3388 = vmatpush1.msra.mxu0 %v3038
        %3389 = vmatprep.subr.mxu0 %v3047
        %3390 = vmatpush1.msra.mxu0 %v3046
        %3391 = vmatprep.subr.mxu0 %v3055
        %3392 = vmatpush1.msra.mxu0 %v3054
        %3393 = vmatprep.subr.mxu0 %v3063
        %3394 = vmatpush1.msra.mxu0 %v3062
        %3395 = vmatprep.subr.mxu0 %v3071
        %3396 = vmatpush1.msra.mxu0 %v3070
        %3397 = vmatprep.subr.mxu0 %v3079
        %3398 = vmatpush1.msra.mxu0 %v3078
        %3399 = vmatprep.subr.mxu0 %v3087
        %3400 = vmatpush1.msra.mxu0 %v3086
        %3401 = vmatprep.subr.mxu0 %v3095
        %3402 = vmatpush1.msra.mxu0 %v3094
        %3403 = vmatprep.subr.mxu0 %v3103
        %3404 = vmatpush1.msra.mxu0 %v3102
        %3405 = vmatprep.subr.mxu0 %v3111
        %3406 = vmatpush1.msra.mxu0 %v3110
        %3407 = vmatprep.subr.mxu0 %v3119
        %3408 = vmatpush1.msra.mxu0 %v3118
        %3409 = vmatprep.subr.mxu0 %v3127
        %3410 = vmatpush1.msra.mxu0 %v3126
        %3411 = vmatprep.subr.mxu0 %v3135
        %3412 = vmatpush1.msra.mxu0 %v3134
        %3413 = vmatprep.mubr.f32.mxu0 %v2879
        %3414 = vmatmul.mubr.f32.gmra.mrb[0].mxu0 %v2878
        %v3415 = vpop.f32.mrb[0].mxu0
        %v3416 = vadd.f32 %v2315, %v3415
        %v3417 = vpop.f32.mrb[0].mxu0
        %v3418 = vadd.f32 %v2319, %v3417
        %3419 = vdwg.mxu0
        %3420 = vst [vmem:[%s1044] sm:$0xff] %v3203
        %3421 = vst [vmem:[%s1044 + $0x8] sm:$0xff] %v3205
        %3422 = vst [vmem:[%s1044 + $0x10] sm:$0xff] %v3274
        %3423 = vst [vmem:[%s1044 + $0x18] sm:$0xff] %v3276
        %3424 = vst [vmem:[%s1044 + $0x20] sm:$0xff] %v3345
        %3425 = vst [vmem:[%s1044 + $0x28] sm:$0xff] %v3347
        %3426 = vst [vmem:[%s1044 + $0x30] sm:$0xff] %v3416
        %3427 = vst [vmem:[%s1044 + $0x38] sm:$0xff] %v3418
        %3428 = vst [vmem:[#allocation3] sm:$0xff] 0.0
        %3429 = vst [vmem:[#allocation3 + $0x8] sm:$0xff] 0.0
        %3430 = vst [vmem:[#allocation4] sm:$0xff] 0.0
        %3431 = vst [vmem:[#allocation4 + $0x8] sm:$0xff] 0.0
        %v3432 = vld [vmem:[#allocation3] sm:$0xff]
        %v3433 = vld [vmem:[#allocation3 + $0x8] sm:$0xff]
        %v3434 = vld [vmem:[#allocation11] sm:$0xff]
        %v3435 = vld [vmem:[#allocation11 + $0x8] sm:$0xff]
        %v3436 = vld [vmem:[#allocation11 + $0x10] sm:$0xff]
        %v3437 = vld [vmem:[#allocation11 + $0x18] sm:$0xff]
        %v3438 = vld [vmem:[#allocation11 + $0x20] sm:$0xff]
        %v3439 = vld [vmem:[#allocation11 + $0x28] sm:$0xff]
        %v3440 = vld [vmem:[#allocation11 + $0x30] sm:$0xff]
        %v3441 = vld [vmem:[#allocation11 + $0x38] sm:$0xff]
        %v3442 = vld [vmem:[#allocation11 + $0x40] sm:$0xff]
        %v3443 = vld [vmem:[#allocation11 + $0x48] sm:$0xff]
        %v3444 = vld [vmem:[#allocation11 + $0x50] sm:$0xff]
        %v3445 = vld [vmem:[#allocation11 + $0x58] sm:$0xff]
        %v3446 = vld [vmem:[#allocation11 + $0x60] sm:$0xff]
        %v3447 = vld [vmem:[#allocation11 + $0x68] sm:$0xff]
        %v3448 = vld [vmem:[#allocation11 + $0x70] sm:$0xff]
        %v3449 = vld [vmem:[#allocation11 + $0x78] sm:$0xff]
        %v3450 = vld [vmem:[#allocation11 + $0x80] sm:$0xff]
        %v3451 = vld [vmem:[#allocation11 + $0x88] sm:$0xff]
        %v3452 = vld [vmem:[#allocation11 + $0x90] sm:$0xff]
        %v3453 = vld [vmem:[#allocation11 + $0x98] sm:$0xff]
        %v3454 = vld [vmem:[#allocation11 + $0xa0] sm:$0xff]
        %v3455 = vld [vmem:[#allocation11 + $0xa8] sm:$0xff]
        %v3456 = vld [vmem:[#allocation11 + $0xb0] sm:$0xff]
        %v3457 = vld [vmem:[#allocation11 + $0xb8] sm:$0xff]
        %v3458 = vld [vmem:[#allocation11 + $0xc0] sm:$0xff]
        %v3459 = vld [vmem:[#allocation11 + $0xc8] sm:$0xff]
        %v3460 = vld [vmem:[#allocation11 + $0xd0] sm:$0xff]
        %v3461 = vld [vmem:[#allocation11 + $0xd8] sm:$0xff]
        %v3462 = vld [vmem:[#allocation11 + $0xe0] sm:$0xff]
        %v3463 = vld [vmem:[#allocation11 + $0xe8] sm:$0xff]
        %v3464 = vld [vmem:[#allocation11 + $0xf0] sm:$0xff]
        %v3465 = vld [vmem:[#allocation11 + $0xf8] sm:$0xff]
        %v3466 = vld [vmem:[#allocation11 + $0x100] sm:$0xff]
        %v3467 = vld [vmem:[#allocation11 + $0x108] sm:$0xff]
        %v3468 = vld [vmem:[#allocation11 + $0x110] sm:$0xff]
        %v3469 = vld [vmem:[#allocation11 + $0x118] sm:$0xff]
        %v3470 = vld [vmem:[#allocation11 + $0x120] sm:$0xff]
        %v3471 = vld [vmem:[#allocation11 + $0x128] sm:$0xff]
        %v3472 = vld [vmem:[#allocation11 + $0x130] sm:$0xff]
        %v3473 = vld [vmem:[#allocation11 + $0x138] sm:$0xff]
        %v3474 = vld [vmem:[#allocation11 + $0x140] sm:$0xff]
        %v3475 = vld [vmem:[#allocation11 + $0x148] sm:$0xff]
        %v3476 = vld [vmem:[#allocation11 + $0x150] sm:$0xff]
        %v3477 = vld [vmem:[#allocation11 + $0x158] sm:$0xff]
        %v3478 = vld [vmem:[#allocation11 + $0x160] sm:$0xff]
        %v3479 = vld [vmem:[#allocation11 + $0x168] sm:$0xff]
        %v3480 = vld [vmem:[#allocation11 + $0x170] sm:$0xff]
        %v3481 = vld [vmem:[#allocation11 + $0x178] sm:$0xff]
        %v3482 = vld [vmem:[#allocation11 + $0x180] sm:$0xff]
        %v3483 = vld [vmem:[#allocation11 + $0x188] sm:$0xff]
        %v3484 = vld [vmem:[#allocation11 + $0x190] sm:$0xff]
        %v3485 = vld [vmem:[#allocation11 + $0x198] sm:$0xff]
        %v3486 = vld [vmem:[#allocation11 + $0x1a0] sm:$0xff]
        %v3487 = vld [vmem:[#allocation11 + $0x1a8] sm:$0xff]
        %v3488 = vld [vmem:[#allocation11 + $0x1b0] sm:$0xff]
        %v3489 = vld [vmem:[#allocation11 + $0x1b8] sm:$0xff]
        %v3490 = vld [vmem:[#allocation11 + $0x1c0] sm:$0xff]
        %v3491 = vld [vmem:[#allocation11 + $0x1c8] sm:$0xff]
        %v3492 = vld [vmem:[#allocation11 + $0x1d0] sm:$0xff]
        %v3493 = vld [vmem:[#allocation11 + $0x1d8] sm:$0xff]
        %v3494 = vld [vmem:[#allocation11 + $0x1e0] sm:$0xff]
        %v3495 = vld [vmem:[#allocation11 + $0x1e8] sm:$0xff]
        %v3496 = vld [vmem:[#allocation11 + $0x1f0] sm:$0xff]
        %v3497 = vld [vmem:[#allocation11 + $0x1f8] sm:$0xff]
        %v3498 = vld [vmem:[#allocation11 + $0x200] sm:$0xff]
        %v3499 = vld [vmem:[#allocation11 + $0x208] sm:$0xff]
        %v3500 = vld [vmem:[#allocation11 + $0x210] sm:$0xff]
        %v3501 = vld [vmem:[#allocation11 + $0x218] sm:$0xff]
        %v3502 = vld [vmem:[#allocation11 + $0x220] sm:$0xff]
        %v3503 = vld [vmem:[#allocation11 + $0x228] sm:$0xff]
        %v3504 = vld [vmem:[#allocation11 + $0x230] sm:$0xff]
        %v3505 = vld [vmem:[#allocation11 + $0x238] sm:$0xff]
        %v3506 = vld [vmem:[#allocation11 + $0x240] sm:$0xff]
        %v3507 = vld [vmem:[#allocation11 + $0x248] sm:$0xff]
        %v3508 = vld [vmem:[#allocation11 + $0x250] sm:$0xff]
        %v3509 = vld [vmem:[#allocation11 + $0x258] sm:$0xff]
        %v3510 = vld [vmem:[#allocation11 + $0x260] sm:$0xff]
        %v3511 = vld [vmem:[#allocation11 + $0x268] sm:$0xff]
        %v3512 = vld [vmem:[#allocation11 + $0x270] sm:$0xff]
        %v3513 = vld [vmem:[#allocation11 + $0x278] sm:$0xff]
        %v3514 = vld [vmem:[#allocation11 + $0x280] sm:$0xff]
        %v3515 = vld [vmem:[#allocation11 + $0x288] sm:$0xff]
        %v3516 = vld [vmem:[#allocation11 + $0x290] sm:$0xff]
        %v3517 = vld [vmem:[#allocation11 + $0x298] sm:$0xff]
        %v3518 = vld [vmem:[#allocation11 + $0x2a0] sm:$0xff]
        %v3519 = vld [vmem:[#allocation11 + $0x2a8] sm:$0xff]
        %v3520 = vld [vmem:[#allocation11 + $0x2b0] sm:$0xff]
        %v3521 = vld [vmem:[#allocation11 + $0x2b8] sm:$0xff]
        %v3522 = vld [vmem:[#allocation11 + $0x2c0] sm:$0xff]
        %v3523 = vld [vmem:[#allocation11 + $0x2c8] sm:$0xff]
        %v3524 = vld [vmem:[#allocation11 + $0x2d0] sm:$0xff]
        %v3525 = vld [vmem:[#allocation11 + $0x2d8] sm:$0xff]
        %v3526 = vld [vmem:[#allocation11 + $0x2e0] sm:$0xff]
        %v3527 = vld [vmem:[#allocation11 + $0x2e8] sm:$0xff]
        %v3528 = vld [vmem:[#allocation11 + $0x2f0] sm:$0xff]
        %v3529 = vld [vmem:[#allocation11 + $0x2f8] sm:$0xff]
        %v3530 = vld [vmem:[#allocation11 + $0x300] sm:$0xff]
        %v3531 = vld [vmem:[#allocation11 + $0x308] sm:$0xff]
        %v3532 = vld [vmem:[#allocation11 + $0x310] sm:$0xff]
        %v3533 = vld [vmem:[#allocation11 + $0x318] sm:$0xff]
        %v3534 = vld [vmem:[#allocation11 + $0x320] sm:$0xff]
        %v3535 = vld [vmem:[#allocation11 + $0x328] sm:$0xff]
        %v3536 = vld [vmem:[#allocation11 + $0x330] sm:$0xff]
        %v3537 = vld [vmem:[#allocation11 + $0x338] sm:$0xff]
        %v3538 = vld [vmem:[#allocation11 + $0x340] sm:$0xff]
        %v3539 = vld [vmem:[#allocation11 + $0x348] sm:$0xff]
        %v3540 = vld [vmem:[#allocation11 + $0x350] sm:$0xff]
        %v3541 = vld [vmem:[#allocation11 + $0x358] sm:$0xff]
        %v3542 = vld [vmem:[#allocation11 + $0x360] sm:$0xff]
        %v3543 = vld [vmem:[#allocation11 + $0x368] sm:$0xff]
        %v3544 = vld [vmem:[#allocation11 + $0x370] sm:$0xff]
        %v3545 = vld [vmem:[#allocation11 + $0x378] sm:$0xff]
        %v3546 = vld [vmem:[#allocation11 + $0x380] sm:$0xff]
        %v3547 = vld [vmem:[#allocation11 + $0x388] sm:$0xff]
        %v3548 = vld [vmem:[#allocation11 + $0x390] sm:$0xff]
        %v3549 = vld [vmem:[#allocation11 + $0x398] sm:$0xff]
        %v3550 = vld [vmem:[#allocation11 + $0x3a0] sm:$0xff]
        %v3551 = vld [vmem:[#allocation11 + $0x3a8] sm:$0xff]
        %v3552 = vld [vmem:[#allocation11 + $0x3b0] sm:$0xff]
        %v3553 = vld [vmem:[#allocation11 + $0x3b8] sm:$0xff]
        %v3554 = vld [vmem:[#allocation11 + $0x3c0] sm:$0xff]
        %v3555 = vld [vmem:[#allocation11 + $0x3c8] sm:$0xff]
        %v3556 = vld [vmem:[#allocation11 + $0x3d0] sm:$0xff]
        %v3557 = vld [vmem:[#allocation11 + $0x3d8] sm:$0xff]
        %v3558 = vld [vmem:[#allocation11 + $0x3e0] sm:$0xff]
        %v3559 = vld [vmem:[#allocation11 + $0x3e8] sm:$0xff]
        %v3560 = vld [vmem:[#allocation11 + $0x3f0] sm:$0xff]
        %v3561 = vld [vmem:[#allocation11 + $0x3f8] sm:$0xff]
        %v3562 = vld [vmem:[#allocation11 + $0x400] sm:$0xff]
        %v3563 = vld [vmem:[#allocation11 + $0x408] sm:$0xff]
        %v3564 = vld [vmem:[#allocation11 + $0x410] sm:$0xff]
        %v3565 = vld [vmem:[#allocation11 + $0x418] sm:$0xff]
        %v3566 = vld [vmem:[#allocation11 + $0x420] sm:$0xff]
        %v3567 = vld [vmem:[#allocation11 + $0x428] sm:$0xff]
        %v3568 = vld [vmem:[#allocation11 + $0x430] sm:$0xff]
        %v3569 = vld [vmem:[#allocation11 + $0x438] sm:$0xff]
        %v3570 = vld [vmem:[#allocation11 + $0x440] sm:$0xff]
        %v3571 = vld [vmem:[#allocation11 + $0x448] sm:$0xff]
        %v3572 = vld [vmem:[#allocation11 + $0x450] sm:$0xff]
        %v3573 = vld [vmem:[#allocation11 + $0x458] sm:$0xff]
        %v3574 = vld [vmem:[#allocation11 + $0x460] sm:$0xff]
        %v3575 = vld [vmem:[#allocation11 + $0x468] sm:$0xff]
        %v3576 = vld [vmem:[#allocation11 + $0x470] sm:$0xff]
        %v3577 = vld [vmem:[#allocation11 + $0x478] sm:$0xff]
        %v3578 = vld [vmem:[#allocation11 + $0x480] sm:$0xff]
        %v3579 = vld [vmem:[#allocation11 + $0x488] sm:$0xff]
        %v3580 = vld [vmem:[#allocation11 + $0x490] sm:$0xff]
        %v3581 = vld [vmem:[#allocation11 + $0x498] sm:$0xff]
        %v3582 = vld [vmem:[#allocation11 + $0x4a0] sm:$0xff]
        %v3583 = vld [vmem:[#allocation11 + $0x4a8] sm:$0xff]
        %v3584 = vld [vmem:[#allocation11 + $0x4b0] sm:$0xff]
        %v3585 = vld [vmem:[#allocation11 + $0x4b8] sm:$0xff]
        %v3586 = vld [vmem:[#allocation11 + $0x4c0] sm:$0xff]
        %v3587 = vld [vmem:[#allocation11 + $0x4c8] sm:$0xff]
        %v3588 = vld [vmem:[#allocation11 + $0x4d0] sm:$0xff]
        %v3589 = vld [vmem:[#allocation11 + $0x4d8] sm:$0xff]
        %v3590 = vld [vmem:[#allocation11 + $0x4e0] sm:$0xff]
        %v3591 = vld [vmem:[#allocation11 + $0x4e8] sm:$0xff]
        %v3592 = vld [vmem:[#allocation11 + $0x4f0] sm:$0xff]
        %v3593 = vld [vmem:[#allocation11 + $0x4f8] sm:$0xff]
        %v3594 = vld [vmem:[#allocation11 + $0x500] sm:$0xff]
        %v3595 = vld [vmem:[#allocation11 + $0x508] sm:$0xff]
        %v3596 = vld [vmem:[#allocation11 + $0x510] sm:$0xff]
        %v3597 = vld [vmem:[#allocation11 + $0x518] sm:$0xff]
        %v3598 = vld [vmem:[#allocation11 + $0x520] sm:$0xff]
        %v3599 = vld [vmem:[#allocation11 + $0x528] sm:$0xff]
        %v3600 = vld [vmem:[#allocation11 + $0x530] sm:$0xff]
        %v3601 = vld [vmem:[#allocation11 + $0x538] sm:$0xff]
        %v3602 = vld [vmem:[#allocation11 + $0x540] sm:$0xff]
        %v3603 = vld [vmem:[#allocation11 + $0x548] sm:$0xff]
        %v3604 = vld [vmem:[#allocation11 + $0x550] sm:$0xff]
        %v3605 = vld [vmem:[#allocation11 + $0x558] sm:$0xff]
        %v3606 = vld [vmem:[#allocation11 + $0x560] sm:$0xff]
        %v3607 = vld [vmem:[#allocation11 + $0x568] sm:$0xff]
        %v3608 = vld [vmem:[#allocation11 + $0x570] sm:$0xff]
        %v3609 = vld [vmem:[#allocation11 + $0x578] sm:$0xff]
        %v3610 = vld [vmem:[#allocation11 + $0x580] sm:$0xff]
        %v3611 = vld [vmem:[#allocation11 + $0x588] sm:$0xff]
        %v3612 = vld [vmem:[#allocation11 + $0x590] sm:$0xff]
        %v3613 = vld [vmem:[#allocation11 + $0x598] sm:$0xff]
        %v3614 = vld [vmem:[#allocation11 + $0x5a0] sm:$0xff]
        %v3615 = vld [vmem:[#allocation11 + $0x5a8] sm:$0xff]
        %v3616 = vld [vmem:[#allocation11 + $0x5b0] sm:$0xff]
        %v3617 = vld [vmem:[#allocation11 + $0x5b8] sm:$0xff]
        %v3618 = vld [vmem:[#allocation11 + $0x5c0] sm:$0xff]
        %v3619 = vld [vmem:[#allocation11 + $0x5c8] sm:$0xff]
        %v3620 = vld [vmem:[#allocation11 + $0x5d0] sm:$0xff]
        %v3621 = vld [vmem:[#allocation11 + $0x5d8] sm:$0xff]
        %v3622 = vld [vmem:[#allocation11 + $0x5e0] sm:$0xff]
        %v3623 = vld [vmem:[#allocation11 + $0x5e8] sm:$0xff]
        %v3624 = vld [vmem:[#allocation11 + $0x5f0] sm:$0xff]
        %v3625 = vld [vmem:[#allocation11 + $0x5f8] sm:$0xff]
        %v3626 = vld [vmem:[#allocation11 + $0x600] sm:$0xff]
        %v3627 = vld [vmem:[#allocation11 + $0x608] sm:$0xff]
        %v3628 = vld [vmem:[#allocation11 + $0x610] sm:$0xff]
        %v3629 = vld [vmem:[#allocation11 + $0x618] sm:$0xff]
        %v3630 = vld [vmem:[#allocation11 + $0x620] sm:$0xff]
        %v3631 = vld [vmem:[#allocation11 + $0x628] sm:$0xff]
        %v3632 = vld [vmem:[#allocation11 + $0x630] sm:$0xff]
        %v3633 = vld [vmem:[#allocation11 + $0x638] sm:$0xff]
        %v3634 = vld [vmem:[#allocation11 + $0x640] sm:$0xff]
        %v3635 = vld [vmem:[#allocation11 + $0x648] sm:$0xff]
        %v3636 = vld [vmem:[#allocation11 + $0x650] sm:$0xff]
        %v3637 = vld [vmem:[#allocation11 + $0x658] sm:$0xff]
        %v3638 = vld [vmem:[#allocation11 + $0x660] sm:$0xff]
        %v3639 = vld [vmem:[#allocation11 + $0x668] sm:$0xff]
        %v3640 = vld [vmem:[#allocation11 + $0x670] sm:$0xff]
        %v3641 = vld [vmem:[#allocation11 + $0x678] sm:$0xff]
        %v3642 = vld [vmem:[#allocation11 + $0x680] sm:$0xff]
        %v3643 = vld [vmem:[#allocation11 + $0x688] sm:$0xff]
        %v3644 = vld [vmem:[#allocation11 + $0x690] sm:$0xff]
        %v3645 = vld [vmem:[#allocation11 + $0x698] sm:$0xff]
        %v3646 = vld [vmem:[#allocation11 + $0x6a0] sm:$0xff]
        %v3647 = vld [vmem:[#allocation11 + $0x6a8] sm:$0xff]
        %v3648 = vld [vmem:[#allocation11 + $0x6b0] sm:$0xff]
        %v3649 = vld [vmem:[#allocation11 + $0x6b8] sm:$0xff]
        %v3650 = vld [vmem:[#allocation11 + $0x6c0] sm:$0xff]
        %v3651 = vld [vmem:[#allocation11 + $0x6c8] sm:$0xff]
        %v3652 = vld [vmem:[#allocation11 + $0x6d0] sm:$0xff]
        %v3653 = vld [vmem:[#allocation11 + $0x6d8] sm:$0xff]
        %v3654 = vld [vmem:[#allocation11 + $0x6e0] sm:$0xff]
        %v3655 = vld [vmem:[#allocation11 + $0x6e8] sm:$0xff]
        %v3656 = vld [vmem:[#allocation11 + $0x6f0] sm:$0xff]
        %v3657 = vld [vmem:[#allocation11 + $0x6f8] sm:$0xff]
        %v3658 = vld [vmem:[#allocation11 + $0x700] sm:$0xff]
        %v3659 = vld [vmem:[#allocation11 + $0x708] sm:$0xff]
        %v3660 = vld [vmem:[#allocation11 + $0x710] sm:$0xff]
        %v3661 = vld [vmem:[#allocation11 + $0x718] sm:$0xff]
        %v3662 = vld [vmem:[#allocation11 + $0x720] sm:$0xff]
        %v3663 = vld [vmem:[#allocation11 + $0x728] sm:$0xff]
        %v3664 = vld [vmem:[#allocation11 + $0x730] sm:$0xff]
        %v3665 = vld [vmem:[#allocation11 + $0x738] sm:$0xff]
        %v3666 = vld [vmem:[#allocation11 + $0x740] sm:$0xff]
        %v3667 = vld [vmem:[#allocation11 + $0x748] sm:$0xff]
        %v3668 = vld [vmem:[#allocation11 + $0x750] sm:$0xff]
        %v3669 = vld [vmem:[#allocation11 + $0x758] sm:$0xff]
        %v3670 = vld [vmem:[#allocation11 + $0x760] sm:$0xff]
        %v3671 = vld [vmem:[#allocation11 + $0x768] sm:$0xff]
        %v3672 = vld [vmem:[#allocation11 + $0x770] sm:$0xff]
        %v3673 = vld [vmem:[#allocation11 + $0x778] sm:$0xff]
        %v3674 = vld [vmem:[#allocation11 + $0x780] sm:$0xff]
        %v3675 = vld [vmem:[#allocation11 + $0x788] sm:$0xff]
        %v3676 = vld [vmem:[#allocation11 + $0x790] sm:$0xff]
        %v3677 = vld [vmem:[#allocation11 + $0x798] sm:$0xff]
        %v3678 = vld [vmem:[#allocation11 + $0x7a0] sm:$0xff]
        %v3679 = vld [vmem:[#allocation11 + $0x7a8] sm:$0xff]
        %v3680 = vld [vmem:[#allocation11 + $0x7b0] sm:$0xff]
        %v3681 = vld [vmem:[#allocation11 + $0x7b8] sm:$0xff]
        %v3682 = vld [vmem:[#allocation11 + $0x7c0] sm:$0xff]
        %v3683 = vld [vmem:[#allocation11 + $0x7c8] sm:$0xff]
        %v3684 = vld [vmem:[#allocation11 + $0x7d0] sm:$0xff]
        %v3685 = vld [vmem:[#allocation11 + $0x7d8] sm:$0xff]
        %v3686 = vld [vmem:[#allocation11 + $0x7e0] sm:$0xff]
        %v3687 = vld [vmem:[#allocation11 + $0x7e8] sm:$0xff]
        %v3688 = vld [vmem:[#allocation11 + $0x7f0] sm:$0xff]
        %v3689 = vld [vmem:[#allocation11 + $0x7f8] sm:$0xff]
        %3690 = vmatprep.subr.mxu0 %v3435
        %3691 = vmatpush1.msra.mxu0 %v3434
        %3692 = vmatprep.subr.mxu0 %v3443
        %3693 = vmatpush1.msra.mxu0 %v3442
        %3694 = vmatprep.subr.mxu0 %v3451
        %3695 = vmatpush1.msra.mxu0 %v3450
        %3696 = vmatprep.subr.mxu0 %v3459
        %3697 = vmatpush1.msra.mxu0 %v3458
        %3698 = vmatprep.subr.mxu0 %v3467
        %3699 = vmatpush1.msra.mxu0 %v3466
        %3700 = vmatprep.subr.mxu0 %v3475
        %3701 = vmatpush1.msra.mxu0 %v3474
        %3702 = vmatprep.subr.mxu0 %v3483
        %3703 = vmatpush1.msra.mxu0 %v3482
        %3704 = vmatprep.subr.mxu0 %v3491
        %3705 = vmatpush1.msra.mxu0 %v3490
        %3706 = vmatprep.subr.mxu0 %v3499
        %3707 = vmatpush1.msra.mxu0 %v3498
        %3708 = vmatprep.subr.mxu0 %v3507
        %3709 = vmatpush1.msra.mxu0 %v3506
        %3710 = vmatprep.subr.mxu0 %v3515
        %3711 = vmatpush1.msra.mxu0 %v3514
        %3712 = vmatprep.subr.mxu0 %v3523
        %3713 = vmatpush1.msra.mxu0 %v3522
        %3714 = vmatprep.subr.mxu0 %v3531
        %3715 = vmatpush1.msra.mxu0 %v3530
        %3716 = vmatprep.subr.mxu0 %v3539
        %3717 = vmatpush1.msra.mxu0 %v3538
        %3718 = vmatprep.subr.mxu0 %v3547
        %3719 = vmatpush1.msra.mxu0 %v3546
        %3720 = vmatprep.subr.mxu0 %v3555
        %3721 = vmatpush1.msra.mxu0 %v3554
        %3722 = vmatprep.subr.mxu0 %v3563
        %3723 = vmatpush1.msra.mxu0 %v3562
        %3724 = vmatprep.subr.mxu0 %v3571
        %3725 = vmatpush1.msra.mxu0 %v3570
        %3726 = vmatprep.subr.mxu0 %v3579
        %3727 = vmatpush1.msra.mxu0 %v3578
        %3728 = vmatprep.subr.mxu0 %v3587
        %3729 = vmatpush1.msra.mxu0 %v3586
        %3730 = vmatprep.subr.mxu0 %v3595
        %3731 = vmatpush1.msra.mxu0 %v3594
        %3732 = vmatprep.subr.mxu0 %v3603
        %3733 = vmatpush1.msra.mxu0 %v3602
        %3734 = vmatprep.subr.mxu0 %v3611
        %3735 = vmatpush1.msra.mxu0 %v3610
        %3736 = vmatprep.subr.mxu0 %v3619
        %3737 = vmatpush1.msra.mxu0 %v3618
        %3738 = vmatprep.subr.mxu0 %v3627
        %3739 = vmatpush1.msra.mxu0 %v3626
        %3740 = vmatprep.subr.mxu0 %v3635
        %3741 = vmatpush1.msra.mxu0 %v3634
        %3742 = vmatprep.subr.mxu0 %v3643
        %3743 = vmatpush1.msra.mxu0 %v3642
        %3744 = vmatprep.subr.mxu0 %v3651
        %3745 = vmatpush1.msra.mxu0 %v3650
        %3746 = vmatprep.subr.mxu0 %v3659
        %3747 = vmatpush1.msra.mxu0 %v3658
        %3748 = vmatprep.subr.mxu0 %v3667
        %3749 = vmatpush1.msra.mxu0 %v3666
        %3750 = vmatprep.subr.mxu0 %v3675
        %3751 = vmatpush1.msra.mxu0 %v3674
        %3752 = vmatprep.subr.mxu0 %v3683
        %3753 = vmatpush1.msra.mxu0 %v3682
        %3754 = vmatprep.mubr.f32.mxu0 %v3433
        %3755 = vmatmul.mubr.f32.gmra.mrb[0].mxu0 %v3432
        %v3756 = vpop.f32.mrb[0].mxu0
        %v3757 = vadd.f32 0.0, %v3756
        %v3758 = vpop.f32.mrb[0].mxu0
        %v3759 = vadd.f32 0.0, %v3758
        %3760 = vdwg.mxu0
        %3761 = vmatprep.subr.mxu0 %v3437
        %3762 = vmatpush1.msra.mxu0 %v3436
        %3763 = vmatprep.subr.mxu0 %v3445
        %3764 = vmatpush1.msra.mxu0 %v3444
        %3765 = vmatprep.subr.mxu0 %v3453
        %3766 = vmatpush1.msra.mxu0 %v3452
        %3767 = vmatprep.subr.mxu0 %v3461
        %3768 = vmatpush1.msra.mxu0 %v3460
        %3769 = vmatprep.subr.mxu0 %v3469
        %3770 = vmatpush1.msra.mxu0 %v3468
        %3771 = vmatprep.subr.mxu0 %v3477
        %3772 = vmatpush1.msra.mxu0 %v3476
        %3773 = vmatprep.subr.mxu0 %v3485
        %3774 = vmatpush1.msra.mxu0 %v3484
        %3775 = vmatprep.subr.mxu0 %v3493
        %3776 = vmatpush1.msra.mxu0 %v3492
        %3777 = vmatprep.subr.mxu0 %v3501
        %3778 = vmatpush1.msra.mxu0 %v3500
        %3779 = vmatprep.subr.mxu0 %v3509
        %3780 = vmatpush1.msra.mxu0 %v3508
        %3781 = vmatprep.subr.mxu0 %v3517
        %3782 = vmatpush1.msra.mxu0 %v3516
        %3783 = vmatprep.subr.mxu0 %v3525
        %3784 = vmatpush1.msra.mxu0 %v3524
        %3785 = vmatprep.subr.mxu0 %v3533
        %3786 = vmatpush1.msra.mxu0 %v3532
        %3787 = vmatprep.subr.mxu0 %v3541
        %3788 = vmatpush1.msra.mxu0 %v3540
        %3789 = vmatprep.subr.mxu0 %v3549
        %3790 = vmatpush1.msra.mxu0 %v3548
        %3791 = vmatprep.subr.mxu0 %v3557
        %3792 = vmatpush1.msra.mxu0 %v3556
        %3793 = vmatprep.subr.mxu0 %v3565
        %3794 = vmatpush1.msra.mxu0 %v3564
        %3795 = vmatprep.subr.mxu0 %v3573
        %3796 = vmatpush1.msra.mxu0 %v3572
        %3797 = vmatprep.subr.mxu0 %v3581
        %3798 = vmatpush1.msra.mxu0 %v3580
        %3799 = vmatprep.subr.mxu0 %v3589
        %3800 = vmatpush1.msra.mxu0 %v3588
        %3801 = vmatprep.subr.mxu0 %v3597
        %3802 = vmatpush1.msra.mxu0 %v3596
        %3803 = vmatprep.subr.mxu0 %v3605
        %3804 = vmatpush1.msra.mxu0 %v3604
        %3805 = vmatprep.subr.mxu0 %v3613
        %3806 = vmatpush1.msra.mxu0 %v3612
        %3807 = vmatprep.subr.mxu0 %v3621
        %3808 = vmatpush1.msra.mxu0 %v3620
        %3809 = vmatprep.subr.mxu0 %v3629
        %3810 = vmatpush1.msra.mxu0 %v3628
        %3811 = vmatprep.subr.mxu0 %v3637
        %3812 = vmatpush1.msra.mxu0 %v3636
        %3813 = vmatprep.subr.mxu0 %v3645
        %3814 = vmatpush1.msra.mxu0 %v3644
        %3815 = vmatprep.subr.mxu0 %v3653
        %3816 = vmatpush1.msra.mxu0 %v3652
        %3817 = vmatprep.subr.mxu0 %v3661
        %3818 = vmatpush1.msra.mxu0 %v3660
        %3819 = vmatprep.subr.mxu0 %v3669
        %3820 = vmatpush1.msra.mxu0 %v3668
        %3821 = vmatprep.subr.mxu0 %v3677
        %3822 = vmatpush1.msra.mxu0 %v3676
        %3823 = vmatprep.subr.mxu0 %v3685
        %3824 = vmatpush1.msra.mxu0 %v3684
        %3825 = vmatprep.mubr.f32.mxu0 %v3433
        %3826 = vmatmul.mubr.f32.gmra.mrb[0].mxu0 %v3432
        %v3827 = vpop.f32.mrb[0].mxu0
        %v3828 = vadd.f32 0.0, %v3827
        %v3829 = vpop.f32.mrb[0].mxu0
        %v3830 = vadd.f32 0.0, %v3829
        %3831 = vdwg.mxu0
        %3832 = vmatprep.subr.mxu0 %v3439
        %3833 = vmatpush1.msra.mxu0 %v3438
        %3834 = vmatprep.subr.mxu0 %v3447
        %3835 = vmatpush1.msra.mxu0 %v3446
        %3836 = vmatprep.subr.mxu0 %v3455
        %3837 = vmatpush1.msra.mxu0 %v3454
        %3838 = vmatprep.subr.mxu0 %v3463
        %3839 = vmatpush1.msra.mxu0 %v3462
        %3840 = vmatprep.subr.mxu0 %v3471
        %3841 = vmatpush1.msra.mxu0 %v3470
        %3842 = vmatprep.subr.mxu0 %v3479
        %3843 = vmatpush1.msra.mxu0 %v3478
        %3844 = vmatprep.subr.mxu0 %v3487
        %3845 = vmatpush1.msra.mxu0 %v3486
        %3846 = vmatprep.subr.mxu0 %v3495
        %3847 = vmatpush1.msra.mxu0 %v3494
        %3848 = vmatprep.subr.mxu0 %v3503
        %3849 = vmatpush1.msra.mxu0 %v3502
        %3850 = vmatprep.subr.mxu0 %v3511
        %3851 = vmatpush1.msra.mxu0 %v3510
        %3852 = vmatprep.subr.mxu0 %v3519
        %3853 = vmatpush1.msra.mxu0 %v3518
        %3854 = vmatprep.subr.mxu0 %v3527
        %3855 = vmatpush1.msra.mxu0 %v3526
        %3856 = vmatprep.subr.mxu0 %v3535
        %3857 = vmatpush1.msra.mxu0 %v3534
        %3858 = vmatprep.subr.mxu0 %v3543
        %3859 = vmatpush1.msra.mxu0 %v3542
        %3860 = vmatprep.subr.mxu0 %v3551
        %3861 = vmatpush1.msra.mxu0 %v3550
        %3862 = vmatprep.subr.mxu0 %v3559
        %3863 = vmatpush1.msra.mxu0 %v3558
        %3864 = vmatprep.subr.mxu0 %v3567
        %3865 = vmatpush1.msra.mxu0 %v3566
        %3866 = vmatprep.subr.mxu0 %v3575
        %3867 = vmatpush1.msra.mxu0 %v3574
        %3868 = vmatprep.subr.mxu0 %v3583
        %3869 = vmatpush1.msra.mxu0 %v3582
        %3870 = vmatprep.subr.mxu0 %v3591
        %3871 = vmatpush1.msra.mxu0 %v3590
        %3872 = vmatprep.subr.mxu0 %v3599
        %3873 = vmatpush1.msra.mxu0 %v3598
        %3874 = vmatprep.subr.mxu0 %v3607
        %3875 = vmatpush1.msra.mxu0 %v3606
        %3876 = vmatprep.subr.mxu0 %v3615
        %3877 = vmatpush1.msra.mxu0 %v3614
        %3878 = vmatprep.subr.mxu0 %v3623
        %3879 = vmatpush1.msra.mxu0 %v3622
        %3880 = vmatprep.subr.mxu0 %v3631
        %3881 = vmatpush1.msra.mxu0 %v3630
        %3882 = vmatprep.subr.mxu0 %v3639
        %3883 = vmatpush1.msra.mxu0 %v3638
        %3884 = vmatprep.subr.mxu0 %v3647
        %3885 = vmatpush1.msra.mxu0 %v3646
        %3886 = vmatprep.subr.mxu0 %v3655
        %3887 = vmatpush1.msra.mxu0 %v3654
        %3888 = vmatprep.subr.mxu0 %v3663
        %3889 = vmatpush1.msra.mxu0 %v3662
        %3890 = vmatprep.subr.mxu0 %v3671
        %3891 = vmatpush1.msra.mxu0 %v3670
        %3892 = vmatprep.subr.mxu0 %v3679
        %3893 = vmatpush1.msra.mxu0 %v3678
        %3894 = vmatprep.subr.mxu0 %v3687
        %3895 = vmatpush1.msra.mxu0 %v3686
        %3896 = vmatprep.mubr.f32.mxu0 %v3433
        %3897 = vmatmul.mubr.f32.gmra.mrb[0].mxu0 %v3432
        %v3898 = vpop.f32.mrb[0].mxu0
        %v3899 = vadd.f32 0.0, %v3898
        %v3900 = vpop.f32.mrb[0].mxu0
        %v3901 = vadd.f32 0.0, %v3900
        %3902 = vdwg.mxu0
        %3903 = vmatprep.subr.mxu0 %v3441
        %3904 = vmatpush1.msra.mxu0 %v3440
        %3905 = vmatprep.subr.mxu0 %v3449
        %3906 = vmatpush1.msra.mxu0 %v3448
        %3907 = vmatprep.subr.mxu0 %v3457
        %3908 = vmatpush1.msra.mxu0 %v3456
        %3909 = vmatprep.subr.mxu0 %v3465
        %3910 = vmatpush1.msra.mxu0 %v3464
        %3911 = vmatprep.subr.mxu0 %v3473
        %3912 = vmatpush1.msra.mxu0 %v3472
        %3913 = vmatprep.subr.mxu0 %v3481
        %3914 = vmatpush1.msra.mxu0 %v3480
        %3915 = vmatprep.subr.mxu0 %v3489
        %3916 = vmatpush1.msra.mxu0 %v3488
        %3917 = vmatprep.subr.mxu0 %v3497
        %3918 = vmatpush1.msra.mxu0 %v3496
        %3919 = vmatprep.subr.mxu0 %v3505
        %3920 = vmatpush1.msra.mxu0 %v3504
        %3921 = vmatprep.subr.mxu0 %v3513
        %3922 = vmatpush1.msra.mxu0 %v3512
        %3923 = vmatprep.subr.mxu0 %v3521
        %3924 = vmatpush1.msra.mxu0 %v3520
        %3925 = vmatprep.subr.mxu0 %v3529
        %3926 = vmatpush1.msra.mxu0 %v3528
        %3927 = vmatprep.subr.mxu0 %v3537
        %3928 = vmatpush1.msra.mxu0 %v3536
        %3929 = vmatprep.subr.mxu0 %v3545
        %3930 = vmatpush1.msra.mxu0 %v3544
        %3931 = vmatprep.subr.mxu0 %v3553
        %3932 = vmatpush1.msra.mxu0 %v3552
        %3933 = vmatprep.subr.mxu0 %v3561
        %3934 = vmatpush1.msra.mxu0 %v3560
        %3935 = vmatprep.subr.mxu0 %v3569
        %3936 = vmatpush1.msra.mxu0 %v3568
        %3937 = vmatprep.subr.mxu0 %v3577
        %3938 = vmatpush1.msra.mxu0 %v3576
        %3939 = vmatprep.subr.mxu0 %v3585
        %3940 = vmatpush1.msra.mxu0 %v3584
        %3941 = vmatprep.subr.mxu0 %v3593
        %3942 = vmatpush1.msra.mxu0 %v3592
        %3943 = vmatprep.subr.mxu0 %v3601
        %3944 = vmatpush1.msra.mxu0 %v3600
        %3945 = vmatprep.subr.mxu0 %v3609
        %3946 = vmatpush1.msra.mxu0 %v3608
        %3947 = vmatprep.subr.mxu0 %v3617
        %3948 = vmatpush1.msra.mxu0 %v3616
        %3949 = vmatprep.subr.mxu0 %v3625
        %3950 = vmatpush1.msra.mxu0 %v3624
        %3951 = vmatprep.subr.mxu0 %v3633
        %3952 = vmatpush1.msra.mxu0 %v3632
        %3953 = vmatprep.subr.mxu0 %v3641
        %3954 = vmatpush1.msra.mxu0 %v3640
        %3955 = vmatprep.subr.mxu0 %v3649
        %3956 = vmatpush1.msra.mxu0 %v3648
        %3957 = vmatprep.subr.mxu0 %v3657
        %3958 = vmatpush1.msra.mxu0 %v3656
        %3959 = vmatprep.subr.mxu0 %v3665
        %3960 = vmatpush1.msra.mxu0 %v3664
        %3961 = vmatprep.subr.mxu0 %v3673
        %3962 = vmatpush1.msra.mxu0 %v3672
        %3963 = vmatprep.subr.mxu0 %v3681
        %3964 = vmatpush1.msra.mxu0 %v3680
        %3965 = vmatprep.subr.mxu0 %v3689
        %3966 = vmatpush1.msra.mxu0 %v3688
        %3967 = vmatprep.mubr.f32.mxu0 %v3433
        %3968 = vmatmul.mubr.f32.gmra.mrb[0].mxu0 %v3432
        %v3969 = vpop.f32.mrb[0].mxu0
        %v3970 = vadd.f32 0.0, %v3969
        %v3971 = vpop.f32.mrb[0].mxu0
        %v3972 = vadd.f32 0.0, %v3971
        %3973 = vdwg.mxu0
        %v3974 = vld [vmem:[#allocation2] sm:$0xff]
        %v3975 = vld [vmem:[#allocation2 + $0x8] sm:$0xff]
        %v3976 = vld [vmem:[#allocation2 + $0x10] sm:$0xff]
        %v3977 = vld [vmem:[#allocation2 + $0x18] sm:$0xff]
        %v3978 = vadd.f32 %v3974, %v3757
        %v3979 = vadd.f32 %v3975, %v3759
        %v3980 = vadd.f32 %v3976, %v3828
        %v3981 = vadd.f32 %v3977, %v3830
        %v3982 = vld [vmem:[%s1044 + $0x20] sm:$0xff]
        %v3983 = vld [vmem:[%s1044 + $0x28] sm:$0xff]
        %v3984 = vld [vmem:[%s1044 + $0x30] sm:$0xff]
        %v3985 = vld [vmem:[%s1044 + $0x38] sm:$0xff]
        %v3986 = vadd.f32 %v3982, %v3899
        %v3987 = vadd.f32 %v3983, %v3901
        %v3988 = vadd.f32 %v3984, %v3970
        %v3989 = vadd.f32 %v3985, %v3972
        %v3990 = vld [vmem:[#allocation4] sm:$0xff]
        %v3991 = vxor.u32 %v3978, 2147483648
        %v3992 = vmul.f32 %v3991, 1.442695
        %v3993 = vpow.pop %v3992
        %v3994 = vadd.f32 %v3993, 1.0
        %v3995 = vrcp.pop %v3994
        %v3996 = vmul.f32 1.0, %v3995
        %v3997 = vxor.u32 %v3979, 2147483648
        %v3998 = vmul.f32 %v3997, 1.442695
        %v3999 = vpow.pop %v3998
        %v4000 = vadd.f32 %v3999, 1.0
        %v4001 = vrcp.pop %v4000
        %v4002 = vmul.f32 1.0, %v4001
        %v4003 = vtanh.pop %v3980
        %v4004 = vxor.u32 %v3981, 2147483648
        %v4005 = vmul.f32 %v4004, 1.442695
        %v4006 = vpow.pop %v4005
        %v4007 = vadd.f32 %v4006, 1.0
        %v4008 = vrcp.pop %v4007
        %v4009 = vmul.f32 1.0, %v4008
        %v4010 = vmul.f32 %v4002, %v3990
        %v4011 = vmul.f32 %v3996, %v4003
        %v4012 = vadd.f32 %v4010, %v4011
        %v4013 = vtanh.pop %v4012
        %v4014 = vmul.f32 %v4009, %v4013
        %v4015 = vld [vmem:[#allocation4 + $0x8] sm:$0xff]
        %v4016 = vxor.u32 %v3986, 2147483648
        %v4017 = vmul.f32 %v4016, 1.442695
        %v4018 = vpow.pop %v4017
        %v4019 = vadd.f32 %v4018, 1.0
        %v4020 = vrcp.pop %v4019
        %v4021 = vmul.f32 1.0, %v4020
        %v4022 = vxor.u32 %v3987, 2147483648
        %v4023 = vmul.f32 %v4022, 1.442695
        %v4024 = vpow.pop %v4023
        %v4025 = vadd.f32 %v4024, 1.0
        %v4026 = vrcp.pop %v4025
        %v4027 = vmul.f32 1.0, %v4026
        %v4028 = vtanh.pop %v3988
        %v4029 = vxor.u32 %v3989, 2147483648
        %v4030 = vmul.f32 %v4029, 1.442695
        %v4031 = vpow.pop %v4030
        %v4032 = vadd.f32 %v4031, 1.0
        %v4033 = vrcp.pop %v4032
        %v4034 = vmul.f32 1.0, %v4033
        %v4035 = vmul.f32 %v4027, %v4015
        %v4036 = vmul.f32 %v4021, %v4028
        %v4037 = vadd.f32 %v4035, %v4036
        %v4038 = vtanh.pop %v4037
        %v4039 = vmul.f32 %v4034, %v4038
        %4040 = vst [vmem:[#allocation4] sm:$0xff] %v4012
        %4041 = vst [vmem:[#allocation4 + $0x8] sm:$0xff] %v4037
        %4042 = vst [vmem:[#allocation3] sm:$0xff] %v4014
        %4043 = vst [vmem:[#allocation3 + $0x8] sm:$0xff] %v4039
        %4044 = vst [vmem:[%s358] sm:$0xff] %v4014
        %4045 = vst [vmem:[%s1670 + $0x8] sm:$0xff] %v4039
        %v4046 = vld [vmem:[#allocation3] sm:$0xff]
        %v4047 = vld [vmem:[#allocation3 + $0x8] sm:$0xff]
        %v4048 = vld [vmem:[#allocation11] sm:$0xff]
        %v4049 = vld [vmem:[#allocation11 + $0x8] sm:$0xff]
        %v4050 = vld [vmem:[#allocation11 + $0x10] sm:$0xff]
        %v4051 = vld [vmem:[#allocation11 + $0x18] sm:$0xff]
        %v4052 = vld [vmem:[#allocation11 + $0x20] sm:$0xff]
        %v4053 = vld [vmem:[#allocation11 + $0x28] sm:$0xff]
        %v4054 = vld [vmem:[#allocation11 + $0x30] sm:$0xff]
        %v4055 = vld [vmem:[#allocation11 + $0x38] sm:$0xff]
        %v4056 = vld [vmem:[#allocation11 + $0x40] sm:$0xff]
        %v4057 = vld [vmem:[#allocation11 + $0x48] sm:$0xff]
        %v4058 = vld [vmem:[#allocation11 + $0x50] sm:$0xff]
        %v4059 = vld [vmem:[#allocation11 + $0x58] sm:$0xff]
        %v4060 = vld [vmem:[#allocation11 + $0x60] sm:$0xff]
        %v4061 = vld [vmem:[#allocation11 + $0x68] sm:$0xff]
        %v4062 = vld [vmem:[#allocation11 + $0x70] sm:$0xff]
        %v4063 = vld [vmem:[#allocation11 + $0x78] sm:$0xff]
        %v4064 = vld [vmem:[#allocation11 + $0x80] sm:$0xff]
        %v4065 = vld [vmem:[#allocation11 + $0x88] sm:$0xff]
        %v4066 = vld [vmem:[#allocation11 + $0x90] sm:$0xff]
        %v4067 = vld [vmem:[#allocation11 + $0x98] sm:$0xff]
        %v4068 = vld [vmem:[#allocation11 + $0xa0] sm:$0xff]
        %v4069 = vld [vmem:[#allocation11 + $0xa8] sm:$0xff]
        %v4070 = vld [vmem:[#allocation11 + $0xb0] sm:$0xff]
        %v4071 = vld [vmem:[#allocation11 + $0xb8] sm:$0xff]
        %v4072 = vld [vmem:[#allocation11 + $0xc0] sm:$0xff]
        %v4073 = vld [vmem:[#allocation11 + $0xc8] sm:$0xff]
        %v4074 = vld [vmem:[#allocation11 + $0xd0] sm:$0xff]
        %v4075 = vld [vmem:[#allocation11 + $0xd8] sm:$0xff]
        %v4076 = vld [vmem:[#allocation11 + $0xe0] sm:$0xff]
        %v4077 = vld [vmem:[#allocation11 + $0xe8] sm:$0xff]
        %v4078 = vld [vmem:[#allocation11 + $0xf0] sm:$0xff]
        %v4079 = vld [vmem:[#allocation11 + $0xf8] sm:$0xff]
        %v4080 = vld [vmem:[#allocation11 + $0x100] sm:$0xff]
        %v4081 = vld [vmem:[#allocation11 + $0x108] sm:$0xff]
        %v4082 = vld [vmem:[#allocation11 + $0x110] sm:$0xff]
        %v4083 = vld [vmem:[#allocation11 + $0x118] sm:$0xff]
        %v4084 = vld [vmem:[#allocation11 + $0x120] sm:$0xff]
        %v4085 = vld [vmem:[#allocation11 + $0x128] sm:$0xff]
        %v4086 = vld [vmem:[#allocation11 + $0x130] sm:$0xff]
        %v4087 = vld [vmem:[#allocation11 + $0x138] sm:$0xff]
        %v4088 = vld [vmem:[#allocation11 + $0x140] sm:$0xff]
        %v4089 = vld [vmem:[#allocation11 + $0x148] sm:$0xff]
        %v4090 = vld [vmem:[#allocation11 + $0x150] sm:$0xff]
        %v4091 = vld [vmem:[#allocation11 + $0x158] sm:$0xff]
        %v4092 = vld [vmem:[#allocation11 + $0x160] sm:$0xff]
        %v4093 = vld [vmem:[#allocation11 + $0x168] sm:$0xff]
        %v4094 = vld [vmem:[#allocation11 + $0x170] sm:$0xff]
        %v4095 = vld [vmem:[#allocation11 + $0x178] sm:$0xff]
        %v4096 = vld [vmem:[#allocation11 + $0x180] sm:$0xff]
        %v4097 = vld [vmem:[#allocation11 + $0x188] sm:$0xff]
        %v4098 = vld [vmem:[#allocation11 + $0x190] sm:$0xff]
        %v4099 = vld [vmem:[#allocation11 + $0x198] sm:$0xff]
        %v4100 = vld [vmem:[#allocation11 + $0x1a0] sm:$0xff]
        %v4101 = vld [vmem:[#allocation11 + $0x1a8] sm:$0xff]
        %v4102 = vld [vmem:[#allocation11 + $0x1b0] sm:$0xff]
        %v4103 = vld [vmem:[#allocation11 + $0x1b8] sm:$0xff]
        %v4104 = vld [vmem:[#allocation11 + $0x1c0] sm:$0xff]
        %v4105 = vld [vmem:[#allocation11 + $0x1c8] sm:$0xff]
        %v4106 = vld [vmem:[#allocation11 + $0x1d0] sm:$0xff]
        %v4107 = vld [vmem:[#allocation11 + $0x1d8] sm:$0xff]
        %v4108 = vld [vmem:[#allocation11 + $0x1e0] sm:$0xff]
        %v4109 = vld [vmem:[#allocation11 + $0x1e8] sm:$0xff]
        %v4110 = vld [vmem:[#allocation11 + $0x1f0] sm:$0xff]
        %v4111 = vld [vmem:[#allocation11 + $0x1f8] sm:$0xff]
        %v4112 = vld [vmem:[#allocation11 + $0x200] sm:$0xff]
        %v4113 = vld [vmem:[#allocation11 + $0x208] sm:$0xff]
        %v4114 = vld [vmem:[#allocation11 + $0x210] sm:$0xff]
        %v4115 = vld [vmem:[#allocation11 + $0x218] sm:$0xff]
        %v4116 = vld [vmem:[#allocation11 + $0x220] sm:$0xff]
        %v4117 = vld [vmem:[#allocation11 + $0x228] sm:$0xff]
        %v4118 = vld [vmem:[#allocation11 + $0x230] sm:$0xff]
        %v4119 = vld [vmem:[#allocation11 + $0x238] sm:$0xff]
        %v4120 = vld [vmem:[#allocation11 + $0x240] sm:$0xff]
        %v4121 = vld [vmem:[#allocation11 + $0x248] sm:$0xff]
        %v4122 = vld [vmem:[#allocation11 + $0x250] sm:$0xff]
        %v4123 = vld [vmem:[#allocation11 + $0x258] sm:$0xff]
        %v4124 = vld [vmem:[#allocation11 + $0x260] sm:$0xff]
        %v4125 = vld [vmem:[#allocation11 + $0x268] sm:$0xff]
        %v4126 = vld [vmem:[#allocation11 + $0x270] sm:$0xff]
        %v4127 = vld [vmem:[#allocation11 + $0x278] sm:$0xff]
        %v4128 = vld [vmem:[#allocation11 + $0x280] sm:$0xff]
        %v4129 = vld [vmem:[#allocation11 + $0x288] sm:$0xff]
        %v4130 = vld [vmem:[#allocation11 + $0x290] sm:$0xff]
        %v4131 = vld [vmem:[#allocation11 + $0x298] sm:$0xff]
        %v4132 = vld [vmem:[#allocation11 + $0x2a0] sm:$0xff]
        %v4133 = vld [vmem:[#allocation11 + $0x2a8] sm:$0xff]
        %v4134 = vld [vmem:[#allocation11 + $0x2b0] sm:$0xff]
        %v4135 = vld [vmem:[#allocation11 + $0x2b8] sm:$0xff]
        %v4136 = vld [vmem:[#allocation11 + $0x2c0] sm:$0xff]
        %v4137 = vld [vmem:[#allocation11 + $0x2c8] sm:$0xff]
        %v4138 = vld [vmem:[#allocation11 + $0x2d0] sm:$0xff]
        %v4139 = vld [vmem:[#allocation11 + $0x2d8] sm:$0xff]
        %v4140 = vld [vmem:[#allocation11 + $0x2e0] sm:$0xff]
        %v4141 = vld [vmem:[#allocation11 + $0x2e8] sm:$0xff]
        %v4142 = vld [vmem:[#allocation11 + $0x2f0] sm:$0xff]
        %v4143 = vld [vmem:[#allocation11 + $0x2f8] sm:$0xff]
        %v4144 = vld [vmem:[#allocation11 + $0x300] sm:$0xff]
        %v4145 = vld [vmem:[#allocation11 + $0x308] sm:$0xff]
        %v4146 = vld [vmem:[#allocation11 + $0x310] sm:$0xff]
        %v4147 = vld [vmem:[#allocation11 + $0x318] sm:$0xff]
        %v4148 = vld [vmem:[#allocation11 + $0x320] sm:$0xff]
        %v4149 = vld [vmem:[#allocation11 + $0x328] sm:$0xff]
        %v4150 = vld [vmem:[#allocation11 + $0x330] sm:$0xff]
        %v4151 = vld [vmem:[#allocation11 + $0x338] sm:$0xff]
        %v4152 = vld [vmem:[#allocation11 + $0x340] sm:$0xff]
        %v4153 = vld [vmem:[#allocation11 + $0x348] sm:$0xff]
        %v4154 = vld [vmem:[#allocation11 + $0x350] sm:$0xff]
        %v4155 = vld [vmem:[#allocation11 + $0x358] sm:$0xff]
        %v4156 = vld [vmem:[#allocation11 + $0x360] sm:$0xff]
        %v4157 = vld [vmem:[#allocation11 + $0x368] sm:$0xff]
        %v4158 = vld [vmem:[#allocation11 + $0x370] sm:$0xff]
        %v4159 = vld [vmem:[#allocation11 + $0x378] sm:$0xff]
        %v4160 = vld [vmem:[#allocation11 + $0x380] sm:$0xff]
        %v4161 = vld [vmem:[#allocation11 + $0x388] sm:$0xff]
        %v4162 = vld [vmem:[#allocation11 + $0x390] sm:$0xff]
        %v4163 = vld [vmem:[#allocation11 + $0x398] sm:$0xff]
        %v4164 = vld [vmem:[#allocation11 + $0x3a0] sm:$0xff]
        %v4165 = vld [vmem:[#allocation11 + $0x3a8] sm:$0xff]
        %v4166 = vld [vmem:[#allocation11 + $0x3b0] sm:$0xff]
        %v4167 = vld [vmem:[#allocation11 + $0x3b8] sm:$0xff]
        %v4168 = vld [vmem:[#allocation11 + $0x3c0] sm:$0xff]
        %v4169 = vld [vmem:[#allocation11 + $0x3c8] sm:$0xff]
        %v4170 = vld [vmem:[#allocation11 + $0x3d0] sm:$0xff]
        %v4171 = vld [vmem:[#allocation11 + $0x3d8] sm:$0xff]
        %v4172 = vld [vmem:[#allocation11 + $0x3e0] sm:$0xff]
        %v4173 = vld [vmem:[#allocation11 + $0x3e8] sm:$0xff]
        %v4174 = vld [vmem:[#allocation11 + $0x3f0] sm:$0xff]
        %v4175 = vld [vmem:[#allocation11 + $0x3f8] sm:$0xff]
        %v4176 = vld [vmem:[#allocation11 + $0x400] sm:$0xff]
        %v4177 = vld [vmem:[#allocation11 + $0x408] sm:$0xff]
        %v4178 = vld [vmem:[#allocation11 + $0x410] sm:$0xff]
        %v4179 = vld [vmem:[#allocation11 + $0x418] sm:$0xff]
        %v4180 = vld [vmem:[#allocation11 + $0x420] sm:$0xff]
        %v4181 = vld [vmem:[#allocation11 + $0x428] sm:$0xff]
        %v4182 = vld [vmem:[#allocation11 + $0x430] sm:$0xff]
        %v4183 = vld [vmem:[#allocation11 + $0x438] sm:$0xff]
        %v4184 = vld [vmem:[#allocation11 + $0x440] sm:$0xff]
        %v4185 = vld [vmem:[#allocation11 + $0x448] sm:$0xff]
        %v4186 = vld [vmem:[#allocation11 + $0x450] sm:$0xff]
        %v4187 = vld [vmem:[#allocation11 + $0x458] sm:$0xff]
        %v4188 = vld [vmem:[#allocation11 + $0x460] sm:$0xff]
        %v4189 = vld [vmem:[#allocation11 + $0x468] sm:$0xff]
        %v4190 = vld [vmem:[#allocation11 + $0x470] sm:$0xff]
        %v4191 = vld [vmem:[#allocation11 + $0x478] sm:$0xff]
        %v4192 = vld [vmem:[#allocation11 + $0x480] sm:$0xff]
        %v4193 = vld [vmem:[#allocation11 + $0x488] sm:$0xff]
        %v4194 = vld [vmem:[#allocation11 + $0x490] sm:$0xff]
        %v4195 = vld [vmem:[#allocation11 + $0x498] sm:$0xff]
        %v4196 = vld [vmem:[#allocation11 + $0x4a0] sm:$0xff]
        %v4197 = vld [vmem:[#allocation11 + $0x4a8] sm:$0xff]
        %v4198 = vld [vmem:[#allocation11 + $0x4b0] sm:$0xff]
        %v4199 = vld [vmem:[#allocation11 + $0x4b8] sm:$0xff]
        %v4200 = vld [vmem:[#allocation11 + $0x4c0] sm:$0xff]
        %v4201 = vld [vmem:[#allocation11 + $0x4c8] sm:$0xff]
        %v4202 = vld [vmem:[#allocation11 + $0x4d0] sm:$0xff]
        %v4203 = vld [vmem:[#allocation11 + $0x4d8] sm:$0xff]
        %v4204 = vld [vmem:[#allocation11 + $0x4e0] sm:$0xff]
        %v4205 = vld [vmem:[#allocation11 + $0x4e8] sm:$0xff]
        %v4206 = vld [vmem:[#allocation11 + $0x4f0] sm:$0xff]
        %v4207 = vld [vmem:[#allocation11 + $0x4f8] sm:$0xff]
        %v4208 = vld [vmem:[#allocation11 + $0x500] sm:$0xff]
        %v4209 = vld [vmem:[#allocation11 + $0x508] sm:$0xff]
        %v4210 = vld [vmem:[#allocation11 + $0x510] sm:$0xff]
        %v4211 = vld [vmem:[#allocation11 + $0x518] sm:$0xff]
        %v4212 = vld [vmem:[#allocation11 + $0x520] sm:$0xff]
        %v4213 = vld [vmem:[#allocation11 + $0x528] sm:$0xff]
        %v4214 = vld [vmem:[#allocation11 + $0x530] sm:$0xff]
        %v4215 = vld [vmem:[#allocation11 + $0x538] sm:$0xff]
        %v4216 = vld [vmem:[#allocation11 + $0x540] sm:$0xff]
        %v4217 = vld [vmem:[#allocation11 + $0x548] sm:$0xff]
        %v4218 = vld [vmem:[#allocation11 + $0x550] sm:$0xff]
        %v4219 = vld [vmem:[#allocation11 + $0x558] sm:$0xff]
        %v4220 = vld [vmem:[#allocation11 + $0x560] sm:$0xff]
        %v4221 = vld [vmem:[#allocation11 + $0x568] sm:$0xff]
        %v4222 = vld [vmem:[#allocation11 + $0x570] sm:$0xff]
        %v4223 = vld [vmem:[#allocation11 + $0x578] sm:$0xff]
        %v4224 = vld [vmem:[#allocation11 + $0x580] sm:$0xff]
        %v4225 = vld [vmem:[#allocation11 + $0x588] sm:$0xff]
        %v4226 = vld [vmem:[#allocation11 + $0x590] sm:$0xff]
        %v4227 = vld [vmem:[#allocation11 + $0x598] sm:$0xff]
        %v4228 = vld [vmem:[#allocation11 + $0x5a0] sm:$0xff]
        %v4229 = vld [vmem:[#allocation11 + $0x5a8] sm:$0xff]
        %v4230 = vld [vmem:[#allocation11 + $0x5b0] sm:$0xff]
        %v4231 = vld [vmem:[#allocation11 + $0x5b8] sm:$0xff]
        %v4232 = vld [vmem:[#allocation11 + $0x5c0] sm:$0xff]
        %v4233 = vld [vmem:[#allocation11 + $0x5c8] sm:$0xff]
        %v4234 = vld [vmem:[#allocation11 + $0x5d0] sm:$0xff]
        %v4235 = vld [vmem:[#allocation11 + $0x5d8] sm:$0xff]
        %v4236 = vld [vmem:[#allocation11 + $0x5e0] sm:$0xff]
        %v4237 = vld [vmem:[#allocation11 + $0x5e8] sm:$0xff]
        %v4238 = vld [vmem:[#allocation11 + $0x5f0] sm:$0xff]
        %v4239 = vld [vmem:[#allocation11 + $0x5f8] sm:$0xff]
        %v4240 = vld [vmem:[#allocation11 + $0x600] sm:$0xff]
        %v4241 = vld [vmem:[#allocation11 + $0x608] sm:$0xff]
        %v4242 = vld [vmem:[#allocation11 + $0x610] sm:$0xff]
        %v4243 = vld [vmem:[#allocation11 + $0x618] sm:$0xff]
        %v4244 = vld [vmem:[#allocation11 + $0x620] sm:$0xff]
        %v4245 = vld [vmem:[#allocation11 + $0x628] sm:$0xff]
        %v4246 = vld [vmem:[#allocation11 + $0x630] sm:$0xff]
        %v4247 = vld [vmem:[#allocation11 + $0x638] sm:$0xff]
        %v4248 = vld [vmem:[#allocation11 + $0x640] sm:$0xff]
        %v4249 = vld [vmem:[#allocation11 + $0x648] sm:$0xff]
        %v4250 = vld [vmem:[#allocation11 + $0x650] sm:$0xff]
        %v4251 = vld [vmem:[#allocation11 + $0x658] sm:$0xff]
        %v4252 = vld [vmem:[#allocation11 + $0x660] sm:$0xff]
        %v4253 = vld [vmem:[#allocation11 + $0x668] sm:$0xff]
        %v4254 = vld [vmem:[#allocation11 + $0x670] sm:$0xff]
        %v4255 = vld [vmem:[#allocation11 + $0x678] sm:$0xff]
        %v4256 = vld [vmem:[#allocation11 + $0x680] sm:$0xff]
        %v4257 = vld [vmem:[#allocation11 + $0x688] sm:$0xff]
        %v4258 = vld [vmem:[#allocation11 + $0x690] sm:$0xff]
        %v4259 = vld [vmem:[#allocation11 + $0x698] sm:$0xff]
        %v4260 = vld [vmem:[#allocation11 + $0x6a0] sm:$0xff]
        %v4261 = vld [vmem:[#allocation11 + $0x6a8] sm:$0xff]
        %v4262 = vld [vmem:[#allocation11 + $0x6b0] sm:$0xff]
        %v4263 = vld [vmem:[#allocation11 + $0x6b8] sm:$0xff]
        %v4264 = vld [vmem:[#allocation11 + $0x6c0] sm:$0xff]
        %v4265 = vld [vmem:[#allocation11 + $0x6c8] sm:$0xff]
        %v4266 = vld [vmem:[#allocation11 + $0x6d0] sm:$0xff]
        %v4267 = vld [vmem:[#allocation11 + $0x6d8] sm:$0xff]
        %v4268 = vld [vmem:[#allocation11 + $0x6e0] sm:$0xff]
        %v4269 = vld [vmem:[#allocation11 + $0x6e8] sm:$0xff]
        %v4270 = vld [vmem:[#allocation11 + $0x6f0] sm:$0xff]
        %v4271 = vld [vmem:[#allocation11 + $0x6f8] sm:$0xff]
        %v4272 = vld [vmem:[#allocation11 + $0x700] sm:$0xff]
        %v4273 = vld [vmem:[#allocation11 + $0x708] sm:$0xff]
        %v4274 = vld [vmem:[#allocation11 + $0x710] sm:$0xff]
        %v4275 = vld [vmem:[#allocation11 + $0x718] sm:$0xff]
        %v4276 = vld [vmem:[#allocation11 + $0x720] sm:$0xff]
        %v4277 = vld [vmem:[#allocation11 + $0x728] sm:$0xff]
        %v4278 = vld [vmem:[#allocation11 + $0x730] sm:$0xff]
        %v4279 = vld [vmem:[#allocation11 + $0x738] sm:$0xff]
        %v4280 = vld [vmem:[#allocation11 + $0x740] sm:$0xff]
        %v4281 = vld [vmem:[#allocation11 + $0x748] sm:$0xff]
        %v4282 = vld [vmem:[#allocation11 + $0x750] sm:$0xff]
        %v4283 = vld [vmem:[#allocation11 + $0x758] sm:$0xff]
        %v4284 = vld [vmem:[#allocation11 + $0x760] sm:$0xff]
        %v4285 = vld [vmem:[#allocation11 + $0x768] sm:$0xff]
        %v4286 = vld [vmem:[#allocation11 + $0x770] sm:$0xff]
        %v4287 = vld [vmem:[#allocation11 + $0x778] sm:$0xff]
        %v4288 = vld [vmem:[#allocation11 + $0x780] sm:$0xff]
        %v4289 = vld [vmem:[#allocation11 + $0x788] sm:$0xff]
        %v4290 = vld [vmem:[#allocation11 + $0x790] sm:$0xff]
        %v4291 = vld [vmem:[#allocation11 + $0x798] sm:$0xff]
        %v4292 = vld [vmem:[#allocation11 + $0x7a0] sm:$0xff]
        %v4293 = vld [vmem:[#allocation11 + $0x7a8] sm:$0xff]
        %v4294 = vld [vmem:[#allocation11 + $0x7b0] sm:$0xff]
        %v4295 = vld [vmem:[#allocation11 + $0x7b8] sm:$0xff]
        %v4296 = vld [vmem:[#allocation11 + $0x7c0] sm:$0xff]
        %v4297 = vld [vmem:[#allocation11 + $0x7c8] sm:$0xff]
        %v4298 = vld [vmem:[#allocation11 + $0x7d0] sm:$0xff]
        %v4299 = vld [vmem:[#allocation11 + $0x7d8] sm:$0xff]
        %v4300 = vld [vmem:[#allocation11 + $0x7e0] sm:$0xff]
        %v4301 = vld [vmem:[#allocation11 + $0x7e8] sm:$0xff]
        %v4302 = vld [vmem:[#allocation11 + $0x7f0] sm:$0xff]
        %v4303 = vld [vmem:[#allocation11 + $0x7f8] sm:$0xff]
        %4304 = vmatprep.subr.mxu0 %v4049
        %4305 = vmatpush1.msra.mxu0 %v4048
        %4306 = vmatprep.subr.mxu0 %v4057
        %4307 = vmatpush1.msra.mxu0 %v4056
        %4308 = vmatprep.subr.mxu0 %v4065
        %4309 = vmatpush1.msra.mxu0 %v4064
        %4310 = vmatprep.subr.mxu0 %v4073
        %4311 = vmatpush1.msra.mxu0 %v4072
        %4312 = vmatprep.subr.mxu0 %v4081
        %4313 = vmatpush1.msra.mxu0 %v4080
        %4314 = vmatprep.subr.mxu0 %v4089
        %4315 = vmatpush1.msra.mxu0 %v4088
        %4316 = vmatprep.subr.mxu0 %v4097
        %4317 = vmatpush1.msra.mxu0 %v4096
        %4318 = vmatprep.subr.mxu0 %v4105
        %4319 = vmatpush1.msra.mxu0 %v4104
        %4320 = vmatprep.subr.mxu0 %v4113
        %4321 = vmatpush1.msra.mxu0 %v4112
        %4322 = vmatprep.subr.mxu0 %v4121
        %4323 = vmatpush1.msra.mxu0 %v4120
        %4324 = vmatprep.subr.mxu0 %v4129
        %4325 = vmatpush1.msra.mxu0 %v4128
        %4326 = vmatprep.subr.mxu0 %v4137
        %4327 = vmatpush1.msra.mxu0 %v4136
        %4328 = vmatprep.subr.mxu0 %v4145
        %4329 = vmatpush1.msra.mxu0 %v4144
        %4330 = vmatprep.subr.mxu0 %v4153
        %4331 = vmatpush1.msra.mxu0 %v4152
        %4332 = vmatprep.subr.mxu0 %v4161
        %4333 = vmatpush1.msra.mxu0 %v4160
        %4334 = vmatprep.subr.mxu0 %v4169
        %4335 = vmatpush1.msra.mxu0 %v4168
        %4336 = vmatprep.subr.mxu0 %v4177
        %4337 = vmatpush1.msra.mxu0 %v4176
        %4338 = vmatprep.subr.mxu0 %v4185
        %4339 = vmatpush1.msra.mxu0 %v4184
        %4340 = vmatprep.subr.mxu0 %v4193
        %4341 = vmatpush1.msra.mxu0 %v4192
        %4342 = vmatprep.subr.mxu0 %v4201
        %4343 = vmatpush1.msra.mxu0 %v4200
        %4344 = vmatprep.subr.mxu0 %v4209
        %4345 = vmatpush1.msra.mxu0 %v4208
        %4346 = vmatprep.subr.mxu0 %v4217
        %4347 = vmatpush1.msra.mxu0 %v4216
        %4348 = vmatprep.subr.mxu0 %v4225
        %4349 = vmatpush1.msra.mxu0 %v4224
        %4350 = vmatprep.subr.mxu0 %v4233
        %4351 = vmatpush1.msra.mxu0 %v4232
        %4352 = vmatprep.subr.mxu0 %v4241
        %4353 = vmatpush1.msra.mxu0 %v4240
        %4354 = vmatprep.subr.mxu0 %v4249
        %4355 = vmatpush1.msra.mxu0 %v4248
        %4356 = vmatprep.subr.mxu0 %v4257
        %4357 = vmatpush1.msra.mxu0 %v4256
        %4358 = vmatprep.subr.mxu0 %v4265
        %4359 = vmatpush1.msra.mxu0 %v4264
        %4360 = vmatprep.subr.mxu0 %v4273
        %4361 = vmatpush1.msra.mxu0 %v4272
        %4362 = vmatprep.subr.mxu0 %v4281
        %4363 = vmatpush1.msra.mxu0 %v4280
        %4364 = vmatprep.subr.mxu0 %v4289
        %4365 = vmatpush1.msra.mxu0 %v4288
        %4366 = vmatprep.subr.mxu0 %v4297
        %4367 = vmatpush1.msra.mxu0 %v4296
        %4368 = vmatprep.mubr.f32.mxu0 %v4047
        %4369 = vmatmul.mubr.f32.gmra.mrb[0].mxu0 %v4046
        %v4370 = vpop.f32.mrb[0].mxu0
        %v4371 = vadd.f32 0.0, %v4370
        %v4372 = vpop.f32.mrb[0].mxu0
        %v4373 = vadd.f32 0.0, %v4372
        %4374 = vdwg.mxu0
        %4375 = vmatprep.subr.mxu0 %v4051
        %4376 = vmatpush1.msra.mxu0 %v4050
        %4377 = vmatprep.subr.mxu0 %v4059
        %4378 = vmatpush1.msra.mxu0 %v4058
        %4379 = vmatprep.subr.mxu0 %v4067
        %4380 = vmatpush1.msra.mxu0 %v4066
        %4381 = vmatprep.subr.mxu0 %v4075
        %4382 = vmatpush1.msra.mxu0 %v4074
        %4383 = vmatprep.subr.mxu0 %v4083
        %4384 = vmatpush1.msra.mxu0 %v4082
        %4385 = vmatprep.subr.mxu0 %v4091
        %4386 = vmatpush1.msra.mxu0 %v4090
        %4387 = vmatprep.subr.mxu0 %v4099
        %4388 = vmatpush1.msra.mxu0 %v4098
        %4389 = vmatprep.subr.mxu0 %v4107
        %4390 = vmatpush1.msra.mxu0 %v4106
        %4391 = vmatprep.subr.mxu0 %v4115
        %4392 = vmatpush1.msra.mxu0 %v4114
        %4393 = vmatprep.subr.mxu0 %v4123
        %4394 = vmatpush1.msra.mxu0 %v4122
        %4395 = vmatprep.subr.mxu0 %v4131
        %4396 = vmatpush1.msra.mxu0 %v4130
        %4397 = vmatprep.subr.mxu0 %v4139
        %4398 = vmatpush1.msra.mxu0 %v4138
        %4399 = vmatprep.subr.mxu0 %v4147
        %4400 = vmatpush1.msra.mxu0 %v4146
        %4401 = vmatprep.subr.mxu0 %v4155
        %4402 = vmatpush1.msra.mxu0 %v4154
        %4403 = vmatprep.subr.mxu0 %v4163
        %4404 = vmatpush1.msra.mxu0 %v4162
        %4405 = vmatprep.subr.mxu0 %v4171
        %4406 = vmatpush1.msra.mxu0 %v4170
        %4407 = vmatprep.subr.mxu0 %v4179
        %4408 = vmatpush1.msra.mxu0 %v4178
        %4409 = vmatprep.subr.mxu0 %v4187
        %4410 = vmatpush1.msra.mxu0 %v4186
        %4411 = vmatprep.subr.mxu0 %v4195
        %4412 = vmatpush1.msra.mxu0 %v4194
        %4413 = vmatprep.subr.mxu0 %v4203
        %4414 = vmatpush1.msra.mxu0 %v4202
        %4415 = vmatprep.subr.mxu0 %v4211
        %4416 = vmatpush1.msra.mxu0 %v4210
        %4417 = vmatprep.subr.mxu0 %v4219
        %4418 = vmatpush1.msra.mxu0 %v4218
        %4419 = vmatprep.subr.mxu0 %v4227
        %4420 = vmatpush1.msra.mxu0 %v4226
        %4421 = vmatprep.subr.mxu0 %v4235
        %4422 = vmatpush1.msra.mxu0 %v4234
        %4423 = vmatprep.subr.mxu0 %v4243
        %4424 = vmatpush1.msra.mxu0 %v4242
        %4425 = vmatprep.subr.mxu0 %v4251
        %4426 = vmatpush1.msra.mxu0 %v4250
        %4427 = vmatprep.subr.mxu0 %v4259
        %4428 = vmatpush1.msra.mxu0 %v4258
        %4429 = vmatprep.subr.mxu0 %v4267
        %4430 = vmatpush1.msra.mxu0 %v4266
        %4431 = vmatprep.subr.mxu0 %v4275
        %4432 = vmatpush1.msra.mxu0 %v4274
        %4433 = vmatprep.subr.mxu0 %v4283
        %4434 = vmatpush1.msra.mxu0 %v4282
        %4435 = vmatprep.subr.mxu0 %v4291
        %4436 = vmatpush1.msra.mxu0 %v4290
        %4437 = vmatprep.subr.mxu0 %v4299
        %4438 = vmatpush1.msra.mxu0 %v4298
        %4439 = vmatprep.mubr.f32.mxu0 %v4047
        %4440 = vmatmul.mubr.f32.gmra.mrb[0].mxu0 %v4046
        %v4441 = vpop.f32.mrb[0].mxu0
        %v4442 = vadd.f32 0.0, %v4441
        %v4443 = vpop.f32.mrb[0].mxu0
        %v4444 = vadd.f32 0.0, %v4443
        %4445 = vdwg.mxu0
        %4446 = vmatprep.subr.mxu0 %v4053
        %4447 = vmatpush1.msra.mxu0 %v4052
        %4448 = vmatprep.subr.mxu0 %v4061
        %4449 = vmatpush1.msra.mxu0 %v4060
        %4450 = vmatprep.subr.mxu0 %v4069
        %4451 = vmatpush1.msra.mxu0 %v4068
        %4452 = vmatprep.subr.mxu0 %v4077
        %4453 = vmatpush1.msra.mxu0 %v4076
        %4454 = vmatprep.subr.mxu0 %v4085
        %4455 = vmatpush1.msra.mxu0 %v4084
        %4456 = vmatprep.subr.mxu0 %v4093
        %4457 = vmatpush1.msra.mxu0 %v4092
        %4458 = vmatprep.subr.mxu0 %v4101
        %4459 = vmatpush1.msra.mxu0 %v4100
        %4460 = vmatprep.subr.mxu0 %v4109
        %4461 = vmatpush1.msra.mxu0 %v4108
        %4462 = vmatprep.subr.mxu0 %v4117
        %4463 = vmatpush1.msra.mxu0 %v4116
        %4464 = vmatprep.subr.mxu0 %v4125
        %4465 = vmatpush1.msra.mxu0 %v4124
        %4466 = vmatprep.subr.mxu0 %v4133
        %4467 = vmatpush1.msra.mxu0 %v4132
        %4468 = vmatprep.subr.mxu0 %v4141
        %4469 = vmatpush1.msra.mxu0 %v4140
        %4470 = vmatprep.subr.mxu0 %v4149
        %4471 = vmatpush1.msra.mxu0 %v4148
        %4472 = vmatprep.subr.mxu0 %v4157
        %4473 = vmatpush1.msra.mxu0 %v4156
        %4474 = vmatprep.subr.mxu0 %v4165
        %4475 = vmatpush1.msra.mxu0 %v4164
        %4476 = vmatprep.subr.mxu0 %v4173
        %4477 = vmatpush1.msra.mxu0 %v4172
        %4478 = vmatprep.subr.mxu0 %v4181
        %4479 = vmatpush1.msra.mxu0 %v4180
        %4480 = vmatprep.subr.mxu0 %v4189
        %4481 = vmatpush1.msra.mxu0 %v4188
        %4482 = vmatprep.subr.mxu0 %v4197
        %4483 = vmatpush1.msra.mxu0 %v4196
        %4484 = vmatprep.subr.mxu0 %v4205
        %4485 = vmatpush1.msra.mxu0 %v4204
        %4486 = vmatprep.subr.mxu0 %v4213
        %4487 = vmatpush1.msra.mxu0 %v4212
        %4488 = vmatprep.subr.mxu0 %v4221
        %4489 = vmatpush1.msra.mxu0 %v4220
        %4490 = vmatprep.subr.mxu0 %v4229
        %4491 = vmatpush1.msra.mxu0 %v4228
        %4492 = vmatprep.subr.mxu0 %v4237
        %4493 = vmatpush1.msra.mxu0 %v4236
        %4494 = vmatprep.subr.mxu0 %v4245
        %4495 = vmatpush1.msra.mxu0 %v4244
        %4496 = vmatprep.subr.mxu0 %v4253
        %4497 = vmatpush1.msra.mxu0 %v4252
        %4498 = vmatprep.subr.mxu0 %v4261
        %4499 = vmatpush1.msra.mxu0 %v4260
        %4500 = vmatprep.subr.mxu0 %v4269
        %4501 = vmatpush1.msra.mxu0 %v4268
        %4502 = vmatprep.subr.mxu0 %v4277
        %4503 = vmatpush1.msra.mxu0 %v4276
        %4504 = vmatprep.subr.mxu0 %v4285
        %4505 = vmatpush1.msra.mxu0 %v4284
        %4506 = vmatprep.subr.mxu0 %v4293
        %4507 = vmatpush1.msra.mxu0 %v4292
        %4508 = vmatprep.subr.mxu0 %v4301
        %4509 = vmatpush1.msra.mxu0 %v4300
        %4510 = vmatprep.mubr.f32.mxu0 %v4047
        %4511 = vmatmul.mubr.f32.gmra.mrb[0].mxu0 %v4046
        %v4512 = vpop.f32.mrb[0].mxu0
        %v4513 = vadd.f32 0.0, %v4512
        %v4514 = vpop.f32.mrb[0].mxu0
        %v4515 = vadd.f32 0.0, %v4514
        %4516 = vdwg.mxu0
        %4517 = vmatprep.subr.mxu0 %v4055
        %4518 = vmatpush1.msra.mxu0 %v4054
        %4519 = vmatprep.subr.mxu0 %v4063
        %4520 = vmatpush1.msra.mxu0 %v4062
        %4521 = vmatprep.subr.mxu0 %v4071
        %4522 = vmatpush1.msra.mxu0 %v4070
        %4523 = vmatprep.subr.mxu0 %v4079
        %4524 = vmatpush1.msra.mxu0 %v4078
        %4525 = vmatprep.subr.mxu0 %v4087
        %4526 = vmatpush1.msra.mxu0 %v4086
        %4527 = vmatprep.subr.mxu0 %v4095
        %4528 = vmatpush1.msra.mxu0 %v4094
        %4529 = vmatprep.subr.mxu0 %v4103
        %4530 = vmatpush1.msra.mxu0 %v4102
        %4531 = vmatprep.subr.mxu0 %v4111
        %4532 = vmatpush1.msra.mxu0 %v4110
        %4533 = vmatprep.subr.mxu0 %v4119
        %4534 = vmatpush1.msra.mxu0 %v4118
        %4535 = vmatprep.subr.mxu0 %v4127
        %4536 = vmatpush1.msra.mxu0 %v4126
        %4537 = vmatprep.subr.mxu0 %v4135
        %4538 = vmatpush1.msra.mxu0 %v4134
        %4539 = vmatprep.subr.mxu0 %v4143
        %4540 = vmatpush1.msra.mxu0 %v4142
        %4541 = vmatprep.subr.mxu0 %v4151
        %4542 = vmatpush1.msra.mxu0 %v4150
        %4543 = vmatprep.subr.mxu0 %v4159
        %4544 = vmatpush1.msra.mxu0 %v4158
        %4545 = vmatprep.subr.mxu0 %v4167
        %4546 = vmatpush1.msra.mxu0 %v4166
        %4547 = vmatprep.subr.mxu0 %v4175
        %4548 = vmatpush1.msra.mxu0 %v4174
        %4549 = vmatprep.subr.mxu0 %v4183
        %4550 = vmatpush1.msra.mxu0 %v4182
        %4551 = vmatprep.subr.mxu0 %v4191
        %4552 = vmatpush1.msra.mxu0 %v4190
        %4553 = vmatprep.subr.mxu0 %v4199
        %4554 = vmatpush1.msra.mxu0 %v4198
        %4555 = vmatprep.subr.mxu0 %v4207
        %4556 = vmatpush1.msra.mxu0 %v4206
        %4557 = vmatprep.subr.mxu0 %v4215
        %4558 = vmatpush1.msra.mxu0 %v4214
        %4559 = vmatprep.subr.mxu0 %v4223
        %4560 = vmatpush1.msra.mxu0 %v4222
        %4561 = vmatprep.subr.mxu0 %v4231
        %4562 = vmatpush1.msra.mxu0 %v4230
        %4563 = vmatprep.subr.mxu0 %v4239
        %4564 = vmatpush1.msra.mxu0 %v4238
        %4565 = vmatprep.subr.mxu0 %v4247
        %4566 = vmatpush1.msra.mxu0 %v4246
        %4567 = vmatprep.subr.mxu0 %v4255
        %4568 = vmatpush1.msra.mxu0 %v4254
        %4569 = vmatprep.subr.mxu0 %v4263
        %4570 = vmatpush1.msra.mxu0 %v4262
        %4571 = vmatprep.subr.mxu0 %v4271
        %4572 = vmatpush1.msra.mxu0 %v4270
        %4573 = vmatprep.subr.mxu0 %v4279
        %4574 = vmatpush1.msra.mxu0 %v4278
        %4575 = vmatprep.subr.mxu0 %v4287
        %4576 = vmatpush1.msra.mxu0 %v4286
        %4577 = vmatprep.subr.mxu0 %v4295
        %4578 = vmatpush1.msra.mxu0 %v4294
        %4579 = vmatprep.subr.mxu0 %v4303
        %4580 = vmatpush1.msra.mxu0 %v4302
        %4581 = vmatprep.mubr.f32.mxu0 %v4047
        %4582 = vmatmul.mubr.f32.gmra.mrb[0].mxu0 %v4046
        %v4583 = vpop.f32.mrb[0].mxu0
        %v4584 = vadd.f32 0.0, %v4583
        %v4585 = vpop.f32.mrb[0].mxu0
        %v4586 = vadd.f32 0.0, %v4585
        %4587 = vdwg.mxu0
        %v4588 = vld [vmem:[%s1044] sm:$0xff]
        %v4589 = vld [vmem:[%s1044 + $0x8] sm:$0xff]
        %v4590 = vld [vmem:[%s1044 + $0x10] sm:$0xff]
        %v4591 = vld [vmem:[%s1044 + $0x18] sm:$0xff]
        %v4592 = vadd.f32 %v4588, %v4371
        %v4593 = vadd.f32 %v4589, %v4373
        %v4594 = vadd.f32 %v4590, %v4442
        %v4595 = vadd.f32 %v4591, %v4444
        %v4596 = vld [vmem:[#allocation2 + $0x20] sm:$0xff]
        %v4597 = vld [vmem:[#allocation2 + $0x28] sm:$0xff]
        %v4598 = vld [vmem:[#allocation2 + $0x30] sm:$0xff]
        %v4599 = vld [vmem:[#allocation2 + $0x38] sm:$0xff]
        %v4600 = vadd.f32 %v4596, %v4513
        %v4601 = vadd.f32 %v4597, %v4515
        %v4602 = vadd.f32 %v4598, %v4584
        %v4603 = vadd.f32 %v4599, %v4586
        %v4604 = vld [vmem:[#allocation4] sm:$0xff]
        %v4605 = vxor.u32 %v4592, 2147483648
        %v4606 = vmul.f32 %v4605, 1.442695
        %v4607 = vpow.pop %v4606
        %v4608 = vadd.f32 %v4607, 1.0
        %v4609 = vrcp.pop %v4608
        %v4610 = vmul.f32 1.0, %v4609
        %v4611 = vxor.u32 %v4593, 2147483648
        %v4612 = vmul.f32 %v4611, 1.442695
        %v4613 = vpow.pop %v4612
        %v4614 = vadd.f32 %v4613, 1.0
        %v4615 = vrcp.pop %v4614
        %v4616 = vmul.f32 1.0, %v4615
        %v4617 = vtanh.pop %v4594
        %v4618 = vxor.u32 %v4595, 2147483648
        %v4619 = vmul.f32 %v4618, 1.442695
        %v4620 = vpow.pop %v4619
        %v4621 = vadd.f32 %v4620, 1.0
        %v4622 = vrcp.pop %v4621
        %v4623 = vmul.f32 1.0, %v4622
        %v4624 = vmul.f32 %v4616, %v4604
        %v4625 = vmul.f32 %v4610, %v4617
        %v4626 = vadd.f32 %v4624, %v4625
        %v4627 = vtanh.pop %v4626
        %v4628 = vmul.f32 %v4623, %v4627
        %v4629 = vld [vmem:[#allocation4 + $0x8] sm:$0xff]
        %v4630 = vxor.u32 %v4600, 2147483648
        %v4631 = vmul.f32 %v4630, 1.442695
        %v4632 = vpow.pop %v4631
        %v4633 = vadd.f32 %v4632, 1.0
        %v4634 = vrcp.pop %v4633
        %v4635 = vmul.f32 1.0, %v4634
        %v4636 = vxor.u32 %v4601, 2147483648
        %v4637 = vmul.f32 %v4636, 1.442695
        %v4638 = vpow.pop %v4637
        %v4639 = vadd.f32 %v4638, 1.0
        %v4640 = vrcp.pop %v4639
        %v4641 = vmul.f32 1.0, %v4640
        %v4642 = vtanh.pop %v4602
        %v4643 = vxor.u32 %v4603, 2147483648
        %v4644 = vmul.f32 %v4643, 1.442695
        %v4645 = vpow.pop %v4644
        %v4646 = vadd.f32 %v4645, 1.0
        %v4647 = vrcp.pop %v4646
        %v4648 = vmul.f32 1.0, %v4647
        %v4649 = vmul.f32 %v4641, %v4629
        %v4650 = vmul.f32 %v4635, %v4642
        %v4651 = vadd.f32 %v4649, %v4650
        %v4652 = vtanh.pop %v4651
        %v4653 = vmul.f32 %v4648, %v4652
        %4654 = vst [vmem:[#allocation4] sm:$0xff] %v4626
        %4655 = vst [vmem:[#allocation4 + $0x8] sm:$0xff] %v4651
        %4656 = vst [vmem:[#allocation3] sm:$0xff] %v4628
        %4657 = vst [vmem:[#allocation3 + $0x8] sm:$0xff] %v4653
        %4658 = vst [vmem:[%s1670] sm:$0xff] %v4628
        %4659 = vst [vmem:[%s358 + $0x8] sm:$0xff] %v4653
        %s4660 = sand.u32 %s183, 1
        %s4661 = scalar_lea.sflag [#allocation8], %s4660
        %s4662 = sand.u32 %s183, 1
        %s4663 = smul.addr %s4662, 32
        %s4664 = scalar_lea.vmem [#allocation12], %s4663
        // Predicated region
        $region99: #{tpu_custom_call.1} parent=81 // pred_check
          %p4665 = pneg %p193
        $region100: #{tpu_custom_call.1} parent=81 // pred_check_branch
          %4667 = sbr.rel (%p4665) target = $region102
        $region101: #{tpu_custom_call.1} parent=81 // pred_region
          %s4669 = ssub.s32 512, 512
          %4670 = vsyncadd %s4661, %s4669
          %s4671 = smul.addr %s23, 2
          %s4672 = smul.addr %s4671, 128
          %s4673 = scalar_lea.hbm %s7, %s4672
          %s4674 = sshll.u32 %s4664, 4
          %s4675 = int_to_ptr.vmem [resolvable:$true] %s4674
          %4680 = dma.vmem_to_hbm [thread:$0]  %s4675, 512, %s4673, %s4661, 256, 512, 16
        $region102: #{tpu_custom_call.1} parent=81 // pred_fallthru
          _
      $region82: #{tpu_custom_call.1} parent=5 // pred_fallthru
        _
      %p4681 = scmp.le.s32.totalorder 2, %s18
      // Predicated region
      $region103: #{tpu_custom_call.1} parent=5 // pred_check
        %p4682 = pneg %p4681
      $region104: #{tpu_custom_call.1} parent=5 // pred_check_branch
        %4684 = sbr.rel (%p4682) target = $region106
      $region105: #{tpu_custom_call.1} parent=5 // pred_region
        %s4685 = ssub.s32 %s18, 2
        // Predicated region
        $region107: #{tpu_custom_call.1} parent=105 // pred_check
          %p4686 = pneg %p199
        $region108: #{tpu_custom_call.1} parent=105 // pred_check_branch
          %4688 = sbr.rel (%p4686) target = $region110
        $region109: #{tpu_custom_call.1} parent=105 // pred_region
          %s4689 = sand.u32 %s184, 1
          %s4690 = scalar_lea.sflag [#allocation8], %s4689
          %s4691 = sand.u32 %s184, 1
          %s4692 = smul.addr %s4691, 32
          %s4693 = scalar_lea.vmem [#allocation12], %s4692
          %4694 = dma.done %s4690, 512
        $region110: #{tpu_custom_call.1} parent=105 // pred_fallthru
          _
      $region106: #{tpu_custom_call.1} parent=5 // pred_fallthru
        _
    $region6: #{tpu_custom_call.1} parent=1 // loop_footer
      %s22 = sadd.s32 1, %s18
    $region7: #{tpu_custom_call.1} parent=1 // loop_footer_branch
      %17 = sbr.rel target = $region3
    $region8: #{tpu_custom_call.1} parent=1 // loop_exit
      _
    %4695 = vsyncpa [#allocation7], 1
    %s4696 = scalar_lea.sflag [#allocation7], 1
    %4697 = vsyncpa %s4696, 1
    %4698 = vsyncpa [#allocation10], 1
    %4699 = vsyncpa [#allocation8], 1
    %s4700 = scalar_lea.sflag [#allocation8], 1
    %4701 = vsyncpa %s4700, 1

</llo_original>
